<compile_context>
chip_gen: v7x
topology: tpu7x:2x2x1
jax: 0.10.0
libtpu: 0.0.40
codegen_flags: <defaults>
</compile_context>

<pallas_src>
import functools

import jax
import jax.numpy as jnp
from jax import lax
from jax.experimental import pallas as pl
from jax.experimental.pallas import tpu as pltpu

# ----- small config consistent with the module -----
B = 2
IM_SIZE = 8
PATCH = 4                  # patch_size
D_MODEL = 32
NHEAD = 8                  # head_dim = 4
NUM_LAYERS = 2
DIM_FF = 64                # dim_feedforward
MODES = (2, 2)             # spectral modes for linear_in over (patch, patch)
SMOOTH_MODES = 3           # smoothing spectral modes over (im, im)
EPS = 1e-5

N_PATCH = (IM_SIZE // PATCH) ** 2          # 4 patches
SEQ = N_PATCH * PATCH * PATCH              # 64 tokens per batch element
PATCH_IN = 3 * PATCH * PATCH               # 48 = (field + 2 coords) * p * p
EMB_K = PATCH * PATCH * PATCH_IN           # 768 block-one-hot contraction dim


# ======================= the fused Pallas kernel =======================

def _encoder_kernel(xb_ref, wemb_ref,
                    wqkv_ref, bqkv_ref, wo_ref, bo_ref, g1_ref, bt1_ref,
                    wff1_ref, bff1_ref, wff2_ref, bff2_ref, g2_ref, bt2_ref,
                    wout_ref, bout_ref, qtail_ref, o_ref,
                    *, num_layers, nhead, eps, attn_scale):
    f32 = jnp.float32

    def ln(z, g, b):
        mu = jnp.mean(z, axis=-1, keepdims=True)
        zc = z - mu
        var = jnp.mean(zc * zc, axis=-1, keepdims=True)
        return zc * lax.rsqrt(var + eps) * g + b

    # linear_in (SpectralConv2d_in folded to a dense matrix): (S, 768)@(768, D)
    x = jnp.dot(xb_ref[0], wemb_ref[...], preferred_element_type=f32)   # (S, D)
    d_model = x.shape[-1]
    dh = d_model // nhead

    for l in range(num_layers):                      # unrolled (2 layers)
        # ---- multi-head self-attention, all heads in one pass ----
        qkv = jnp.dot(x, wqkv_ref[l], preferred_element_type=f32) + bqkv_ref[l]
        q = qkv[:, 0:d_model] * attn_scale           # fold scale into q
        k = qkv[:, d_model:2 * d_model]
        v = qkv[:, 2 * d_model:3 * d_model]
        heads = []
        for h in range(nhead):
            lo, hi = h * dh, (h + 1) * dh
            qh, kh, vh = q[:, lo:hi], k[:, lo:hi], v[:, lo:hi]
            s = lax.dot_general(qh, kh, (((1,), (1,)), ((), ())),
                                preferred_element_type=f32)              # (S, S)
            m = jnp.max(s, axis=-1, keepdims=True)
            p = jnp.exp(s - m)
            denom = jnp.sum(p, axis=-1, keepdims=True)
            p = p * pl.reciprocal(denom, approx=True)                    # EUP slot
            heads.append(jnp.dot(p, vh, preferred_element_type=f32))     # (S, dh)
        attn = jnp.concatenate(heads, axis=-1)                           # (S, D)
        attn = jnp.dot(attn, wo_ref[l], preferred_element_type=f32) + bo_ref[l]
        # residual + LayerNorm fused as the matmul epilogue
        x = ln(x + attn, g1_ref[l], bt1_ref[l])

        # ---- feed-forward ----
        h1 = jnp.dot(x, wff1_ref[l], preferred_element_type=f32) + bff1_ref[l]
        h1 = jnp.maximum(h1, 0.0)
        h2 = jnp.dot(h1, wff2_ref[l], preferred_element_type=f32) + bff2_ref[l]
        x = ln(x + h2, g2_ref[l], bt2_ref[l])

    # linear_out + patch->image permutation + smoothing residual (I + S),
    # all folded into the precomputed (S, S) tail matrix.
    y = jnp.dot(x, wout_ref[...], preferred_element_type=f32) + bout_ref[...]   # (S, 1)
    img = jnp.dot(qtail_ref[...], y, preferred_element_type=f32)                # (S, 1)
    o_ref[0] = img


def fused_encoder(xb, kp):
    """xb: (B, S, EMB_K) block-one-hot token inputs; kp: folded/stacked weights."""
    Bb, S, K = xb.shape
    L = kp["w_qkv"].shape[0]

    weights = (kp["w_emb"],
               kp["w_qkv"], kp["b_qkv"], kp["w_o"], kp["b_o"],
               kp["ln1_g"], kp["ln1_b"],
               kp["w_ff1"], kp["b_ff1"], kp["w_ff2"], kp["b_ff2"],
               kp["ln2_g"], kp["ln2_b"],
               kp["w_out"], kp["b_out"], kp["q_tail"])

    def whole(arr):  # whole-array VMEM-resident block, same block every step
        nd = arr.ndim
        return pl.BlockSpec(arr.shape, lambda b, _n=nd: (0,) * _n)

    in_specs = ([pl.BlockSpec((1, S, K), lambda b: (b, 0, 0))]
                + [whole(w) for w in weights])
    out_specs = pl.BlockSpec((1, S, 1), lambda b: (b, 0, 0))

    kernel = functools.partial(
        _encoder_kernel, num_layers=L, nhead=NHEAD, eps=EPS,
        attn_scale=1.0 / float(D_MODEL // NHEAD) ** 0.5)

    return pl.pallas_call(
        kernel,
        grid=(Bb,),
        in_specs=in_specs,
        out_specs=out_specs,
        out_shape=jax.ShapeDtypeStruct((Bb, S, 1), jnp.float32),
        compiler_params=pltpu.CompilerParams(dimension_semantics=("parallel",)),
    )(xb, *weights)


# ======================= parameter folding (one-time, off the hot path) =======================

def spectral_conv2d(x, w1, w2, m1, m2):
    """Canonical FNO SpectralConv2d over the last two dims.  Used ONLY at
    parameter-preparation time to fold the (linear) spectral convs into dense
    matrices -- FFT has no Pallas TPU lowering and never runs per forward."""
    H, W = x.shape[-2], x.shape[-1]
    assert 2 * m1 <= H and m2 <= W // 2 + 1, "spectral modes would alias"
    x_ft = jnp.fft.rfft2(x)
    cout = w1.shape[1]
    out_ft = jnp.zeros(x.shape[:-3] + (cout, H, W // 2 + 1), dtype=jnp.complex64)
    top = jnp.einsum("...ixy,ioxy->...oxy", x_ft[..., :, :m1, :m2], w1)
    bot = jnp.einsum("...ixy,ioxy->...oxy", x_ft[..., :, H - m1:, :m2], w2)
    out_ft = out_ft.at[..., :m1, :m2].set(top)
    out_ft = out_ft.at[..., H - m1:, :m2].set(bot)
    return jnp.fft.irfft2(out_ft, s=(H, W)).astype(jnp.float32)


def prepare_kernel_params(params):
    p, D = PATCH, D_MODEL
    n_side = IM_SIZE // p

    # ---- fold linear_in (SpectralConv2d_in) into a dense (EMB_K, D) matrix ----
    basis = jnp.eye(PATCH_IN, dtype=jnp.float32).reshape(PATCH_IN, 3, p, p)
    emb = spectral_conv2d(basis, params["lin_in_w1"], params["lin_in_w2"],
                          MODES[0], MODES[1])                      # (48, D, p, p)
    emb = jnp.transpose(emb, (0, 2, 3, 1)).reshape(PATCH_IN, p * p, D)  # (48, 16, D)
    w_emb = jnp.transpose(emb, (1, 0, 2)).reshape(EMB_K, D)        # rows ordered (pos, in)

    # ---- fold patch->image permutation + smoothing residual into (SEQ, SEQ) ----
    def tail(y_tok):   # y_tok in token order t = n*p*p + ph*p + pw, n = hr*2 + wc
        y = y_tok.reshape(n_side, n_side, p, p)
        img = jnp.transpose(y, (0, 2, 1, 3)).reshape(IM_SIZE, IM_SIZE)[None, None]
        sm = spectral_conv2d(img, params["sm_w1"], params["sm_w2"],
                             SMOOTH_MODES, SMOOTH_MODES)
        return (img + sm)[0, 0].reshape(IM_SIZE * IM_SIZE)
    q_tail = jnp.transpose(jax.vmap(tail)(jnp.eye(SEQ, dtype=jnp.float32)))  # (64, 64)

    stack = lambda name: jnp.stack([lp[name] for lp in params["layers"]])
    return {
        "w_emb": w_emb,
        "q_tail": q_tail,
        "w_qkv": stack("in_w"),                "b_qkv": stack("in_b")[:, None, :],
        "w_o": stack("out_w"),                 "b_o": stack("out_b")[:, None, :],
        "ln1_g": stack("ln1_g")[:, None, :],   "ln1_b": stack("ln1_b")[:, None, :],
        "w_ff1": stack("ff_w1"),               "b_ff1": stack("ff_b1")[:, None, :],
        "w_ff2": stack("ff_w2"),               "b_ff2": stack("ff_b2")[:, None, :],
        "ln2_g": stack("ln2_g")[:, None, :],   "ln2_b": stack("ln2_b")[:, None, :],
        "w_out": params["lin_out_w"],
        "b_out": params["lin_out_b"].reshape(1, 1),
    }


# ======================= forward wrapper =======================

def simple_encoder_forward(x, coords_x, kparams):
    Bb, H, W = x.shape
    p = PATCH
    n_side = H // p

    # cat(field, coords) -- mirrors the torch unsqueeze / squeeze / repeat / cat
    xf = x.astype(jnp.float32)[:, None]                              # (B,1,H,W)
    cx = jnp.squeeze(coords_x, 2).astype(jnp.float32)                # (1,2,H,W)
    cx = jnp.broadcast_to(cx, (Bb,) + cx.shape[1:])
    xc = jnp.concatenate([xf, cx], axis=1)                           # (B,3,H,W)

    # chop_to_patches collapsed into one reshape + one transpose:
    # (B, N, c*ph*pw) with n = hr*n_side + wc, j = c*p*p + ph*p + pw
    patches = xc.reshape(Bb, 3, n_side, p, n_side, p)
    patches = jnp.transpose(patches, (0, 2, 4, 1, 3, 5)).reshape(
        Bb, n_side * n_side, PATCH_IN)

    # per-token block-one-hot expansion so the folded spectral conv is a
    # single (S, EMB_K) @ (EMB_K, D) matmul inside the Pallas kernel
    eye_pp = jnp.eye(p * p, dtype=jnp.float32)
    xb = patches[:, :, None, None, :] * eye_pp[None, None, :, :, None]
    xb = xb.reshape(Bb, n_side * n_side * p * p, EMB_K)              # (B, S, 768)

    out = fused_encoder(xb, kparams)                                 # (B, S, 1)
    return out.reshape(Bb, H, W)


# ======================= deterministic parameter init =======================

def init_params(key):
    ks = jax.random.split(key, 8)

    def cplx(k, shape, scale):
        kr, ki = jax.random.split(k)
        w = scale * (jax.random.uniform(kr, shape) + 1j * jax.random.uniform(ki, shape))
        return w.astype(jnp.complex64)

    def dense(k, shape, scale=0.05):
        return (scale * jax.random.normal(k, shape)).astype(jnp.float32)

    params = {
        "lin_in_w1": cplx(ks[0], (3, D_MODEL, MODES[0], MODES[1]), 1.0 / (3 * D_MODEL)),
        "lin_in_w2": cplx(ks[1], (3, D_MODEL, MODES[0], MODES[1]), 1.0 / (3 * D_MODEL)),
        "lin_out_w": dense(ks[2], (D_MODEL, 1)),
        "lin_out_b": jnp.zeros((1,), jnp.float32),
        "sm_w1": cplx(ks[3], (1, 1, SMOOTH_MODES, SMOOTH_MODES), 1.0),
        "sm_w2": cplx(ks[4], (1, 1, SMOOTH_MODES, SMOOTH_MODES), 1.0),
        "layers": [],
    }
    for lk in jax.random.split(ks[5], NUM_LAYERS):
        kk = jax.random.split(lk, 4)
        params["layers"].append({
            "in_w": dense(kk[0], (D_MODEL, 3 * D_MODEL)),
            "in_b": jnp.zeros((3 * D_MODEL,), jnp.float32),
            "out_w": dense(kk[1], (D_MODEL, D_MODEL)),
            "out_b": jnp.zeros((D_MODEL,), jnp.float32),
            "ff_w1": dense(kk[2], (D_MODEL, DIM_FF)),
            "ff_b1": jnp.zeros((DIM_FF,), jnp.float32),
            "ff_w2": dense(kk[3], (DIM_FF, D_MODEL)),
            "ff_b2": jnp.zeros((D_MODEL,), jnp.float32),
            "ln1_g": jnp.ones((D_MODEL,), jnp.float32),
            "ln1_b": jnp.zeros((D_MODEL,), jnp.float32),
            "ln2_g": jnp.ones((D_MODEL,), jnp.float32),
            "ln2_b": jnp.zeros((D_MODEL,), jnp.float32),
        })
    return params


if __name__ == "__main__":
    key = jax.random.PRNGKey(0)
    kx, kc, kp = jax.random.split(key, 3)
    x = jax.random.normal(kx, (B, IM_SIZE, IM_SIZE), dtype=jnp.float32)
    coords_x = jax.random.normal(kc, (1, 2, 1, IM_SIZE, IM_SIZE), dtype=jnp.float32)

    params = init_params(kp)
    kparams = prepare_kernel_params(params)   # one-time weight folding (FFTs here)

    fwd = jax.jit(simple_encoder_forward)
    out = jax.block_until_ready(fwd(x, coords_x, kparams))

    assert out.shape == (B, IM_SIZE, IM_SIZE) and out.dtype == jnp.float32
    assert bool(jnp.all(jnp.isfinite(out)))
    print("KERNEL_OK")
</pallas_src>

<mosaic_0001>
module attributes {stable_mosaic.version = 11 : i64} {
  func.func @_encoder_kernel(%arg0: i32, %arg1: memref<1x64x768xf32, #tpu.memory_space<vmem>>, %arg2: memref<768x32xf32, #tpu.memory_space<vmem>>, %arg3: memref<2x32x96xf32, #tpu.memory_space<vmem>>, %arg4: memref<2x1x96xf32, #tpu.memory_space<vmem>>, %arg5: memref<2x32x32xf32, #tpu.memory_space<vmem>>, %arg6: memref<2x1x32xf32, #tpu.memory_space<vmem>>, %arg7: memref<2x1x32xf32, #tpu.memory_space<vmem>>, %arg8: memref<2x1x32xf32, #tpu.memory_space<vmem>>, %arg9: memref<2x32x64xf32, #tpu.memory_space<vmem>>, %arg10: memref<2x1x64xf32, #tpu.memory_space<vmem>>, %arg11: memref<2x64x32xf32, #tpu.memory_space<vmem>>, %arg12: memref<2x1x32xf32, #tpu.memory_space<vmem>>, %arg13: memref<2x1x32xf32, #tpu.memory_space<vmem>>, %arg14: memref<2x1x32xf32, #tpu.memory_space<vmem>>, %arg15: memref<32x1xf32, #tpu.memory_space<vmem>>, %arg16: memref<1x1xf32, #tpu.memory_space<vmem>>, %arg17: memref<64x64xf32, #tpu.memory_space<vmem>>, %arg18: memref<1x64x1xf32, #tpu.memory_space<vmem>>) attributes {dimension_semantics = [#tpu.dimension_semantics<parallel>], iteration_bounds = array<i64: 2>, scalar_prefetch = 0 : i64, scratch_operands = 0 : i64, tpu.core_type = #tpu.core_type<tc>, window_params = [{transform_indices = @transform_0, window_bounds = array<i64: 1, 64, 768>}, {pipeline_mode = #tpu.pipeline_mode<synchronous>, transform_indices = @transform_1, window_bounds = array<i64: 768, 32>}, {pipeline_mode = #tpu.pipeline_mode<synchronous>, transform_indices = @transform_2, window_bounds = array<i64: 2, 32, 96>}, {pipeline_mode = #tpu.pipeline_mode<synchronous>, transform_indices = @transform_3, window_bounds = array<i64: 2, 1, 96>}, {pipeline_mode = #tpu.pipeline_mode<synchronous>, transform_indices = @transform_4, window_bounds = array<i64: 2, 32, 32>}, {pipeline_mode = #tpu.pipeline_mode<synchronous>, transform_indices = @transform_5, window_bounds = array<i64: 2, 1, 32>}, {pipeline_mode = #tpu.pipeline_mode<synchronous>, transform_indices = @transform_6, window_bounds = array<i64: 2, 1, 32>}, {pipeline_mode = #tpu.pipeline_mode<synchronous>, transform_indices = @transform_7, window_bounds = array<i64: 2, 1, 32>}, {pipeline_mode = #tpu.pipeline_mode<synchronous>, transform_indices = @transform_8, window_bounds = array<i64: 2, 32, 64>}, {pipeline_mode = #tpu.pipeline_mode<synchronous>, transform_indices = @transform_9, window_bounds = array<i64: 2, 1, 64>}, {pipeline_mode = #tpu.pipeline_mode<synchronous>, transform_indices = @transform_10, window_bounds = array<i64: 2, 64, 32>}, {pipeline_mode = #tpu.pipeline_mode<synchronous>, transform_indices = @transform_11, window_bounds = array<i64: 2, 1, 32>}, {pipeline_mode = #tpu.pipeline_mode<synchronous>, transform_indices = @transform_12, window_bounds = array<i64: 2, 1, 32>}, {pipeline_mode = #tpu.pipeline_mode<synchronous>, transform_indices = @transform_13, window_bounds = array<i64: 2, 1, 32>}, {pipeline_mode = #tpu.pipeline_mode<synchronous>, transform_indices = @transform_14, window_bounds = array<i64: 32, 1>}, {pipeline_mode = #tpu.pipeline_mode<synchronous>, transform_indices = @transform_15, window_bounds = array<i64: 1, 1>}, {pipeline_mode = #tpu.pipeline_mode<synchronous>, transform_indices = @transform_16, window_bounds = array<i64: 64, 64>}, {transform_indices = @transform_17, window_bounds = array<i64: 1, 64, 1>}]} {
    %c0 = arith.constant 0 : index
    %c0_0 = arith.constant 0 : index
    %c0_1 = arith.constant 0 : index
    %0 = vector.load %arg1[%c0, %c0_0, %c0_1] : memref<1x64x768xf32, #tpu.memory_space<vmem>>, vector<1x64x768xf32>
    %1 = vector.shape_cast %0 : vector<1x64x768xf32> to vector<64x768xf32>
    %c0_2 = arith.constant 0 : index
    %c0_3 = arith.constant 0 : index
    %2 = vector.load %arg2[%c0_2, %c0_3] : memref<768x32xf32, #tpu.memory_space<vmem>>, vector<768x32xf32>
    %cst = arith.constant dense<0.000000e+00> : vector<64x32xf32>
    %3 = tpu.matmul %1, %2, %cst {dimension_numbers = #tpu.dot_dimension_numbers<[1], [0], [0], [1], [0, 0, 1, 1], [], []>} : vector<64x768xf32>, vector<768x32xf32>, vector<64x32xf32> -> vector<64x32xf32>
    %c0_4 = arith.constant 0 : index
    %c0_5 = arith.constant 0 : index
    %c0_6 = arith.constant 0 : index
    %4 = vector.load %arg3[%c0_4, %c0_5, %c0_6] : memref<2x32x96xf32, #tpu.memory_space<vmem>>, vector<1x32x96xf32>
    %5 = vector.shape_cast %4 : vector<1x32x96xf32> to vector<32x96xf32>
    %cst_7 = arith.constant dense<0.000000e+00> : vector<64x96xf32>
    %6 = tpu.matmul %3, %5, %cst_7 {dimension_numbers = #tpu.dot_dimension_numbers<[1], [0], [0], [1], [0, 0, 1, 1], [], []>} : vector<64x32xf32>, vector<32x96xf32>, vector<64x96xf32> -> vector<64x96xf32>
    %c0_8 = arith.constant 0 : index
    %c0_9 = arith.constant 0 : index
    %c0_10 = arith.constant 0 : index
    %7 = vector.load %arg4[%c0_8, %c0_9, %c0_10] : memref<2x1x96xf32, #tpu.memory_space<vmem>>, vector<1x1x96xf32>
    %8 = vector.shape_cast %7 : vector<1x1x96xf32> to vector<1x96xf32>
    %9 = vector.broadcast %8 : vector<1x96xf32> to vector<64x96xf32>
    %10 = arith.addf %6, %9 : vector<64x96xf32>
    %11 = vector.extract_strided_slice %10 {offsets = [0, 0], sizes = [64, 32], strides = [1, 1]} : vector<64x96xf32> to vector<64x32xf32>
    %cst_11 = arith.constant 5.000000e-01 : f32
    %12 = vector.broadcast %cst_11 : f32 to vector<64x32xf32>
    %13 = arith.mulf %11, %12 : vector<64x32xf32>
    %14 = vector.extract_strided_slice %10 {offsets = [0, 32], sizes = [64, 32], strides = [1, 1]} : vector<64x96xf32> to vector<64x32xf32>
    %15 = vector.extract_strided_slice %10 {offsets = [0, 64], sizes = [64, 32], strides = [1, 1]} : vector<64x96xf32> to vector<64x32xf32>
    %16 = vector.extract_strided_slice %13 {offsets = [0, 0], sizes = [64, 4], strides = [1, 1]} : vector<64x32xf32> to vector<64x4xf32>
    %17 = vector.extract_strided_slice %14 {offsets = [0, 0], sizes = [64, 4], strides = [1, 1]} : vector<64x32xf32> to vector<64x4xf32>
    %18 = vector.extract_strided_slice %15 {offsets = [0, 0], sizes = [64, 4], strides = [1, 1]} : vector<64x32xf32> to vector<64x4xf32>
    %cst_12 = arith.constant dense<0.000000e+00> : vector<64x64xf32>
    %19 = tpu.matmul %16, %17, %cst_12 {dimension_numbers = #tpu.dot_dimension_numbers<[1], [1], [0], [0], [0, 0, 1, 0], [], []>} : vector<64x4xf32>, vector<64x4xf32>, vector<64x64xf32> -> vector<64x64xf32>
    %cst_13 = arith.constant dense<0xFF800000> : vector<64xf32>
    %20 = vector.multi_reduction <maximumf>, %19, %cst_13 [1] : vector<64x64xf32> to vector<64xf32>
    %21 = vector.shape_cast %20 : vector<64xf32> to vector<64x1xf32>
    %22 = vector.broadcast %21 : vector<64x1xf32> to vector<64x64xf32>
    %23 = arith.subf %19, %22 : vector<64x64xf32>
    %24 = math.exp %23 : vector<64x64xf32>
    %cst_14 = arith.constant dense<0.000000e+00> : vector<64xf32>
    %25 = vector.multi_reduction <add>, %24, %cst_14 [1] : vector<64x64xf32> to vector<64xf32>
    %26 = vector.shape_cast %25 : vector<64xf32> to vector<64x1xf32>
    %27 = tpu.reciprocal %26 {approx = true} : vector<64x1xf32> -> vector<64x1xf32>
    %28 = vector.broadcast %27 : vector<64x1xf32> to vector<64x64xf32>
    %29 = arith.mulf %24, %28 : vector<64x64xf32>
    %cst_15 = arith.constant dense<0.000000e+00> : vector<64x4xf32>
    %30 = tpu.matmul %29, %18, %cst_15 {dimension_numbers = #tpu.dot_dimension_numbers<[1], [0], [0], [1], [0, 0, 1, 1], [], []>} : vector<64x64xf32>, vector<64x4xf32>, vector<64x4xf32> -> vector<64x4xf32>
    %31 = vector.extract_strided_slice %13 {offsets = [0, 4], sizes = [64, 4], strides = [1, 1]} : vector<64x32xf32> to vector<64x4xf32>
    %32 = vector.extract_strided_slice %14 {offsets = [0, 4], sizes = [64, 4], strides = [1, 1]} : vector<64x32xf32> to vector<64x4xf32>
    %33 = vector.extract_strided_slice %15 {offsets = [0, 4], sizes = [64, 4], strides = [1, 1]} : vector<64x32xf32> to vector<64x4xf32>
    %cst_16 = arith.constant dense<0.000000e+00> : vector<64x64xf32>
    %34 = tpu.matmul %31, %32, %cst_16 {dimension_numbers = #tpu.dot_dimension_numbers<[1], [1], [0], [0], [0, 0, 1, 0], [], []>} : vector<64x4xf32>, vector<64x4xf32>, vector<64x64xf32> -> vector<64x64xf32>
    %cst_17 = arith.constant dense<0xFF800000> : vector<64xf32>
    %35 = vector.multi_reduction <maximumf>, %34, %cst_17 [1] : vector<64x64xf32> to vector<64xf32>
    %36 = vector.shape_cast %35 : vector<64xf32> to vector<64x1xf32>
    %37 = vector.broadcast %36 : vector<64x1xf32> to vector<64x64xf32>
    %38 = arith.subf %34, %37 : vector<64x64xf32>
    %39 = math.exp %38 : vector<64x64xf32>
    %cst_18 = arith.constant dense<0.000000e+00> : vector<64xf32>
    %40 = vector.multi_reduction <add>, %39, %cst_18 [1] : vector<64x64xf32> to vector<64xf32>
    %41 = vector.shape_cast %40 : vector<64xf32> to vector<64x1xf32>
    %42 = tpu.reciprocal %41 {approx = true} : vector<64x1xf32> -> vector<64x1xf32>
    %43 = vector.broadcast %42 : vector<64x1xf32> to vector<64x64xf32>
    %44 = arith.mulf %39, %43 : vector<64x64xf32>
    %cst_19 = arith.constant dense<0.000000e+00> : vector<64x4xf32>
    %45 = tpu.matmul %44, %33, %cst_19 {dimension_numbers = #tpu.dot_dimension_numbers<[1], [0], [0], [1], [0, 0, 1, 1], [], []>} : vector<64x64xf32>, vector<64x4xf32>, vector<64x4xf32> -> vector<64x4xf32>
    %46 = vector.extract_strided_slice %13 {offsets = [0, 8], sizes = [64, 4], strides = [1, 1]} : vector<64x32xf32> to vector<64x4xf32>
    %47 = vector.extract_strided_slice %14 {offsets = [0, 8], sizes = [64, 4], strides = [1, 1]} : vector<64x32xf32> to vector<64x4xf32>
    %48 = vector.extract_strided_slice %15 {offsets = [0, 8], sizes = [64, 4], strides = [1, 1]} : vector<64x32xf32> to vector<64x4xf32>
    %cst_20 = arith.constant dense<0.000000e+00> : vector<64x64xf32>
    %49 = tpu.matmul %46, %47, %cst_20 {dimension_numbers = #tpu.dot_dimension_numbers<[1], [1], [0], [0], [0, 0, 1, 0], [], []>} : vector<64x4xf32>, vector<64x4xf32>, vector<64x64xf32> -> vector<64x64xf32>
    %cst_21 = arith.constant dense<0xFF800000> : vector<64xf32>
    %50 = vector.multi_reduction <maximumf>, %49, %cst_21 [1] : vector<64x64xf32> to vector<64xf32>
    %51 = vector.shape_cast %50 : vector<64xf32> to vector<64x1xf32>
    %52 = vector.broadcast %51 : vector<64x1xf32> to vector<64x64xf32>
    %53 = arith.subf %49, %52 : vector<64x64xf32>
    %54 = math.exp %53 : vector<64x64xf32>
    %cst_22 = arith.constant dense<0.000000e+00> : vector<64xf32>
    %55 = vector.multi_reduction <add>, %54, %cst_22 [1] : vector<64x64xf32> to vector<64xf32>
    %56 = vector.shape_cast %55 : vector<64xf32> to vector<64x1xf32>
    %57 = tpu.reciprocal %56 {approx = true} : vector<64x1xf32> -> vector<64x1xf32>
    %58 = vector.broadcast %57 : vector<64x1xf32> to vector<64x64xf32>
    %59 = arith.mulf %54, %58 : vector<64x64xf32>
    %cst_23 = arith.constant dense<0.000000e+00> : vector<64x4xf32>
    %60 = tpu.matmul %59, %48, %cst_23 {dimension_numbers = #tpu.dot_dimension_numbers<[1], [0], [0], [1], [0, 0, 1, 1], [], []>} : vector<64x64xf32>, vector<64x4xf32>, vector<64x4xf32> -> vector<64x4xf32>
    %61 = vector.extract_strided_slice %13 {offsets = [0, 12], sizes = [64, 4], strides = [1, 1]} : vector<64x32xf32> to vector<64x4xf32>
    %62 = vector.extract_strided_slice %14 {offsets = [0, 12], sizes = [64, 4], strides = [1, 1]} : vector<64x32xf32> to vector<64x4xf32>
    %63 = vector.extract_strided_slice %15 {offsets = [0, 12], sizes = [64, 4], strides = [1, 1]} : vector<64x32xf32> to vector<64x4xf32>
    %cst_24 = arith.constant dense<0.000000e+00> : vector<64x64xf32>
    %64 = tpu.matmul %61, %62, %cst_24 {dimension_numbers = #tpu.dot_dimension_numbers<[1], [1], [0], [0], [0, 0, 1, 0], [], []>} : vector<64x4xf32>, vector<64x4xf32>, vector<64x64xf32> -> vector<64x64xf32>
    %cst_25 = arith.constant dense<0xFF800000> : vector<64xf32>
    %65 = vector.multi_reduction <maximumf>, %64, %cst_25 [1] : vector<64x64xf32> to vector<64xf32>
    %66 = vector.shape_cast %65 : vector<64xf32> to vector<64x1xf32>
    %67 = vector.broadcast %66 : vector<64x1xf32> to vector<64x64xf32>
    %68 = arith.subf %64, %67 : vector<64x64xf32>
    %69 = math.exp %68 : vector<64x64xf32>
    %cst_26 = arith.constant dense<0.000000e+00> : vector<64xf32>
    %70 = vector.multi_reduction <add>, %69, %cst_26 [1] : vector<64x64xf32> to vector<64xf32>
    %71 = vector.shape_cast %70 : vector<64xf32> to vector<64x1xf32>
    %72 = tpu.reciprocal %71 {approx = true} : vector<64x1xf32> -> vector<64x1xf32>
    %73 = vector.broadcast %72 : vector<64x1xf32> to vector<64x64xf32>
    %74 = arith.mulf %69, %73 : vector<64x64xf32>
    %cst_27 = arith.constant dense<0.000000e+00> : vector<64x4xf32>
    %75 = tpu.matmul %74, %63, %cst_27 {dimension_numbers = #tpu.dot_dimension_numbers<[1], [0], [0], [1], [0, 0, 1, 1], [], []>} : vector<64x64xf32>, vector<64x4xf32>, vector<64x4xf32> -> vector<64x4xf32>
    %76 = vector.extract_strided_slice %13 {offsets = [0, 16], sizes = [64, 4], strides = [1, 1]} : vector<64x32xf32> to vector<64x4xf32>
    %77 = vector.extract_strided_slice %14 {offsets = [0, 16], sizes = [64, 4], strides = [1, 1]} : vector<64x32xf32> to vector<64x4xf32>
    %78 = vector.extract_strided_slice %15 {offsets = [0, 16], sizes = [64, 4], strides = [1, 1]} : vector<64x32xf32> to vector<64x4xf32>
    %cst_28 = arith.constant dense<0.000000e+00> : vector<64x64xf32>
    %79 = tpu.matmul %76, %77, %cst_28 {dimension_numbers = #tpu.dot_dimension_numbers<[1], [1], [0], [0], [0, 0, 1, 0], [], []>} : vector<64x4xf32>, vector<64x4xf32>, vector<64x64xf32> -> vector<64x64xf32>
    %cst_29 = arith.constant dense<0xFF800000> : vector<64xf32>
    %80 = vector.multi_reduction <maximumf>, %79, %cst_29 [1] : vector<64x64xf32> to vector<64xf32>
    %81 = vector.shape_cast %80 : vector<64xf32> to vector<64x1xf32>
    %82 = vector.broadcast %81 : vector<64x1xf32> to vector<64x64xf32>
    %83 = arith.subf %79, %82 : vector<64x64xf32>
    %84 = math.exp %83 : vector<64x64xf32>
    %cst_30 = arith.constant dense<0.000000e+00> : vector<64xf32>
    %85 = vector.multi_reduction <add>, %84, %cst_30 [1] : vector<64x64xf32> to vector<64xf32>
    %86 = vector.shape_cast %85 : vector<64xf32> to vector<64x1xf32>
    %87 = tpu.reciprocal %86 {approx = true} : vector<64x1xf32> -> vector<64x1xf32>
    %88 = vector.broadcast %87 : vector<64x1xf32> to vector<64x64xf32>
    %89 = arith.mulf %84, %88 : vector<64x64xf32>
    %cst_31 = arith.constant dense<0.000000e+00> : vector<64x4xf32>
    %90 = tpu.matmul %89, %78, %cst_31 {dimension_numbers = #tpu.dot_dimension_numbers<[1], [0], [0], [1], [0, 0, 1, 1], [], []>} : vector<64x64xf32>, vector<64x4xf32>, vector<64x4xf32> -> vector<64x4xf32>
    %91 = vector.extract_strided_slice %13 {offsets = [0, 20], sizes = [64, 4], strides = [1, 1]} : vector<64x32xf32> to vector<64x4xf32>
    %92 = vector.extract_strided_slice %14 {offsets = [0, 20], sizes = [64, 4], strides = [1, 1]} : vector<64x32xf32> to vector<64x4xf32>
    %93 = vector.extract_strided_slice %15 {offsets = [0, 20], sizes = [64, 4], strides = [1, 1]} : vector<64x32xf32> to vector<64x4xf32>
    %cst_32 = arith.constant dense<0.000000e+00> : vector<64x64xf32>
    %94 = tpu.matmul %91, %92, %cst_32 {dimension_numbers = #tpu.dot_dimension_numbers<[1], [1], [0], [0], [0, 0, 1, 0], [], []>} : vector<64x4xf32>, vector<64x4xf32>, vector<64x64xf32> -> vector<64x64xf32>
    %cst_33 = arith.constant dense<0xFF800000> : vector<64xf32>
    %95 = vector.multi_reduction <maximumf>, %94, %cst_33 [1] : vector<64x64xf32> to vector<64xf32>
    %96 = vector.shape_cast %95 : vector<64xf32> to vector<64x1xf32>
    %97 = vector.broadcast %96 : vector<64x1xf32> to vector<64x64xf32>
    %98 = arith.subf %94, %97 : vector<64x64xf32>
    %99 = math.exp %98 : vector<64x64xf32>
    %cst_34 = arith.constant dense<0.000000e+00> : vector<64xf32>
    %100 = vector.multi_reduction <add>, %99, %cst_34 [1] : vector<64x64xf32> to vector<64xf32>
    %101 = vector.shape_cast %100 : vector<64xf32> to vector<64x1xf32>
    %102 = tpu.reciprocal %101 {approx = true} : vector<64x1xf32> -> vector<64x1xf32>
    %103 = vector.broadcast %102 : vector<64x1xf32> to vector<64x64xf32>
    %104 = arith.mulf %99, %103 : vector<64x64xf32>
    %cst_35 = arith.constant dense<0.000000e+00> : vector<64x4xf32>
    %105 = tpu.matmul %104, %93, %cst_35 {dimension_numbers = #tpu.dot_dimension_numbers<[1], [0], [0], [1], [0, 0, 1, 1], [], []>} : vector<64x64xf32>, vector<64x4xf32>, vector<64x4xf32> -> vector<64x4xf32>
    %106 = vector.extract_strided_slice %13 {offsets = [0, 24], sizes = [64, 4], strides = [1, 1]} : vector<64x32xf32> to vector<64x4xf32>
    %107 = vector.extract_strided_slice %14 {offsets = [0, 24], sizes = [64, 4], strides = [1, 1]} : vector<64x32xf32> to vector<64x4xf32>
    %108 = vector.extract_strided_slice %15 {offsets = [0, 24], sizes = [64, 4], strides = [1, 1]} : vector<64x32xf32> to vector<64x4xf32>
    %cst_36 = arith.constant dense<0.000000e+00> : vector<64x64xf32>
    %109 = tpu.matmul %106, %107, %cst_36 {dimension_numbers = #tpu.dot_dimension_numbers<[1], [1], [0], [0], [0, 0, 1, 0], [], []>} : vector<64x4xf32>, vector<64x4xf32>, vector<64x64xf32> -> vector<64x64xf32>
    %cst_37 = arith.constant dense<0xFF800000> : vector<64xf32>
    %110 = vector.multi_reduction <maximumf>, %109, %cst_37 [1] : vector<64x64xf32> to vector<64xf32>
    %111 = vector.shape_cast %110 : vector<64xf32> to vector<64x1xf32>
    %112 = vector.broadcast %111 : vector<64x1xf32> to vector<64x64xf32>
    %113 = arith.subf %109, %112 : vector<64x64xf32>
    %114 = math.exp %113 : vector<64x64xf32>
    %cst_38 = arith.constant dense<0.000000e+00> : vector<64xf32>
    %115 = vector.multi_reduction <add>, %114, %cst_38 [1] : vector<64x64xf32> to vector<64xf32>
    %116 = vector.shape_cast %115 : vector<64xf32> to vector<64x1xf32>
    %117 = tpu.reciprocal %116 {approx = true} : vector<64x1xf32> -> vector<64x1xf32>
    %118 = vector.broadcast %117 : vector<64x1xf32> to vector<64x64xf32>
    %119 = arith.mulf %114, %118 : vector<64x64xf32>
    %cst_39 = arith.constant dense<0.000000e+00> : vector<64x4xf32>
    %120 = tpu.matmul %119, %108, %cst_39 {dimension_numbers = #tpu.dot_dimension_numbers<[1], [0], [0], [1], [0, 0, 1, 1], [], []>} : vector<64x64xf32>, vector<64x4xf32>, vector<64x4xf32> -> vector<64x4xf32>
    %121 = vector.extract_strided_slice %13 {offsets = [0, 28], sizes = [64, 4], strides = [1, 1]} : vector<64x32xf32> to vector<64x4xf32>
    %122 = vector.extract_strided_slice %14 {offsets = [0, 28], sizes = [64, 4], strides = [1, 1]} : vector<64x32xf32> to vector<64x4xf32>
    %123 = vector.extract_strided_slice %15 {offsets = [0, 28], sizes = [64, 4], strides = [1, 1]} : vector<64x32xf32> to vector<64x4xf32>
    %cst_40 = arith.constant dense<0.000000e+00> : vector<64x64xf32>
    %124 = tpu.matmul %121, %122, %cst_40 {dimension_numbers = #tpu.dot_dimension_numbers<[1], [1], [0], [0], [0, 0, 1, 0], [], []>} : vector<64x4xf32>, vector<64x4xf32>, vector<64x64xf32> -> vector<64x64xf32>
    %cst_41 = arith.constant dense<0xFF800000> : vector<64xf32>
    %125 = vector.multi_reduction <maximumf>, %124, %cst_41 [1] : vector<64x64xf32> to vector<64xf32>
    %126 = vector.shape_cast %125 : vector<64xf32> to vector<64x1xf32>
    %127 = vector.broadcast %126 : vector<64x1xf32> to vector<64x64xf32>
    %128 = arith.subf %124, %127 : vector<64x64xf32>
    %129 = math.exp %128 : vector<64x64xf32>
    %cst_42 = arith.constant dense<0.000000e+00> : vector<64xf32>
    %130 = vector.multi_reduction <add>, %129, %cst_42 [1] : vector<64x64xf32> to vector<64xf32>
    %131 = vector.shape_cast %130 : vector<64xf32> to vector<64x1xf32>
    %132 = tpu.reciprocal %131 {approx = true} : vector<64x1xf32> -> vector<64x1xf32>
    %133 = vector.broadcast %132 : vector<64x1xf32> to vector<64x64xf32>
    %134 = arith.mulf %129, %133 : vector<64x64xf32>
    %cst_43 = arith.constant dense<0.000000e+00> : vector<64x4xf32>
    %135 = tpu.matmul %134, %123, %cst_43 {dimension_numbers = #tpu.dot_dimension_numbers<[1], [0], [0], [1], [0, 0, 1, 1], [], []>} : vector<64x64xf32>, vector<64x4xf32>, vector<64x4xf32> -> vector<64x4xf32>
    %136 = tpu.concatenate %30, %45, %60, %75, %90, %105, %120, %135 in 1 : vector<64x4xf32>, vector<64x4xf32>, vector<64x4xf32>, vector<64x4xf32>, vector<64x4xf32>, vector<64x4xf32>, vector<64x4xf32>, vector<64x4xf32> -> vector<64x32xf32>
    %c0_44 = arith.constant 0 : index
    %c0_45 = arith.constant 0 : index
    %c0_46 = arith.constant 0 : index
    %137 = vector.load %arg5[%c0_44, %c0_45, %c0_46] : memref<2x32x32xf32, #tpu.memory_space<vmem>>, vector<1x32x32xf32>
    %138 = vector.shape_cast %137 : vector<1x32x32xf32> to vector<32x32xf32>
    %cst_47 = arith.constant dense<0.000000e+00> : vector<64x32xf32>
    %139 = tpu.matmul %136, %138, %cst_47 {dimension_numbers = #tpu.dot_dimension_numbers<[1], [0], [0], [1], [0, 0, 1, 1], [], []>} : vector<64x32xf32>, vector<32x32xf32>, vector<64x32xf32> -> vector<64x32xf32>
    %c0_48 = arith.constant 0 : index
    %c0_49 = arith.constant 0 : index
    %c0_50 = arith.constant 0 : index
    %140 = vector.load %arg6[%c0_48, %c0_49, %c0_50] : memref<2x1x32xf32, #tpu.memory_space<vmem>>, vector<1x1x32xf32>
    %141 = vector.shape_cast %140 : vector<1x1x32xf32> to vector<1x32xf32>
    %142 = vector.broadcast %141 : vector<1x32xf32> to vector<64x32xf32>
    %143 = arith.addf %139, %142 : vector<64x32xf32>
    %144 = arith.addf %3, %143 : vector<64x32xf32>
    %c0_51 = arith.constant 0 : index
    %c0_52 = arith.constant 0 : index
    %c0_53 = arith.constant 0 : index
    %145 = vector.load %arg7[%c0_51, %c0_52, %c0_53] : memref<2x1x32xf32, #tpu.memory_space<vmem>>, vector<1x1x32xf32>
    %146 = vector.shape_cast %145 : vector<1x1x32xf32> to vector<1x32xf32>
    %c0_54 = arith.constant 0 : index
    %c0_55 = arith.constant 0 : index
    %c0_56 = arith.constant 0 : index
    %147 = vector.load %arg8[%c0_54, %c0_55, %c0_56] : memref<2x1x32xf32, #tpu.memory_space<vmem>>, vector<1x1x32xf32>
    %148 = vector.shape_cast %147 : vector<1x1x32xf32> to vector<1x32xf32>
    %cst_57 = arith.constant dense<0.000000e+00> : vector<64xf32>
    %149 = vector.multi_reduction <add>, %144, %cst_57 [1] : vector<64x32xf32> to vector<64xf32>
    %150 = vector.shape_cast %149 : vector<64xf32> to vector<64x1xf32>
    %cst_58 = arith.constant 3.200000e+01 : f32
    %151 = vector.broadcast %cst_58 : f32 to vector<64x1xf32>
    %152 = arith.divf %150, %151 : vector<64x1xf32>
    %153 = vector.broadcast %152 : vector<64x1xf32> to vector<64x32xf32>
    %154 = arith.subf %144, %153 : vector<64x32xf32>
    %155 = arith.mulf %154, %154 : vector<64x32xf32>
    %cst_59 = arith.constant dense<0.000000e+00> : vector<64xf32>
    %156 = vector.multi_reduction <add>, %155, %cst_59 [1] : vector<64x32xf32> to vector<64xf32>
    %157 = vector.shape_cast %156 : vector<64xf32> to vector<64x1xf32>
    %cst_60 = arith.constant 3.200000e+01 : f32
    %158 = vector.broadcast %cst_60 : f32 to vector<64x1xf32>
    %159 = arith.divf %157, %158 : vector<64x1xf32>
    %cst_61 = arith.constant 9.99999974E-6 : f32
    %160 = vector.broadcast %cst_61 : f32 to vector<64x1xf32>
    %161 = arith.addf %159, %160 : vector<64x1xf32>
    %162 = math.rsqrt %161 : vector<64x1xf32>
    %163 = vector.broadcast %162 : vector<64x1xf32> to vector<64x32xf32>
    %164 = arith.mulf %154, %163 : vector<64x32xf32>
    %165 = vector.broadcast %146 : vector<1x32xf32> to vector<64x32xf32>
    %166 = arith.mulf %164, %165 : vector<64x32xf32>
    %167 = vector.broadcast %148 : vector<1x32xf32> to vector<64x32xf32>
    %168 = arith.addf %166, %167 : vector<64x32xf32>
    %c0_62 = arith.constant 0 : index
    %c0_63 = arith.constant 0 : index
    %c0_64 = arith.constant 0 : index
    %169 = vector.load %arg9[%c0_62, %c0_63, %c0_64] : memref<2x32x64xf32, #tpu.memory_space<vmem>>, vector<1x32x64xf32>
    %170 = vector.shape_cast %169 : vector<1x32x64xf32> to vector<32x64xf32>
    %cst_65 = arith.constant dense<0.000000e+00> : vector<64x64xf32>
    %171 = tpu.matmul %168, %170, %cst_65 {dimension_numbers = #tpu.dot_dimension_numbers<[1], [0], [0], [1], [0, 0, 1, 1], [], []>} : vector<64x32xf32>, vector<32x64xf32>, vector<64x64xf32> -> vector<64x64xf32>
    %c0_66 = arith.constant 0 : index
    %c0_67 = arith.constant 0 : index
    %c0_68 = arith.constant 0 : index
    %172 = vector.load %arg10[%c0_66, %c0_67, %c0_68] : memref<2x1x64xf32, #tpu.memory_space<vmem>>, vector<1x1x64xf32>
    %173 = vector.shape_cast %172 : vector<1x1x64xf32> to vector<1x64xf32>
    %174 = vector.broadcast %173 : vector<1x64xf32> to vector<64x64xf32>
    %175 = arith.addf %171, %174 : vector<64x64xf32>
    %cst_69 = arith.constant 0.000000e+00 : f32
    %176 = vector.broadcast %cst_69 : f32 to vector<64x64xf32>
    %177 = arith.maximumf %175, %176 : vector<64x64xf32>
    %c0_70 = arith.constant 0 : index
    %c0_71 = arith.constant 0 : index
    %c0_72 = arith.constant 0 : index
    %178 = vector.load %arg11[%c0_70, %c0_71, %c0_72] : memref<2x64x32xf32, #tpu.memory_space<vmem>>, vector<1x64x32xf32>
    %179 = vector.shape_cast %178 : vector<1x64x32xf32> to vector<64x32xf32>
    %cst_73 = arith.constant dense<0.000000e+00> : vector<64x32xf32>
    %180 = tpu.matmul %177, %179, %cst_73 {dimension_numbers = #tpu.dot_dimension_numbers<[1], [0], [0], [1], [0, 0, 1, 1], [], []>} : vector<64x64xf32>, vector<64x32xf32>, vector<64x32xf32> -> vector<64x32xf32>
    %c0_74 = arith.constant 0 : index
    %c0_75 = arith.constant 0 : index
    %c0_76 = arith.constant 0 : index
    %181 = vector.load %arg12[%c0_74, %c0_75, %c0_76] : memref<2x1x32xf32, #tpu.memory_space<vmem>>, vector<1x1x32xf32>
    %182 = vector.shape_cast %181 : vector<1x1x32xf32> to vector<1x32xf32>
    %183 = vector.broadcast %182 : vector<1x32xf32> to vector<64x32xf32>
    %184 = arith.addf %180, %183 : vector<64x32xf32>
    %185 = arith.addf %168, %184 : vector<64x32xf32>
    %c0_77 = arith.constant 0 : index
    %c0_78 = arith.constant 0 : index
    %c0_79 = arith.constant 0 : index
    %186 = vector.load %arg13[%c0_77, %c0_78, %c0_79] : memref<2x1x32xf32, #tpu.memory_space<vmem>>, vector<1x1x32xf32>
    %187 = vector.shape_cast %186 : vector<1x1x32xf32> to vector<1x32xf32>
    %c0_80 = arith.constant 0 : index
    %c0_81 = arith.constant 0 : index
    %c0_82 = arith.constant 0 : index
    %188 = vector.load %arg14[%c0_80, %c0_81, %c0_82] : memref<2x1x32xf32, #tpu.memory_space<vmem>>, vector<1x1x32xf32>
    %189 = vector.shape_cast %188 : vector<1x1x32xf32> to vector<1x32xf32>
    %cst_83 = arith.constant dense<0.000000e+00> : vector<64xf32>
    %190 = vector.multi_reduction <add>, %185, %cst_83 [1] : vector<64x32xf32> to vector<64xf32>
    %191 = vector.shape_cast %190 : vector<64xf32> to vector<64x1xf32>
    %cst_84 = arith.constant 3.200000e+01 : f32
    %192 = vector.broadcast %cst_84 : f32 to vector<64x1xf32>
    %193 = arith.divf %191, %192 : vector<64x1xf32>
    %194 = vector.broadcast %193 : vector<64x1xf32> to vector<64x32xf32>
    %195 = arith.subf %185, %194 : vector<64x32xf32>
    %196 = arith.mulf %195, %195 : vector<64x32xf32>
    %cst_85 = arith.constant dense<0.000000e+00> : vector<64xf32>
    %197 = vector.multi_reduction <add>, %196, %cst_85 [1] : vector<64x32xf32> to vector<64xf32>
    %198 = vector.shape_cast %197 : vector<64xf32> to vector<64x1xf32>
    %cst_86 = arith.constant 3.200000e+01 : f32
    %199 = vector.broadcast %cst_86 : f32 to vector<64x1xf32>
    %200 = arith.divf %198, %199 : vector<64x1xf32>
    %cst_87 = arith.constant 9.99999974E-6 : f32
    %201 = vector.broadcast %cst_87 : f32 to vector<64x1xf32>
    %202 = arith.addf %200, %201 : vector<64x1xf32>
    %203 = math.rsqrt %202 : vector<64x1xf32>
    %204 = vector.broadcast %203 : vector<64x1xf32> to vector<64x32xf32>
    %205 = arith.mulf %195, %204 : vector<64x32xf32>
    %206 = vector.broadcast %187 : vector<1x32xf32> to vector<64x32xf32>
    %207 = arith.mulf %205, %206 : vector<64x32xf32>
    %208 = vector.broadcast %189 : vector<1x32xf32> to vector<64x32xf32>
    %209 = arith.addf %207, %208 : vector<64x32xf32>
    %c1 = arith.constant 1 : index
    %c0_88 = arith.constant 0 : index
    %c0_89 = arith.constant 0 : index
    %210 = vector.load %arg3[%c1, %c0_88, %c0_89] : memref<2x32x96xf32, #tpu.memory_space<vmem>>, vector<1x32x96xf32>
    %211 = vector.shape_cast %210 : vector<1x32x96xf32> to vector<32x96xf32>
    %cst_90 = arith.constant dense<0.000000e+00> : vector<64x96xf32>
    %212 = tpu.matmul %209, %211, %cst_90 {dimension_numbers = #tpu.dot_dimension_numbers<[1], [0], [0], [1], [0, 0, 1, 1], [], []>} : vector<64x32xf32>, vector<32x96xf32>, vector<64x96xf32> -> vector<64x96xf32>
    %c1_91 = arith.constant 1 : index
    %c0_92 = arith.constant 0 : index
    %c0_93 = arith.constant 0 : index
    %213 = vector.load %arg4[%c1_91, %c0_92, %c0_93] : memref<2x1x96xf32, #tpu.memory_space<vmem>>, vector<1x1x96xf32>
    %214 = vector.shape_cast %213 : vector<1x1x96xf32> to vector<1x96xf32>
    %215 = vector.broadcast %214 : vector<1x96xf32> to vector<64x96xf32>
    %216 = arith.addf %212, %215 : vector<64x96xf32>
    %217 = vector.extract_strided_slice %216 {offsets = [0, 0], sizes = [64, 32], strides = [1, 1]} : vector<64x96xf32> to vector<64x32xf32>
    %cst_94 = arith.constant 5.000000e-01 : f32
    %218 = vector.broadcast %cst_94 : f32 to vector<64x32xf32>
    %219 = arith.mulf %217, %218 : vector<64x32xf32>
    %220 = vector.extract_strided_slice %216 {offsets = [0, 32], sizes = [64, 32], strides = [1, 1]} : vector<64x96xf32> to vector<64x32xf32>
    %221 = vector.extract_strided_slice %216 {offsets = [0, 64], sizes = [64, 32], strides = [1, 1]} : vector<64x96xf32> to vector<64x32xf32>
    %222 = vector.extract_strided_slice %219 {offsets = [0, 0], sizes = [64, 4], strides = [1, 1]} : vector<64x32xf32> to vector<64x4xf32>
    %223 = vector.extract_strided_slice %220 {offsets = [0, 0], sizes = [64, 4], strides = [1, 1]} : vector<64x32xf32> to vector<64x4xf32>
    %224 = vector.extract_strided_slice %221 {offsets = [0, 0], sizes = [64, 4], strides = [1, 1]} : vector<64x32xf32> to vector<64x4xf32>
    %cst_95 = arith.constant dense<0.000000e+00> : vector<64x64xf32>
    %225 = tpu.matmul %222, %223, %cst_95 {dimension_numbers = #tpu.dot_dimension_numbers<[1], [1], [0], [0], [0, 0, 1, 0], [], []>} : vector<64x4xf32>, vector<64x4xf32>, vector<64x64xf32> -> vector<64x64xf32>
    %cst_96 = arith.constant dense<0xFF800000> : vector<64xf32>
    %226 = vector.multi_reduction <maximumf>, %225, %cst_96 [1] : vector<64x64xf32> to vector<64xf32>
    %227 = vector.shape_cast %226 : vector<64xf32> to vector<64x1xf32>
    %228 = vector.broadcast %227 : vector<64x1xf32> to vector<64x64xf32>
    %229 = arith.subf %225, %228 : vector<64x64xf32>
    %230 = math.exp %229 : vector<64x64xf32>
    %cst_97 = arith.constant dense<0.000000e+00> : vector<64xf32>
    %231 = vector.multi_reduction <add>, %230, %cst_97 [1] : vector<64x64xf32> to vector<64xf32>
    %232 = vector.shape_cast %231 : vector<64xf32> to vector<64x1xf32>
    %233 = tpu.reciprocal %232 {approx = true} : vector<64x1xf32> -> vector<64x1xf32>
    %234 = vector.broadcast %233 : vector<64x1xf32> to vector<64x64xf32>
    %235 = arith.mulf %230, %234 : vector<64x64xf32>
    %cst_98 = arith.constant dense<0.000000e+00> : vector<64x4xf32>
    %236 = tpu.matmul %235, %224, %cst_98 {dimension_numbers = #tpu.dot_dimension_numbers<[1], [0], [0], [1], [0, 0, 1, 1], [], []>} : vector<64x64xf32>, vector<64x4xf32>, vector<64x4xf32> -> vector<64x4xf32>
    %237 = vector.extract_strided_slice %219 {offsets = [0, 4], sizes = [64, 4], strides = [1, 1]} : vector<64x32xf32> to vector<64x4xf32>
    %238 = vector.extract_strided_slice %220 {offsets = [0, 4], sizes = [64, 4], strides = [1, 1]} : vector<64x32xf32> to vector<64x4xf32>
    %239 = vector.extract_strided_slice %221 {offsets = [0, 4], sizes = [64, 4], strides = [1, 1]} : vector<64x32xf32> to vector<64x4xf32>
    %cst_99 = arith.constant dense<0.000000e+00> : vector<64x64xf32>
    %240 = tpu.matmul %237, %238, %cst_99 {dimension_numbers = #tpu.dot_dimension_numbers<[1], [1], [0], [0], [0, 0, 1, 0], [], []>} : vector<64x4xf32>, vector<64x4xf32>, vector<64x64xf32> -> vector<64x64xf32>
    %cst_100 = arith.constant dense<0xFF800000> : vector<64xf32>
    %241 = vector.multi_reduction <maximumf>, %240, %cst_100 [1] : vector<64x64xf32> to vector<64xf32>
    %242 = vector.shape_cast %241 : vector<64xf32> to vector<64x1xf32>
    %243 = vector.broadcast %242 : vector<64x1xf32> to vector<64x64xf32>
    %244 = arith.subf %240, %243 : vector<64x64xf32>
    %245 = math.exp %244 : vector<64x64xf32>
    %cst_101 = arith.constant dense<0.000000e+00> : vector<64xf32>
    %246 = vector.multi_reduction <add>, %245, %cst_101 [1] : vector<64x64xf32> to vector<64xf32>
    %247 = vector.shape_cast %246 : vector<64xf32> to vector<64x1xf32>
    %248 = tpu.reciprocal %247 {approx = true} : vector<64x1xf32> -> vector<64x1xf32>
    %249 = vector.broadcast %248 : vector<64x1xf32> to vector<64x64xf32>
    %250 = arith.mulf %245, %249 : vector<64x64xf32>
    %cst_102 = arith.constant dense<0.000000e+00> : vector<64x4xf32>
    %251 = tpu.matmul %250, %239, %cst_102 {dimension_numbers = #tpu.dot_dimension_numbers<[1], [0], [0], [1], [0, 0, 1, 1], [], []>} : vector<64x64xf32>, vector<64x4xf32>, vector<64x4xf32> -> vector<64x4xf32>
    %252 = vector.extract_strided_slice %219 {offsets = [0, 8], sizes = [64, 4], strides = [1, 1]} : vector<64x32xf32> to vector<64x4xf32>
    %253 = vector.extract_strided_slice %220 {offsets = [0, 8], sizes = [64, 4], strides = [1, 1]} : vector<64x32xf32> to vector<64x4xf32>
    %254 = vector.extract_strided_slice %221 {offsets = [0, 8], sizes = [64, 4], strides = [1, 1]} : vector<64x32xf32> to vector<64x4xf32>
    %cst_103 = arith.constant dense<0.000000e+00> : vector<64x64xf32>
    %255 = tpu.matmul %252, %253, %cst_103 {dimension_numbers = #tpu.dot_dimension_numbers<[1], [1], [0], [0], [0, 0, 1, 0], [], []>} : vector<64x4xf32>, vector<64x4xf32>, vector<64x64xf32> -> vector<64x64xf32>
    %cst_104 = arith.constant dense<0xFF800000> : vector<64xf32>
    %256 = vector.multi_reduction <maximumf>, %255, %cst_104 [1] : vector<64x64xf32> to vector<64xf32>
    %257 = vector.shape_cast %256 : vector<64xf32> to vector<64x1xf32>
    %258 = vector.broadcast %257 : vector<64x1xf32> to vector<64x64xf32>
    %259 = arith.subf %255, %258 : vector<64x64xf32>
    %260 = math.exp %259 : vector<64x64xf32>
    %cst_105 = arith.constant dense<0.000000e+00> : vector<64xf32>
    %261 = vector.multi_reduction <add>, %260, %cst_105 [1] : vector<64x64xf32> to vector<64xf32>
    %262 = vector.shape_cast %261 : vector<64xf32> to vector<64x1xf32>
    %263 = tpu.reciprocal %262 {approx = true} : vector<64x1xf32> -> vector<64x1xf32>
    %264 = vector.broadcast %263 : vector<64x1xf32> to vector<64x64xf32>
    %265 = arith.mulf %260, %264 : vector<64x64xf32>
    %cst_106 = arith.constant dense<0.000000e+00> : vector<64x4xf32>
    %266 = tpu.matmul %265, %254, %cst_106 {dimension_numbers = #tpu.dot_dimension_numbers<[1], [0], [0], [1], [0, 0, 1, 1], [], []>} : vector<64x64xf32>, vector<64x4xf32>, vector<64x4xf32> -> vector<64x4xf32>
    %267 = vector.extract_strided_slice %219 {offsets = [0, 12], sizes = [64, 4], strides = [1, 1]} : vector<64x32xf32> to vector<64x4xf32>
    %268 = vector.extract_strided_slice %220 {offsets = [0, 12], sizes = [64, 4], strides = [1, 1]} : vector<64x32xf32> to vector<64x4xf32>
    %269 = vector.extract_strided_slice %221 {offsets = [0, 12], sizes = [64, 4], strides = [1, 1]} : vector<64x32xf32> to vector<64x4xf32>
    %cst_107 = arith.constant dense<0.000000e+00> : vector<64x64xf32>
    %270 = tpu.matmul %267, %268, %cst_107 {dimension_numbers = #tpu.dot_dimension_numbers<[1], [1], [0], [0], [0, 0, 1, 0], [], []>} : vector<64x4xf32>, vector<64x4xf32>, vector<64x64xf32> -> vector<64x64xf32>
    %cst_108 = arith.constant dense<0xFF800000> : vector<64xf32>
    %271 = vector.multi_reduction <maximumf>, %270, %cst_108 [1] : vector<64x64xf32> to vector<64xf32>
    %272 = vector.shape_cast %271 : vector<64xf32> to vector<64x1xf32>
    %273 = vector.broadcast %272 : vector<64x1xf32> to vector<64x64xf32>
    %274 = arith.subf %270, %273 : vector<64x64xf32>
    %275 = math.exp %274 : vector<64x64xf32>
    %cst_109 = arith.constant dense<0.000000e+00> : vector<64xf32>
    %276 = vector.multi_reduction <add>, %275, %cst_109 [1] : vector<64x64xf32> to vector<64xf32>
    %277 = vector.shape_cast %276 : vector<64xf32> to vector<64x1xf32>
    %278 = tpu.reciprocal %277 {approx = true} : vector<64x1xf32> -> vector<64x1xf32>
    %279 = vector.broadcast %278 : vector<64x1xf32> to vector<64x64xf32>
    %280 = arith.mulf %275, %279 : vector<64x64xf32>
    %cst_110 = arith.constant dense<0.000000e+00> : vector<64x4xf32>
    %281 = tpu.matmul %280, %269, %cst_110 {dimension_numbers = #tpu.dot_dimension_numbers<[1], [0], [0], [1], [0, 0, 1, 1], [], []>} : vector<64x64xf32>, vector<64x4xf32>, vector<64x4xf32> -> vector<64x4xf32>
    %282 = vector.extract_strided_slice %219 {offsets = [0, 16], sizes = [64, 4], strides = [1, 1]} : vector<64x32xf32> to vector<64x4xf32>
    %283 = vector.extract_strided_slice %220 {offsets = [0, 16], sizes = [64, 4], strides = [1, 1]} : vector<64x32xf32> to vector<64x4xf32>
    %284 = vector.extract_strided_slice %221 {offsets = [0, 16], sizes = [64, 4], strides = [1, 1]} : vector<64x32xf32> to vector<64x4xf32>
    %cst_111 = arith.constant dense<0.000000e+00> : vector<64x64xf32>
    %285 = tpu.matmul %282, %283, %cst_111 {dimension_numbers = #tpu.dot_dimension_numbers<[1], [1], [0], [0], [0, 0, 1, 0], [], []>} : vector<64x4xf32>, vector<64x4xf32>, vector<64x64xf32> -> vector<64x64xf32>
    %cst_112 = arith.constant dense<0xFF800000> : vector<64xf32>
    %286 = vector.multi_reduction <maximumf>, %285, %cst_112 [1] : vector<64x64xf32> to vector<64xf32>
    %287 = vector.shape_cast %286 : vector<64xf32> to vector<64x1xf32>
    %288 = vector.broadcast %287 : vector<64x1xf32> to vector<64x64xf32>
    %289 = arith.subf %285, %288 : vector<64x64xf32>
    %290 = math.exp %289 : vector<64x64xf32>
    %cst_113 = arith.constant dense<0.000000e+00> : vector<64xf32>
    %291 = vector.multi_reduction <add>, %290, %cst_113 [1] : vector<64x64xf32> to vector<64xf32>
    %292 = vector.shape_cast %291 : vector<64xf32> to vector<64x1xf32>
    %293 = tpu.reciprocal %292 {approx = true} : vector<64x1xf32> -> vector<64x1xf32>
    %294 = vector.broadcast %293 : vector<64x1xf32> to vector<64x64xf32>
    %295 = arith.mulf %290, %294 : vector<64x64xf32>
    %cst_114 = arith.constant dense<0.000000e+00> : vector<64x4xf32>
    %296 = tpu.matmul %295, %284, %cst_114 {dimension_numbers = #tpu.dot_dimension_numbers<[1], [0], [0], [1], [0, 0, 1, 1], [], []>} : vector<64x64xf32>, vector<64x4xf32>, vector<64x4xf32> -> vector<64x4xf32>
    %297 = vector.extract_strided_slice %219 {offsets = [0, 20], sizes = [64, 4], strides = [1, 1]} : vector<64x32xf32> to vector<64x4xf32>
    %298 = vector.extract_strided_slice %220 {offsets = [0, 20], sizes = [64, 4], strides = [1, 1]} : vector<64x32xf32> to vector<64x4xf32>
    %299 = vector.extract_strided_slice %221 {offsets = [0, 20], sizes = [64, 4], strides = [1, 1]} : vector<64x32xf32> to vector<64x4xf32>
    %cst_115 = arith.constant dense<0.000000e+00> : vector<64x64xf32>
    %300 = tpu.matmul %297, %298, %cst_115 {dimension_numbers = #tpu.dot_dimension_numbers<[1], [1], [0], [0], [0, 0, 1, 0], [], []>} : vector<64x4xf32>, vector<64x4xf32>, vector<64x64xf32> -> vector<64x64xf32>
    %cst_116 = arith.constant dense<0xFF800000> : vector<64xf32>
    %301 = vector.multi_reduction <maximumf>, %300, %cst_116 [1] : vector<64x64xf32> to vector<64xf32>
    %302 = vector.shape_cast %301 : vector<64xf32> to vector<64x1xf32>
    %303 = vector.broadcast %302 : vector<64x1xf32> to vector<64x64xf32>
    %304 = arith.subf %300, %303 : vector<64x64xf32>
    %305 = math.exp %304 : vector<64x64xf32>
    %cst_117 = arith.constant dense<0.000000e+00> : vector<64xf32>
    %306 = vector.multi_reduction <add>, %305, %cst_117 [1] : vector<64x64xf32> to vector<64xf32>
    %307 = vector.shape_cast %306 : vector<64xf32> to vector<64x1xf32>
    %308 = tpu.reciprocal %307 {approx = true} : vector<64x1xf32> -> vector<64x1xf32>
    %309 = vector.broadcast %308 : vector<64x1xf32> to vector<64x64xf32>
    %310 = arith.mulf %305, %309 : vector<64x64xf32>
    %cst_118 = arith.constant dense<0.000000e+00> : vector<64x4xf32>
    %311 = tpu.matmul %310, %299, %cst_118 {dimension_numbers = #tpu.dot_dimension_numbers<[1], [0], [0], [1], [0, 0, 1, 1], [], []>} : vector<64x64xf32>, vector<64x4xf32>, vector<64x4xf32> -> vector<64x4xf32>
    %312 = vector.extract_strided_slice %219 {offsets = [0, 24], sizes = [64, 4], strides = [1, 1]} : vector<64x32xf32> to vector<64x4xf32>
    %313 = vector.extract_strided_slice %220 {offsets = [0, 24], sizes = [64, 4], strides = [1, 1]} : vector<64x32xf32> to vector<64x4xf32>
    %314 = vector.extract_strided_slice %221 {offsets = [0, 24], sizes = [64, 4], strides = [1, 1]} : vector<64x32xf32> to vector<64x4xf32>
    %cst_119 = arith.constant dense<0.000000e+00> : vector<64x64xf32>
    %315 = tpu.matmul %312, %313, %cst_119 {dimension_numbers = #tpu.dot_dimension_numbers<[1], [1], [0], [0], [0, 0, 1, 0], [], []>} : vector<64x4xf32>, vector<64x4xf32>, vector<64x64xf32> -> vector<64x64xf32>
    %cst_120 = arith.constant dense<0xFF800000> : vector<64xf32>
    %316 = vector.multi_reduction <maximumf>, %315, %cst_120 [1] : vector<64x64xf32> to vector<64xf32>
    %317 = vector.shape_cast %316 : vector<64xf32> to vector<64x1xf32>
    %318 = vector.broadcast %317 : vector<64x1xf32> to vector<64x64xf32>
    %319 = arith.subf %315, %318 : vector<64x64xf32>
    %320 = math.exp %319 : vector<64x64xf32>
    %cst_121 = arith.constant dense<0.000000e+00> : vector<64xf32>
    %321 = vector.multi_reduction <add>, %320, %cst_121 [1] : vector<64x64xf32> to vector<64xf32>
    %322 = vector.shape_cast %321 : vector<64xf32> to vector<64x1xf32>
    %323 = tpu.reciprocal %322 {approx = true} : vector<64x1xf32> -> vector<64x1xf32>
    %324 = vector.broadcast %323 : vector<64x1xf32> to vector<64x64xf32>
    %325 = arith.mulf %320, %324 : vector<64x64xf32>
    %cst_122 = arith.constant dense<0.000000e+00> : vector<64x4xf32>
    %326 = tpu.matmul %325, %314, %cst_122 {dimension_numbers = #tpu.dot_dimension_numbers<[1], [0], [0], [1], [0, 0, 1, 1], [], []>} : vector<64x64xf32>, vector<64x4xf32>, vector<64x4xf32> -> vector<64x4xf32>
    %327 = vector.extract_strided_slice %219 {offsets = [0, 28], sizes = [64, 4], strides = [1, 1]} : vector<64x32xf32> to vector<64x4xf32>
    %328 = vector.extract_strided_slice %220 {offsets = [0, 28], sizes = [64, 4], strides = [1, 1]} : vector<64x32xf32> to vector<64x4xf32>
    %329 = vector.extract_strided_slice %221 {offsets = [0, 28], sizes = [64, 4], strides = [1, 1]} : vector<64x32xf32> to vector<64x4xf32>
    %cst_123 = arith.constant dense<0.000000e+00> : vector<64x64xf32>
    %330 = tpu.matmul %327, %328, %cst_123 {dimension_numbers = #tpu.dot_dimension_numbers<[1], [1], [0], [0], [0, 0, 1, 0], [], []>} : vector<64x4xf32>, vector<64x4xf32>, vector<64x64xf32> -> vector<64x64xf32>
    %cst_124 = arith.constant dense<0xFF800000> : vector<64xf32>
    %331 = vector.multi_reduction <maximumf>, %330, %cst_124 [1] : vector<64x64xf32> to vector<64xf32>
    %332 = vector.shape_cast %331 : vector<64xf32> to vector<64x1xf32>
    %333 = vector.broadcast %332 : vector<64x1xf32> to vector<64x64xf32>
    %334 = arith.subf %330, %333 : vector<64x64xf32>
    %335 = math.exp %334 : vector<64x64xf32>
    %cst_125 = arith.constant dense<0.000000e+00> : vector<64xf32>
    %336 = vector.multi_reduction <add>, %335, %cst_125 [1] : vector<64x64xf32> to vector<64xf32>
    %337 = vector.shape_cast %336 : vector<64xf32> to vector<64x1xf32>
    %338 = tpu.reciprocal %337 {approx = true} : vector<64x1xf32> -> vector<64x1xf32>
    %339 = vector.broadcast %338 : vector<64x1xf32> to vector<64x64xf32>
    %340 = arith.mulf %335, %339 : vector<64x64xf32>
    %cst_126 = arith.constant dense<0.000000e+00> : vector<64x4xf32>
    %341 = tpu.matmul %340, %329, %cst_126 {dimension_numbers = #tpu.dot_dimension_numbers<[1], [0], [0], [1], [0, 0, 1, 1], [], []>} : vector<64x64xf32>, vector<64x4xf32>, vector<64x4xf32> -> vector<64x4xf32>
    %342 = tpu.concatenate %236, %251, %266, %281, %296, %311, %326, %341 in 1 : vector<64x4xf32>, vector<64x4xf32>, vector<64x4xf32>, vector<64x4xf32>, vector<64x4xf32>, vector<64x4xf32>, vector<64x4xf32>, vector<64x4xf32> -> vector<64x32xf32>
    %c1_127 = arith.constant 1 : index
    %c0_128 = arith.constant 0 : index
    %c0_129 = arith.constant 0 : index
    %343 = vector.load %arg5[%c1_127, %c0_128, %c0_129] : memref<2x32x32xf32, #tpu.memory_space<vmem>>, vector<1x32x32xf32>
    %344 = vector.shape_cast %343 : vector<1x32x32xf32> to vector<32x32xf32>
    %cst_130 = arith.constant dense<0.000000e+00> : vector<64x32xf32>
    %345 = tpu.matmul %342, %344, %cst_130 {dimension_numbers = #tpu.dot_dimension_numbers<[1], [0], [0], [1], [0, 0, 1, 1], [], []>} : vector<64x32xf32>, vector<32x32xf32>, vector<64x32xf32> -> vector<64x32xf32>
    %c1_131 = arith.constant 1 : index
    %c0_132 = arith.constant 0 : index
    %c0_133 = arith.constant 0 : index
    %346 = vector.load %arg6[%c1_131, %c0_132, %c0_133] : memref<2x1x32xf32, #tpu.memory_space<vmem>>, vector<1x1x32xf32>
    %347 = vector.shape_cast %346 : vector<1x1x32xf32> to vector<1x32xf32>
    %348 = vector.broadcast %347 : vector<1x32xf32> to vector<64x32xf32>
    %349 = arith.addf %345, %348 : vector<64x32xf32>
    %350 = arith.addf %209, %349 : vector<64x32xf32>
    %c1_134 = arith.constant 1 : index
    %c0_135 = arith.constant 0 : index
    %c0_136 = arith.constant 0 : index
    %351 = vector.load %arg7[%c1_134, %c0_135, %c0_136] : memref<2x1x32xf32, #tpu.memory_space<vmem>>, vector<1x1x32xf32>
    %352 = vector.shape_cast %351 : vector<1x1x32xf32> to vector<1x32xf32>
    %c1_137 = arith.constant 1 : index
    %c0_138 = arith.constant 0 : index
    %c0_139 = arith.constant 0 : index
    %353 = vector.load %arg8[%c1_137, %c0_138, %c0_139] : memref<2x1x32xf32, #tpu.memory_space<vmem>>, vector<1x1x32xf32>
    %354 = vector.shape_cast %353 : vector<1x1x32xf32> to vector<1x32xf32>
    %cst_140 = arith.constant dense<0.000000e+00> : vector<64xf32>
    %355 = vector.multi_reduction <add>, %350, %cst_140 [1] : vector<64x32xf32> to vector<64xf32>
    %356 = vector.shape_cast %355 : vector<64xf32> to vector<64x1xf32>
    %cst_141 = arith.constant 3.200000e+01 : f32
    %357 = vector.broadcast %cst_141 : f32 to vector<64x1xf32>
    %358 = arith.divf %356, %357 : vector<64x1xf32>
    %359 = vector.broadcast %358 : vector<64x1xf32> to vector<64x32xf32>
    %360 = arith.subf %350, %359 : vector<64x32xf32>
    %361 = arith.mulf %360, %360 : vector<64x32xf32>
    %cst_142 = arith.constant dense<0.000000e+00> : vector<64xf32>
    %362 = vector.multi_reduction <add>, %361, %cst_142 [1] : vector<64x32xf32> to vector<64xf32>
    %363 = vector.shape_cast %362 : vector<64xf32> to vector<64x1xf32>
    %cst_143 = arith.constant 3.200000e+01 : f32
    %364 = vector.broadcast %cst_143 : f32 to vector<64x1xf32>
    %365 = arith.divf %363, %364 : vector<64x1xf32>
    %cst_144 = arith.constant 9.99999974E-6 : f32
    %366 = vector.broadcast %cst_144 : f32 to vector<64x1xf32>
    %367 = arith.addf %365, %366 : vector<64x1xf32>
    %368 = math.rsqrt %367 : vector<64x1xf32>
    %369 = vector.broadcast %368 : vector<64x1xf32> to vector<64x32xf32>
    %370 = arith.mulf %360, %369 : vector<64x32xf32>
    %371 = vector.broadcast %352 : vector<1x32xf32> to vector<64x32xf32>
    %372 = arith.mulf %370, %371 : vector<64x32xf32>
    %373 = vector.broadcast %354 : vector<1x32xf32> to vector<64x32xf32>
    %374 = arith.addf %372, %373 : vector<64x32xf32>
    %c1_145 = arith.constant 1 : index
    %c0_146 = arith.constant 0 : index
    %c0_147 = arith.constant 0 : index
    %375 = vector.load %arg9[%c1_145, %c0_146, %c0_147] : memref<2x32x64xf32, #tpu.memory_space<vmem>>, vector<1x32x64xf32>
    %376 = vector.shape_cast %375 : vector<1x32x64xf32> to vector<32x64xf32>
    %cst_148 = arith.constant dense<0.000000e+00> : vector<64x64xf32>
    %377 = tpu.matmul %374, %376, %cst_148 {dimension_numbers = #tpu.dot_dimension_numbers<[1], [0], [0], [1], [0, 0, 1, 1], [], []>} : vector<64x32xf32>, vector<32x64xf32>, vector<64x64xf32> -> vector<64x64xf32>
    %c1_149 = arith.constant 1 : index
    %c0_150 = arith.constant 0 : index
    %c0_151 = arith.constant 0 : index
    %378 = vector.load %arg10[%c1_149, %c0_150, %c0_151] : memref<2x1x64xf32, #tpu.memory_space<vmem>>, vector<1x1x64xf32>
    %379 = vector.shape_cast %378 : vector<1x1x64xf32> to vector<1x64xf32>
    %380 = vector.broadcast %379 : vector<1x64xf32> to vector<64x64xf32>
    %381 = arith.addf %377, %380 : vector<64x64xf32>
    %cst_152 = arith.constant 0.000000e+00 : f32
    %382 = vector.broadcast %cst_152 : f32 to vector<64x64xf32>
    %383 = arith.maximumf %381, %382 : vector<64x64xf32>
    %c1_153 = arith.constant 1 : index
    %c0_154 = arith.constant 0 : index
    %c0_155 = arith.constant 0 : index
    %384 = vector.load %arg11[%c1_153, %c0_154, %c0_155] : memref<2x64x32xf32, #tpu.memory_space<vmem>>, vector<1x64x32xf32>
    %385 = vector.shape_cast %384 : vector<1x64x32xf32> to vector<64x32xf32>
    %cst_156 = arith.constant dense<0.000000e+00> : vector<64x32xf32>
    %386 = tpu.matmul %383, %385, %cst_156 {dimension_numbers = #tpu.dot_dimension_numbers<[1], [0], [0], [1], [0, 0, 1, 1], [], []>} : vector<64x64xf32>, vector<64x32xf32>, vector<64x32xf32> -> vector<64x32xf32>
    %c1_157 = arith.constant 1 : index
    %c0_158 = arith.constant 0 : index
    %c0_159 = arith.constant 0 : index
    %387 = vector.load %arg12[%c1_157, %c0_158, %c0_159] : memref<2x1x32xf32, #tpu.memory_space<vmem>>, vector<1x1x32xf32>
    %388 = vector.shape_cast %387 : vector<1x1x32xf32> to vector<1x32xf32>
    %389 = vector.broadcast %388 : vector<1x32xf32> to vector<64x32xf32>
    %390 = arith.addf %386, %389 : vector<64x32xf32>
    %391 = arith.addf %374, %390 : vector<64x32xf32>
    %c1_160 = arith.constant 1 : index
    %c0_161 = arith.constant 0 : index
    %c0_162 = arith.constant 0 : index
    %392 = vector.load %arg13[%c1_160, %c0_161, %c0_162] : memref<2x1x32xf32, #tpu.memory_space<vmem>>, vector<1x1x32xf32>
    %393 = vector.shape_cast %392 : vector<1x1x32xf32> to vector<1x32xf32>
    %c1_163 = arith.constant 1 : index
    %c0_164 = arith.constant 0 : index
    %c0_165 = arith.constant 0 : index
    %394 = vector.load %arg14[%c1_163, %c0_164, %c0_165] : memref<2x1x32xf32, #tpu.memory_space<vmem>>, vector<1x1x32xf32>
    %395 = vector.shape_cast %394 : vector<1x1x32xf32> to vector<1x32xf32>
    %cst_166 = arith.constant dense<0.000000e+00> : vector<64xf32>
    %396 = vector.multi_reduction <add>, %391, %cst_166 [1] : vector<64x32xf32> to vector<64xf32>
    %397 = vector.shape_cast %396 : vector<64xf32> to vector<64x1xf32>
    %cst_167 = arith.constant 3.200000e+01 : f32
    %398 = vector.broadcast %cst_167 : f32 to vector<64x1xf32>
    %399 = arith.divf %397, %398 : vector<64x1xf32>
    %400 = vector.broadcast %399 : vector<64x1xf32> to vector<64x32xf32>
    %401 = arith.subf %391, %400 : vector<64x32xf32>
    %402 = arith.mulf %401, %401 : vector<64x32xf32>
    %cst_168 = arith.constant dense<0.000000e+00> : vector<64xf32>
    %403 = vector.multi_reduction <add>, %402, %cst_168 [1] : vector<64x32xf32> to vector<64xf32>
    %404 = vector.shape_cast %403 : vector<64xf32> to vector<64x1xf32>
    %cst_169 = arith.constant 3.200000e+01 : f32
    %405 = vector.broadcast %cst_169 : f32 to vector<64x1xf32>
    %406 = arith.divf %404, %405 : vector<64x1xf32>
    %cst_170 = arith.constant 9.99999974E-6 : f32
    %407 = vector.broadcast %cst_170 : f32 to vector<64x1xf32>
    %408 = arith.addf %406, %407 : vector<64x1xf32>
    %409 = math.rsqrt %408 : vector<64x1xf32>
    %410 = vector.broadcast %409 : vector<64x1xf32> to vector<64x32xf32>
    %411 = arith.mulf %401, %410 : vector<64x32xf32>
    %412 = vector.broadcast %393 : vector<1x32xf32> to vector<64x32xf32>
    %413 = arith.mulf %411, %412 : vector<64x32xf32>
    %414 = vector.broadcast %395 : vector<1x32xf32> to vector<64x32xf32>
    %415 = arith.addf %413, %414 : vector<64x32xf32>
    %c0_171 = arith.constant 0 : index
    %c0_172 = arith.constant 0 : index
    %416 = vector.load %arg15[%c0_171, %c0_172] : memref<32x1xf32, #tpu.memory_space<vmem>>, vector<32x1xf32>
    %cst_173 = arith.constant dense<0.000000e+00> : vector<64x1xf32>
    %417 = tpu.matmul %415, %416, %cst_173 {dimension_numbers = #tpu.dot_dimension_numbers<[1], [0], [0], [1], [0, 0, 1, 1], [], []>} : vector<64x32xf32>, vector<32x1xf32>, vector<64x1xf32> -> vector<64x1xf32>
    %c0_174 = arith.constant 0 : index
    %c0_175 = arith.constant 0 : index
    %418 = vector.load %arg16[%c0_174, %c0_175] : memref<1x1xf32, #tpu.memory_space<vmem>>, vector<1x1xf32>
    %419 = vector.broadcast %418 : vector<1x1xf32> to vector<64x1xf32>
    %420 = arith.addf %417, %419 : vector<64x1xf32>
    %c0_176 = arith.constant 0 : index
    %c0_177 = arith.constant 0 : index
    %421 = vector.load %arg17[%c0_176, %c0_177] : memref<64x64xf32, #tpu.memory_space<vmem>>, vector<64x64xf32>
    %cst_178 = arith.constant dense<0.000000e+00> : vector<64x1xf32>
    %422 = tpu.matmul %421, %420, %cst_178 {dimension_numbers = #tpu.dot_dimension_numbers<[1], [0], [0], [1], [0, 0, 1, 1], [], []>} : vector<64x64xf32>, vector<64x1xf32>, vector<64x1xf32> -> vector<64x1xf32>
    %c0_179 = arith.constant 0 : index
    %c0_180 = arith.constant 0 : index
    %c0_181 = arith.constant 0 : index
    %423 = vector.load %arg18[%c0_179, %c0_180, %c0_181] : memref<1x64x1xf32, #tpu.memory_space<vmem>>, vector<1x64x1xf32>
    %424 = vector.shape_cast %423 : vector<1x64x1xf32> to vector<64x1xf32>
    %425 = vector.shape_cast %422 : vector<64x1xf32> to vector<1x64x1xf32>
    tpu.vector_store %arg18[%c0_179, %c0_180, %c0_181], %425 {strides = array<i32>} : memref<1x64x1xf32, #tpu.memory_space<vmem>>, vector<1x64x1xf32>,
    return
  }
  func.func @transform_0(%arg0: i32) -> (i32, i32, i32) {
    %c0_i32 = arith.constant 0 : i32
    %c0_i32_0 = arith.constant 0 : i32
    %c0_i32_1 = arith.constant 0 : i32
    return %arg0, %c0_i32, %c0_i32_0 : i32, i32, i32
  }
  func.func @transform_1(%arg0: i32) -> (i32, i32) {
    %c0_i32 = arith.constant 0 : i32
    %c0_i32_0 = arith.constant 0 : i32
    %c0_i32_1 = arith.constant 0 : i32
    return %c0_i32, %c0_i32_0 : i32, i32
  }
  func.func @transform_2(%arg0: i32) -> (i32, i32, i32) {
    %c0_i32 = arith.constant 0 : i32
    %c0_i32_0 = arith.constant 0 : i32
    %c0_i32_1 = arith.constant 0 : i32
    %c0_i32_2 = arith.constant 0 : i32
    return %c0_i32, %c0_i32_0, %c0_i32_1 : i32, i32, i32
  }
  func.func @transform_3(%arg0: i32) -> (i32, i32, i32) {
    %c0_i32 = arith.constant 0 : i32
    %c0_i32_0 = arith.constant 0 : i32
    %c0_i32_1 = arith.constant 0 : i32
    %c0_i32_2 = arith.constant 0 : i32
    return %c0_i32, %c0_i32_0, %c0_i32_1 : i32, i32, i32
  }
  func.func @transform_4(%arg0: i32) -> (i32, i32, i32) {
    %c0_i32 = arith.constant 0 : i32
    %c0_i32_0 = arith.constant 0 : i32
    %c0_i32_1 = arith.constant 0 : i32
    %c0_i32_2 = arith.constant 0 : i32
    return %c0_i32, %c0_i32_0, %c0_i32_1 : i32, i32, i32
  }
  func.func @transform_5(%arg0: i32) -> (i32, i32, i32) {
    %c0_i32 = arith.constant 0 : i32
    %c0_i32_0 = arith.constant 0 : i32
    %c0_i32_1 = arith.constant 0 : i32
    %c0_i32_2 = arith.constant 0 : i32
    return %c0_i32, %c0_i32_0, %c0_i32_1 : i32, i32, i32
  }
  func.func @transform_6(%arg0: i32) -> (i32, i32, i32) {
    %c0_i32 = arith.constant 0 : i32
    %c0_i32_0 = arith.constant 0 : i32
    %c0_i32_1 = arith.constant 0 : i32
    %c0_i32_2 = arith.constant 0 : i32
    return %c0_i32, %c0_i32_0, %c0_i32_1 : i32, i32, i32
  }
  func.func @transform_7(%arg0: i32) -> (i32, i32, i32) {
    %c0_i32 = arith.constant 0 : i32
    %c0_i32_0 = arith.constant 0 : i32
    %c0_i32_1 = arith.constant 0 : i32
    %c0_i32_2 = arith.constant 0 : i32
    return %c0_i32, %c0_i32_0, %c0_i32_1 : i32, i32, i32
  }
  func.func @transform_8(%arg0: i32) -> (i32, i32, i32) {
    %c0_i32 = arith.constant 0 : i32
    %c0_i32_0 = arith.constant 0 : i32
    %c0_i32_1 = arith.constant 0 : i32
    %c0_i32_2 = arith.constant 0 : i32
    return %c0_i32, %c0_i32_0, %c0_i32_1 : i32, i32, i32
  }
  func.func @transform_9(%arg0: i32) -> (i32, i32, i32) {
    %c0_i32 = arith.constant 0 : i32
    %c0_i32_0 = arith.constant 0 : i32
    %c0_i32_1 = arith.constant 0 : i32
    %c0_i32_2 = arith.constant 0 : i32
    return %c0_i32, %c0_i32_0, %c0_i32_1 : i32, i32, i32
  }
  func.func @transform_10(%arg0: i32) -> (i32, i32, i32) {
    %c0_i32 = arith.constant 0 : i32
    %c0_i32_0 = arith.constant 0 : i32
    %c0_i32_1 = arith.constant 0 : i32
    %c0_i32_2 = arith.constant 0 : i32
    return %c0_i32, %c0_i32_0, %c0_i32_1 : i32, i32, i32
  }
  func.func @transform_11(%arg0: i32) -> (i32, i32, i32) {
    %c0_i32 = arith.constant 0 : i32
    %c0_i32_0 = arith.constant 0 : i32
    %c0_i32_1 = arith.constant 0 : i32
    %c0_i32_2 = arith.constant 0 : i32
    return %c0_i32, %c0_i32_0, %c0_i32_1 : i32, i32, i32
  }
  func.func @transform_12(%arg0: i32) -> (i32, i32, i32) {
    %c0_i32 = arith.constant 0 : i32
    %c0_i32_0 = arith.constant 0 : i32
    %c0_i32_1 = arith.constant 0 : i32
    %c0_i32_2 = arith.constant 0 : i32
    return %c0_i32, %c0_i32_0, %c0_i32_1 : i32, i32, i32
  }
  func.func @transform_13(%arg0: i32) -> (i32, i32, i32) {
    %c0_i32 = arith.constant 0 : i32
    %c0_i32_0 = arith.constant 0 : i32
    %c0_i32_1 = arith.constant 0 : i32
    %c0_i32_2 = arith.constant 0 : i32
    return %c0_i32, %c0_i32_0, %c0_i32_1 : i32, i32, i32
  }
  func.func @transform_14(%arg0: i32) -> (i32, i32) {
    %c0_i32 = arith.constant 0 : i32
    %c0_i32_0 = arith.constant 0 : i32
    %c0_i32_1 = arith.constant 0 : i32
    return %c0_i32, %c0_i32_0 : i32, i32
  }
  func.func @transform_15(%arg0: i32) -> (i32, i32) {
    %c0_i32 = arith.constant 0 : i32
    %c0_i32_0 = arith.constant 0 : i32
    %c0_i32_1 = arith.constant 0 : i32
    return %c0_i32, %c0_i32_0 : i32, i32
  }
  func.func @transform_16(%arg0: i32) -> (i32, i32) {
    %c0_i32 = arith.constant 0 : i32
    %c0_i32_0 = arith.constant 0 : i32
    %c0_i32_1 = arith.constant 0 : i32
    return %c0_i32, %c0_i32_0 : i32, i32
  }
  func.func @transform_17(%arg0: i32) -> (i32, i32, i32) {
    %c0_i32 = arith.constant 0 : i32
    %c0_i32_0 = arith.constant 0 : i32
    %c0_i32_1 = arith.constant 0 : i32
    return %arg0, %c0_i32, %c0_i32_0 : i32, i32, i32
  }
}

</mosaic_0001>

<llo_original>
// kernel: mul.8
$region0: #{mul.8}
  %s0 = inlined_call_operand.vmem [shape: f32[2,2,2,3,4,4], index: 0, kind: input, shape index: {}]
  %s1 = inlined_call_operand.vmem [shape: f32[2,4,48], index: 1, kind: output, shape index: {}]
  $region1: #{mul.8} parent=0
    #allocation0 [shape = 'u8[8192]{0}', space=vmem, size = 0x2000, scoped, tag = 'scoped mem for output reshape']
    #allocation1 [shape = 'u8[98304]{0}', space=vmem, size = 0x18000, scoped, tag = 'scoped mem for input reshape']
    %s3 = sshllo.u32 0, 4
    %s4 = smul.addr 4, 23
    %s5 = scalar_lea.vmem %s0, %s4
    %v6 = vld [vmem:[%s5] sm:%s3]
    %s7 = scalar_lea.vmem [#allocation1], 184
    %8 = vst [vmem:[%s7] sm:%s3] %v6
    %s9 = smul.addr 4, 22
    %s10 = scalar_lea.vmem %s0, %s9
    %v11 = vld [vmem:[%s10] sm:%s3]
    %s12 = scalar_lea.vmem [#allocation1], 176
    %13 = vst [vmem:[%s12] sm:%s3] %v11
    %s14 = smul.addr 4, 21
    %s15 = scalar_lea.vmem %s0, %s14
    %v16 = vld [vmem:[%s15] sm:%s3]
    %s17 = scalar_lea.vmem [#allocation1], 168
    %18 = vst [vmem:[%s17] sm:%s3] %v16
    %s19 = smul.addr 4, 20
    %s20 = scalar_lea.vmem %s0, %s19
    %v21 = vld [vmem:[%s20] sm:%s3]
    %s22 = scalar_lea.vmem [#allocation1], 160
    %23 = vst [vmem:[%s22] sm:%s3] %v21
    %s24 = smul.addr 4, 19
    %s25 = scalar_lea.vmem %s0, %s24
    %v26 = vld [vmem:[%s25] sm:%s3]
    %s27 = scalar_lea.vmem [#allocation1], 152
    %28 = vst [vmem:[%s27] sm:%s3] %v26
    %s29 = smul.addr 4, 18
    %s30 = scalar_lea.vmem %s0, %s29
    %v31 = vld [vmem:[%s30] sm:%s3]
    %s32 = scalar_lea.vmem [#allocation1], 144
    %33 = vst [vmem:[%s32] sm:%s3] %v31
    %s34 = smul.addr 4, 17
    %s35 = scalar_lea.vmem %s0, %s34
    %v36 = vld [vmem:[%s35] sm:%s3]
    %s37 = scalar_lea.vmem [#allocation1], 136
    %38 = vst [vmem:[%s37] sm:%s3] %v36
    %s39 = smul.addr 4, 16
    %s40 = scalar_lea.vmem %s0, %s39
    %v41 = vld [vmem:[%s40] sm:%s3]
    %s42 = scalar_lea.vmem [#allocation1], 128
    %43 = vst [vmem:[%s42] sm:%s3] %v41
    %s44 = smul.addr 4, 15
    %s45 = scalar_lea.vmem %s0, %s44
    %v46 = vld [vmem:[%s45] sm:%s3]
    %s47 = scalar_lea.vmem [#allocation1], 120
    %48 = vst [vmem:[%s47] sm:%s3] %v46
    %s49 = smul.addr 4, 14
    %s50 = scalar_lea.vmem %s0, %s49
    %v51 = vld [vmem:[%s50] sm:%s3]
    %s52 = scalar_lea.vmem [#allocation1], 112
    %53 = vst [vmem:[%s52] sm:%s3] %v51
    %s54 = smul.addr 4, 13
    %s55 = scalar_lea.vmem %s0, %s54
    %v56 = vld [vmem:[%s55] sm:%s3]
    %s57 = scalar_lea.vmem [#allocation1], 104
    %58 = vst [vmem:[%s57] sm:%s3] %v56
    %s59 = smul.addr 4, 12
    %s60 = scalar_lea.vmem %s0, %s59
    %v61 = vld [vmem:[%s60] sm:%s3]
    %s62 = scalar_lea.vmem [#allocation1], 96
    %63 = vst [vmem:[%s62] sm:%s3] %v61
    %s64 = smul.addr 4, 11
    %s65 = scalar_lea.vmem %s0, %s64
    %v66 = vld [vmem:[%s65] sm:%s3]
    %s67 = scalar_lea.vmem [#allocation1], 88
    %68 = vst [vmem:[%s67] sm:%s3] %v66
    %s69 = smul.addr 4, 10
    %s70 = scalar_lea.vmem %s0, %s69
    %v71 = vld [vmem:[%s70] sm:%s3]
    %s72 = scalar_lea.vmem [#allocation1], 80
    %73 = vst [vmem:[%s72] sm:%s3] %v71
    %s74 = smul.addr 4, 9
    %s75 = scalar_lea.vmem %s0, %s74
    %v76 = vld [vmem:[%s75] sm:%s3]
    %s77 = scalar_lea.vmem [#allocation1], 72
    %78 = vst [vmem:[%s77] sm:%s3] %v76
    %s79 = smul.addr 4, 8
    %s80 = scalar_lea.vmem %s0, %s79
    %v81 = vld [vmem:[%s80] sm:%s3]
    %s82 = scalar_lea.vmem [#allocation1], 64
    %83 = vst [vmem:[%s82] sm:%s3] %v81
    %s84 = smul.addr 4, 7
    %s85 = scalar_lea.vmem %s0, %s84
    %v86 = vld [vmem:[%s85] sm:%s3]
    %s87 = scalar_lea.vmem [#allocation1], 56
    %88 = vst [vmem:[%s87] sm:%s3] %v86
    %s89 = smul.addr 4, 6
    %s90 = scalar_lea.vmem %s0, %s89
    %v91 = vld [vmem:[%s90] sm:%s3]
    %s92 = scalar_lea.vmem [#allocation1], 48
    %93 = vst [vmem:[%s92] sm:%s3] %v91
    %s94 = smul.addr 4, 5
    %s95 = scalar_lea.vmem %s0, %s94
    %v96 = vld [vmem:[%s95] sm:%s3]
    %s97 = scalar_lea.vmem [#allocation1], 40
    %98 = vst [vmem:[%s97] sm:%s3] %v96
    %s99 = smul.addr 4, 4
    %s100 = scalar_lea.vmem %s0, %s99
    %v101 = vld [vmem:[%s100] sm:%s3]
    %s102 = scalar_lea.vmem [#allocation1], 32
    %103 = vst [vmem:[%s102] sm:%s3] %v101
    %s104 = smul.addr 4, 3
    %s105 = scalar_lea.vmem %s0, %s104
    %v106 = vld [vmem:[%s105] sm:%s3]
    %s107 = scalar_lea.vmem [#allocation1], 24
    %108 = vst [vmem:[%s107] sm:%s3] %v106
    %s109 = smul.addr 4, 2
    %s110 = scalar_lea.vmem %s0, %s109
    %v111 = vld [vmem:[%s110] sm:%s3]
    %s112 = scalar_lea.vmem [#allocation1], 16
    %113 = vst [vmem:[%s112] sm:%s3] %v111
    %s114 = scalar_lea.vmem %s0, 4
    %v115 = vld [vmem:[%s114] sm:%s3]
    %s116 = scalar_lea.vmem [#allocation1], 8
    %117 = vst [vmem:[%s116] sm:%s3] %v115
    %v118 = vld [vmem:[%s0] sm:%s3]
    %119 = vst [vmem:[#allocation1] sm:%s3] %v118
    %v120 = vld [vmem:[#allocation1] ss:$24 sm:$0xf]
    %v121 = vld [vmem:[#allocation1] ss:$24 sm:$0xf0]
    %vm122 = vcmask 1047556
    %v123 = vsel %vm122, %v121, %v120
    %vm124 = vcmask 31744
    %125 = vst.msk [vmem:[#allocation0] sm:$0xf] %vm124, %v123
    %s126 = scalar_lea.vmem [#allocation0], 4
    %127 = vst.msk [vmem:[%s126] sm:$0xf0] %vm124, %v123
    %s128 = scalar_lea.vmem [#allocation1], 19
    %v129 = vld [vmem:[%s128] ss:$24 sm:$0xf]
    %s130 = scalar_lea.vmem [#allocation1], 19
    %v131 = vld [vmem:[%s130] ss:$24 sm:$0xf0]
    %vm132 = vcmask 1047556
    %v133 = vsel %vm132, %v131, %v129
    %134 = vrot.lane.b32.xlu0 %v133, 44
    %v135 = vpop.permute.xlu0 %134
    %vm136 = vcmask 392544
    %137 = vst.msk [vmem:[#allocation0] sm:$0xf] %vm136, %v135
    %s138 = scalar_lea.vmem [#allocation0], 4
    %139 = vst.msk [vmem:[%s138] sm:$0xf0] %vm136, %v135
    %s140 = scalar_lea.vmem [#allocation1], 18
    %v141 = vld [vmem:[%s140] ss:$24 sm:$0xf]
    %s142 = scalar_lea.vmem [#allocation1], 18
    %v143 = vld [vmem:[%s142] ss:$24 sm:$0xf0]
    %vm144 = vcmask 1047556
    %v145 = vsel %vm144, %v143, %v141
    %146 = vrot.lane.b32.xlu0 %v145, 40
    %v147 = vpop.permute.xlu0 %146
    %vm148 = vcmask 359744
    %149 = vst.msk [vmem:[#allocation0] sm:$0xf] %vm148, %v147
    %s150 = scalar_lea.vmem [#allocation0], 4
    %151 = vst.msk [vmem:[%s150] sm:$0xf0] %vm148, %v147
    %s152 = scalar_lea.vmem [#allocation1], 17
    %v153 = vld [vmem:[%s152] ss:$24 sm:$0xf]
    %s154 = scalar_lea.vmem [#allocation1], 17
    %v155 = vld [vmem:[%s154] ss:$24 sm:$0xf0]
    %vm156 = vcmask 1047556
    %v157 = vsel %vm156, %v155, %v153
    %158 = vrot.lane.b32.xlu0 %v157, 36
    %v159 = vpop.permute.xlu0 %158
    %vm160 = vcmask 326944
    %161 = vst.msk [vmem:[#allocation0] sm:$0xf] %vm160, %v159
    %s162 = scalar_lea.vmem [#allocation0], 4
    %163 = vst.msk [vmem:[%s162] sm:$0xf0] %vm160, %v159
    %s164 = scalar_lea.vmem [#allocation1], 16
    %v165 = vld [vmem:[%s164] ss:$24 sm:$0xf]
    %s166 = scalar_lea.vmem [#allocation1], 16
    %v167 = vld [vmem:[%s166] ss:$24 sm:$0xf0]
    %vm168 = vcmask 1047556
    %v169 = vsel %vm168, %v167, %v165
    %170 = vrot.lane.b32.xlu0 %v169, 32
    %v171 = vpop.permute.xlu0 %170
    %vm172 = vcmask 294144
    %173 = vst.msk [vmem:[#allocation0] sm:$0xf] %vm172, %v171
    %s174 = scalar_lea.vmem [#allocation0], 4
    %175 = vst.msk [vmem:[%s174] sm:$0xf0] %vm172, %v171
    %s176 = scalar_lea.vmem [#allocation1], 11
    %v177 = vld [vmem:[%s176] ss:$24 sm:$0xf]
    %s178 = scalar_lea.vmem [#allocation1], 11
    %v179 = vld [vmem:[%s178] ss:$24 sm:$0xf0]
    %vm180 = vcmask 1047556
    %v181 = vsel %vm180, %v179, %v177
    %182 = vrot.lane.b32.xlu0 %v181, 28
    %v183 = vpop.permute.xlu0 %182
    %vm184 = vcmask 261344
    %185 = vst.msk [vmem:[#allocation0] sm:$0xf] %vm184, %v183
    %s186 = scalar_lea.vmem [#allocation0], 4
    %187 = vst.msk [vmem:[%s186] sm:$0xf0] %vm184, %v183
    %s188 = scalar_lea.vmem [#allocation1], 10
    %v189 = vld [vmem:[%s188] ss:$24 sm:$0xf]
    %s190 = scalar_lea.vmem [#allocation1], 10
    %v191 = vld [vmem:[%s190] ss:$24 sm:$0xf0]
    %vm192 = vcmask 1047556
    %v193 = vsel %vm192, %v191, %v189
    %194 = vrot.lane.b32.xlu0 %v193, 24
    %v195 = vpop.permute.xlu0 %194
    %vm196 = vcmask 228544
    %197 = vst.msk [vmem:[#allocation0] sm:$0xf] %vm196, %v195
    %s198 = scalar_lea.vmem [#allocation0], 4
    %199 = vst.msk [vmem:[%s198] sm:$0xf0] %vm196, %v195
    %s200 = scalar_lea.vmem [#allocation1], 9
    %v201 = vld [vmem:[%s200] ss:$24 sm:$0xf]
    %s202 = scalar_lea.vmem [#allocation1], 9
    %v203 = vld [vmem:[%s202] ss:$24 sm:$0xf0]
    %vm204 = vcmask 1047556
    %v205 = vsel %vm204, %v203, %v201
    %206 = vrot.lane.b32.xlu0 %v205, 20
    %v207 = vpop.permute.xlu0 %206
    %vm208 = vcmask 195744
    %209 = vst.msk [vmem:[#allocation0] sm:$0xf] %vm208, %v207
    %s210 = scalar_lea.vmem [#allocation0], 4
    %211 = vst.msk [vmem:[%s210] sm:$0xf0] %vm208, %v207
    %s212 = scalar_lea.vmem [#allocation1], 8
    %v213 = vld [vmem:[%s212] ss:$24 sm:$0xf]
    %s214 = scalar_lea.vmem [#allocation1], 8
    %v215 = vld [vmem:[%s214] ss:$24 sm:$0xf0]
    %vm216 = vcmask 1047556
    %v217 = vsel %vm216, %v215, %v213
    %218 = vrot.lane.b32.xlu0 %v217, 16
    %v219 = vpop.permute.xlu0 %218
    %vm220 = vcmask 162944
    %221 = vst.msk [vmem:[#allocation0] sm:$0xf] %vm220, %v219
    %s222 = scalar_lea.vmem [#allocation0], 4
    %223 = vst.msk [vmem:[%s222] sm:$0xf0] %vm220, %v219
    %s224 = scalar_lea.vmem [#allocation1], 3
    %v225 = vld [vmem:[%s224] ss:$24 sm:$0xf]
    %s226 = scalar_lea.vmem [#allocation1], 3
    %v227 = vld [vmem:[%s226] ss:$24 sm:$0xf0]
    %vm228 = vcmask 1047556
    %v229 = vsel %vm228, %v227, %v225
    %230 = vrot.lane.b32.xlu0 %v229, 12
    %v231 = vpop.permute.xlu0 %230
    %vm232 = vcmask 130144
    %233 = vst.msk [vmem:[#allocation0] sm:$0xf] %vm232, %v231
    %s234 = scalar_lea.vmem [#allocation0], 4
    %235 = vst.msk [vmem:[%s234] sm:$0xf0] %vm232, %v231
    %s236 = scalar_lea.vmem [#allocation1], 2
    %v237 = vld [vmem:[%s236] ss:$24 sm:$0xf]
    %s238 = scalar_lea.vmem [#allocation1], 2
    %v239 = vld [vmem:[%s238] ss:$24 sm:$0xf0]
    %vm240 = vcmask 1047556
    %v241 = vsel %vm240, %v239, %v237
    %242 = vrot.lane.b32.xlu0 %v241, 8
    %v243 = vpop.permute.xlu0 %242
    %vm244 = vcmask 97344
    %245 = vst.msk [vmem:[#allocation0] sm:$0xf] %vm244, %v243
    %s246 = scalar_lea.vmem [#allocation0], 4
    %247 = vst.msk [vmem:[%s246] sm:$0xf0] %vm244, %v243
    %s248 = scalar_lea.vmem [#allocation1], 1
    %v249 = vld [vmem:[%s248] ss:$24 sm:$0xf]
    %s250 = scalar_lea.vmem [#allocation1], 1
    %v251 = vld [vmem:[%s250] ss:$24 sm:$0xf0]
    %vm252 = vcmask 1047556
    %v253 = vsel %vm252, %v251, %v249
    %254 = vrot.lane.b32.xlu0 %v253, 4
    %v255 = vpop.permute.xlu0 %254
    %vm256 = vcmask 64544
    %257 = vst.msk [vmem:[#allocation0] sm:$0xf] %vm256, %v255
    %s258 = scalar_lea.vmem [#allocation0], 4
    %259 = vst.msk [vmem:[%s258] sm:$0xf0] %vm256, %v255
    %s261 = sshllo.u32 0, 4
    %v263 = vld [vmem:[#allocation0] sm:%s261]
    %s264 = sshllo.u32 0, 4
    %265 = vst [vmem:[%s1] sm:%s264] %v263
    %s266 = scalar_lea.vmem [#allocation0], 8
    %v267 = vld [vmem:[%s266] sm:%s261]
    %s268 = sshllo.u32 0, 4
    %s269 = scalar_lea.vmem %s1, 4
    %270 = vst [vmem:[%s269] sm:%s268] %v267

// kernel: simple_encoder_forward.1
$region0: #{simple_encoder_forward.1}
  #allocation0 [shape = 'u32[]', space=smem, size = 0x4, offset = 0x4, fixed_abs, tag = 'smem constant byte address 0x4 - core index']
  #allocation1 [shape = 'u32[144,128]{1,0:T(1,128)}', space=vmem, size = 0x12000, scoped, tag = 'internal scratch']
  #allocation2 [shape = 'f32[1,1]{1,0:T(1,128)S(1)}', space=vmem, size = 0x200, scoped, tag = 'scoped memory for simple_encoder_forward.1']
  %s0 = inlined_call_operand.vmem [shape: f32[2,64,768], index: 0, kind: input, shape index: {}]
  %s1 = inlined_call_operand.vmem [shape: f32[768,32], index: 1, kind: input, shape index: {}]
  %s2 = inlined_call_operand.vmem [shape: f32[2,32,96], index: 2, kind: input, shape index: {}]
  %s3 = inlined_call_operand.vmem [shape: f32[2,1,96], index: 3, kind: input, shape index: {}]
  %s4 = inlined_call_operand.vmem [shape: f32[2,32,32], index: 4, kind: input, shape index: {}]
  %s5 = inlined_call_operand.vmem [shape: f32[2,1,32], index: 5, kind: input, shape index: {}]
  %s6 = inlined_call_operand.vmem [shape: f32[2,1,32], index: 6, kind: input, shape index: {}]
  %s7 = inlined_call_operand.vmem [shape: f32[2,1,32], index: 7, kind: input, shape index: {}]
  %s8 = inlined_call_operand.vmem [shape: f32[2,32,64], index: 8, kind: input, shape index: {}]
  %s9 = inlined_call_operand.vmem [shape: f32[2,1,64], index: 9, kind: input, shape index: {}]
  %s10 = inlined_call_operand.vmem [shape: f32[2,64,32], index: 10, kind: input, shape index: {}]
  %s11 = inlined_call_operand.vmem [shape: f32[2,1,32], index: 11, kind: input, shape index: {}]
  %s12 = inlined_call_operand.vmem [shape: f32[2,1,32], index: 12, kind: input, shape index: {}]
  %s13 = inlined_call_operand.vmem [shape: f32[2,1,32], index: 13, kind: input, shape index: {}]
  %s14 = inlined_call_operand.vmem [shape: f32[32,1], index: 14, kind: input, shape index: {}]
  %s15 = inlined_call_operand.<no memory space> [shape: f32[1,1], index: 15, kind: input, shape index: {}]
  %s16 = inlined_call_operand.vmem [shape: f32[64,64], index: 16, kind: input, shape index: {}]
  %s17 = inlined_call_operand.vmem [shape: f32[2,64,1], index: 17, kind: output, shape index: {}]
  %s18 = sld [smem:[#allocation0]]
  $region101: #{simple_encoder_forward.1} parent=0
    _
  %s20 = ssub.s32 1, %s18
  %s21 = scalar_select 0, %s20, %s18
  %v22 = vstv %s15
  %23 = vst [vmem:[#allocation2] sm:$0x1] %v22
  loop: start=0, step=1, limit=4
  $region2: #{simple_encoder_forward.1} parent=0 // loop_pre_header
    _
  $region3: #{simple_encoder_forward.1} parent=0 // loop_header
    %s25 = sphi 0, %s29
    %p26 = scmp.ge.s32.totalorder %s25, 4
    %s35 = sphi 0, %s37
    %s38 = sphi 0, %s35
    %s39 = sphi 0, %s38
    %s55 = sphi 0, %s39
    %s59 = sphi 0, %s59
    %s61 = sphi 0, %s59
    %s62 = sphi 0, %s61
    %s76 = sphi 0, %s62
    %s80 = sphi 0, %s80
    %s82 = sphi 0, %s80
    %s83 = sphi 0, %s82
    %s97 = sphi 0, %s83
    %s101 = sphi 0, %s101
    %s103 = sphi 0, %s101
    %s104 = sphi 0, %s103
    %s118 = sphi 0, %s104
    %s122 = sphi 0, %s122
    %s124 = sphi 0, %s122
    %s125 = sphi 0, %s124
    %s139 = sphi 0, %s125
    %s143 = sphi 0, %s143
    %s145 = sphi 0, %s143
    %s146 = sphi 0, %s145
    %s160 = sphi 0, %s146
    %s164 = sphi 0, %s164
    %s166 = sphi 0, %s164
    %s167 = sphi 0, %s166
    %s181 = sphi 0, %s167
    %s185 = sphi 0, %s185
    %s187 = sphi 0, %s185
    %s188 = sphi 0, %s187
    %s202 = sphi 0, %s188
    %s206 = sphi 0, %s206
    %s208 = sphi 0, %s206
    %s209 = sphi 0, %s208
    %s223 = sphi 0, %s209
    %s227 = sphi 0, %s227
    %s229 = sphi 0, %s227
    %s230 = sphi 0, %s229
    %s244 = sphi 0, %s230
    %s248 = sphi 0, %s248
    %s250 = sphi 0, %s248
    %s251 = sphi 0, %s250
    %s265 = sphi 0, %s251
    %s269 = sphi 0, %s269
    %s271 = sphi 0, %s269
    %s272 = sphi 0, %s271
    %s286 = sphi 0, %s272
    %s290 = sphi 0, %s290
    %s292 = sphi 0, %s290
    %s293 = sphi 0, %s292
    %s307 = sphi 0, %s293
    %s311 = sphi 0, %s311
    %s313 = sphi 0, %s311
    %s314 = sphi 0, %s313
    %s328 = sphi 0, %s314
    %s332 = sphi 0, %s332
    %s334 = sphi 0, %s332
    %s335 = sphi 0, %s334
    %s349 = sphi 0, %s335
    %s353 = sphi 0, %s353
    %s355 = sphi 0, %s353
    %s356 = sphi 0, %s355
    %s370 = sphi 0, %s356
    %s374 = sphi 0, %s374
    %s376 = sphi 0, %s374
    %s377 = sphi 0, %s376
    %s391 = sphi 0, %s377
    %s397 = sphi 0, %s399
    %s400 = sphi 0, %s397
    %s401 = sphi 0, %s400
    %s417 = sphi 0, %s401
  $region4: #{simple_encoder_forward.1} parent=0 // loop_header_branch
    %28 = sbr.rel (%p26) target = $region8
  $region5: #{simple_encoder_forward.1} parent=0 // loop_body
    %s30 = ssub.s32 %s25, 1
    %s31 = ssub.s32 %s25, 2
    %s32 = sadd.s32 %s25, 1
    %s33 = ssub.s32 %s25, %s32
    %p34 = scmp.eq.s32.totalorder %s33, 0
    %s36 = sadd.s32 %s35, 1
    %s37 = scalar_select %p34, %s35, %s36
    %p40 = pneg %p34
    %p41 = scmp.eq.s32.totalorder %s25, 1
    %p42 = por %p40, %p41
    %p43 = scmp.ne.s32.totalorder %s35, %s38
    %p44 = scmp.eq.s32.totalorder %s25, 0
    %p45 = por %p43, %p44
    %p46 = scmp.ne.s32.totalorder %s35, %s38
    %p47 = scmp.eq.s32.totalorder %s30, 1
    %p48 = por %p46, %p47
    %p49 = scmp.ne.s32.totalorder %s38, %s39
    %p50 = scmp.eq.s32.totalorder %s30, 0
    %p51 = por %p49, %p50
    %p52 = scmp.ne.s32.totalorder %s38, %s39
    %p53 = scmp.eq.s32.totalorder %s31, 1
    %p54 = por %p52, %p53
    %p56 = scmp.ne.s32.totalorder %s39, %s55
    %p57 = scmp.eq.s32.totalorder %s31, 0
    %p58 = por %p56, %p57
    %s60 = sadd.s32 %s59, 1
    %p63 = scmp.eq.s32.totalorder %s25, 1
    %p64 = scmp.ne.s32.totalorder %s59, %s61
    %p65 = scmp.eq.s32.totalorder %s25, 0
    %p66 = por %p64, %p65
    %p67 = scmp.ne.s32.totalorder %s59, %s61
    %p68 = scmp.eq.s32.totalorder %s30, 1
    %p69 = por %p67, %p68
    %p70 = scmp.ne.s32.totalorder %s61, %s62
    %p71 = scmp.eq.s32.totalorder %s30, 0
    %p72 = por %p70, %p71
    %p73 = scmp.ne.s32.totalorder %s61, %s62
    %p74 = scmp.eq.s32.totalorder %s31, 1
    %p75 = por %p73, %p74
    %p77 = scmp.ne.s32.totalorder %s62, %s76
    %p78 = scmp.eq.s32.totalorder %s31, 0
    %p79 = por %p77, %p78
    %s81 = sadd.s32 %s80, 1
    %p84 = scmp.eq.s32.totalorder %s25, 1
    %p85 = scmp.ne.s32.totalorder %s80, %s82
    %p86 = scmp.eq.s32.totalorder %s25, 0
    %p87 = por %p85, %p86
    %p88 = scmp.ne.s32.totalorder %s80, %s82
    %p89 = scmp.eq.s32.totalorder %s30, 1
    %p90 = por %p88, %p89
    %p91 = scmp.ne.s32.totalorder %s82, %s83
    %p92 = scmp.eq.s32.totalorder %s30, 0
    %p93 = por %p91, %p92
    %p94 = scmp.ne.s32.totalorder %s82, %s83
    %p95 = scmp.eq.s32.totalorder %s31, 1
    %p96 = por %p94, %p95
    %p98 = scmp.ne.s32.totalorder %s83, %s97
    %p99 = scmp.eq.s32.totalorder %s31, 0
    %p100 = por %p98, %p99
    %s102 = sadd.s32 %s101, 1
    %p105 = scmp.eq.s32.totalorder %s25, 1
    %p106 = scmp.ne.s32.totalorder %s101, %s103
    %p107 = scmp.eq.s32.totalorder %s25, 0
    %p108 = por %p106, %p107
    %p109 = scmp.ne.s32.totalorder %s101, %s103
    %p110 = scmp.eq.s32.totalorder %s30, 1
    %p111 = por %p109, %p110
    %p112 = scmp.ne.s32.totalorder %s103, %s104
    %p113 = scmp.eq.s32.totalorder %s30, 0
    %p114 = por %p112, %p113
    %p115 = scmp.ne.s32.totalorder %s103, %s104
    %p116 = scmp.eq.s32.totalorder %s31, 1
    %p117 = por %p115, %p116
    %p119 = scmp.ne.s32.totalorder %s104, %s118
    %p120 = scmp.eq.s32.totalorder %s31, 0
    %p121 = por %p119, %p120
    %s123 = sadd.s32 %s122, 1
    %p126 = scmp.eq.s32.totalorder %s25, 1
    %p127 = scmp.ne.s32.totalorder %s122, %s124
    %p128 = scmp.eq.s32.totalorder %s25, 0
    %p129 = por %p127, %p128
    %p130 = scmp.ne.s32.totalorder %s122, %s124
    %p131 = scmp.eq.s32.totalorder %s30, 1
    %p132 = por %p130, %p131
    %p133 = scmp.ne.s32.totalorder %s124, %s125
    %p134 = scmp.eq.s32.totalorder %s30, 0
    %p135 = por %p133, %p134
    %p136 = scmp.ne.s32.totalorder %s124, %s125
    %p137 = scmp.eq.s32.totalorder %s31, 1
    %p138 = por %p136, %p137
    %p140 = scmp.ne.s32.totalorder %s125, %s139
    %p141 = scmp.eq.s32.totalorder %s31, 0
    %p142 = por %p140, %p141
    %s144 = sadd.s32 %s143, 1
    %p147 = scmp.eq.s32.totalorder %s25, 1
    %p148 = scmp.ne.s32.totalorder %s143, %s145
    %p149 = scmp.eq.s32.totalorder %s25, 0
    %p150 = por %p148, %p149
    %p151 = scmp.ne.s32.totalorder %s143, %s145
    %p152 = scmp.eq.s32.totalorder %s30, 1
    %p153 = por %p151, %p152
    %p154 = scmp.ne.s32.totalorder %s145, %s146
    %p155 = scmp.eq.s32.totalorder %s30, 0
    %p156 = por %p154, %p155
    %p157 = scmp.ne.s32.totalorder %s145, %s146
    %p158 = scmp.eq.s32.totalorder %s31, 1
    %p159 = por %p157, %p158
    %p161 = scmp.ne.s32.totalorder %s146, %s160
    %p162 = scmp.eq.s32.totalorder %s31, 0
    %p163 = por %p161, %p162
    %s165 = sadd.s32 %s164, 1
    %p168 = scmp.eq.s32.totalorder %s25, 1
    %p169 = scmp.ne.s32.totalorder %s164, %s166
    %p170 = scmp.eq.s32.totalorder %s25, 0
    %p171 = por %p169, %p170
    %p172 = scmp.ne.s32.totalorder %s164, %s166
    %p173 = scmp.eq.s32.totalorder %s30, 1
    %p174 = por %p172, %p173
    %p175 = scmp.ne.s32.totalorder %s166, %s167
    %p176 = scmp.eq.s32.totalorder %s30, 0
    %p177 = por %p175, %p176
    %p178 = scmp.ne.s32.totalorder %s166, %s167
    %p179 = scmp.eq.s32.totalorder %s31, 1
    %p180 = por %p178, %p179
    %p182 = scmp.ne.s32.totalorder %s167, %s181
    %p183 = scmp.eq.s32.totalorder %s31, 0
    %p184 = por %p182, %p183
    %s186 = sadd.s32 %s185, 1
    %p189 = scmp.eq.s32.totalorder %s25, 1
    %p190 = scmp.ne.s32.totalorder %s185, %s187
    %p191 = scmp.eq.s32.totalorder %s25, 0
    %p192 = por %p190, %p191
    %p193 = scmp.ne.s32.totalorder %s185, %s187
    %p194 = scmp.eq.s32.totalorder %s30, 1
    %p195 = por %p193, %p194
    %p196 = scmp.ne.s32.totalorder %s187, %s188
    %p197 = scmp.eq.s32.totalorder %s30, 0
    %p198 = por %p196, %p197
    %p199 = scmp.ne.s32.totalorder %s187, %s188
    %p200 = scmp.eq.s32.totalorder %s31, 1
    %p201 = por %p199, %p200
    %p203 = scmp.ne.s32.totalorder %s188, %s202
    %p204 = scmp.eq.s32.totalorder %s31, 0
    %p205 = por %p203, %p204
    %s207 = sadd.s32 %s206, 1
    %p210 = scmp.eq.s32.totalorder %s25, 1
    %p211 = scmp.ne.s32.totalorder %s206, %s208
    %p212 = scmp.eq.s32.totalorder %s25, 0
    %p213 = por %p211, %p212
    %p214 = scmp.ne.s32.totalorder %s206, %s208
    %p215 = scmp.eq.s32.totalorder %s30, 1
    %p216 = por %p214, %p215
    %p217 = scmp.ne.s32.totalorder %s208, %s209
    %p218 = scmp.eq.s32.totalorder %s30, 0
    %p219 = por %p217, %p218
    %p220 = scmp.ne.s32.totalorder %s208, %s209
    %p221 = scmp.eq.s32.totalorder %s31, 1
    %p222 = por %p220, %p221
    %p224 = scmp.ne.s32.totalorder %s209, %s223
    %p225 = scmp.eq.s32.totalorder %s31, 0
    %p226 = por %p224, %p225
    %s228 = sadd.s32 %s227, 1
    %p231 = scmp.eq.s32.totalorder %s25, 1
    %p232 = scmp.ne.s32.totalorder %s227, %s229
    %p233 = scmp.eq.s32.totalorder %s25, 0
    %p234 = por %p232, %p233
    %p235 = scmp.ne.s32.totalorder %s227, %s229
    %p236 = scmp.eq.s32.totalorder %s30, 1
    %p237 = por %p235, %p236
    %p238 = scmp.ne.s32.totalorder %s229, %s230
    %p239 = scmp.eq.s32.totalorder %s30, 0
    %p240 = por %p238, %p239
    %p241 = scmp.ne.s32.totalorder %s229, %s230
    %p242 = scmp.eq.s32.totalorder %s31, 1
    %p243 = por %p241, %p242
    %p245 = scmp.ne.s32.totalorder %s230, %s244
    %p246 = scmp.eq.s32.totalorder %s31, 0
    %p247 = por %p245, %p246
    %s249 = sadd.s32 %s248, 1
    %p252 = scmp.eq.s32.totalorder %s25, 1
    %p253 = scmp.ne.s32.totalorder %s248, %s250
    %p254 = scmp.eq.s32.totalorder %s25, 0
    %p255 = por %p253, %p254
    %p256 = scmp.ne.s32.totalorder %s248, %s250
    %p257 = scmp.eq.s32.totalorder %s30, 1
    %p258 = por %p256, %p257
    %p259 = scmp.ne.s32.totalorder %s250, %s251
    %p260 = scmp.eq.s32.totalorder %s30, 0
    %p261 = por %p259, %p260
    %p262 = scmp.ne.s32.totalorder %s250, %s251
    %p263 = scmp.eq.s32.totalorder %s31, 1
    %p264 = por %p262, %p263
    %p266 = scmp.ne.s32.totalorder %s251, %s265
    %p267 = scmp.eq.s32.totalorder %s31, 0
    %p268 = por %p266, %p267
    %s270 = sadd.s32 %s269, 1
    %p273 = scmp.eq.s32.totalorder %s25, 1
    %p274 = scmp.ne.s32.totalorder %s269, %s271
    %p275 = scmp.eq.s32.totalorder %s25, 0
    %p276 = por %p274, %p275
    %p277 = scmp.ne.s32.totalorder %s269, %s271
    %p278 = scmp.eq.s32.totalorder %s30, 1
    %p279 = por %p277, %p278
    %p280 = scmp.ne.s32.totalorder %s271, %s272
    %p281 = scmp.eq.s32.totalorder %s30, 0
    %p282 = por %p280, %p281
    %p283 = scmp.ne.s32.totalorder %s271, %s272
    %p284 = scmp.eq.s32.totalorder %s31, 1
    %p285 = por %p283, %p284
    %p287 = scmp.ne.s32.totalorder %s272, %s286
    %p288 = scmp.eq.s32.totalorder %s31, 0
    %p289 = por %p287, %p288
    %s291 = sadd.s32 %s290, 1
    %p294 = scmp.eq.s32.totalorder %s25, 1
    %p295 = scmp.ne.s32.totalorder %s290, %s292
    %p296 = scmp.eq.s32.totalorder %s25, 0
    %p297 = por %p295, %p296
    %p298 = scmp.ne.s32.totalorder %s290, %s292
    %p299 = scmp.eq.s32.totalorder %s30, 1
    %p300 = por %p298, %p299
    %p301 = scmp.ne.s32.totalorder %s292, %s293
    %p302 = scmp.eq.s32.totalorder %s30, 0
    %p303 = por %p301, %p302
    %p304 = scmp.ne.s32.totalorder %s292, %s293
    %p305 = scmp.eq.s32.totalorder %s31, 1
    %p306 = por %p304, %p305
    %p308 = scmp.ne.s32.totalorder %s293, %s307
    %p309 = scmp.eq.s32.totalorder %s31, 0
    %p310 = por %p308, %p309
    %s312 = sadd.s32 %s311, 1
    %p315 = scmp.eq.s32.totalorder %s25, 1
    %p316 = scmp.ne.s32.totalorder %s311, %s313
    %p317 = scmp.eq.s32.totalorder %s25, 0
    %p318 = por %p316, %p317
    %p319 = scmp.ne.s32.totalorder %s311, %s313
    %p320 = scmp.eq.s32.totalorder %s30, 1
    %p321 = por %p319, %p320
    %p322 = scmp.ne.s32.totalorder %s313, %s314
    %p323 = scmp.eq.s32.totalorder %s30, 0
    %p324 = por %p322, %p323
    %p325 = scmp.ne.s32.totalorder %s313, %s314
    %p326 = scmp.eq.s32.totalorder %s31, 1
    %p327 = por %p325, %p326
    %p329 = scmp.ne.s32.totalorder %s314, %s328
    %p330 = scmp.eq.s32.totalorder %s31, 0
    %p331 = por %p329, %p330
    %s333 = sadd.s32 %s332, 1
    %p336 = scmp.eq.s32.totalorder %s25, 1
    %p337 = scmp.ne.s32.totalorder %s332, %s334
    %p338 = scmp.eq.s32.totalorder %s25, 0
    %p339 = por %p337, %p338
    %p340 = scmp.ne.s32.totalorder %s332, %s334
    %p341 = scmp.eq.s32.totalorder %s30, 1
    %p342 = por %p340, %p341
    %p343 = scmp.ne.s32.totalorder %s334, %s335
    %p344 = scmp.eq.s32.totalorder %s30, 0
    %p345 = por %p343, %p344
    %p346 = scmp.ne.s32.totalorder %s334, %s335
    %p347 = scmp.eq.s32.totalorder %s31, 1
    %p348 = por %p346, %p347
    %p350 = scmp.ne.s32.totalorder %s335, %s349
    %p351 = scmp.eq.s32.totalorder %s31, 0
    %p352 = por %p350, %p351
    %s354 = sadd.s32 %s353, 1
    %p357 = scmp.eq.s32.totalorder %s25, 1
    %p358 = scmp.ne.s32.totalorder %s353, %s355
    %p359 = scmp.eq.s32.totalorder %s25, 0
    %p360 = por %p358, %p359
    %p361 = scmp.ne.s32.totalorder %s353, %s355
    %p362 = scmp.eq.s32.totalorder %s30, 1
    %p363 = por %p361, %p362
    %p364 = scmp.ne.s32.totalorder %s355, %s356
    %p365 = scmp.eq.s32.totalorder %s30, 0
    %p366 = por %p364, %p365
    %p367 = scmp.ne.s32.totalorder %s355, %s356
    %p368 = scmp.eq.s32.totalorder %s31, 1
    %p369 = por %p367, %p368
    %p371 = scmp.ne.s32.totalorder %s356, %s370
    %p372 = scmp.eq.s32.totalorder %s31, 0
    %p373 = por %p371, %p372
    %s375 = sadd.s32 %s374, 1
    %p378 = scmp.eq.s32.totalorder %s25, 1
    %p379 = scmp.ne.s32.totalorder %s374, %s376
    %p380 = scmp.eq.s32.totalorder %s25, 0
    %p381 = por %p379, %p380
    %p382 = scmp.ne.s32.totalorder %s374, %s376
    %p383 = scmp.eq.s32.totalorder %s30, 1
    %p384 = por %p382, %p383
    %p385 = scmp.ne.s32.totalorder %s376, %s377
    %p386 = scmp.eq.s32.totalorder %s30, 0
    %p387 = por %p385, %p386
    %p388 = scmp.ne.s32.totalorder %s376, %s377
    %p389 = scmp.eq.s32.totalorder %s31, 1
    %p390 = por %p388, %p389
    %p392 = scmp.ne.s32.totalorder %s377, %s391
    %p393 = scmp.eq.s32.totalorder %s31, 0
    %p394 = por %p392, %p393
    %s395 = ssub.s32 %s25, %s32
    %p396 = scmp.eq.s32.totalorder %s395, 0
    %s398 = sadd.s32 %s397, 1
    %s399 = scalar_select %p396, %s397, %s398
    %p402 = pneg %p396
    %p403 = scmp.eq.s32.totalorder %s25, 1
    %p404 = por %p402, %p403
    %p405 = scmp.ne.s32.totalorder %s397, %s400
    %p406 = scmp.eq.s32.totalorder %s25, 0
    %p407 = por %p405, %p406
    %p408 = scmp.ne.s32.totalorder %s397, %s400
    %p409 = scmp.eq.s32.totalorder %s30, 1
    %p410 = por %p408, %p409
    %p411 = scmp.ne.s32.totalorder %s400, %s401
    %p412 = scmp.eq.s32.totalorder %s30, 0
    %p413 = por %p411, %p412
    %p414 = scmp.ne.s32.totalorder %s400, %s401
    %p415 = scmp.eq.s32.totalorder %s31, 1
    %p416 = por %p414, %p415
    %p418 = scmp.ne.s32.totalorder %s401, %s417
    %p419 = scmp.eq.s32.totalorder %s31, 0
    %p420 = por %p418, %p419
    %p421 = scmp.le.s32.totalorder 1, %s25
    %p422 = scmp.lt.s32.totalorder %s25, 3
    %p423 = pnand %p421, %p422
    %p424 = pneg %p423
    // Predicated region
    $region9: #{simple_encoder_forward.1} parent=5 // pred_check
      _
    $region10: #{simple_encoder_forward.1} parent=5 // pred_check_branch
      %426 = sbr.rel (%p423) target = $region12
    $region11: #{simple_encoder_forward.1} parent=5 // pred_region
      %s427 = ssub.s32 %s25, 1
      // Predicated region
      $region13: #{simple_encoder_forward.1} parent=11 // pred_check
        %p428 = pneg %p72
      $region14: #{simple_encoder_forward.1} parent=11 // pred_check_branch
        %430 = sbr.rel (%p428) target = $region16
      $region15: #{simple_encoder_forward.1} parent=11 // pred_region
        _
      $region16: #{simple_encoder_forward.1} parent=11 // pred_fallthru
        _
      // Predicated region
      $region17: #{simple_encoder_forward.1} parent=11 // pred_check
        %p431 = pneg %p93
      $region18: #{simple_encoder_forward.1} parent=11 // pred_check_branch
        %433 = sbr.rel (%p431) target = $region20
      $region19: #{simple_encoder_forward.1} parent=11 // pred_region
        _
      $region20: #{simple_encoder_forward.1} parent=11 // pred_fallthru
        _
      // Predicated region
      $region21: #{simple_encoder_forward.1} parent=11 // pred_check
        %p434 = pneg %p114
      $region22: #{simple_encoder_forward.1} parent=11 // pred_check_branch
        %436 = sbr.rel (%p434) target = $region24
      $region23: #{simple_encoder_forward.1} parent=11 // pred_region
        _
      $region24: #{simple_encoder_forward.1} parent=11 // pred_fallthru
        _
      // Predicated region
      $region25: #{simple_encoder_forward.1} parent=11 // pred_check
        %p437 = pneg %p135
      $region26: #{simple_encoder_forward.1} parent=11 // pred_check_branch
        %439 = sbr.rel (%p437) target = $region28
      $region27: #{simple_encoder_forward.1} parent=11 // pred_region
        _
      $region28: #{simple_encoder_forward.1} parent=11 // pred_fallthru
        _
      // Predicated region
      $region29: #{simple_encoder_forward.1} parent=11 // pred_check
        %p440 = pneg %p156
      $region30: #{simple_encoder_forward.1} parent=11 // pred_check_branch
        %442 = sbr.rel (%p440) target = $region32
      $region31: #{simple_encoder_forward.1} parent=11 // pred_region
        _
      $region32: #{simple_encoder_forward.1} parent=11 // pred_fallthru
        _
      // Predicated region
      $region33: #{simple_encoder_forward.1} parent=11 // pred_check
        %p443 = pneg %p177
      $region34: #{simple_encoder_forward.1} parent=11 // pred_check_branch
        %445 = sbr.rel (%p443) target = $region36
      $region35: #{simple_encoder_forward.1} parent=11 // pred_region
        _
      $region36: #{simple_encoder_forward.1} parent=11 // pred_fallthru
        _
      // Predicated region
      $region37: #{simple_encoder_forward.1} parent=11 // pred_check
        %p446 = pneg %p198
      $region38: #{simple_encoder_forward.1} parent=11 // pred_check_branch
        %448 = sbr.rel (%p446) target = $region40
      $region39: #{simple_encoder_forward.1} parent=11 // pred_region
        _
      $region40: #{simple_encoder_forward.1} parent=11 // pred_fallthru
        _
      // Predicated region
      $region41: #{simple_encoder_forward.1} parent=11 // pred_check
        %p449 = pneg %p219
      $region42: #{simple_encoder_forward.1} parent=11 // pred_check_branch
        %451 = sbr.rel (%p449) target = $region44
      $region43: #{simple_encoder_forward.1} parent=11 // pred_region
        _
      $region44: #{simple_encoder_forward.1} parent=11 // pred_fallthru
        _
      // Predicated region
      $region45: #{simple_encoder_forward.1} parent=11 // pred_check
        %p452 = pneg %p240
      $region46: #{simple_encoder_forward.1} parent=11 // pred_check_branch
        %454 = sbr.rel (%p452) target = $region48
      $region47: #{simple_encoder_forward.1} parent=11 // pred_region
        _
      $region48: #{simple_encoder_forward.1} parent=11 // pred_fallthru
        _
      // Predicated region
      $region49: #{simple_encoder_forward.1} parent=11 // pred_check
        %p455 = pneg %p261
      $region50: #{simple_encoder_forward.1} parent=11 // pred_check_branch
        %457 = sbr.rel (%p455) target = $region52
      $region51: #{simple_encoder_forward.1} parent=11 // pred_region
        _
      $region52: #{simple_encoder_forward.1} parent=11 // pred_fallthru
        _
      // Predicated region
      $region53: #{simple_encoder_forward.1} parent=11 // pred_check
        %p458 = pneg %p282
      $region54: #{simple_encoder_forward.1} parent=11 // pred_check_branch
        %460 = sbr.rel (%p458) target = $region56
      $region55: #{simple_encoder_forward.1} parent=11 // pred_region
        _
      $region56: #{simple_encoder_forward.1} parent=11 // pred_fallthru
        _
      // Predicated region
      $region57: #{simple_encoder_forward.1} parent=11 // pred_check
        %p461 = pneg %p303
      $region58: #{simple_encoder_forward.1} parent=11 // pred_check_branch
        %463 = sbr.rel (%p461) target = $region60
      $region59: #{simple_encoder_forward.1} parent=11 // pred_region
        _
      $region60: #{simple_encoder_forward.1} parent=11 // pred_fallthru
        _
      // Predicated region
      $region61: #{simple_encoder_forward.1} parent=11 // pred_check
        %p464 = pneg %p324
      $region62: #{simple_encoder_forward.1} parent=11 // pred_check_branch
        %466 = sbr.rel (%p464) target = $region64
      $region63: #{simple_encoder_forward.1} parent=11 // pred_region
        _
      $region64: #{simple_encoder_forward.1} parent=11 // pred_fallthru
        _
      // Predicated region
      $region65: #{simple_encoder_forward.1} parent=11 // pred_check
        %p467 = pneg %p345
      $region66: #{simple_encoder_forward.1} parent=11 // pred_check_branch
        %469 = sbr.rel (%p467) target = $region68
      $region67: #{simple_encoder_forward.1} parent=11 // pred_region
        _
      $region68: #{simple_encoder_forward.1} parent=11 // pred_fallthru
        _
      // Predicated region
      $region69: #{simple_encoder_forward.1} parent=11 // pred_check
        %p470 = pneg %p366
      $region70: #{simple_encoder_forward.1} parent=11 // pred_check_branch
        %472 = sbr.rel (%p470) target = $region72
      $region71: #{simple_encoder_forward.1} parent=11 // pred_region
        _
      $region72: #{simple_encoder_forward.1} parent=11 // pred_fallthru
        _
      // Predicated region
      $region73: #{simple_encoder_forward.1} parent=11 // pred_check
        %p473 = pneg %p387
      $region74: #{simple_encoder_forward.1} parent=11 // pred_check_branch
        %475 = sbr.rel (%p473) target = $region76
      $region75: #{simple_encoder_forward.1} parent=11 // pred_region
        _
      $region76: #{simple_encoder_forward.1} parent=11 // pred_fallthru
        _
    $region12: #{simple_encoder_forward.1} parent=5 // pred_fallthru
      _
    %p476 = scmp.lt.s32.totalorder %s25, 2
    // Predicated region
    $region77: #{simple_encoder_forward.1} parent=5 // pred_check
      %p477 = pneg %p476
    $region78: #{simple_encoder_forward.1} parent=5 // pred_check_branch
      %479 = sbr.rel (%p477) target = $region80
    $region79: #{simple_encoder_forward.1} parent=5 // pred_region
      // Predicated region
      $region81: #{simple_encoder_forward.1} parent=79 // pred_check
        %p480 = pneg %p45
      $region82: #{simple_encoder_forward.1} parent=79 // pred_check_branch
        %482 = sbr.rel (%p480) target = $region84
      $region83: #{simple_encoder_forward.1} parent=79 // pred_region
        %p483 = scmp.lt.s32.totalorder %s25, 1
        %s484 = scalar_select %p483, %s25, 1
        %s485 = smul.addr %s484, 48
        %s486 = smul.addr %s485, 8
        %s487 = scalar_lea.vmem %s0, %s486
      $region84: #{simple_encoder_forward.1} parent=79 // pred_fallthru
        _
    $region80: #{simple_encoder_forward.1} parent=5 // pred_fallthru
      _
    %p488 = scmp.le.s32.totalorder 1, %s25
    %p489 = scmp.lt.s32.totalorder %s25, 3
    %p490 = pnand %p488, %p489
    %p491 = pneg %p490
    // Predicated region
    $region85: #{simple_encoder_forward.1} parent=5 // pred_check
      _
    $region86: #{simple_encoder_forward.1} parent=5 // pred_check_branch
      %493 = sbr.rel (%p490) target = $region88
    $region87: #{simple_encoder_forward.1} parent=5 // pred_region
      %s494 = ssub.s32 %s25, 1
      %p495 = scmp.lt.s32.totalorder %s30, 1
      %s496 = scalar_select %p495, %s30, 1
      %s497 = smul.addr %s496, 48
      %s498 = smul.addr %s497, 8
      %s499 = scalar_lea.vmem %s0, %s498
      %p500 = pneg %p51
      %p501 = pneg %p48
      %p502 = pneg %p72
      %p503 = pneg %p69
      %p504 = pneg %p93
      %p505 = pneg %p90
      %p506 = pneg %p114
      %p507 = pneg %p111
      %p508 = pneg %p135
      %p509 = pneg %p132
      %p510 = pneg %p156
      %p511 = pneg %p153
      %p512 = pneg %p177
      %p513 = pneg %p174
      %p514 = pneg %p198
      %p515 = pneg %p195
      %p516 = pneg %p219
      %p517 = pneg %p216
      %p518 = pneg %p240
      %p519 = pneg %p237
      %p520 = pneg %p261
      %p521 = pneg %p258
      %p522 = pneg %p282
      %p523 = pneg %p279
      %p524 = pneg %p303
      %p525 = pneg %p300
      %p526 = pneg %p324
      %p527 = pneg %p321
      %p528 = pneg %p345
      %p529 = pneg %p342
      %p530 = pneg %p366
      %p531 = pneg %p363
      %p532 = pneg %p387
      %p533 = pneg %p384
      %p534 = pneg %p413
      %p535 = pneg %p410
      %p536 = scmp.lt.s32.totalorder %s30, 1
      %s537 = scalar_select %p536, %s30, 1
      %s538 = smul.addr %s537, 8
      %s539 = smul.addr %s538, 8
      %s540 = scalar_lea.vmem %s17, %s539
      %p541 = scmp.lt.s32.totalorder %s30, 1
      %s542 = scalar_select %p541, %s30, 1
      %s543 = smul.addr %s542, 48
      %s544 = smul.addr %s543, 8
      %s545 = scalar_lea.vmem %s0, %s544
      %p546 = scmp.lt.s32.totalorder %s30, 1
      %s547 = scalar_select %p546, %s30, 1
      %s548 = smul.addr %s547, 8
      %s549 = smul.addr %s548, 8
      %s550 = scalar_lea.vmem %s17, %s549
      %v551 = vld [vmem:[%s545] sm:$0xff]
      %v552 = vld [vmem:[%s545 + $0x8] sm:$0xff]
      %v553 = vld [vmem:[%s545 + $0x10] sm:$0xff]
      %v554 = vld [vmem:[%s545 + $0x18] sm:$0xff]
      %v555 = vld [vmem:[%s545 + $0x20] sm:$0xff]
      %v556 = vld [vmem:[%s545 + $0x28] sm:$0xff]
      %v557 = vld [vmem:[%s545 + $0x30] sm:$0xff]
      %v558 = vld [vmem:[%s545 + $0x38] sm:$0xff]
      %v559 = vld [vmem:[%s545 + $0x40] sm:$0xff]
      %v560 = vld [vmem:[%s545 + $0x48] sm:$0xff]
      %v561 = vld [vmem:[%s545 + $0x50] sm:$0xff]
      %v562 = vld [vmem:[%s545 + $0x58] sm:$0xff]
      %v563 = vld [vmem:[%s545 + $0x60] sm:$0xff]
      %v564 = vld [vmem:[%s545 + $0x68] sm:$0xff]
      %v565 = vld [vmem:[%s545 + $0x70] sm:$0xff]
      %v566 = vld [vmem:[%s545 + $0x78] sm:$0xff]
      %v567 = vld [vmem:[%s545 + $0x80] sm:$0xff]
      %v568 = vld [vmem:[%s545 + $0x88] sm:$0xff]
      %v569 = vld [vmem:[%s545 + $0x90] sm:$0xff]
      %v570 = vld [vmem:[%s545 + $0x98] sm:$0xff]
      %v571 = vld [vmem:[%s545 + $0xa0] sm:$0xff]
      %v572 = vld [vmem:[%s545 + $0xa8] sm:$0xff]
      %v573 = vld [vmem:[%s545 + $0xb0] sm:$0xff]
      %v574 = vld [vmem:[%s545 + $0xb8] sm:$0xff]
      %v575 = vld [vmem:[%s545 + $0xc0] sm:$0xff]
      %v576 = vld [vmem:[%s545 + $0xc8] sm:$0xff]
      %v577 = vld [vmem:[%s545 + $0xd0] sm:$0xff]
      %v578 = vld [vmem:[%s545 + $0xd8] sm:$0xff]
      %v579 = vld [vmem:[%s545 + $0xe0] sm:$0xff]
      %v580 = vld [vmem:[%s545 + $0xe8] sm:$0xff]
      %v581 = vld [vmem:[%s545 + $0xf0] sm:$0xff]
      %v582 = vld [vmem:[%s545 + $0xf8] sm:$0xff]
      %v583 = vld [vmem:[%s545 + $0x100] sm:$0xff]
      %v584 = vld [vmem:[%s545 + $0x108] sm:$0xff]
      %v585 = vld [vmem:[%s545 + $0x110] sm:$0xff]
      %v586 = vld [vmem:[%s545 + $0x118] sm:$0xff]
      %v587 = vld [vmem:[%s545 + $0x120] sm:$0xff]
      %v588 = vld [vmem:[%s545 + $0x128] sm:$0xff]
      %v589 = vld [vmem:[%s545 + $0x130] sm:$0xff]
      %v590 = vld [vmem:[%s545 + $0x138] sm:$0xff]
      %v591 = vld [vmem:[%s545 + $0x140] sm:$0xff]
      %v592 = vld [vmem:[%s545 + $0x148] sm:$0xff]
      %v593 = vld [vmem:[%s545 + $0x150] sm:$0xff]
      %v594 = vld [vmem:[%s545 + $0x158] sm:$0xff]
      %v595 = vld [vmem:[%s545 + $0x160] sm:$0xff]
      %v596 = vld [vmem:[%s545 + $0x168] sm:$0xff]
      %v597 = vld [vmem:[%s545 + $0x170] sm:$0xff]
      %v598 = vld [vmem:[%s545 + $0x178] sm:$0xff]
      %v599 = vld [vmem:[%s1] sm:$0xff]
      %v600 = vld [vmem:[%s1 + $0x8] sm:$0xff]
      %v601 = vld [vmem:[%s1 + $0x10] sm:$0xff]
      %v602 = vld [vmem:[%s1 + $0x18] sm:$0xff]
      %v603 = vld [vmem:[%s1 + $0x20] sm:$0xff]
      %v604 = vld [vmem:[%s1 + $0x28] sm:$0xff]
      %v605 = vld [vmem:[%s1 + $0x30] sm:$0xff]
      %v606 = vld [vmem:[%s1 + $0x38] sm:$0xff]
      %v607 = vld [vmem:[%s1 + $0x40] sm:$0xff]
      %v608 = vld [vmem:[%s1 + $0x48] sm:$0xff]
      %v609 = vld [vmem:[%s1 + $0x50] sm:$0xff]
      %v610 = vld [vmem:[%s1 + $0x58] sm:$0xff]
      %v611 = vld [vmem:[%s1 + $0x60] sm:$0xff]
      %v612 = vld [vmem:[%s1 + $0x68] sm:$0xff]
      %v613 = vld [vmem:[%s1 + $0x70] sm:$0xff]
      %v614 = vld [vmem:[%s1 + $0x78] sm:$0xff]
      %v615 = vld [vmem:[%s1 + $0x80] sm:$0xff]
      %v616 = vld [vmem:[%s1 + $0x88] sm:$0xff]
      %v617 = vld [vmem:[%s1 + $0x90] sm:$0xff]
      %v618 = vld [vmem:[%s1 + $0x98] sm:$0xff]
      %v619 = vld [vmem:[%s1 + $0xa0] sm:$0xff]
      %v620 = vld [vmem:[%s1 + $0xa8] sm:$0xff]
      %v621 = vld [vmem:[%s1 + $0xb0] sm:$0xff]
      %v622 = vld [vmem:[%s1 + $0xb8] sm:$0xff]
      %v623 = vld [vmem:[%s1 + $0xc0] sm:$0xff]
      %v624 = vld [vmem:[%s1 + $0xc8] sm:$0xff]
      %v625 = vld [vmem:[%s1 + $0xd0] sm:$0xff]
      %v626 = vld [vmem:[%s1 + $0xd8] sm:$0xff]
      %v627 = vld [vmem:[%s1 + $0xe0] sm:$0xff]
      %v628 = vld [vmem:[%s1 + $0xe8] sm:$0xff]
      %v629 = vld [vmem:[%s1 + $0xf0] sm:$0xff]
      %v630 = vld [vmem:[%s1 + $0xf8] sm:$0xff]
      %v631 = vld [vmem:[%s1 + $0x100] sm:$0xff]
      %v632 = vld [vmem:[%s1 + $0x108] sm:$0xff]
      %v633 = vld [vmem:[%s1 + $0x110] sm:$0xff]
      %v634 = vld [vmem:[%s1 + $0x118] sm:$0xff]
      %v635 = vld [vmem:[%s1 + $0x120] sm:$0xff]
      %v636 = vld [vmem:[%s1 + $0x128] sm:$0xff]
      %v637 = vld [vmem:[%s1 + $0x130] sm:$0xff]
      %v638 = vld [vmem:[%s1 + $0x138] sm:$0xff]
      %v639 = vld [vmem:[%s1 + $0x140] sm:$0xff]
      %v640 = vld [vmem:[%s1 + $0x148] sm:$0xff]
      %v641 = vld [vmem:[%s1 + $0x150] sm:$0xff]
      %v642 = vld [vmem:[%s1 + $0x158] sm:$0xff]
      %v643 = vld [vmem:[%s1 + $0x160] sm:$0xff]
      %v644 = vld [vmem:[%s1 + $0x168] sm:$0xff]
      %v645 = vld [vmem:[%s1 + $0x170] sm:$0xff]
      %v646 = vld [vmem:[%s1 + $0x178] sm:$0xff]
      %v647 = vld [vmem:[%s1 + $0x180] sm:$0xff]
      %v648 = vld [vmem:[%s1 + $0x188] sm:$0xff]
      %v649 = vld [vmem:[%s1 + $0x190] sm:$0xff]
      %v650 = vld [vmem:[%s1 + $0x198] sm:$0xff]
      %v651 = vld [vmem:[%s1 + $0x1a0] sm:$0xff]
      %v652 = vld [vmem:[%s1 + $0x1a8] sm:$0xff]
      %v653 = vld [vmem:[%s1 + $0x1b0] sm:$0xff]
      %v654 = vld [vmem:[%s1 + $0x1b8] sm:$0xff]
      %v655 = vld [vmem:[%s1 + $0x1c0] sm:$0xff]
      %v656 = vld [vmem:[%s1 + $0x1c8] sm:$0xff]
      %v657 = vld [vmem:[%s1 + $0x1d0] sm:$0xff]
      %v658 = vld [vmem:[%s1 + $0x1d8] sm:$0xff]
      %v659 = vld [vmem:[%s1 + $0x1e0] sm:$0xff]
      %v660 = vld [vmem:[%s1 + $0x1e8] sm:$0xff]
      %v661 = vld [vmem:[%s1 + $0x1f0] sm:$0xff]
      %v662 = vld [vmem:[%s1 + $0x1f8] sm:$0xff]
      %v663 = vld [vmem:[%s1 + $0x200] sm:$0xff]
      %v664 = vld [vmem:[%s1 + $0x208] sm:$0xff]
      %v665 = vld [vmem:[%s1 + $0x210] sm:$0xff]
      %v666 = vld [vmem:[%s1 + $0x218] sm:$0xff]
      %v667 = vld [vmem:[%s1 + $0x220] sm:$0xff]
      %v668 = vld [vmem:[%s1 + $0x228] sm:$0xff]
      %v669 = vld [vmem:[%s1 + $0x230] sm:$0xff]
      %v670 = vld [vmem:[%s1 + $0x238] sm:$0xff]
      %v671 = vld [vmem:[%s1 + $0x240] sm:$0xff]
      %v672 = vld [vmem:[%s1 + $0x248] sm:$0xff]
      %v673 = vld [vmem:[%s1 + $0x250] sm:$0xff]
      %v674 = vld [vmem:[%s1 + $0x258] sm:$0xff]
      %v675 = vld [vmem:[%s1 + $0x260] sm:$0xff]
      %v676 = vld [vmem:[%s1 + $0x268] sm:$0xff]
      %v677 = vld [vmem:[%s1 + $0x270] sm:$0xff]
      %v678 = vld [vmem:[%s1 + $0x278] sm:$0xff]
      %v679 = vld [vmem:[%s1 + $0x280] sm:$0xff]
      %v680 = vld [vmem:[%s1 + $0x288] sm:$0xff]
      %v681 = vld [vmem:[%s1 + $0x290] sm:$0xff]
      %v682 = vld [vmem:[%s1 + $0x298] sm:$0xff]
      %v683 = vld [vmem:[%s1 + $0x2a0] sm:$0xff]
      %v684 = vld [vmem:[%s1 + $0x2a8] sm:$0xff]
      %v685 = vld [vmem:[%s1 + $0x2b0] sm:$0xff]
      %v686 = vld [vmem:[%s1 + $0x2b8] sm:$0xff]
      %v687 = vld [vmem:[%s1 + $0x2c0] sm:$0xff]
      %v688 = vld [vmem:[%s1 + $0x2c8] sm:$0xff]
      %v689 = vld [vmem:[%s1 + $0x2d0] sm:$0xff]
      %v690 = vld [vmem:[%s1 + $0x2d8] sm:$0xff]
      %v691 = vld [vmem:[%s1 + $0x2e0] sm:$0xff]
      %v692 = vld [vmem:[%s1 + $0x2e8] sm:$0xff]
      %v693 = vld [vmem:[%s1 + $0x2f0] sm:$0xff]
      %v694 = vld [vmem:[%s1 + $0x2f8] sm:$0xff]
      %695 = vmatprep.subr.mxu0 0.0
      %696 = vmatpush1.msra.mxu0 %v599
      %697 = vmatprep.subr.mxu0 0.0
      %698 = vmatpush1.msra.mxu0 %v600
      %699 = vmatprep.subr.mxu0 0.0
      %700 = vmatpush1.msra.mxu0 %v601
      %701 = vmatprep.subr.mxu0 0.0
      %702 = vmatpush1.msra.mxu0 %v602
      %703 = vmatprep.subr.mxu0 0.0
      %704 = vmatpush1.msra.mxu0 %v603
      %705 = vmatprep.subr.mxu0 0.0
      %706 = vmatpush1.msra.mxu0 %v604
      %707 = vmatprep.subr.mxu0 0.0
      %708 = vmatpush1.msra.mxu0 %v605
      %709 = vmatprep.subr.mxu0 0.0
      %710 = vmatpush1.msra.mxu0 %v606
      %711 = vmatprep.subr.mxu0 0.0
      %712 = vmatpush1.msra.mxu0 %v607
      %713 = vmatprep.subr.mxu0 0.0
      %714 = vmatpush1.msra.mxu0 %v608
      %715 = vmatprep.subr.mxu0 0.0
      %716 = vmatpush1.msra.mxu0 %v609
      %717 = vmatprep.subr.mxu0 0.0
      %718 = vmatpush1.msra.mxu0 %v610
      %719 = vmatprep.subr.mxu0 0.0
      %720 = vmatpush1.msra.mxu0 %v611
      %721 = vmatprep.subr.mxu0 0.0
      %722 = vmatpush1.msra.mxu0 %v612
      %723 = vmatprep.subr.mxu0 0.0
      %724 = vmatpush1.msra.mxu0 %v613
      %725 = vmatprep.subr.mxu0 0.0
      %726 = vmatpush1.msra.mxu0 %v614
      %727 = vmatprep.subr.mxu0 0.0
      %728 = vmatpush1.msra.mxu0 %v615
      %729 = vmatprep.subr.mxu0 0.0
      %730 = vmatpush1.msra.mxu0 %v616
      %731 = vmatprep.subr.mxu0 0.0
      %732 = vmatpush1.msra.mxu0 %v617
      %733 = vmatprep.subr.mxu0 0.0
      %734 = vmatpush1.msra.mxu0 %v618
      %735 = vmatprep.subr.mxu0 0.0
      %736 = vmatpush1.msra.mxu0 %v619
      %737 = vmatprep.subr.mxu0 0.0
      %738 = vmatpush1.msra.mxu0 %v620
      %739 = vmatprep.subr.mxu0 0.0
      %740 = vmatpush1.msra.mxu0 %v621
      %741 = vmatprep.subr.mxu0 0.0
      %742 = vmatpush1.msra.mxu0 %v622
      %743 = vmatprep.subr.mxu0 0.0
      %744 = vmatpush1.msra.mxu0 %v623
      %745 = vmatprep.subr.mxu0 0.0
      %746 = vmatpush1.msra.mxu0 %v624
      %747 = vmatprep.subr.mxu0 0.0
      %748 = vmatpush1.msra.mxu0 %v625
      %749 = vmatprep.subr.mxu0 0.0
      %750 = vmatpush1.msra.mxu0 %v626
      %751 = vmatprep.subr.mxu0 0.0
      %752 = vmatpush1.msra.mxu0 %v627
      %753 = vmatprep.subr.mxu0 0.0
      %754 = vmatpush1.msra.mxu0 %v628
      %755 = vmatprep.subr.mxu0 0.0
      %756 = vmatpush1.msra.mxu0 %v629
      %757 = vmatprep.subr.mxu0 0.0
      %758 = vmatpush1.msra.mxu0 %v630
      %759 = vmatprep.mubr.f32.mxu0 %v552
      %760 = vmatmul.mubr.f32.gmra.mrb[0].mxu0 %v551
      %v761 = vpop.f32.mrb[0].mxu0
      %v762 = vadd.f32 0.0, %v761
      %v763 = vpop.f32.mrb[0].mxu0
      %764 = vmatprep.mubr.f32.mxu0 %v558
      %765 = vmatmul.mubr.f32.gmra.mrb[0].mxu0 %v557
      %v766 = vpop.f32.mrb[0].mxu0
      %v767 = vadd.f32 0.0, %v766
      %v768 = vpop.f32.mrb[0].mxu0
      %769 = vmatprep.mubr.f32.mxu0 %v564
      %770 = vmatmul.mubr.f32.gmra.mrb[0].mxu0 %v563
      %v771 = vpop.f32.mrb[0].mxu0
      %v772 = vadd.f32 0.0, %v771
      %v773 = vpop.f32.mrb[0].mxu0
      %774 = vmatprep.mubr.f32.mxu0 %v570
      %775 = vmatmul.mubr.f32.gmra.mrb[0].mxu0 %v569
      %v776 = vpop.f32.mrb[0].mxu0
      %v777 = vadd.f32 0.0, %v776
      %v778 = vpop.f32.mrb[0].mxu0
      %779 = vmatprep.mubr.f32.mxu0 %v576
      %780 = vmatmul.mubr.f32.gmra.mrb[0].mxu0 %v575
      %v781 = vpop.f32.mrb[0].mxu0
      %v782 = vadd.f32 0.0, %v781
      %v783 = vpop.f32.mrb[0].mxu0
      %784 = vmatprep.mubr.f32.mxu0 %v582
      %785 = vmatmul.mubr.f32.gmra.mrb[0].mxu0 %v581
      %v786 = vpop.f32.mrb[0].mxu0
      %v787 = vadd.f32 0.0, %v786
      %v788 = vpop.f32.mrb[0].mxu0
      %789 = vmatprep.mubr.f32.mxu0 %v588
      %790 = vmatmul.mubr.f32.gmra.mrb[0].mxu0 %v587
      %v791 = vpop.f32.mrb[0].mxu0
      %v792 = vadd.f32 0.0, %v791
      %v793 = vpop.f32.mrb[0].mxu0
      %794 = vmatprep.mubr.f32.mxu0 %v594
      %795 = vmatmul.mubr.f32.gmra.mrb[0].mxu0 %v593
      %v796 = vpop.f32.mrb[0].mxu0
      %v797 = vadd.f32 0.0, %v796
      %v798 = vpop.f32.mrb[0].mxu0
      %799 = vdwg.mxu0
      %800 = vmatprep.subr.mxu0 0.0
      %801 = vmatpush1.msra.mxu0 %v631
      %802 = vmatprep.subr.mxu0 0.0
      %803 = vmatpush1.msra.mxu0 %v632
      %804 = vmatprep.subr.mxu0 0.0
      %805 = vmatpush1.msra.mxu0 %v633
      %806 = vmatprep.subr.mxu0 0.0
      %807 = vmatpush1.msra.mxu0 %v634
      %808 = vmatprep.subr.mxu0 0.0
      %809 = vmatpush1.msra.mxu0 %v635
      %810 = vmatprep.subr.mxu0 0.0
      %811 = vmatpush1.msra.mxu0 %v636
      %812 = vmatprep.subr.mxu0 0.0
      %813 = vmatpush1.msra.mxu0 %v637
      %814 = vmatprep.subr.mxu0 0.0
      %815 = vmatpush1.msra.mxu0 %v638
      %816 = vmatprep.subr.mxu0 0.0
      %817 = vmatpush1.msra.mxu0 %v639
      %818 = vmatprep.subr.mxu0 0.0
      %819 = vmatpush1.msra.mxu0 %v640
      %820 = vmatprep.subr.mxu0 0.0
      %821 = vmatpush1.msra.mxu0 %v641
      %822 = vmatprep.subr.mxu0 0.0
      %823 = vmatpush1.msra.mxu0 %v642
      %824 = vmatprep.subr.mxu0 0.0
      %825 = vmatpush1.msra.mxu0 %v643
      %826 = vmatprep.subr.mxu0 0.0
      %827 = vmatpush1.msra.mxu0 %v644
      %828 = vmatprep.subr.mxu0 0.0
      %829 = vmatpush1.msra.mxu0 %v645
      %830 = vmatprep.subr.mxu0 0.0
      %831 = vmatpush1.msra.mxu0 %v646
      %832 = vmatprep.subr.mxu0 0.0
      %833 = vmatpush1.msra.mxu0 %v647
      %834 = vmatprep.subr.mxu0 0.0
      %835 = vmatpush1.msra.mxu0 %v648
      %836 = vmatprep.subr.mxu0 0.0
      %837 = vmatpush1.msra.mxu0 %v649
      %838 = vmatprep.subr.mxu0 0.0
      %839 = vmatpush1.msra.mxu0 %v650
      %840 = vmatprep.subr.mxu0 0.0
      %841 = vmatpush1.msra.mxu0 %v651
      %842 = vmatprep.subr.mxu0 0.0
      %843 = vmatpush1.msra.mxu0 %v652
      %844 = vmatprep.subr.mxu0 0.0
      %845 = vmatpush1.msra.mxu0 %v653
      %846 = vmatprep.subr.mxu0 0.0
      %847 = vmatpush1.msra.mxu0 %v654
      %848 = vmatprep.subr.mxu0 0.0
      %849 = vmatpush1.msra.mxu0 %v655
      %850 = vmatprep.subr.mxu0 0.0
      %851 = vmatpush1.msra.mxu0 %v656
      %852 = vmatprep.subr.mxu0 0.0
      %853 = vmatpush1.msra.mxu0 %v657
      %854 = vmatprep.subr.mxu0 0.0
      %855 = vmatpush1.msra.mxu0 %v658
      %856 = vmatprep.subr.mxu0 0.0
      %857 = vmatpush1.msra.mxu0 %v659
      %858 = vmatprep.subr.mxu0 0.0
      %859 = vmatpush1.msra.mxu0 %v660
      %860 = vmatprep.subr.mxu0 0.0
      %861 = vmatpush1.msra.mxu0 %v661
      %862 = vmatprep.subr.mxu0 0.0
      %863 = vmatpush1.msra.mxu0 %v662
      %864 = vmatprep.mubr.f32.mxu0 %v554
      %865 = vmatmul.mubr.f32.gmra.mrb[0].mxu0 %v553
      %v866 = vpop.f32.mrb[0].mxu0
      %v867 = vadd.f32 %v762, %v866
      %v868 = vpop.f32.mrb[0].mxu0
      %869 = vmatprep.mubr.f32.mxu0 %v560
      %870 = vmatmul.mubr.f32.gmra.mrb[0].mxu0 %v559
      %v871 = vpop.f32.mrb[0].mxu0
      %v872 = vadd.f32 %v767, %v871
      %v873 = vpop.f32.mrb[0].mxu0
      %874 = vmatprep.mubr.f32.mxu0 %v566
      %875 = vmatmul.mubr.f32.gmra.mrb[0].mxu0 %v565
      %v876 = vpop.f32.mrb[0].mxu0
      %v877 = vadd.f32 %v772, %v876
      %v878 = vpop.f32.mrb[0].mxu0
      %879 = vmatprep.mubr.f32.mxu0 %v572
      %880 = vmatmul.mubr.f32.gmra.mrb[0].mxu0 %v571
      %v881 = vpop.f32.mrb[0].mxu0
      %v882 = vadd.f32 %v777, %v881
      %v883 = vpop.f32.mrb[0].mxu0
      %884 = vmatprep.mubr.f32.mxu0 %v578
      %885 = vmatmul.mubr.f32.gmra.mrb[0].mxu0 %v577
      %v886 = vpop.f32.mrb[0].mxu0
      %v887 = vadd.f32 %v782, %v886
      %v888 = vpop.f32.mrb[0].mxu0
      %889 = vmatprep.mubr.f32.mxu0 %v584
      %890 = vmatmul.mubr.f32.gmra.mrb[0].mxu0 %v583
      %v891 = vpop.f32.mrb[0].mxu0
      %v892 = vadd.f32 %v787, %v891
      %v893 = vpop.f32.mrb[0].mxu0
      %894 = vmatprep.mubr.f32.mxu0 %v590
      %895 = vmatmul.mubr.f32.gmra.mrb[0].mxu0 %v589
      %v896 = vpop.f32.mrb[0].mxu0
      %v897 = vadd.f32 %v792, %v896
      %v898 = vpop.f32.mrb[0].mxu0
      %899 = vmatprep.mubr.f32.mxu0 %v596
      %900 = vmatmul.mubr.f32.gmra.mrb[0].mxu0 %v595
      %v901 = vpop.f32.mrb[0].mxu0
      %v902 = vadd.f32 %v797, %v901
      %v903 = vpop.f32.mrb[0].mxu0
      %904 = vdwg.mxu0
      %905 = vmatprep.subr.mxu0 0.0
      %906 = vmatpush1.msra.mxu0 %v663
      %907 = vmatprep.subr.mxu0 0.0
      %908 = vmatpush1.msra.mxu0 %v664
      %909 = vmatprep.subr.mxu0 0.0
      %910 = vmatpush1.msra.mxu0 %v665
      %911 = vmatprep.subr.mxu0 0.0
      %912 = vmatpush1.msra.mxu0 %v666
      %913 = vmatprep.subr.mxu0 0.0
      %914 = vmatpush1.msra.mxu0 %v667
      %915 = vmatprep.subr.mxu0 0.0
      %916 = vmatpush1.msra.mxu0 %v668
      %917 = vmatprep.subr.mxu0 0.0
      %918 = vmatpush1.msra.mxu0 %v669
      %919 = vmatprep.subr.mxu0 0.0
      %920 = vmatpush1.msra.mxu0 %v670
      %921 = vmatprep.subr.mxu0 0.0
      %922 = vmatpush1.msra.mxu0 %v671
      %923 = vmatprep.subr.mxu0 0.0
      %924 = vmatpush1.msra.mxu0 %v672
      %925 = vmatprep.subr.mxu0 0.0
      %926 = vmatpush1.msra.mxu0 %v673
      %927 = vmatprep.subr.mxu0 0.0
      %928 = vmatpush1.msra.mxu0 %v674
      %929 = vmatprep.subr.mxu0 0.0
      %930 = vmatpush1.msra.mxu0 %v675
      %931 = vmatprep.subr.mxu0 0.0
      %932 = vmatpush1.msra.mxu0 %v676
      %933 = vmatprep.subr.mxu0 0.0
      %934 = vmatpush1.msra.mxu0 %v677
      %935 = vmatprep.subr.mxu0 0.0
      %936 = vmatpush1.msra.mxu0 %v678
      %937 = vmatprep.subr.mxu0 0.0
      %938 = vmatpush1.msra.mxu0 %v679
      %939 = vmatprep.subr.mxu0 0.0
      %940 = vmatpush1.msra.mxu0 %v680
      %941 = vmatprep.subr.mxu0 0.0
      %942 = vmatpush1.msra.mxu0 %v681
      %943 = vmatprep.subr.mxu0 0.0
      %944 = vmatpush1.msra.mxu0 %v682
      %945 = vmatprep.subr.mxu0 0.0
      %946 = vmatpush1.msra.mxu0 %v683
      %947 = vmatprep.subr.mxu0 0.0
      %948 = vmatpush1.msra.mxu0 %v684
      %949 = vmatprep.subr.mxu0 0.0
      %950 = vmatpush1.msra.mxu0 %v685
      %951 = vmatprep.subr.mxu0 0.0
      %952 = vmatpush1.msra.mxu0 %v686
      %953 = vmatprep.subr.mxu0 0.0
      %954 = vmatpush1.msra.mxu0 %v687
      %955 = vmatprep.subr.mxu0 0.0
      %956 = vmatpush1.msra.mxu0 %v688
      %957 = vmatprep.subr.mxu0 0.0
      %958 = vmatpush1.msra.mxu0 %v689
      %959 = vmatprep.subr.mxu0 0.0
      %960 = vmatpush1.msra.mxu0 %v690
      %961 = vmatprep.subr.mxu0 0.0
      %962 = vmatpush1.msra.mxu0 %v691
      %963 = vmatprep.subr.mxu0 0.0
      %964 = vmatpush1.msra.mxu0 %v692
      %965 = vmatprep.subr.mxu0 0.0
      %966 = vmatpush1.msra.mxu0 %v693
      %967 = vmatprep.subr.mxu0 0.0
      %968 = vmatpush1.msra.mxu0 %v694
      %969 = vmatprep.mubr.f32.mxu0 %v556
      %970 = vmatmul.mubr.f32.gmra.mrb[0].mxu0 %v555
      %v971 = vpop.f32.mrb[0].mxu0
      %v972 = vadd.f32 %v867, %v971
      %v973 = vpop.f32.mrb[0].mxu0
      %974 = vmatprep.mubr.f32.mxu0 %v562
      %975 = vmatmul.mubr.f32.gmra.mrb[0].mxu0 %v561
      %v976 = vpop.f32.mrb[0].mxu0
      %v977 = vadd.f32 %v872, %v976
      %v978 = vpop.f32.mrb[0].mxu0
      %979 = vmatprep.mubr.f32.mxu0 %v568
      %980 = vmatmul.mubr.f32.gmra.mrb[0].mxu0 %v567
      %v981 = vpop.f32.mrb[0].mxu0
      %v982 = vadd.f32 %v877, %v981
      %v983 = vpop.f32.mrb[0].mxu0
      %984 = vmatprep.mubr.f32.mxu0 %v574
      %985 = vmatmul.mubr.f32.gmra.mrb[0].mxu0 %v573
      %v986 = vpop.f32.mrb[0].mxu0
      %v987 = vadd.f32 %v882, %v986
      %v988 = vpop.f32.mrb[0].mxu0
      %989 = vmatprep.mubr.f32.mxu0 %v580
      %990 = vmatmul.mubr.f32.gmra.mrb[0].mxu0 %v579
      %v991 = vpop.f32.mrb[0].mxu0
      %v992 = vadd.f32 %v887, %v991
      %v993 = vpop.f32.mrb[0].mxu0
      %994 = vmatprep.mubr.f32.mxu0 %v586
      %995 = vmatmul.mubr.f32.gmra.mrb[0].mxu0 %v585
      %v996 = vpop.f32.mrb[0].mxu0
      %v997 = vadd.f32 %v892, %v996
      %v998 = vpop.f32.mrb[0].mxu0
      %999 = vmatprep.mubr.f32.mxu0 %v592
      %1000 = vmatmul.mubr.f32.gmra.mrb[0].mxu0 %v591
      %v1001 = vpop.f32.mrb[0].mxu0
      %v1002 = vadd.f32 %v897, %v1001
      %v1003 = vpop.f32.mrb[0].mxu0
      %1004 = vmatprep.mubr.f32.mxu0 %v598
      %1005 = vmatmul.mubr.f32.gmra.mrb[0].mxu0 %v597
      %v1006 = vpop.f32.mrb[0].mxu0
      %v1007 = vadd.f32 %v902, %v1006
      %v1008 = vpop.f32.mrb[0].mxu0
      %1009 = vdwg.mxu0
      %v1010 = vld [vmem:[%s2] sm:$0xff]
      %v1011 = vld [vmem:[%s2 + $0x8] sm:$0xff]
      %v1012 = vld [vmem:[%s2 + $0x10] sm:$0xff]
      %v1013 = vld [vmem:[%s2 + $0x18] sm:$0xff]
      %v1014 = vld [vmem:[%s3] sm:$0x1]
      %v1016 = vlaneseq
      %v1017 = vshrl.u32 %v1016, 7
      %v1018 = vsub.s32 0, %v1017
      %v1019 = vrot.slane %v1014, %v1018
      %vm1021 = vcmask 261120
      %v1023 = vsel %vm1021, %v972, 0
      %v1026 = vsel %vm1021, %v977, 0
      %v1029 = vsel %vm1021, %v982, 0
      %v1032 = vsel %vm1021, %v987, 0
      %v1035 = vsel %vm1021, %v992, 0
      %v1038 = vsel %vm1021, %v997, 0
      %v1041 = vsel %vm1021, %v1002, 0
      %v1044 = vsel %vm1021, %v1007, 0
      %1046 = vmatprep.subr.mxu0 0.0
      %1047 = vmatpush1.msra.mxu0 %v1010
      %1048 = vmatprep.subr.mxu0 0.0
      %1049 = vmatpush1.msra.mxu0 %v1011
      %1050 = vmatprep.subr.mxu0 0.0
      %1051 = vmatpush1.msra.mxu0 %v1012
      %1052 = vmatprep.subr.mxu0 0.0
      %1053 = vmatpush1.msra.mxu0 %v1013
      %1054 = vmatprep.subr.mxu0 0.0
      %1055 = vmatpush1.msra.mxu0 0.0
      %1056 = vmatprep.subr.mxu0 0.0
      %1057 = vmatpush1.msra.mxu0 0.0
      %1058 = vmatprep.subr.mxu0 0.0
      %1059 = vmatpush1.msra.mxu0 0.0
      %1060 = vmatprep.subr.mxu0 0.0
      %1061 = vmatpush1.msra.mxu0 0.0
      %1062 = vmatprep.subr.mxu0 0.0
      %1063 = vmatpush1.msra.mxu0 0.0
      %1064 = vmatprep.subr.mxu0 0.0
      %1065 = vmatpush1.msra.mxu0 0.0
      %1066 = vmatprep.subr.mxu0 0.0
      %1067 = vmatpush1.msra.mxu0 0.0
      %1068 = vmatprep.subr.mxu0 0.0
      %1069 = vmatpush1.msra.mxu0 0.0
      %1070 = vmatprep.subr.mxu0 0.0
      %1071 = vmatpush1.msra.mxu0 0.0
      %1072 = vmatprep.subr.mxu0 0.0
      %1073 = vmatpush1.msra.mxu0 0.0
      %1074 = vmatprep.subr.mxu0 0.0
      %1075 = vmatpush1.msra.mxu0 0.0
      %1076 = vmatprep.subr.mxu0 0.0
      %1077 = vmatpush1.msra.mxu0 0.0
      %1078 = vmatprep.subr.mxu0 0.0
      %1079 = vmatpush1.msra.mxu0 0.0
      %1080 = vmatprep.subr.mxu0 0.0
      %1081 = vmatpush1.msra.mxu0 0.0
      %1082 = vmatprep.subr.mxu0 0.0
      %1083 = vmatpush1.msra.mxu0 0.0
      %1084 = vmatprep.subr.mxu0 0.0
      %1085 = vmatpush1.msra.mxu0 0.0
      %1086 = vmatprep.subr.mxu0 0.0
      %1087 = vmatpush1.msra.mxu0 0.0
      %1088 = vmatprep.subr.mxu0 0.0
      %1089 = vmatpush1.msra.mxu0 0.0
      %1090 = vmatprep.subr.mxu0 0.0
      %1091 = vmatpush1.msra.mxu0 0.0
      %1092 = vmatprep.subr.mxu0 0.0
      %1093 = vmatpush1.msra.mxu0 0.0
      %1094 = vmatprep.subr.mxu0 0.0
      %1095 = vmatpush1.msra.mxu0 0.0
      %1096 = vmatprep.subr.mxu0 0.0
      %1097 = vmatpush1.msra.mxu0 0.0
      %1098 = vmatprep.subr.mxu0 0.0
      %1099 = vmatpush1.msra.mxu0 0.0
      %1100 = vmatprep.subr.mxu0 0.0
      %1101 = vmatpush1.msra.mxu0 0.0
      %1102 = vmatprep.subr.mxu0 0.0
      %1103 = vmatpush1.msra.mxu0 0.0
      %1104 = vmatprep.subr.mxu0 0.0
      %1105 = vmatpush1.msra.mxu0 0.0
      %1106 = vmatprep.subr.mxu0 0.0
      %1107 = vmatpush1.msra.mxu0 0.0
      %1108 = vmatprep.subr.mxu0 0.0
      %1109 = vmatpush1.msra.mxu0 0.0
      %1110 = vmatprep.mubr.f32.mxu0 0.0
      %1111 = vmatmul.mubr.f32.gmra.mrb[0].mxu0 %v1023
      %v1112 = vpop.f32.mrb[0].mxu0
      %v1113 = vadd.f32 %v1019, %v1112
      %v1114 = vpop.f32.mrb[0].mxu0
      %1115 = vmatprep.mubr.f32.mxu0 0.0
      %1116 = vmatmul.mubr.f32.gmra.mrb[0].mxu0 %v1026
      %v1117 = vpop.f32.mrb[0].mxu0
      %v1118 = vadd.f32 %v1019, %v1117
      %v1119 = vpop.f32.mrb[0].mxu0
      %1120 = vmatprep.mubr.f32.mxu0 0.0
      %1121 = vmatmul.mubr.f32.gmra.mrb[0].mxu0 %v1029
      %v1122 = vpop.f32.mrb[0].mxu0
      %v1123 = vadd.f32 %v1019, %v1122
      %v1124 = vpop.f32.mrb[0].mxu0
      %1125 = vmatprep.mubr.f32.mxu0 0.0
      %1126 = vmatmul.mubr.f32.gmra.mrb[0].mxu0 %v1032
      %v1127 = vpop.f32.mrb[0].mxu0
      %v1128 = vadd.f32 %v1019, %v1127
      %v1129 = vpop.f32.mrb[0].mxu0
      %1130 = vmatprep.mubr.f32.mxu0 0.0
      %1131 = vmatmul.mubr.f32.gmra.mrb[0].mxu0 %v1035
      %v1132 = vpop.f32.mrb[0].mxu0
      %v1133 = vadd.f32 %v1019, %v1132
      %v1134 = vpop.f32.mrb[0].mxu0
      %1135 = vmatprep.mubr.f32.mxu0 0.0
      %1136 = vmatmul.mubr.f32.gmra.mrb[0].mxu0 %v1038
      %v1137 = vpop.f32.mrb[0].mxu0
      %v1138 = vadd.f32 %v1019, %v1137
      %v1139 = vpop.f32.mrb[0].mxu0
      %1140 = vmatprep.mubr.f32.mxu0 0.0
      %1141 = vmatmul.mubr.f32.gmra.mrb[0].mxu0 %v1041
      %v1142 = vpop.f32.mrb[0].mxu0
      %v1143 = vadd.f32 %v1019, %v1142
      %v1144 = vpop.f32.mrb[0].mxu0
      %1145 = vmatprep.mubr.f32.mxu0 0.0
      %1146 = vmatmul.mubr.f32.gmra.mrb[0].mxu0 %v1044
      %v1147 = vpop.f32.mrb[0].mxu0
      %v1148 = vadd.f32 %v1019, %v1147
      %v1149 = vpop.f32.mrb[0].mxu0
      %1150 = vdwg.mxu0
      %v1151 = vmul.f32 %v1113, 0.5
      %v1152 = vmul.f32 %v1118, 0.5
      %v1153 = vmul.f32 %v1123, 0.5
      %v1154 = vmul.f32 %v1128, 0.5
      %v1155 = vmul.f32 %v1133, 0.5
      %v1156 = vmul.f32 %v1138, 0.5
      %v1157 = vmul.f32 %v1143, 0.5
      %v1158 = vmul.f32 %v1148, 0.5
      %1167 = vrot.lane.b32.xlu0 %v1113, 96
      %v1168 = vpop.permute.xlu0 %1167
      %1169 = vrot.lane.b32.xlu0 %v1118, 96
      %v1170 = vpop.permute.xlu0 %1169
      %1171 = vrot.lane.b32.xlu0 %v1123, 96
      %v1172 = vpop.permute.xlu0 %1171
      %1173 = vrot.lane.b32.xlu0 %v1128, 96
      %v1174 = vpop.permute.xlu0 %1173
      %1175 = vrot.lane.b32.xlu0 %v1133, 96
      %v1176 = vpop.permute.xlu0 %1175
      %1177 = vrot.lane.b32.xlu0 %v1138, 96
      %v1178 = vpop.permute.xlu0 %1177
      %1179 = vrot.lane.b32.xlu0 %v1143, 96
      %v1180 = vpop.permute.xlu0 %1179
      %1181 = vrot.lane.b32.xlu0 %v1148, 96
      %v1182 = vpop.permute.xlu0 %1181
      %vm1183 = vcmask 31744
      %v1185 = vsel %vm1183, %v1151, 0
      %v1188 = vsel %vm1183, %v1152, 0
      %v1191 = vsel %vm1183, %v1153, 0
      %v1194 = vsel %vm1183, %v1154, 0
      %v1197 = vsel %vm1183, %v1155, 0
      %v1200 = vsel %vm1183, %v1156, 0
      %v1203 = vsel %vm1183, %v1157, 0
      %v1206 = vsel %vm1183, %v1158, 0
      %v1208 = vsel %vm1183, %v1168, 0
      %v1210 = vsel %vm1183, %v1170, 0
      %v1212 = vsel %vm1183, %v1172, 0
      %v1214 = vsel %vm1183, %v1174, 0
      %v1216 = vsel %vm1183, %v1176, 0
      %v1218 = vsel %vm1183, %v1178, 0
      %v1220 = vsel %vm1183, %v1180, 0
      %v1222 = vsel %vm1183, %v1182, 0
      %1224 = vmatprep.subr.mxu0 0.0
      %1225 = vmatpush1.xpose.msra.mxu0 %v1208
      %1226 = vmatprep.subr.mxu0 0.0
      %1227 = vmatpush1.xpose.msra.mxu0 %v1210
      %1228 = vmatprep.subr.mxu0 0.0
      %1229 = vmatpush1.xpose.msra.mxu0 %v1212
      %1230 = vmatprep.subr.mxu0 0.0
      %1231 = vmatpush1.xpose.msra.mxu0 %v1214
      %1232 = vmatprep.subr.mxu0 0.0
      %1233 = vmatpush1.xpose.msra.mxu0 %v1216
      %1234 = vmatprep.subr.mxu0 0.0
      %1235 = vmatpush1.xpose.msra.mxu0 %v1218
      %1236 = vmatprep.subr.mxu0 0.0
      %1237 = vmatpush1.xpose.msra.mxu0 %v1220
      %1238 = vmatprep.subr.mxu0 0.0
      %1239 = vmatpush1.xpose.msra.mxu0 %v1222
      %1240 = vmatprep.subr.mxu0 0.0
      %1241 = vmatpush1.xpose.msra.mxu0 0.0
      %1242 = vmatprep.subr.mxu0 0.0
      %1243 = vmatpush1.xpose.msra.mxu0 0.0
      %1244 = vmatprep.subr.mxu0 0.0
      %1245 = vmatpush1.xpose.msra.mxu0 0.0
      %1246 = vmatprep.subr.mxu0 0.0
      %1247 = vmatpush1.xpose.msra.mxu0 0.0
      %1248 = vmatprep.subr.mxu0 0.0
      %1249 = vmatpush1.xpose.msra.mxu0 0.0
      %1250 = vmatprep.subr.mxu0 0.0
      %1251 = vmatpush1.xpose.msra.mxu0 0.0
      %1252 = vmatprep.subr.mxu0 0.0
      %1253 = vmatpush1.xpose.msra.mxu0 0.0
      %1254 = vmatprep.subr.mxu0 0.0
      %1255 = vmatpush1.xpose.msra.mxu0 0.0
      %1256 = vmatprep.subr.mxu0 0.0
      %1257 = vmatpush1.xpose.msra.mxu0 0.0
      %1258 = vmatprep.subr.mxu0 0.0
      %1259 = vmatpush1.xpose.msra.mxu0 0.0
      %1260 = vmatprep.subr.mxu0 0.0
      %1261 = vmatpush1.xpose.msra.mxu0 0.0
      %1262 = vmatprep.subr.mxu0 0.0
      %1263 = vmatpush1.xpose.msra.mxu0 0.0
      %1264 = vmatprep.subr.mxu0 0.0
      %1265 = vmatpush1.xpose.msra.mxu0 0.0
      %1266 = vmatprep.subr.mxu0 0.0
      %1267 = vmatpush1.xpose.msra.mxu0 0.0
      %1268 = vmatprep.subr.mxu0 0.0
      %1269 = vmatpush1.xpose.msra.mxu0 0.0
      %1270 = vmatprep.subr.mxu0 0.0
      %1271 = vmatpush1.xpose.msra.mxu0 0.0
      %1272 = vmatprep.subr.mxu0 0.0
      %1273 = vmatpush1.xpose.msra.mxu0 0.0
      %1274 = vmatprep.subr.mxu0 0.0
      %1275 = vmatpush1.xpose.msra.mxu0 0.0
      %1276 = vmatprep.subr.mxu0 0.0
      %1277 = vmatpush1.xpose.msra.mxu0 0.0
      %1278 = vmatprep.subr.mxu0 0.0
      %1279 = vmatpush1.xpose.msra.mxu0 0.0
      %1280 = vmatprep.subr.mxu0 0.0
      %1281 = vmatpush1.xpose.msra.mxu0 0.0
      %1282 = vmatprep.subr.mxu0 0.0
      %1283 = vmatpush1.xpose.msra.mxu0 0.0
      %1284 = vmatprep.subr.mxu0 0.0
      %1285 = vmatpush1.xpose.msra.mxu0 0.0
      %1286 = vmatprep.subr.mxu0 0.0
      %1287 = vmatpush1.xpose.msra.mxu0 0.0
      %1288 = vmatprep.mubr.f32.mxu0 0.0
      %1289 = vmatmul.mubr.f32.gmra.mrb[0].mxu0 %v1185
      %v1290 = vpop.f32.mrb[0].mxu0
      %v1291 = vadd.f32 0.0, %v1290
      %v1292 = vpop.f32.mrb[0].mxu0
      %1293 = vmatprep.mubr.f32.mxu0 0.0
      %1294 = vmatmul.mubr.f32.gmra.mrb[0].mxu0 %v1188
      %v1295 = vpop.f32.mrb[0].mxu0
      %v1296 = vadd.f32 0.0, %v1295
      %v1297 = vpop.f32.mrb[0].mxu0
      %1298 = vmatprep.mubr.f32.mxu0 0.0
      %1299 = vmatmul.mubr.f32.gmra.mrb[0].mxu0 %v1191
      %v1300 = vpop.f32.mrb[0].mxu0
      %v1301 = vadd.f32 0.0, %v1300
      %v1302 = vpop.f32.mrb[0].mxu0
      %1303 = vmatprep.mubr.f32.mxu0 0.0
      %1304 = vmatmul.mubr.f32.gmra.mrb[0].mxu0 %v1194
      %v1305 = vpop.f32.mrb[0].mxu0
      %v1306 = vadd.f32 0.0, %v1305
      %v1307 = vpop.f32.mrb[0].mxu0
      %1308 = vmatprep.mubr.f32.mxu0 0.0
      %1309 = vmatmul.mubr.f32.gmra.mrb[0].mxu0 %v1197
      %v1310 = vpop.f32.mrb[0].mxu0
      %v1311 = vadd.f32 0.0, %v1310
      %v1312 = vpop.f32.mrb[0].mxu0
      %1313 = vmatprep.mubr.f32.mxu0 0.0
      %1314 = vmatmul.mubr.f32.gmra.mrb[0].mxu0 %v1200
      %v1315 = vpop.f32.mrb[0].mxu0
      %v1316 = vadd.f32 0.0, %v1315
      %v1317 = vpop.f32.mrb[0].mxu0
      %1318 = vmatprep.mubr.f32.mxu0 0.0
      %1319 = vmatmul.mubr.f32.gmra.mrb[0].mxu0 %v1203
      %v1320 = vpop.f32.mrb[0].mxu0
      %v1321 = vadd.f32 0.0, %v1320
      %v1322 = vpop.f32.mrb[0].mxu0
      %1323 = vmatprep.mubr.f32.mxu0 0.0
      %1324 = vmatmul.mubr.f32.gmra.mrb[0].mxu0 %v1206
      %v1325 = vpop.f32.mrb[0].mxu0
      %v1326 = vadd.f32 0.0, %v1325
      %v1327 = vpop.f32.mrb[0].mxu0
      %1328 = vdwg.mxu0
      %vm1329 = vcmask 523264
      %v1330 = vsel %vm1329, %v1291, -inf
      %1331 = vmax.xlane.f32.xlu0 %v1330
      %v1332 = vpop.xlane.xlu0 %1331
      %v1333 = vsel %vm1329, %v1296, -inf
      %1334 = vmax.xlane.f32.xlu0 %v1333
      %v1335 = vpop.xlane.xlu0 %1334
      %v1336 = vsel %vm1329, %v1301, -inf
      %1337 = vmax.xlane.f32.xlu0 %v1336
      %v1338 = vpop.xlane.xlu0 %1337
      %v1339 = vsel %vm1329, %v1306, -inf
      %1340 = vmax.xlane.f32.xlu0 %v1339
      %v1341 = vpop.xlane.xlu0 %1340
      %v1342 = vsel %vm1329, %v1311, -inf
      %1343 = vmax.xlane.f32.xlu0 %v1342
      %v1344 = vpop.xlane.xlu0 %1343
      %v1345 = vsel %vm1329, %v1316, -inf
      %1346 = vmax.xlane.f32.xlu0 %v1345
      %v1347 = vpop.xlane.xlu0 %1346
      %v1348 = vsel %vm1329, %v1321, -inf
      %1349 = vmax.xlane.f32.xlu0 %v1348
      %v1350 = vpop.xlane.xlu0 %1349
      %v1351 = vsel %vm1329, %v1326, -inf
      %1352 = vmax.xlane.f32.xlu0 %v1351
      %v1353 = vpop.xlane.xlu0 %1352
      %v1354 = vsub.f32 %v1291, %v1332
      %v1355 = vsub.f32 %v1296, %v1335
      %v1356 = vsub.f32 %v1301, %v1338
      %v1357 = vsub.f32 %v1306, %v1341
      %v1358 = vsub.f32 %v1311, %v1344
      %v1359 = vsub.f32 %v1316, %v1347
      %v1360 = vsub.f32 %v1321, %v1350
      %v1361 = vsub.f32 %v1326, %v1353
      %v1362 = vmul.f32 %v1354, 1.442695
      %v1363 = vpow.pop %v1362
      %v1364 = vmul.f32 %v1355, 1.442695
      %v1365 = vpow.pop %v1364
      %v1366 = vmul.f32 %v1356, 1.442695
      %v1367 = vpow.pop %v1366
      %v1368 = vmul.f32 %v1357, 1.442695
      %v1369 = vpow.pop %v1368
      %v1370 = vmul.f32 %v1358, 1.442695
      %v1371 = vpow.pop %v1370
      %v1372 = vmul.f32 %v1359, 1.442695
      %v1373 = vpow.pop %v1372
      %v1374 = vmul.f32 %v1360, 1.442695
      %v1375 = vpow.pop %v1374
      %v1376 = vmul.f32 %v1361, 1.442695
      %v1377 = vpow.pop %v1376
      %v1378 = vsel %vm1329, %v1363, 0.0
      %1379 = vadd.xlane.f32.xlu0 %v1378
      %v1380 = vpop.xlane.xlu0 %1379
      %v1381 = vsel %vm1329, %v1365, 0.0
      %1382 = vadd.xlane.f32.xlu0 %v1381
      %v1383 = vpop.xlane.xlu0 %1382
      %v1384 = vsel %vm1329, %v1367, 0.0
      %1385 = vadd.xlane.f32.xlu0 %v1384
      %v1386 = vpop.xlane.xlu0 %1385
      %v1387 = vsel %vm1329, %v1369, 0.0
      %1388 = vadd.xlane.f32.xlu0 %v1387
      %v1389 = vpop.xlane.xlu0 %1388
      %v1390 = vsel %vm1329, %v1371, 0.0
      %1391 = vadd.xlane.f32.xlu0 %v1390
      %v1392 = vpop.xlane.xlu0 %1391
      %v1393 = vsel %vm1329, %v1373, 0.0
      %1394 = vadd.xlane.f32.xlu0 %v1393
      %v1395 = vpop.xlane.xlu0 %1394
      %v1396 = vsel %vm1329, %v1375, 0.0
      %1397 = vadd.xlane.f32.xlu0 %v1396
      %v1398 = vpop.xlane.xlu0 %1397
      %v1399 = vsel %vm1329, %v1377, 0.0
      %1400 = vadd.xlane.f32.xlu0 %v1399
      %v1401 = vpop.xlane.xlu0 %1400
      %v1402 = vrcp.pop %v1380
      %v1403 = vrcp.pop %v1383
      %v1404 = vrcp.pop %v1386
      %v1405 = vrcp.pop %v1389
      %v1406 = vrcp.pop %v1392
      %v1407 = vrcp.pop %v1395
      %v1408 = vrcp.pop %v1398
      %v1409 = vrcp.pop %v1401
      %v1410 = vmul.f32 %v1363, %v1402
      %v1411 = vmul.f32 %v1365, %v1403
      %v1412 = vmul.f32 %v1367, %v1404
      %v1413 = vmul.f32 %v1369, %v1405
      %v1414 = vmul.f32 %v1371, %v1406
      %v1415 = vmul.f32 %v1373, %v1407
      %v1416 = vmul.f32 %v1375, %v1408
      %v1417 = vmul.f32 %v1377, %v1409
      %1418 = vrot.lane.b32.xlu0 %v1113, 64
      %v1419 = vpop.permute.xlu0 %1418
      %1420 = vrot.lane.b32.xlu0 %v1118, 64
      %v1421 = vpop.permute.xlu0 %1420
      %1422 = vrot.lane.b32.xlu0 %v1123, 64
      %v1423 = vpop.permute.xlu0 %1422
      %1424 = vrot.lane.b32.xlu0 %v1128, 64
      %v1425 = vpop.permute.xlu0 %1424
      %1426 = vrot.lane.b32.xlu0 %v1133, 64
      %v1427 = vpop.permute.xlu0 %1426
      %1428 = vrot.lane.b32.xlu0 %v1138, 64
      %v1429 = vpop.permute.xlu0 %1428
      %1430 = vrot.lane.b32.xlu0 %v1143, 64
      %v1431 = vpop.permute.xlu0 %1430
      %1432 = vrot.lane.b32.xlu0 %v1148, 64
      %v1433 = vpop.permute.xlu0 %1432
      %v1443 = vsel %vm1329, %v1410, 0
      %v1446 = vsel %vm1329, %v1411, 0
      %v1449 = vsel %vm1329, %v1412, 0
      %v1452 = vsel %vm1329, %v1413, 0
      %v1455 = vsel %vm1329, %v1414, 0
      %v1458 = vsel %vm1329, %v1415, 0
      %v1461 = vsel %vm1329, %v1416, 0
      %v1464 = vsel %vm1329, %v1417, 0
      %1466 = vmatprep.subr.mxu0 0.0
      %1467 = vmatpush1.msra.mxu0 %v1419
      %1468 = vmatprep.subr.mxu0 0.0
      %1469 = vmatpush1.msra.mxu0 %v1421
      %1470 = vmatprep.subr.mxu0 0.0
      %1471 = vmatpush1.msra.mxu0 %v1423
      %1472 = vmatprep.subr.mxu0 0.0
      %1473 = vmatpush1.msra.mxu0 %v1425
      %1474 = vmatprep.subr.mxu0 0.0
      %1475 = vmatpush1.msra.mxu0 %v1427
      %1476 = vmatprep.subr.mxu0 0.0
      %1477 = vmatpush1.msra.mxu0 %v1429
      %1478 = vmatprep.subr.mxu0 0.0
      %1479 = vmatpush1.msra.mxu0 %v1431
      %1480 = vmatprep.subr.mxu0 0.0
      %1481 = vmatpush1.msra.mxu0 %v1433
      %1482 = vmatprep.subr.mxu0 0.0
      %1483 = vmatpush1.msra.mxu0 0.0
      %1484 = vmatprep.subr.mxu0 0.0
      %1485 = vmatpush1.msra.mxu0 0.0
      %1486 = vmatprep.subr.mxu0 0.0
      %1487 = vmatpush1.msra.mxu0 0.0
      %1488 = vmatprep.subr.mxu0 0.0
      %1489 = vmatpush1.msra.mxu0 0.0
      %1490 = vmatprep.subr.mxu0 0.0
      %1491 = vmatpush1.msra.mxu0 0.0
      %1492 = vmatprep.subr.mxu0 0.0
      %1493 = vmatpush1.msra.mxu0 0.0
      %1494 = vmatprep.subr.mxu0 0.0
      %1495 = vmatpush1.msra.mxu0 0.0
      %1496 = vmatprep.subr.mxu0 0.0
      %1497 = vmatpush1.msra.mxu0 0.0
      %1498 = vmatprep.subr.mxu0 0.0
      %1499 = vmatpush1.msra.mxu0 0.0
      %1500 = vmatprep.subr.mxu0 0.0
      %1501 = vmatpush1.msra.mxu0 0.0
      %1502 = vmatprep.subr.mxu0 0.0
      %1503 = vmatpush1.msra.mxu0 0.0
      %1504 = vmatprep.subr.mxu0 0.0
      %1505 = vmatpush1.msra.mxu0 0.0
      %1506 = vmatprep.subr.mxu0 0.0
      %1507 = vmatpush1.msra.mxu0 0.0
      %1508 = vmatprep.subr.mxu0 0.0
      %1509 = vmatpush1.msra.mxu0 0.0
      %1510 = vmatprep.subr.mxu0 0.0
      %1511 = vmatpush1.msra.mxu0 0.0
      %1512 = vmatprep.subr.mxu0 0.0
      %1513 = vmatpush1.msra.mxu0 0.0
      %1514 = vmatprep.subr.mxu0 0.0
      %1515 = vmatpush1.msra.mxu0 0.0
      %1516 = vmatprep.subr.mxu0 0.0
      %1517 = vmatpush1.msra.mxu0 0.0
      %1518 = vmatprep.subr.mxu0 0.0
      %1519 = vmatpush1.msra.mxu0 0.0
      %1520 = vmatprep.subr.mxu0 0.0
      %1521 = vmatpush1.msra.mxu0 0.0
      %1522 = vmatprep.subr.mxu0 0.0
      %1523 = vmatpush1.msra.mxu0 0.0
      %1524 = vmatprep.subr.mxu0 0.0
      %1525 = vmatpush1.msra.mxu0 0.0
      %1526 = vmatprep.subr.mxu0 0.0
      %1527 = vmatpush1.msra.mxu0 0.0
      %1528 = vmatprep.subr.mxu0 0.0
      %1529 = vmatpush1.msra.mxu0 0.0
      %1530 = vmatprep.mubr.f32.mxu0 0.0
      %1531 = vmatmul.mubr.f32.gmra.mrb[0].mxu0 %v1443
      %v1532 = vpop.f32.mrb[0].mxu0
      %v1533 = vadd.f32 0.0, %v1532
      %v1534 = vpop.f32.mrb[0].mxu0
      %1535 = vmatprep.mubr.f32.mxu0 0.0
      %1536 = vmatmul.mubr.f32.gmra.mrb[0].mxu0 %v1446
      %v1537 = vpop.f32.mrb[0].mxu0
      %v1538 = vadd.f32 0.0, %v1537
      %v1539 = vpop.f32.mrb[0].mxu0
      %1540 = vmatprep.mubr.f32.mxu0 0.0
      %1541 = vmatmul.mubr.f32.gmra.mrb[0].mxu0 %v1449
      %v1542 = vpop.f32.mrb[0].mxu0
      %v1543 = vadd.f32 0.0, %v1542
      %v1544 = vpop.f32.mrb[0].mxu0
      %1545 = vmatprep.mubr.f32.mxu0 0.0
      %1546 = vmatmul.mubr.f32.gmra.mrb[0].mxu0 %v1452
      %v1547 = vpop.f32.mrb[0].mxu0
      %v1548 = vadd.f32 0.0, %v1547
      %v1549 = vpop.f32.mrb[0].mxu0
      %1550 = vmatprep.mubr.f32.mxu0 0.0
      %1551 = vmatmul.mubr.f32.gmra.mrb[0].mxu0 %v1455
      %v1552 = vpop.f32.mrb[0].mxu0
      %v1553 = vadd.f32 0.0, %v1552
      %v1554 = vpop.f32.mrb[0].mxu0
      %1555 = vmatprep.mubr.f32.mxu0 0.0
      %1556 = vmatmul.mubr.f32.gmra.mrb[0].mxu0 %v1458
      %v1557 = vpop.f32.mrb[0].mxu0
      %v1558 = vadd.f32 0.0, %v1557
      %v1559 = vpop.f32.mrb[0].mxu0
      %1560 = vmatprep.mubr.f32.mxu0 0.0
      %1561 = vmatmul.mubr.f32.gmra.mrb[0].mxu0 %v1461
      %v1562 = vpop.f32.mrb[0].mxu0
      %v1563 = vadd.f32 0.0, %v1562
      %v1564 = vpop.f32.mrb[0].mxu0
      %1565 = vmatprep.mubr.f32.mxu0 0.0
      %1566 = vmatmul.mubr.f32.gmra.mrb[0].mxu0 %v1464
      %v1567 = vpop.f32.mrb[0].mxu0
      %v1568 = vadd.f32 0.0, %v1567
      %v1569 = vpop.f32.mrb[0].mxu0
      %1570 = vdwg.mxu0
      %1571 = vrot.lane.b32.xlu0 %v1151, 124
      %v1572 = vpop.permute.xlu0 %1571
      %1573 = vrot.lane.b32.xlu0 %v1152, 124
      %v1574 = vpop.permute.xlu0 %1573
      %1575 = vrot.lane.b32.xlu0 %v1153, 124
      %v1576 = vpop.permute.xlu0 %1575
      %1577 = vrot.lane.b32.xlu0 %v1154, 124
      %v1578 = vpop.permute.xlu0 %1577
      %1579 = vrot.lane.b32.xlu0 %v1155, 124
      %v1580 = vpop.permute.xlu0 %1579
      %1581 = vrot.lane.b32.xlu0 %v1156, 124
      %v1582 = vpop.permute.xlu0 %1581
      %1583 = vrot.lane.b32.xlu0 %v1157, 124
      %v1584 = vpop.permute.xlu0 %1583
      %1585 = vrot.lane.b32.xlu0 %v1158, 124
      %v1586 = vpop.permute.xlu0 %1585
      %1587 = vrot.lane.b32.xlu0 %v1113, 92
      %v1588 = vpop.permute.xlu0 %1587
      %1589 = vrot.lane.b32.xlu0 %v1118, 92
      %v1590 = vpop.permute.xlu0 %1589
      %1591 = vrot.lane.b32.xlu0 %v1123, 92
      %v1592 = vpop.permute.xlu0 %1591
      %1593 = vrot.lane.b32.xlu0 %v1128, 92
      %v1594 = vpop.permute.xlu0 %1593
      %1595 = vrot.lane.b32.xlu0 %v1133, 92
      %v1596 = vpop.permute.xlu0 %1595
      %1597 = vrot.lane.b32.xlu0 %v1138, 92
      %v1598 = vpop.permute.xlu0 %1597
      %1599 = vrot.lane.b32.xlu0 %v1143, 92
      %v1600 = vpop.permute.xlu0 %1599
      %1601 = vrot.lane.b32.xlu0 %v1148, 92
      %v1602 = vpop.permute.xlu0 %1601
      %v1603 = vsel %vm1183, %v1572, 0
      %v1605 = vsel %vm1183, %v1574, 0
      %v1607 = vsel %vm1183, %v1576, 0
      %v1609 = vsel %vm1183, %v1578, 0
      %v1611 = vsel %vm1183, %v1580, 0
      %v1613 = vsel %vm1183, %v1582, 0
      %v1615 = vsel %vm1183, %v1584, 0
      %v1617 = vsel %vm1183, %v1586, 0
      %v1619 = vsel %vm1183, %v1588, 0
      %v1621 = vsel %vm1183, %v1590, 0
      %v1623 = vsel %vm1183, %v1592, 0
      %v1625 = vsel %vm1183, %v1594, 0
      %v1627 = vsel %vm1183, %v1596, 0
      %v1629 = vsel %vm1183, %v1598, 0
      %v1631 = vsel %vm1183, %v1600, 0
      %v1633 = vsel %vm1183, %v1602, 0
      %1635 = vmatprep.subr.mxu0 0.0
      %1636 = vmatpush1.xpose.msra.mxu0 %v1619
      %1637 = vmatprep.subr.mxu0 0.0
      %1638 = vmatpush1.xpose.msra.mxu0 %v1621
      %1639 = vmatprep.subr.mxu0 0.0
      %1640 = vmatpush1.xpose.msra.mxu0 %v1623
      %1641 = vmatprep.subr.mxu0 0.0
      %1642 = vmatpush1.xpose.msra.mxu0 %v1625
      %1643 = vmatprep.subr.mxu0 0.0
      %1644 = vmatpush1.xpose.msra.mxu0 %v1627
      %1645 = vmatprep.subr.mxu0 0.0
      %1646 = vmatpush1.xpose.msra.mxu0 %v1629
      %1647 = vmatprep.subr.mxu0 0.0
      %1648 = vmatpush1.xpose.msra.mxu0 %v1631
      %1649 = vmatprep.subr.mxu0 0.0
      %1650 = vmatpush1.xpose.msra.mxu0 %v1633
      %1651 = vmatprep.subr.mxu0 0.0
      %1652 = vmatpush1.xpose.msra.mxu0 0.0
      %1653 = vmatprep.subr.mxu0 0.0
      %1654 = vmatpush1.xpose.msra.mxu0 0.0
      %1655 = vmatprep.subr.mxu0 0.0
      %1656 = vmatpush1.xpose.msra.mxu0 0.0
      %1657 = vmatprep.subr.mxu0 0.0
      %1658 = vmatpush1.xpose.msra.mxu0 0.0
      %1659 = vmatprep.subr.mxu0 0.0
      %1660 = vmatpush1.xpose.msra.mxu0 0.0
      %1661 = vmatprep.subr.mxu0 0.0
      %1662 = vmatpush1.xpose.msra.mxu0 0.0
      %1663 = vmatprep.subr.mxu0 0.0
      %1664 = vmatpush1.xpose.msra.mxu0 0.0
      %1665 = vmatprep.subr.mxu0 0.0
      %1666 = vmatpush1.xpose.msra.mxu0 0.0
      %1667 = vmatprep.subr.mxu0 0.0
      %1668 = vmatpush1.xpose.msra.mxu0 0.0
      %1669 = vmatprep.subr.mxu0 0.0
      %1670 = vmatpush1.xpose.msra.mxu0 0.0
      %1671 = vmatprep.subr.mxu0 0.0
      %1672 = vmatpush1.xpose.msra.mxu0 0.0
      %1673 = vmatprep.subr.mxu0 0.0
      %1674 = vmatpush1.xpose.msra.mxu0 0.0
      %1675 = vmatprep.subr.mxu0 0.0
      %1676 = vmatpush1.xpose.msra.mxu0 0.0
      %1677 = vmatprep.subr.mxu0 0.0
      %1678 = vmatpush1.xpose.msra.mxu0 0.0
      %1679 = vmatprep.subr.mxu0 0.0
      %1680 = vmatpush1.xpose.msra.mxu0 0.0
      %1681 = vmatprep.subr.mxu0 0.0
      %1682 = vmatpush1.xpose.msra.mxu0 0.0
      %1683 = vmatprep.subr.mxu0 0.0
      %1684 = vmatpush1.xpose.msra.mxu0 0.0
      %1685 = vmatprep.subr.mxu0 0.0
      %1686 = vmatpush1.xpose.msra.mxu0 0.0
      %1687 = vmatprep.subr.mxu0 0.0
      %1688 = vmatpush1.xpose.msra.mxu0 0.0
      %1689 = vmatprep.subr.mxu0 0.0
      %1690 = vmatpush1.xpose.msra.mxu0 0.0
      %1691 = vmatprep.subr.mxu0 0.0
      %1692 = vmatpush1.xpose.msra.mxu0 0.0
      %1693 = vmatprep.subr.mxu0 0.0
      %1694 = vmatpush1.xpose.msra.mxu0 0.0
      %1695 = vmatprep.subr.mxu0 0.0
      %1696 = vmatpush1.xpose.msra.mxu0 0.0
      %1697 = vmatprep.subr.mxu0 0.0
      %1698 = vmatpush1.xpose.msra.mxu0 0.0
      %1699 = vmatprep.mubr.f32.mxu0 0.0
      %1700 = vmatmul.mubr.f32.gmra.mrb[0].mxu0 %v1603
      %v1701 = vpop.f32.mrb[0].mxu0
      %v1702 = vadd.f32 0.0, %v1701
      %v1703 = vpop.f32.mrb[0].mxu0
      %1704 = vmatprep.mubr.f32.mxu0 0.0
      %1705 = vmatmul.mubr.f32.gmra.mrb[0].mxu0 %v1605
      %v1706 = vpop.f32.mrb[0].mxu0
      %v1707 = vadd.f32 0.0, %v1706
      %v1708 = vpop.f32.mrb[0].mxu0
      %1709 = vmatprep.mubr.f32.mxu0 0.0
      %1710 = vmatmul.mubr.f32.gmra.mrb[0].mxu0 %v1607
      %v1711 = vpop.f32.mrb[0].mxu0
      %v1712 = vadd.f32 0.0, %v1711
      %v1713 = vpop.f32.mrb[0].mxu0
      %1714 = vmatprep.mubr.f32.mxu0 0.0
      %1715 = vmatmul.mubr.f32.gmra.mrb[0].mxu0 %v1609
      %v1716 = vpop.f32.mrb[0].mxu0
      %v1717 = vadd.f32 0.0, %v1716
      %v1718 = vpop.f32.mrb[0].mxu0
      %1719 = vmatprep.mubr.f32.mxu0 0.0
      %1720 = vmatmul.mubr.f32.gmra.mrb[0].mxu0 %v1611
      %v1721 = vpop.f32.mrb[0].mxu0
      %v1722 = vadd.f32 0.0, %v1721
      %v1723 = vpop.f32.mrb[0].mxu0
      %1724 = vmatprep.mubr.f32.mxu0 0.0
      %1725 = vmatmul.mubr.f32.gmra.mrb[0].mxu0 %v1613
      %v1726 = vpop.f32.mrb[0].mxu0
      %v1727 = vadd.f32 0.0, %v1726
      %v1728 = vpop.f32.mrb[0].mxu0
      %1729 = vmatprep.mubr.f32.mxu0 0.0
      %1730 = vmatmul.mubr.f32.gmra.mrb[0].mxu0 %v1615
      %v1731 = vpop.f32.mrb[0].mxu0
      %v1732 = vadd.f32 0.0, %v1731
      %v1733 = vpop.f32.mrb[0].mxu0
      %1734 = vmatprep.mubr.f32.mxu0 0.0
      %1735 = vmatmul.mubr.f32.gmra.mrb[0].mxu0 %v1617
      %v1736 = vpop.f32.mrb[0].mxu0
      %v1737 = vadd.f32 0.0, %v1736
      %v1738 = vpop.f32.mrb[0].mxu0
      %1739 = vdwg.mxu0
      %v1740 = vsel %vm1329, %v1702, -inf
      %1741 = vmax.xlane.f32.xlu0 %v1740
      %v1742 = vpop.xlane.xlu0 %1741
      %v1743 = vsel %vm1329, %v1707, -inf
      %1744 = vmax.xlane.f32.xlu0 %v1743
      %v1745 = vpop.xlane.xlu0 %1744
      %v1746 = vsel %vm1329, %v1712, -inf
      %1747 = vmax.xlane.f32.xlu0 %v1746
      %v1748 = vpop.xlane.xlu0 %1747
      %v1749 = vsel %vm1329, %v1717, -inf
      %1750 = vmax.xlane.f32.xlu0 %v1749
      %v1751 = vpop.xlane.xlu0 %1750
      %v1752 = vsel %vm1329, %v1722, -inf
      %1753 = vmax.xlane.f32.xlu0 %v1752
      %v1754 = vpop.xlane.xlu0 %1753
      %v1755 = vsel %vm1329, %v1727, -inf
      %1756 = vmax.xlane.f32.xlu0 %v1755
      %v1757 = vpop.xlane.xlu0 %1756
      %v1758 = vsel %vm1329, %v1732, -inf
      %1759 = vmax.xlane.f32.xlu0 %v1758
      %v1760 = vpop.xlane.xlu0 %1759
      %v1761 = vsel %vm1329, %v1737, -inf
      %1762 = vmax.xlane.f32.xlu0 %v1761
      %v1763 = vpop.xlane.xlu0 %1762
      %v1764 = vsub.f32 %v1702, %v1742
      %v1765 = vsub.f32 %v1707, %v1745
      %v1766 = vsub.f32 %v1712, %v1748
      %v1767 = vsub.f32 %v1717, %v1751
      %v1768 = vsub.f32 %v1722, %v1754
      %v1769 = vsub.f32 %v1727, %v1757
      %v1770 = vsub.f32 %v1732, %v1760
      %v1771 = vsub.f32 %v1737, %v1763
      %v1772 = vmul.f32 %v1764, 1.442695
      %v1773 = vpow.pop %v1772
      %v1774 = vmul.f32 %v1765, 1.442695
      %v1775 = vpow.pop %v1774
      %v1776 = vmul.f32 %v1766, 1.442695
      %v1777 = vpow.pop %v1776
      %v1778 = vmul.f32 %v1767, 1.442695
      %v1779 = vpow.pop %v1778
      %v1780 = vmul.f32 %v1768, 1.442695
      %v1781 = vpow.pop %v1780
      %v1782 = vmul.f32 %v1769, 1.442695
      %v1783 = vpow.pop %v1782
      %v1784 = vmul.f32 %v1770, 1.442695
      %v1785 = vpow.pop %v1784
      %v1786 = vmul.f32 %v1771, 1.442695
      %v1787 = vpow.pop %v1786
      %v1788 = vsel %vm1329, %v1773, 0.0
      %1789 = vadd.xlane.f32.xlu0 %v1788
      %v1790 = vpop.xlane.xlu0 %1789
      %v1791 = vsel %vm1329, %v1775, 0.0
      %1792 = vadd.xlane.f32.xlu0 %v1791
      %v1793 = vpop.xlane.xlu0 %1792
      %v1794 = vsel %vm1329, %v1777, 0.0
      %1795 = vadd.xlane.f32.xlu0 %v1794
      %v1796 = vpop.xlane.xlu0 %1795
      %v1797 = vsel %vm1329, %v1779, 0.0
      %1798 = vadd.xlane.f32.xlu0 %v1797
      %v1799 = vpop.xlane.xlu0 %1798
      %v1800 = vsel %vm1329, %v1781, 0.0
      %1801 = vadd.xlane.f32.xlu0 %v1800
      %v1802 = vpop.xlane.xlu0 %1801
      %v1803 = vsel %vm1329, %v1783, 0.0
      %1804 = vadd.xlane.f32.xlu0 %v1803
      %v1805 = vpop.xlane.xlu0 %1804
      %v1806 = vsel %vm1329, %v1785, 0.0
      %1807 = vadd.xlane.f32.xlu0 %v1806
      %v1808 = vpop.xlane.xlu0 %1807
      %v1809 = vsel %vm1329, %v1787, 0.0
      %1810 = vadd.xlane.f32.xlu0 %v1809
      %v1811 = vpop.xlane.xlu0 %1810
      %v1812 = vrcp.pop %v1790
      %v1813 = vrcp.pop %v1793
      %v1814 = vrcp.pop %v1796
      %v1815 = vrcp.pop %v1799
      %v1816 = vrcp.pop %v1802
      %v1817 = vrcp.pop %v1805
      %v1818 = vrcp.pop %v1808
      %v1819 = vrcp.pop %v1811
      %v1820 = vmul.f32 %v1773, %v1812
      %v1821 = vmul.f32 %v1775, %v1813
      %v1822 = vmul.f32 %v1777, %v1814
      %v1823 = vmul.f32 %v1779, %v1815
      %v1824 = vmul.f32 %v1781, %v1816
      %v1825 = vmul.f32 %v1783, %v1817
      %v1826 = vmul.f32 %v1785, %v1818
      %v1827 = vmul.f32 %v1787, %v1819
      %1828 = vrot.lane.b32.xlu0 %v1113, 60
      %v1829 = vpop.permute.xlu0 %1828
      %1830 = vrot.lane.b32.xlu0 %v1118, 60
      %v1831 = vpop.permute.xlu0 %1830
      %1832 = vrot.lane.b32.xlu0 %v1123, 60
      %v1833 = vpop.permute.xlu0 %1832
      %1834 = vrot.lane.b32.xlu0 %v1128, 60
      %v1835 = vpop.permute.xlu0 %1834
      %1836 = vrot.lane.b32.xlu0 %v1133, 60
      %v1837 = vpop.permute.xlu0 %1836
      %1838 = vrot.lane.b32.xlu0 %v1138, 60
      %v1839 = vpop.permute.xlu0 %1838
      %1840 = vrot.lane.b32.xlu0 %v1143, 60
      %v1841 = vpop.permute.xlu0 %1840
      %1842 = vrot.lane.b32.xlu0 %v1148, 60
      %v1843 = vpop.permute.xlu0 %1842
      %v1853 = vsel %vm1329, %v1820, 0
      %v1856 = vsel %vm1329, %v1821, 0
      %v1859 = vsel %vm1329, %v1822, 0
      %v1862 = vsel %vm1329, %v1823, 0
      %v1865 = vsel %vm1329, %v1824, 0
      %v1868 = vsel %vm1329, %v1825, 0
      %v1871 = vsel %vm1329, %v1826, 0
      %v1874 = vsel %vm1329, %v1827, 0
      %1876 = vmatprep.subr.mxu0 0.0
      %1877 = vmatpush1.msra.mxu0 %v1829
      %1878 = vmatprep.subr.mxu0 0.0
      %1879 = vmatpush1.msra.mxu0 %v1831
      %1880 = vmatprep.subr.mxu0 0.0
      %1881 = vmatpush1.msra.mxu0 %v1833
      %1882 = vmatprep.subr.mxu0 0.0
      %1883 = vmatpush1.msra.mxu0 %v1835
      %1884 = vmatprep.subr.mxu0 0.0
      %1885 = vmatpush1.msra.mxu0 %v1837
      %1886 = vmatprep.subr.mxu0 0.0
      %1887 = vmatpush1.msra.mxu0 %v1839
      %1888 = vmatprep.subr.mxu0 0.0
      %1889 = vmatpush1.msra.mxu0 %v1841
      %1890 = vmatprep.subr.mxu0 0.0
      %1891 = vmatpush1.msra.mxu0 %v1843
      %1892 = vmatprep.subr.mxu0 0.0
      %1893 = vmatpush1.msra.mxu0 0.0
      %1894 = vmatprep.subr.mxu0 0.0
      %1895 = vmatpush1.msra.mxu0 0.0
      %1896 = vmatprep.subr.mxu0 0.0
      %1897 = vmatpush1.msra.mxu0 0.0
      %1898 = vmatprep.subr.mxu0 0.0
      %1899 = vmatpush1.msra.mxu0 0.0
      %1900 = vmatprep.subr.mxu0 0.0
      %1901 = vmatpush1.msra.mxu0 0.0
      %1902 = vmatprep.subr.mxu0 0.0
      %1903 = vmatpush1.msra.mxu0 0.0
      %1904 = vmatprep.subr.mxu0 0.0
      %1905 = vmatpush1.msra.mxu0 0.0
      %1906 = vmatprep.subr.mxu0 0.0
      %1907 = vmatpush1.msra.mxu0 0.0
      %1908 = vmatprep.subr.mxu0 0.0
      %1909 = vmatpush1.msra.mxu0 0.0
      %1910 = vmatprep.subr.mxu0 0.0
      %1911 = vmatpush1.msra.mxu0 0.0
      %1912 = vmatprep.subr.mxu0 0.0
      %1913 = vmatpush1.msra.mxu0 0.0
      %1914 = vmatprep.subr.mxu0 0.0
      %1915 = vmatpush1.msra.mxu0 0.0
      %1916 = vmatprep.subr.mxu0 0.0
      %1917 = vmatpush1.msra.mxu0 0.0
      %1918 = vmatprep.subr.mxu0 0.0
      %1919 = vmatpush1.msra.mxu0 0.0
      %1920 = vmatprep.subr.mxu0 0.0
      %1921 = vmatpush1.msra.mxu0 0.0
      %1922 = vmatprep.subr.mxu0 0.0
      %1923 = vmatpush1.msra.mxu0 0.0
      %1924 = vmatprep.subr.mxu0 0.0
      %1925 = vmatpush1.msra.mxu0 0.0
      %1926 = vmatprep.subr.mxu0 0.0
      %1927 = vmatpush1.msra.mxu0 0.0
      %1928 = vmatprep.subr.mxu0 0.0
      %1929 = vmatpush1.msra.mxu0 0.0
      %1930 = vmatprep.subr.mxu0 0.0
      %1931 = vmatpush1.msra.mxu0 0.0
      %1932 = vmatprep.subr.mxu0 0.0
      %1933 = vmatpush1.msra.mxu0 0.0
      %1934 = vmatprep.subr.mxu0 0.0
      %1935 = vmatpush1.msra.mxu0 0.0
      %1936 = vmatprep.subr.mxu0 0.0
      %1937 = vmatpush1.msra.mxu0 0.0
      %1938 = vmatprep.subr.mxu0 0.0
      %1939 = vmatpush1.msra.mxu0 0.0
      %1940 = vmatprep.mubr.f32.mxu0 0.0
      %1941 = vmatmul.mubr.f32.gmra.mrb[0].mxu0 %v1853
      %v1942 = vpop.f32.mrb[0].mxu0
      %v1943 = vadd.f32 0.0, %v1942
      %v1944 = vpop.f32.mrb[0].mxu0
      %1945 = vmatprep.mubr.f32.mxu0 0.0
      %1946 = vmatmul.mubr.f32.gmra.mrb[0].mxu0 %v1856
      %v1947 = vpop.f32.mrb[0].mxu0
      %v1948 = vadd.f32 0.0, %v1947
      %v1949 = vpop.f32.mrb[0].mxu0
      %1950 = vmatprep.mubr.f32.mxu0 0.0
      %1951 = vmatmul.mubr.f32.gmra.mrb[0].mxu0 %v1859
      %v1952 = vpop.f32.mrb[0].mxu0
      %v1953 = vadd.f32 0.0, %v1952
      %v1954 = vpop.f32.mrb[0].mxu0
      %1955 = vmatprep.mubr.f32.mxu0 0.0
      %1956 = vmatmul.mubr.f32.gmra.mrb[0].mxu0 %v1862
      %v1957 = vpop.f32.mrb[0].mxu0
      %v1958 = vadd.f32 0.0, %v1957
      %v1959 = vpop.f32.mrb[0].mxu0
      %1960 = vmatprep.mubr.f32.mxu0 0.0
      %1961 = vmatmul.mubr.f32.gmra.mrb[0].mxu0 %v1865
      %v1962 = vpop.f32.mrb[0].mxu0
      %v1963 = vadd.f32 0.0, %v1962
      %v1964 = vpop.f32.mrb[0].mxu0
      %1965 = vmatprep.mubr.f32.mxu0 0.0
      %1966 = vmatmul.mubr.f32.gmra.mrb[0].mxu0 %v1868
      %v1967 = vpop.f32.mrb[0].mxu0
      %v1968 = vadd.f32 0.0, %v1967
      %v1969 = vpop.f32.mrb[0].mxu0
      %1970 = vmatprep.mubr.f32.mxu0 0.0
      %1971 = vmatmul.mubr.f32.gmra.mrb[0].mxu0 %v1871
      %v1972 = vpop.f32.mrb[0].mxu0
      %v1973 = vadd.f32 0.0, %v1972
      %v1974 = vpop.f32.mrb[0].mxu0
      %1975 = vmatprep.mubr.f32.mxu0 0.0
      %1976 = vmatmul.mubr.f32.gmra.mrb[0].mxu0 %v1874
      %v1977 = vpop.f32.mrb[0].mxu0
      %v1978 = vadd.f32 0.0, %v1977
      %v1979 = vpop.f32.mrb[0].mxu0
      %1980 = vdwg.mxu0
      %1981 = vrot.lane.b32.xlu0 %v1151, 120
      %v1982 = vpop.permute.xlu0 %1981
      %1983 = vrot.lane.b32.xlu0 %v1152, 120
      %v1984 = vpop.permute.xlu0 %1983
      %1985 = vrot.lane.b32.xlu0 %v1153, 120
      %v1986 = vpop.permute.xlu0 %1985
      %1987 = vrot.lane.b32.xlu0 %v1154, 120
      %v1988 = vpop.permute.xlu0 %1987
      %1989 = vrot.lane.b32.xlu0 %v1155, 120
      %v1990 = vpop.permute.xlu0 %1989
      %1991 = vrot.lane.b32.xlu0 %v1156, 120
      %v1992 = vpop.permute.xlu0 %1991
      %1993 = vrot.lane.b32.xlu0 %v1157, 120
      %v1994 = vpop.permute.xlu0 %1993
      %1995 = vrot.lane.b32.xlu0 %v1158, 120
      %v1996 = vpop.permute.xlu0 %1995
      %1997 = vrot.lane.b32.xlu0 %v1113, 88
      %v1998 = vpop.permute.xlu0 %1997
      %1999 = vrot.lane.b32.xlu0 %v1118, 88
      %v2000 = vpop.permute.xlu0 %1999
      %2001 = vrot.lane.b32.xlu0 %v1123, 88
      %v2002 = vpop.permute.xlu0 %2001
      %2003 = vrot.lane.b32.xlu0 %v1128, 88
      %v2004 = vpop.permute.xlu0 %2003
      %2005 = vrot.lane.b32.xlu0 %v1133, 88
      %v2006 = vpop.permute.xlu0 %2005
      %2007 = vrot.lane.b32.xlu0 %v1138, 88
      %v2008 = vpop.permute.xlu0 %2007
      %2009 = vrot.lane.b32.xlu0 %v1143, 88
      %v2010 = vpop.permute.xlu0 %2009
      %2011 = vrot.lane.b32.xlu0 %v1148, 88
      %v2012 = vpop.permute.xlu0 %2011
      %v2013 = vsel %vm1183, %v1982, 0
      %v2015 = vsel %vm1183, %v1984, 0
      %v2017 = vsel %vm1183, %v1986, 0
      %v2019 = vsel %vm1183, %v1988, 0
      %v2021 = vsel %vm1183, %v1990, 0
      %v2023 = vsel %vm1183, %v1992, 0
      %v2025 = vsel %vm1183, %v1994, 0
      %v2027 = vsel %vm1183, %v1996, 0
      %v2029 = vsel %vm1183, %v1998, 0
      %v2031 = vsel %vm1183, %v2000, 0
      %v2033 = vsel %vm1183, %v2002, 0
      %v2035 = vsel %vm1183, %v2004, 0
      %v2037 = vsel %vm1183, %v2006, 0
      %v2039 = vsel %vm1183, %v2008, 0
      %v2041 = vsel %vm1183, %v2010, 0
      %v2043 = vsel %vm1183, %v2012, 0
      %2045 = vmatprep.subr.mxu0 0.0
      %2046 = vmatpush1.xpose.msra.mxu0 %v2029
      %2047 = vmatprep.subr.mxu0 0.0
      %2048 = vmatpush1.xpose.msra.mxu0 %v2031
      %2049 = vmatprep.subr.mxu0 0.0
      %2050 = vmatpush1.xpose.msra.mxu0 %v2033
      %2051 = vmatprep.subr.mxu0 0.0
      %2052 = vmatpush1.xpose.msra.mxu0 %v2035
      %2053 = vmatprep.subr.mxu0 0.0
      %2054 = vmatpush1.xpose.msra.mxu0 %v2037
      %2055 = vmatprep.subr.mxu0 0.0
      %2056 = vmatpush1.xpose.msra.mxu0 %v2039
      %2057 = vmatprep.subr.mxu0 0.0
      %2058 = vmatpush1.xpose.msra.mxu0 %v2041
      %2059 = vmatprep.subr.mxu0 0.0
      %2060 = vmatpush1.xpose.msra.mxu0 %v2043
      %2061 = vmatprep.subr.mxu0 0.0
      %2062 = vmatpush1.xpose.msra.mxu0 0.0
      %2063 = vmatprep.subr.mxu0 0.0
      %2064 = vmatpush1.xpose.msra.mxu0 0.0
      %2065 = vmatprep.subr.mxu0 0.0
      %2066 = vmatpush1.xpose.msra.mxu0 0.0
      %2067 = vmatprep.subr.mxu0 0.0
      %2068 = vmatpush1.xpose.msra.mxu0 0.0
      %2069 = vmatprep.subr.mxu0 0.0
      %2070 = vmatpush1.xpose.msra.mxu0 0.0
      %2071 = vmatprep.subr.mxu0 0.0
      %2072 = vmatpush1.xpose.msra.mxu0 0.0
      %2073 = vmatprep.subr.mxu0 0.0
      %2074 = vmatpush1.xpose.msra.mxu0 0.0
      %2075 = vmatprep.subr.mxu0 0.0
      %2076 = vmatpush1.xpose.msra.mxu0 0.0
      %2077 = vmatprep.subr.mxu0 0.0
      %2078 = vmatpush1.xpose.msra.mxu0 0.0
      %2079 = vmatprep.subr.mxu0 0.0
      %2080 = vmatpush1.xpose.msra.mxu0 0.0
      %2081 = vmatprep.subr.mxu0 0.0
      %2082 = vmatpush1.xpose.msra.mxu0 0.0
      %2083 = vmatprep.subr.mxu0 0.0
      %2084 = vmatpush1.xpose.msra.mxu0 0.0
      %2085 = vmatprep.subr.mxu0 0.0
      %2086 = vmatpush1.xpose.msra.mxu0 0.0
      %2087 = vmatprep.subr.mxu0 0.0
      %2088 = vmatpush1.xpose.msra.mxu0 0.0
      %2089 = vmatprep.subr.mxu0 0.0
      %2090 = vmatpush1.xpose.msra.mxu0 0.0
      %2091 = vmatprep.subr.mxu0 0.0
      %2092 = vmatpush1.xpose.msra.mxu0 0.0
      %2093 = vmatprep.subr.mxu0 0.0
      %2094 = vmatpush1.xpose.msra.mxu0 0.0
      %2095 = vmatprep.subr.mxu0 0.0
      %2096 = vmatpush1.xpose.msra.mxu0 0.0
      %2097 = vmatprep.subr.mxu0 0.0
      %2098 = vmatpush1.xpose.msra.mxu0 0.0
      %2099 = vmatprep.subr.mxu0 0.0
      %2100 = vmatpush1.xpose.msra.mxu0 0.0
      %2101 = vmatprep.subr.mxu0 0.0
      %2102 = vmatpush1.xpose.msra.mxu0 0.0
      %2103 = vmatprep.subr.mxu0 0.0
      %2104 = vmatpush1.xpose.msra.mxu0 0.0
      %2105 = vmatprep.subr.mxu0 0.0
      %2106 = vmatpush1.xpose.msra.mxu0 0.0
      %2107 = vmatprep.subr.mxu0 0.0
      %2108 = vmatpush1.xpose.msra.mxu0 0.0
      %2109 = vmatprep.mubr.f32.mxu0 0.0
      %2110 = vmatmul.mubr.f32.gmra.mrb[0].mxu0 %v2013
      %v2111 = vpop.f32.mrb[0].mxu0
      %v2112 = vadd.f32 0.0, %v2111
      %v2113 = vpop.f32.mrb[0].mxu0
      %2114 = vmatprep.mubr.f32.mxu0 0.0
      %2115 = vmatmul.mubr.f32.gmra.mrb[0].mxu0 %v2015
      %v2116 = vpop.f32.mrb[0].mxu0
      %v2117 = vadd.f32 0.0, %v2116
      %v2118 = vpop.f32.mrb[0].mxu0
      %2119 = vmatprep.mubr.f32.mxu0 0.0
      %2120 = vmatmul.mubr.f32.gmra.mrb[0].mxu0 %v2017
      %v2121 = vpop.f32.mrb[0].mxu0
      %v2122 = vadd.f32 0.0, %v2121
      %v2123 = vpop.f32.mrb[0].mxu0
      %2124 = vmatprep.mubr.f32.mxu0 0.0
      %2125 = vmatmul.mubr.f32.gmra.mrb[0].mxu0 %v2019
      %v2126 = vpop.f32.mrb[0].mxu0
      %v2127 = vadd.f32 0.0, %v2126
      %v2128 = vpop.f32.mrb[0].mxu0
      %2129 = vmatprep.mubr.f32.mxu0 0.0
      %2130 = vmatmul.mubr.f32.gmra.mrb[0].mxu0 %v2021
      %v2131 = vpop.f32.mrb[0].mxu0
      %v2132 = vadd.f32 0.0, %v2131
      %v2133 = vpop.f32.mrb[0].mxu0
      %2134 = vmatprep.mubr.f32.mxu0 0.0
      %2135 = vmatmul.mubr.f32.gmra.mrb[0].mxu0 %v2023
      %v2136 = vpop.f32.mrb[0].mxu0
      %v2137 = vadd.f32 0.0, %v2136
      %v2138 = vpop.f32.mrb[0].mxu0
      %2139 = vmatprep.mubr.f32.mxu0 0.0
      %2140 = vmatmul.mubr.f32.gmra.mrb[0].mxu0 %v2025
      %v2141 = vpop.f32.mrb[0].mxu0
      %v2142 = vadd.f32 0.0, %v2141
      %v2143 = vpop.f32.mrb[0].mxu0
      %2144 = vmatprep.mubr.f32.mxu0 0.0
      %2145 = vmatmul.mubr.f32.gmra.mrb[0].mxu0 %v2027
      %v2146 = vpop.f32.mrb[0].mxu0
      %v2147 = vadd.f32 0.0, %v2146
      %v2148 = vpop.f32.mrb[0].mxu0
      %2149 = vdwg.mxu0
      %v2150 = vsel %vm1329, %v2112, -inf
      %2151 = vmax.xlane.f32.xlu0 %v2150
      %v2152 = vpop.xlane.xlu0 %2151
      %v2153 = vsel %vm1329, %v2117, -inf
      %2154 = vmax.xlane.f32.xlu0 %v2153
      %v2155 = vpop.xlane.xlu0 %2154
      %v2156 = vsel %vm1329, %v2122, -inf
      %2157 = vmax.xlane.f32.xlu0 %v2156
      %v2158 = vpop.xlane.xlu0 %2157
      %v2159 = vsel %vm1329, %v2127, -inf
      %2160 = vmax.xlane.f32.xlu0 %v2159
      %v2161 = vpop.xlane.xlu0 %2160
      %v2162 = vsel %vm1329, %v2132, -inf
      %2163 = vmax.xlane.f32.xlu0 %v2162
      %v2164 = vpop.xlane.xlu0 %2163
      %v2165 = vsel %vm1329, %v2137, -inf
      %2166 = vmax.xlane.f32.xlu0 %v2165
      %v2167 = vpop.xlane.xlu0 %2166
      %v2168 = vsel %vm1329, %v2142, -inf
      %2169 = vmax.xlane.f32.xlu0 %v2168
      %v2170 = vpop.xlane.xlu0 %2169
      %v2171 = vsel %vm1329, %v2147, -inf
      %2172 = vmax.xlane.f32.xlu0 %v2171
      %v2173 = vpop.xlane.xlu0 %2172
      %v2174 = vsub.f32 %v2112, %v2152
      %v2175 = vsub.f32 %v2117, %v2155
      %v2176 = vsub.f32 %v2122, %v2158
      %v2177 = vsub.f32 %v2127, %v2161
      %v2178 = vsub.f32 %v2132, %v2164
      %v2179 = vsub.f32 %v2137, %v2167
      %v2180 = vsub.f32 %v2142, %v2170
      %v2181 = vsub.f32 %v2147, %v2173
      %v2182 = vmul.f32 %v2174, 1.442695
      %v2183 = vpow.pop %v2182
      %v2184 = vmul.f32 %v2175, 1.442695
      %v2185 = vpow.pop %v2184
      %v2186 = vmul.f32 %v2176, 1.442695
      %v2187 = vpow.pop %v2186
      %v2188 = vmul.f32 %v2177, 1.442695
      %v2189 = vpow.pop %v2188
      %v2190 = vmul.f32 %v2178, 1.442695
      %v2191 = vpow.pop %v2190
      %v2192 = vmul.f32 %v2179, 1.442695
      %v2193 = vpow.pop %v2192
      %v2194 = vmul.f32 %v2180, 1.442695
      %v2195 = vpow.pop %v2194
      %v2196 = vmul.f32 %v2181, 1.442695
      %v2197 = vpow.pop %v2196
      %v2198 = vsel %vm1329, %v2183, 0.0
      %2199 = vadd.xlane.f32.xlu0 %v2198
      %v2200 = vpop.xlane.xlu0 %2199
      %v2201 = vsel %vm1329, %v2185, 0.0
      %2202 = vadd.xlane.f32.xlu0 %v2201
      %v2203 = vpop.xlane.xlu0 %2202
      %v2204 = vsel %vm1329, %v2187, 0.0
      %2205 = vadd.xlane.f32.xlu0 %v2204
      %v2206 = vpop.xlane.xlu0 %2205
      %v2207 = vsel %vm1329, %v2189, 0.0
      %2208 = vadd.xlane.f32.xlu0 %v2207
      %v2209 = vpop.xlane.xlu0 %2208
      %v2210 = vsel %vm1329, %v2191, 0.0
      %2211 = vadd.xlane.f32.xlu0 %v2210
      %v2212 = vpop.xlane.xlu0 %2211
      %v2213 = vsel %vm1329, %v2193, 0.0
      %2214 = vadd.xlane.f32.xlu0 %v2213
      %v2215 = vpop.xlane.xlu0 %2214
      %v2216 = vsel %vm1329, %v2195, 0.0
      %2217 = vadd.xlane.f32.xlu0 %v2216
      %v2218 = vpop.xlane.xlu0 %2217
      %v2219 = vsel %vm1329, %v2197, 0.0
      %2220 = vadd.xlane.f32.xlu0 %v2219
      %v2221 = vpop.xlane.xlu0 %2220
      %v2222 = vrcp.pop %v2200
      %v2223 = vrcp.pop %v2203
      %v2224 = vrcp.pop %v2206
      %v2225 = vrcp.pop %v2209
      %v2226 = vrcp.pop %v2212
      %v2227 = vrcp.pop %v2215
      %v2228 = vrcp.pop %v2218
      %v2229 = vrcp.pop %v2221
      %v2230 = vmul.f32 %v2183, %v2222
      %v2231 = vmul.f32 %v2185, %v2223
      %v2232 = vmul.f32 %v2187, %v2224
      %v2233 = vmul.f32 %v2189, %v2225
      %v2234 = vmul.f32 %v2191, %v2226
      %v2235 = vmul.f32 %v2193, %v2227
      %v2236 = vmul.f32 %v2195, %v2228
      %v2237 = vmul.f32 %v2197, %v2229
      %2238 = vrot.lane.b32.xlu0 %v1113, 56
      %v2239 = vpop.permute.xlu0 %2238
      %2240 = vrot.lane.b32.xlu0 %v1118, 56
      %v2241 = vpop.permute.xlu0 %2240
      %2242 = vrot.lane.b32.xlu0 %v1123, 56
      %v2243 = vpop.permute.xlu0 %2242
      %2244 = vrot.lane.b32.xlu0 %v1128, 56
      %v2245 = vpop.permute.xlu0 %2244
      %2246 = vrot.lane.b32.xlu0 %v1133, 56
      %v2247 = vpop.permute.xlu0 %2246
      %2248 = vrot.lane.b32.xlu0 %v1138, 56
      %v2249 = vpop.permute.xlu0 %2248
      %2250 = vrot.lane.b32.xlu0 %v1143, 56
      %v2251 = vpop.permute.xlu0 %2250
      %2252 = vrot.lane.b32.xlu0 %v1148, 56
      %v2253 = vpop.permute.xlu0 %2252
      %v2263 = vsel %vm1329, %v2230, 0
      %v2266 = vsel %vm1329, %v2231, 0
      %v2269 = vsel %vm1329, %v2232, 0
      %v2272 = vsel %vm1329, %v2233, 0
      %v2275 = vsel %vm1329, %v2234, 0
      %v2278 = vsel %vm1329, %v2235, 0
      %v2281 = vsel %vm1329, %v2236, 0
      %v2284 = vsel %vm1329, %v2237, 0
      %2286 = vmatprep.subr.mxu0 0.0
      %2287 = vmatpush1.msra.mxu0 %v2239
      %2288 = vmatprep.subr.mxu0 0.0
      %2289 = vmatpush1.msra.mxu0 %v2241
      %2290 = vmatprep.subr.mxu0 0.0
      %2291 = vmatpush1.msra.mxu0 %v2243
      %2292 = vmatprep.subr.mxu0 0.0
      %2293 = vmatpush1.msra.mxu0 %v2245
      %2294 = vmatprep.subr.mxu0 0.0
      %2295 = vmatpush1.msra.mxu0 %v2247
      %2296 = vmatprep.subr.mxu0 0.0
      %2297 = vmatpush1.msra.mxu0 %v2249
      %2298 = vmatprep.subr.mxu0 0.0
      %2299 = vmatpush1.msra.mxu0 %v2251
      %2300 = vmatprep.subr.mxu0 0.0
      %2301 = vmatpush1.msra.mxu0 %v2253
      %2302 = vmatprep.subr.mxu0 0.0
      %2303 = vmatpush1.msra.mxu0 0.0
      %2304 = vmatprep.subr.mxu0 0.0
      %2305 = vmatpush1.msra.mxu0 0.0
      %2306 = vmatprep.subr.mxu0 0.0
      %2307 = vmatpush1.msra.mxu0 0.0
      %2308 = vmatprep.subr.mxu0 0.0
      %2309 = vmatpush1.msra.mxu0 0.0
      %2310 = vmatprep.subr.mxu0 0.0
      %2311 = vmatpush1.msra.mxu0 0.0
      %2312 = vmatprep.subr.mxu0 0.0
      %2313 = vmatpush1.msra.mxu0 0.0
      %2314 = vmatprep.subr.mxu0 0.0
      %2315 = vmatpush1.msra.mxu0 0.0
      %2316 = vmatprep.subr.mxu0 0.0
      %2317 = vmatpush1.msra.mxu0 0.0
      %2318 = vmatprep.subr.mxu0 0.0
      %2319 = vmatpush1.msra.mxu0 0.0
      %2320 = vmatprep.subr.mxu0 0.0
      %2321 = vmatpush1.msra.mxu0 0.0
      %2322 = vmatprep.subr.mxu0 0.0
      %2323 = vmatpush1.msra.mxu0 0.0
      %2324 = vmatprep.subr.mxu0 0.0
      %2325 = vmatpush1.msra.mxu0 0.0
      %2326 = vmatprep.subr.mxu0 0.0
      %2327 = vmatpush1.msra.mxu0 0.0
      %2328 = vmatprep.subr.mxu0 0.0
      %2329 = vmatpush1.msra.mxu0 0.0
      %2330 = vmatprep.subr.mxu0 0.0
      %2331 = vmatpush1.msra.mxu0 0.0
      %2332 = vmatprep.subr.mxu0 0.0
      %2333 = vmatpush1.msra.mxu0 0.0
      %2334 = vmatprep.subr.mxu0 0.0
      %2335 = vmatpush1.msra.mxu0 0.0
      %2336 = vmatprep.subr.mxu0 0.0
      %2337 = vmatpush1.msra.mxu0 0.0
      %2338 = vmatprep.subr.mxu0 0.0
      %2339 = vmatpush1.msra.mxu0 0.0
      %2340 = vmatprep.subr.mxu0 0.0
      %2341 = vmatpush1.msra.mxu0 0.0
      %2342 = vmatprep.subr.mxu0 0.0
      %2343 = vmatpush1.msra.mxu0 0.0
      %2344 = vmatprep.subr.mxu0 0.0
      %2345 = vmatpush1.msra.mxu0 0.0
      %2346 = vmatprep.subr.mxu0 0.0
      %2347 = vmatpush1.msra.mxu0 0.0
      %2348 = vmatprep.subr.mxu0 0.0
      %2349 = vmatpush1.msra.mxu0 0.0
      %2350 = vmatprep.mubr.f32.mxu0 0.0
      %2351 = vmatmul.mubr.f32.gmra.mrb[0].mxu0 %v2263
      %v2352 = vpop.f32.mrb[0].mxu0
      %v2353 = vadd.f32 0.0, %v2352
      %v2354 = vpop.f32.mrb[0].mxu0
      %2355 = vmatprep.mubr.f32.mxu0 0.0
      %2356 = vmatmul.mubr.f32.gmra.mrb[0].mxu0 %v2266
      %v2357 = vpop.f32.mrb[0].mxu0
      %v2358 = vadd.f32 0.0, %v2357
      %v2359 = vpop.f32.mrb[0].mxu0
      %2360 = vmatprep.mubr.f32.mxu0 0.0
      %2361 = vmatmul.mubr.f32.gmra.mrb[0].mxu0 %v2269
      %v2362 = vpop.f32.mrb[0].mxu0
      %v2363 = vadd.f32 0.0, %v2362
      %v2364 = vpop.f32.mrb[0].mxu0
      %2365 = vmatprep.mubr.f32.mxu0 0.0
      %2366 = vmatmul.mubr.f32.gmra.mrb[0].mxu0 %v2272
      %v2367 = vpop.f32.mrb[0].mxu0
      %v2368 = vadd.f32 0.0, %v2367
      %v2369 = vpop.f32.mrb[0].mxu0
      %2370 = vmatprep.mubr.f32.mxu0 0.0
      %2371 = vmatmul.mubr.f32.gmra.mrb[0].mxu0 %v2275
      %v2372 = vpop.f32.mrb[0].mxu0
      %v2373 = vadd.f32 0.0, %v2372
      %v2374 = vpop.f32.mrb[0].mxu0
      %2375 = vmatprep.mubr.f32.mxu0 0.0
      %2376 = vmatmul.mubr.f32.gmra.mrb[0].mxu0 %v2278
      %v2377 = vpop.f32.mrb[0].mxu0
      %v2378 = vadd.f32 0.0, %v2377
      %v2379 = vpop.f32.mrb[0].mxu0
      %2380 = vmatprep.mubr.f32.mxu0 0.0
      %2381 = vmatmul.mubr.f32.gmra.mrb[0].mxu0 %v2281
      %v2382 = vpop.f32.mrb[0].mxu0
      %v2383 = vadd.f32 0.0, %v2382
      %v2384 = vpop.f32.mrb[0].mxu0
      %2385 = vmatprep.mubr.f32.mxu0 0.0
      %2386 = vmatmul.mubr.f32.gmra.mrb[0].mxu0 %v2284
      %v2387 = vpop.f32.mrb[0].mxu0
      %v2388 = vadd.f32 0.0, %v2387
      %v2389 = vpop.f32.mrb[0].mxu0
      %2390 = vdwg.mxu0
      %2391 = vrot.lane.b32.xlu0 %v1151, 116
      %v2392 = vpop.permute.xlu0 %2391
      %2393 = vrot.lane.b32.xlu0 %v1152, 116
      %v2394 = vpop.permute.xlu0 %2393
      %2395 = vrot.lane.b32.xlu0 %v1153, 116
      %v2396 = vpop.permute.xlu0 %2395
      %2397 = vrot.lane.b32.xlu0 %v1154, 116
      %v2398 = vpop.permute.xlu0 %2397
      %2399 = vrot.lane.b32.xlu0 %v1155, 116
      %v2400 = vpop.permute.xlu0 %2399
      %2401 = vrot.lane.b32.xlu0 %v1156, 116
      %v2402 = vpop.permute.xlu0 %2401
      %2403 = vrot.lane.b32.xlu0 %v1157, 116
      %v2404 = vpop.permute.xlu0 %2403
      %2405 = vrot.lane.b32.xlu0 %v1158, 116
      %v2406 = vpop.permute.xlu0 %2405
      %2407 = vrot.lane.b32.xlu0 %v1113, 84
      %v2408 = vpop.permute.xlu0 %2407
      %2409 = vrot.lane.b32.xlu0 %v1118, 84
      %v2410 = vpop.permute.xlu0 %2409
      %2411 = vrot.lane.b32.xlu0 %v1123, 84
      %v2412 = vpop.permute.xlu0 %2411
      %2413 = vrot.lane.b32.xlu0 %v1128, 84
      %v2414 = vpop.permute.xlu0 %2413
      %2415 = vrot.lane.b32.xlu0 %v1133, 84
      %v2416 = vpop.permute.xlu0 %2415
      %2417 = vrot.lane.b32.xlu0 %v1138, 84
      %v2418 = vpop.permute.xlu0 %2417
      %2419 = vrot.lane.b32.xlu0 %v1143, 84
      %v2420 = vpop.permute.xlu0 %2419
      %2421 = vrot.lane.b32.xlu0 %v1148, 84
      %v2422 = vpop.permute.xlu0 %2421
      %v2423 = vsel %vm1183, %v2392, 0
      %v2425 = vsel %vm1183, %v2394, 0
      %v2427 = vsel %vm1183, %v2396, 0
      %v2429 = vsel %vm1183, %v2398, 0
      %v2431 = vsel %vm1183, %v2400, 0
      %v2433 = vsel %vm1183, %v2402, 0
      %v2435 = vsel %vm1183, %v2404, 0
      %v2437 = vsel %vm1183, %v2406, 0
      %v2439 = vsel %vm1183, %v2408, 0
      %v2441 = vsel %vm1183, %v2410, 0
      %v2443 = vsel %vm1183, %v2412, 0
      %v2445 = vsel %vm1183, %v2414, 0
      %v2447 = vsel %vm1183, %v2416, 0
      %v2449 = vsel %vm1183, %v2418, 0
      %v2451 = vsel %vm1183, %v2420, 0
      %v2453 = vsel %vm1183, %v2422, 0
      %2455 = vmatprep.subr.mxu0 0.0
      %2456 = vmatpush1.xpose.msra.mxu0 %v2439
      %2457 = vmatprep.subr.mxu0 0.0
      %2458 = vmatpush1.xpose.msra.mxu0 %v2441
      %2459 = vmatprep.subr.mxu0 0.0
      %2460 = vmatpush1.xpose.msra.mxu0 %v2443
      %2461 = vmatprep.subr.mxu0 0.0
      %2462 = vmatpush1.xpose.msra.mxu0 %v2445
      %2463 = vmatprep.subr.mxu0 0.0
      %2464 = vmatpush1.xpose.msra.mxu0 %v2447
      %2465 = vmatprep.subr.mxu0 0.0
      %2466 = vmatpush1.xpose.msra.mxu0 %v2449
      %2467 = vmatprep.subr.mxu0 0.0
      %2468 = vmatpush1.xpose.msra.mxu0 %v2451
      %2469 = vmatprep.subr.mxu0 0.0
      %2470 = vmatpush1.xpose.msra.mxu0 %v2453
      %2471 = vmatprep.subr.mxu0 0.0
      %2472 = vmatpush1.xpose.msra.mxu0 0.0
      %2473 = vmatprep.subr.mxu0 0.0
      %2474 = vmatpush1.xpose.msra.mxu0 0.0
      %2475 = vmatprep.subr.mxu0 0.0
      %2476 = vmatpush1.xpose.msra.mxu0 0.0
      %2477 = vmatprep.subr.mxu0 0.0
      %2478 = vmatpush1.xpose.msra.mxu0 0.0
      %2479 = vmatprep.subr.mxu0 0.0
      %2480 = vmatpush1.xpose.msra.mxu0 0.0
      %2481 = vmatprep.subr.mxu0 0.0
      %2482 = vmatpush1.xpose.msra.mxu0 0.0
      %2483 = vmatprep.subr.mxu0 0.0
      %2484 = vmatpush1.xpose.msra.mxu0 0.0
      %2485 = vmatprep.subr.mxu0 0.0
      %2486 = vmatpush1.xpose.msra.mxu0 0.0
      %2487 = vmatprep.subr.mxu0 0.0
      %2488 = vmatpush1.xpose.msra.mxu0 0.0
      %2489 = vmatprep.subr.mxu0 0.0
      %2490 = vmatpush1.xpose.msra.mxu0 0.0
      %2491 = vmatprep.subr.mxu0 0.0
      %2492 = vmatpush1.xpose.msra.mxu0 0.0
      %2493 = vmatprep.subr.mxu0 0.0
      %2494 = vmatpush1.xpose.msra.mxu0 0.0
      %2495 = vmatprep.subr.mxu0 0.0
      %2496 = vmatpush1.xpose.msra.mxu0 0.0
      %2497 = vmatprep.subr.mxu0 0.0
      %2498 = vmatpush1.xpose.msra.mxu0 0.0
      %2499 = vmatprep.subr.mxu0 0.0
      %2500 = vmatpush1.xpose.msra.mxu0 0.0
      %2501 = vmatprep.subr.mxu0 0.0
      %2502 = vmatpush1.xpose.msra.mxu0 0.0
      %2503 = vmatprep.subr.mxu0 0.0
      %2504 = vmatpush1.xpose.msra.mxu0 0.0
      %2505 = vmatprep.subr.mxu0 0.0
      %2506 = vmatpush1.xpose.msra.mxu0 0.0
      %2507 = vmatprep.subr.mxu0 0.0
      %2508 = vmatpush1.xpose.msra.mxu0 0.0
      %2509 = vmatprep.subr.mxu0 0.0
      %2510 = vmatpush1.xpose.msra.mxu0 0.0
      %2511 = vmatprep.subr.mxu0 0.0
      %2512 = vmatpush1.xpose.msra.mxu0 0.0
      %2513 = vmatprep.subr.mxu0 0.0
      %2514 = vmatpush1.xpose.msra.mxu0 0.0
      %2515 = vmatprep.subr.mxu0 0.0
      %2516 = vmatpush1.xpose.msra.mxu0 0.0
      %2517 = vmatprep.subr.mxu0 0.0
      %2518 = vmatpush1.xpose.msra.mxu0 0.0
      %2519 = vmatprep.mubr.f32.mxu0 0.0
      %2520 = vmatmul.mubr.f32.gmra.mrb[0].mxu0 %v2423
      %v2521 = vpop.f32.mrb[0].mxu0
      %v2522 = vadd.f32 0.0, %v2521
      %v2523 = vpop.f32.mrb[0].mxu0
      %2524 = vmatprep.mubr.f32.mxu0 0.0
      %2525 = vmatmul.mubr.f32.gmra.mrb[0].mxu0 %v2425
      %v2526 = vpop.f32.mrb[0].mxu0
      %v2527 = vadd.f32 0.0, %v2526
      %v2528 = vpop.f32.mrb[0].mxu0
      %2529 = vmatprep.mubr.f32.mxu0 0.0
      %2530 = vmatmul.mubr.f32.gmra.mrb[0].mxu0 %v2427
      %v2531 = vpop.f32.mrb[0].mxu0
      %v2532 = vadd.f32 0.0, %v2531
      %v2533 = vpop.f32.mrb[0].mxu0
      %2534 = vmatprep.mubr.f32.mxu0 0.0
      %2535 = vmatmul.mubr.f32.gmra.mrb[0].mxu0 %v2429
      %v2536 = vpop.f32.mrb[0].mxu0
      %v2537 = vadd.f32 0.0, %v2536
      %v2538 = vpop.f32.mrb[0].mxu0
      %2539 = vmatprep.mubr.f32.mxu0 0.0
      %2540 = vmatmul.mubr.f32.gmra.mrb[0].mxu0 %v2431
      %v2541 = vpop.f32.mrb[0].mxu0
      %v2542 = vadd.f32 0.0, %v2541
      %v2543 = vpop.f32.mrb[0].mxu0
      %2544 = vmatprep.mubr.f32.mxu0 0.0
      %2545 = vmatmul.mubr.f32.gmra.mrb[0].mxu0 %v2433
      %v2546 = vpop.f32.mrb[0].mxu0
      %v2547 = vadd.f32 0.0, %v2546
      %v2548 = vpop.f32.mrb[0].mxu0
      %2549 = vmatprep.mubr.f32.mxu0 0.0
      %2550 = vmatmul.mubr.f32.gmra.mrb[0].mxu0 %v2435
      %v2551 = vpop.f32.mrb[0].mxu0
      %v2552 = vadd.f32 0.0, %v2551
      %v2553 = vpop.f32.mrb[0].mxu0
      %2554 = vmatprep.mubr.f32.mxu0 0.0
      %2555 = vmatmul.mubr.f32.gmra.mrb[0].mxu0 %v2437
      %v2556 = vpop.f32.mrb[0].mxu0
      %v2557 = vadd.f32 0.0, %v2556
      %v2558 = vpop.f32.mrb[0].mxu0
      %2559 = vdwg.mxu0
      %v2560 = vsel %vm1329, %v2522, -inf
      %2561 = vmax.xlane.f32.xlu0 %v2560
      %v2562 = vpop.xlane.xlu0 %2561
      %v2563 = vsel %vm1329, %v2527, -inf
      %2564 = vmax.xlane.f32.xlu0 %v2563
      %v2565 = vpop.xlane.xlu0 %2564
      %v2566 = vsel %vm1329, %v2532, -inf
      %2567 = vmax.xlane.f32.xlu0 %v2566
      %v2568 = vpop.xlane.xlu0 %2567
      %v2569 = vsel %vm1329, %v2537, -inf
      %2570 = vmax.xlane.f32.xlu0 %v2569
      %v2571 = vpop.xlane.xlu0 %2570
      %v2572 = vsel %vm1329, %v2542, -inf
      %2573 = vmax.xlane.f32.xlu0 %v2572
      %v2574 = vpop.xlane.xlu0 %2573
      %v2575 = vsel %vm1329, %v2547, -inf
      %2576 = vmax.xlane.f32.xlu0 %v2575
      %v2577 = vpop.xlane.xlu0 %2576
      %v2578 = vsel %vm1329, %v2552, -inf
      %2579 = vmax.xlane.f32.xlu0 %v2578
      %v2580 = vpop.xlane.xlu0 %2579
      %v2581 = vsel %vm1329, %v2557, -inf
      %2582 = vmax.xlane.f32.xlu0 %v2581
      %v2583 = vpop.xlane.xlu0 %2582
      %v2584 = vsub.f32 %v2522, %v2562
      %v2585 = vsub.f32 %v2527, %v2565
      %v2586 = vsub.f32 %v2532, %v2568
      %v2587 = vsub.f32 %v2537, %v2571
      %v2588 = vsub.f32 %v2542, %v2574
      %v2589 = vsub.f32 %v2547, %v2577
      %v2590 = vsub.f32 %v2552, %v2580
      %v2591 = vsub.f32 %v2557, %v2583
      %v2592 = vmul.f32 %v2584, 1.442695
      %v2593 = vpow.pop %v2592
      %v2594 = vmul.f32 %v2585, 1.442695
      %v2595 = vpow.pop %v2594
      %v2596 = vmul.f32 %v2586, 1.442695
      %v2597 = vpow.pop %v2596
      %v2598 = vmul.f32 %v2587, 1.442695
      %v2599 = vpow.pop %v2598
      %v2600 = vmul.f32 %v2588, 1.442695
      %v2601 = vpow.pop %v2600
      %v2602 = vmul.f32 %v2589, 1.442695
      %v2603 = vpow.pop %v2602
      %v2604 = vmul.f32 %v2590, 1.442695
      %v2605 = vpow.pop %v2604
      %v2606 = vmul.f32 %v2591, 1.442695
      %v2607 = vpow.pop %v2606
      %v2608 = vsel %vm1329, %v2593, 0.0
      %2609 = vadd.xlane.f32.xlu0 %v2608
      %v2610 = vpop.xlane.xlu0 %2609
      %v2611 = vsel %vm1329, %v2595, 0.0
      %2612 = vadd.xlane.f32.xlu0 %v2611
      %v2613 = vpop.xlane.xlu0 %2612
      %v2614 = vsel %vm1329, %v2597, 0.0
      %2615 = vadd.xlane.f32.xlu0 %v2614
      %v2616 = vpop.xlane.xlu0 %2615
      %v2617 = vsel %vm1329, %v2599, 0.0
      %2618 = vadd.xlane.f32.xlu0 %v2617
      %v2619 = vpop.xlane.xlu0 %2618
      %v2620 = vsel %vm1329, %v2601, 0.0
      %2621 = vadd.xlane.f32.xlu0 %v2620
      %v2622 = vpop.xlane.xlu0 %2621
      %v2623 = vsel %vm1329, %v2603, 0.0
      %2624 = vadd.xlane.f32.xlu0 %v2623
      %v2625 = vpop.xlane.xlu0 %2624
      %v2626 = vsel %vm1329, %v2605, 0.0
      %2627 = vadd.xlane.f32.xlu0 %v2626
      %v2628 = vpop.xlane.xlu0 %2627
      %v2629 = vsel %vm1329, %v2607, 0.0
      %2630 = vadd.xlane.f32.xlu0 %v2629
      %v2631 = vpop.xlane.xlu0 %2630
      %v2632 = vrcp.pop %v2610
      %v2633 = vrcp.pop %v2613
      %v2634 = vrcp.pop %v2616
      %v2635 = vrcp.pop %v2619
      %v2636 = vrcp.pop %v2622
      %v2637 = vrcp.pop %v2625
      %v2638 = vrcp.pop %v2628
      %v2639 = vrcp.pop %v2631
      %v2640 = vmul.f32 %v2593, %v2632
      %v2641 = vmul.f32 %v2595, %v2633
      %v2642 = vmul.f32 %v2597, %v2634
      %v2643 = vmul.f32 %v2599, %v2635
      %v2644 = vmul.f32 %v2601, %v2636
      %v2645 = vmul.f32 %v2603, %v2637
      %v2646 = vmul.f32 %v2605, %v2638
      %v2647 = vmul.f32 %v2607, %v2639
      %2648 = vrot.lane.b32.xlu0 %v1113, 52
      %v2649 = vpop.permute.xlu0 %2648
      %2650 = vrot.lane.b32.xlu0 %v1118, 52
      %v2651 = vpop.permute.xlu0 %2650
      %2652 = vrot.lane.b32.xlu0 %v1123, 52
      %v2653 = vpop.permute.xlu0 %2652
      %2654 = vrot.lane.b32.xlu0 %v1128, 52
      %v2655 = vpop.permute.xlu0 %2654
      %2656 = vrot.lane.b32.xlu0 %v1133, 52
      %v2657 = vpop.permute.xlu0 %2656
      %2658 = vrot.lane.b32.xlu0 %v1138, 52
      %v2659 = vpop.permute.xlu0 %2658
      %2660 = vrot.lane.b32.xlu0 %v1143, 52
      %v2661 = vpop.permute.xlu0 %2660
      %2662 = vrot.lane.b32.xlu0 %v1148, 52
      %v2663 = vpop.permute.xlu0 %2662
      %v2673 = vsel %vm1329, %v2640, 0
      %v2676 = vsel %vm1329, %v2641, 0
      %v2679 = vsel %vm1329, %v2642, 0
      %v2682 = vsel %vm1329, %v2643, 0
      %v2685 = vsel %vm1329, %v2644, 0
      %v2688 = vsel %vm1329, %v2645, 0
      %v2691 = vsel %vm1329, %v2646, 0
      %v2694 = vsel %vm1329, %v2647, 0
      %2696 = vmatprep.subr.mxu0 0.0
      %2697 = vmatpush1.msra.mxu0 %v2649
      %2698 = vmatprep.subr.mxu0 0.0
      %2699 = vmatpush1.msra.mxu0 %v2651
      %2700 = vmatprep.subr.mxu0 0.0
      %2701 = vmatpush1.msra.mxu0 %v2653
      %2702 = vmatprep.subr.mxu0 0.0
      %2703 = vmatpush1.msra.mxu0 %v2655
      %2704 = vmatprep.subr.mxu0 0.0
      %2705 = vmatpush1.msra.mxu0 %v2657
      %2706 = vmatprep.subr.mxu0 0.0
      %2707 = vmatpush1.msra.mxu0 %v2659
      %2708 = vmatprep.subr.mxu0 0.0
      %2709 = vmatpush1.msra.mxu0 %v2661
      %2710 = vmatprep.subr.mxu0 0.0
      %2711 = vmatpush1.msra.mxu0 %v2663
      %2712 = vmatprep.subr.mxu0 0.0
      %2713 = vmatpush1.msra.mxu0 0.0
      %2714 = vmatprep.subr.mxu0 0.0
      %2715 = vmatpush1.msra.mxu0 0.0
      %2716 = vmatprep.subr.mxu0 0.0
      %2717 = vmatpush1.msra.mxu0 0.0
      %2718 = vmatprep.subr.mxu0 0.0
      %2719 = vmatpush1.msra.mxu0 0.0
      %2720 = vmatprep.subr.mxu0 0.0
      %2721 = vmatpush1.msra.mxu0 0.0
      %2722 = vmatprep.subr.mxu0 0.0
      %2723 = vmatpush1.msra.mxu0 0.0
      %2724 = vmatprep.subr.mxu0 0.0
      %2725 = vmatpush1.msra.mxu0 0.0
      %2726 = vmatprep.subr.mxu0 0.0
      %2727 = vmatpush1.msra.mxu0 0.0
      %2728 = vmatprep.subr.mxu0 0.0
      %2729 = vmatpush1.msra.mxu0 0.0
      %2730 = vmatprep.subr.mxu0 0.0
      %2731 = vmatpush1.msra.mxu0 0.0
      %2732 = vmatprep.subr.mxu0 0.0
      %2733 = vmatpush1.msra.mxu0 0.0
      %2734 = vmatprep.subr.mxu0 0.0
      %2735 = vmatpush1.msra.mxu0 0.0
      %2736 = vmatprep.subr.mxu0 0.0
      %2737 = vmatpush1.msra.mxu0 0.0
      %2738 = vmatprep.subr.mxu0 0.0
      %2739 = vmatpush1.msra.mxu0 0.0
      %2740 = vmatprep.subr.mxu0 0.0
      %2741 = vmatpush1.msra.mxu0 0.0
      %2742 = vmatprep.subr.mxu0 0.0
      %2743 = vmatpush1.msra.mxu0 0.0
      %2744 = vmatprep.subr.mxu0 0.0
      %2745 = vmatpush1.msra.mxu0 0.0
      %2746 = vmatprep.subr.mxu0 0.0
      %2747 = vmatpush1.msra.mxu0 0.0
      %2748 = vmatprep.subr.mxu0 0.0
      %2749 = vmatpush1.msra.mxu0 0.0
      %2750 = vmatprep.subr.mxu0 0.0
      %2751 = vmatpush1.msra.mxu0 0.0
      %2752 = vmatprep.subr.mxu0 0.0
      %2753 = vmatpush1.msra.mxu0 0.0
      %2754 = vmatprep.subr.mxu0 0.0
      %2755 = vmatpush1.msra.mxu0 0.0
      %2756 = vmatprep.subr.mxu0 0.0
      %2757 = vmatpush1.msra.mxu0 0.0
      %2758 = vmatprep.subr.mxu0 0.0
      %2759 = vmatpush1.msra.mxu0 0.0
      %2760 = vmatprep.mubr.f32.mxu0 0.0
      %2761 = vmatmul.mubr.f32.gmra.mrb[0].mxu0 %v2673
      %v2762 = vpop.f32.mrb[0].mxu0
      %v2763 = vadd.f32 0.0, %v2762
      %v2764 = vpop.f32.mrb[0].mxu0
      %2765 = vmatprep.mubr.f32.mxu0 0.0
      %2766 = vmatmul.mubr.f32.gmra.mrb[0].mxu0 %v2676
      %v2767 = vpop.f32.mrb[0].mxu0
      %v2768 = vadd.f32 0.0, %v2767
      %v2769 = vpop.f32.mrb[0].mxu0
      %2770 = vmatprep.mubr.f32.mxu0 0.0
      %2771 = vmatmul.mubr.f32.gmra.mrb[0].mxu0 %v2679
      %v2772 = vpop.f32.mrb[0].mxu0
      %v2773 = vadd.f32 0.0, %v2772
      %v2774 = vpop.f32.mrb[0].mxu0
      %2775 = vmatprep.mubr.f32.mxu0 0.0
      %2776 = vmatmul.mubr.f32.gmra.mrb[0].mxu0 %v2682
      %v2777 = vpop.f32.mrb[0].mxu0
      %v2778 = vadd.f32 0.0, %v2777
      %v2779 = vpop.f32.mrb[0].mxu0
      %2780 = vmatprep.mubr.f32.mxu0 0.0
      %2781 = vmatmul.mubr.f32.gmra.mrb[0].mxu0 %v2685
      %v2782 = vpop.f32.mrb[0].mxu0
      %v2783 = vadd.f32 0.0, %v2782
      %v2784 = vpop.f32.mrb[0].mxu0
      %2785 = vmatprep.mubr.f32.mxu0 0.0
      %2786 = vmatmul.mubr.f32.gmra.mrb[0].mxu0 %v2688
      %v2787 = vpop.f32.mrb[0].mxu0
      %v2788 = vadd.f32 0.0, %v2787
      %v2789 = vpop.f32.mrb[0].mxu0
      %2790 = vmatprep.mubr.f32.mxu0 0.0
      %2791 = vmatmul.mubr.f32.gmra.mrb[0].mxu0 %v2691
      %v2792 = vpop.f32.mrb[0].mxu0
      %v2793 = vadd.f32 0.0, %v2792
      %v2794 = vpop.f32.mrb[0].mxu0
      %2795 = vmatprep.mubr.f32.mxu0 0.0
      %2796 = vmatmul.mubr.f32.gmra.mrb[0].mxu0 %v2694
      %v2797 = vpop.f32.mrb[0].mxu0
      %v2798 = vadd.f32 0.0, %v2797
      %v2799 = vpop.f32.mrb[0].mxu0
      %2800 = vdwg.mxu0
      %2801 = vrot.lane.b32.xlu0 %v1151, 112
      %v2802 = vpop.permute.xlu0 %2801
      %2803 = vrot.lane.b32.xlu0 %v1152, 112
      %v2804 = vpop.permute.xlu0 %2803
      %2805 = vrot.lane.b32.xlu0 %v1153, 112
      %v2806 = vpop.permute.xlu0 %2805
      %2807 = vrot.lane.b32.xlu0 %v1154, 112
      %v2808 = vpop.permute.xlu0 %2807
      %2809 = vrot.lane.b32.xlu0 %v1155, 112
      %v2810 = vpop.permute.xlu0 %2809
      %2811 = vrot.lane.b32.xlu0 %v1156, 112
      %v2812 = vpop.permute.xlu0 %2811
      %2813 = vrot.lane.b32.xlu0 %v1157, 112
      %v2814 = vpop.permute.xlu0 %2813
      %2815 = vrot.lane.b32.xlu0 %v1158, 112
      %v2816 = vpop.permute.xlu0 %2815
      %2817 = vrot.lane.b32.xlu0 %v1113, 80
      %v2818 = vpop.permute.xlu0 %2817
      %2819 = vrot.lane.b32.xlu0 %v1118, 80
      %v2820 = vpop.permute.xlu0 %2819
      %2821 = vrot.lane.b32.xlu0 %v1123, 80
      %v2822 = vpop.permute.xlu0 %2821
      %2823 = vrot.lane.b32.xlu0 %v1128, 80
      %v2824 = vpop.permute.xlu0 %2823
      %2825 = vrot.lane.b32.xlu0 %v1133, 80
      %v2826 = vpop.permute.xlu0 %2825
      %2827 = vrot.lane.b32.xlu0 %v1138, 80
      %v2828 = vpop.permute.xlu0 %2827
      %2829 = vrot.lane.b32.xlu0 %v1143, 80
      %v2830 = vpop.permute.xlu0 %2829
      %2831 = vrot.lane.b32.xlu0 %v1148, 80
      %v2832 = vpop.permute.xlu0 %2831
      %v2833 = vsel %vm1183, %v2802, 0
      %v2835 = vsel %vm1183, %v2804, 0
      %v2837 = vsel %vm1183, %v2806, 0
      %v2839 = vsel %vm1183, %v2808, 0
      %v2841 = vsel %vm1183, %v2810, 0
      %v2843 = vsel %vm1183, %v2812, 0
      %v2845 = vsel %vm1183, %v2814, 0
      %v2847 = vsel %vm1183, %v2816, 0
      %v2849 = vsel %vm1183, %v2818, 0
      %v2851 = vsel %vm1183, %v2820, 0
      %v2853 = vsel %vm1183, %v2822, 0
      %v2855 = vsel %vm1183, %v2824, 0
      %v2857 = vsel %vm1183, %v2826, 0
      %v2859 = vsel %vm1183, %v2828, 0
      %v2861 = vsel %vm1183, %v2830, 0
      %v2863 = vsel %vm1183, %v2832, 0
      %2865 = vmatprep.subr.mxu0 0.0
      %2866 = vmatpush1.xpose.msra.mxu0 %v2849
      %2867 = vmatprep.subr.mxu0 0.0
      %2868 = vmatpush1.xpose.msra.mxu0 %v2851
      %2869 = vmatprep.subr.mxu0 0.0
      %2870 = vmatpush1.xpose.msra.mxu0 %v2853
      %2871 = vmatprep.subr.mxu0 0.0
      %2872 = vmatpush1.xpose.msra.mxu0 %v2855
      %2873 = vmatprep.subr.mxu0 0.0
      %2874 = vmatpush1.xpose.msra.mxu0 %v2857
      %2875 = vmatprep.subr.mxu0 0.0
      %2876 = vmatpush1.xpose.msra.mxu0 %v2859
      %2877 = vmatprep.subr.mxu0 0.0
      %2878 = vmatpush1.xpose.msra.mxu0 %v2861
      %2879 = vmatprep.subr.mxu0 0.0
      %2880 = vmatpush1.xpose.msra.mxu0 %v2863
      %2881 = vmatprep.subr.mxu0 0.0
      %2882 = vmatpush1.xpose.msra.mxu0 0.0
      %2883 = vmatprep.subr.mxu0 0.0
      %2884 = vmatpush1.xpose.msra.mxu0 0.0
      %2885 = vmatprep.subr.mxu0 0.0
      %2886 = vmatpush1.xpose.msra.mxu0 0.0
      %2887 = vmatprep.subr.mxu0 0.0
      %2888 = vmatpush1.xpose.msra.mxu0 0.0
      %2889 = vmatprep.subr.mxu0 0.0
      %2890 = vmatpush1.xpose.msra.mxu0 0.0
      %2891 = vmatprep.subr.mxu0 0.0
      %2892 = vmatpush1.xpose.msra.mxu0 0.0
      %2893 = vmatprep.subr.mxu0 0.0
      %2894 = vmatpush1.xpose.msra.mxu0 0.0
      %2895 = vmatprep.subr.mxu0 0.0
      %2896 = vmatpush1.xpose.msra.mxu0 0.0
      %2897 = vmatprep.subr.mxu0 0.0
      %2898 = vmatpush1.xpose.msra.mxu0 0.0
      %2899 = vmatprep.subr.mxu0 0.0
      %2900 = vmatpush1.xpose.msra.mxu0 0.0
      %2901 = vmatprep.subr.mxu0 0.0
      %2902 = vmatpush1.xpose.msra.mxu0 0.0
      %2903 = vmatprep.subr.mxu0 0.0
      %2904 = vmatpush1.xpose.msra.mxu0 0.0
      %2905 = vmatprep.subr.mxu0 0.0
      %2906 = vmatpush1.xpose.msra.mxu0 0.0
      %2907 = vmatprep.subr.mxu0 0.0
      %2908 = vmatpush1.xpose.msra.mxu0 0.0
      %2909 = vmatprep.subr.mxu0 0.0
      %2910 = vmatpush1.xpose.msra.mxu0 0.0
      %2911 = vmatprep.subr.mxu0 0.0
      %2912 = vmatpush1.xpose.msra.mxu0 0.0
      %2913 = vmatprep.subr.mxu0 0.0
      %2914 = vmatpush1.xpose.msra.mxu0 0.0
      %2915 = vmatprep.subr.mxu0 0.0
      %2916 = vmatpush1.xpose.msra.mxu0 0.0
      %2917 = vmatprep.subr.mxu0 0.0
      %2918 = vmatpush1.xpose.msra.mxu0 0.0
      %2919 = vmatprep.subr.mxu0 0.0
      %2920 = vmatpush1.xpose.msra.mxu0 0.0
      %2921 = vmatprep.subr.mxu0 0.0
      %2922 = vmatpush1.xpose.msra.mxu0 0.0
      %2923 = vmatprep.subr.mxu0 0.0
      %2924 = vmatpush1.xpose.msra.mxu0 0.0
      %2925 = vmatprep.subr.mxu0 0.0
      %2926 = vmatpush1.xpose.msra.mxu0 0.0
      %2927 = vmatprep.subr.mxu0 0.0
      %2928 = vmatpush1.xpose.msra.mxu0 0.0
      %2929 = vmatprep.mubr.f32.mxu0 0.0
      %2930 = vmatmul.mubr.f32.gmra.mrb[0].mxu0 %v2833
      %v2931 = vpop.f32.mrb[0].mxu0
      %v2932 = vadd.f32 0.0, %v2931
      %v2933 = vpop.f32.mrb[0].mxu0
      %2934 = vmatprep.mubr.f32.mxu0 0.0
      %2935 = vmatmul.mubr.f32.gmra.mrb[0].mxu0 %v2835
      %v2936 = vpop.f32.mrb[0].mxu0
      %v2937 = vadd.f32 0.0, %v2936
      %v2938 = vpop.f32.mrb[0].mxu0
      %2939 = vmatprep.mubr.f32.mxu0 0.0
      %2940 = vmatmul.mubr.f32.gmra.mrb[0].mxu0 %v2837
      %v2941 = vpop.f32.mrb[0].mxu0
      %v2942 = vadd.f32 0.0, %v2941
      %v2943 = vpop.f32.mrb[0].mxu0
      %2944 = vmatprep.mubr.f32.mxu0 0.0
      %2945 = vmatmul.mubr.f32.gmra.mrb[0].mxu0 %v2839
      %v2946 = vpop.f32.mrb[0].mxu0
      %v2947 = vadd.f32 0.0, %v2946
      %v2948 = vpop.f32.mrb[0].mxu0
      %2949 = vmatprep.mubr.f32.mxu0 0.0
      %2950 = vmatmul.mubr.f32.gmra.mrb[0].mxu0 %v2841
      %v2951 = vpop.f32.mrb[0].mxu0
      %v2952 = vadd.f32 0.0, %v2951
      %v2953 = vpop.f32.mrb[0].mxu0
      %2954 = vmatprep.mubr.f32.mxu0 0.0
      %2955 = vmatmul.mubr.f32.gmra.mrb[0].mxu0 %v2843
      %v2956 = vpop.f32.mrb[0].mxu0
      %v2957 = vadd.f32 0.0, %v2956
      %v2958 = vpop.f32.mrb[0].mxu0
      %2959 = vmatprep.mubr.f32.mxu0 0.0
      %2960 = vmatmul.mubr.f32.gmra.mrb[0].mxu0 %v2845
      %v2961 = vpop.f32.mrb[0].mxu0
      %v2962 = vadd.f32 0.0, %v2961
      %v2963 = vpop.f32.mrb[0].mxu0
      %2964 = vmatprep.mubr.f32.mxu0 0.0
      %2965 = vmatmul.mubr.f32.gmra.mrb[0].mxu0 %v2847
      %v2966 = vpop.f32.mrb[0].mxu0
      %v2967 = vadd.f32 0.0, %v2966
      %v2968 = vpop.f32.mrb[0].mxu0
      %2969 = vdwg.mxu0
      %v2970 = vsel %vm1329, %v2932, -inf
      %2971 = vmax.xlane.f32.xlu0 %v2970
      %v2972 = vpop.xlane.xlu0 %2971
      %v2973 = vsel %vm1329, %v2937, -inf
      %2974 = vmax.xlane.f32.xlu0 %v2973
      %v2975 = vpop.xlane.xlu0 %2974
      %v2976 = vsel %vm1329, %v2942, -inf
      %2977 = vmax.xlane.f32.xlu0 %v2976
      %v2978 = vpop.xlane.xlu0 %2977
      %v2979 = vsel %vm1329, %v2947, -inf
      %2980 = vmax.xlane.f32.xlu0 %v2979
      %v2981 = vpop.xlane.xlu0 %2980
      %v2982 = vsel %vm1329, %v2952, -inf
      %2983 = vmax.xlane.f32.xlu0 %v2982
      %v2984 = vpop.xlane.xlu0 %2983
      %v2985 = vsel %vm1329, %v2957, -inf
      %2986 = vmax.xlane.f32.xlu0 %v2985
      %v2987 = vpop.xlane.xlu0 %2986
      %v2988 = vsel %vm1329, %v2962, -inf
      %2989 = vmax.xlane.f32.xlu0 %v2988
      %v2990 = vpop.xlane.xlu0 %2989
      %v2991 = vsel %vm1329, %v2967, -inf
      %2992 = vmax.xlane.f32.xlu0 %v2991
      %v2993 = vpop.xlane.xlu0 %2992
      %v2994 = vsub.f32 %v2932, %v2972
      %v2995 = vsub.f32 %v2937, %v2975
      %v2996 = vsub.f32 %v2942, %v2978
      %v2997 = vsub.f32 %v2947, %v2981
      %v2998 = vsub.f32 %v2952, %v2984
      %v2999 = vsub.f32 %v2957, %v2987
      %v3000 = vsub.f32 %v2962, %v2990
      %v3001 = vsub.f32 %v2967, %v2993
      %v3002 = vmul.f32 %v2994, 1.442695
      %v3003 = vpow.pop %v3002
      %v3004 = vmul.f32 %v2995, 1.442695
      %v3005 = vpow.pop %v3004
      %v3006 = vmul.f32 %v2996, 1.442695
      %v3007 = vpow.pop %v3006
      %v3008 = vmul.f32 %v2997, 1.442695
      %v3009 = vpow.pop %v3008
      %v3010 = vmul.f32 %v2998, 1.442695
      %v3011 = vpow.pop %v3010
      %v3012 = vmul.f32 %v2999, 1.442695
      %v3013 = vpow.pop %v3012
      %v3014 = vmul.f32 %v3000, 1.442695
      %v3015 = vpow.pop %v3014
      %v3016 = vmul.f32 %v3001, 1.442695
      %v3017 = vpow.pop %v3016
      %v3018 = vsel %vm1329, %v3003, 0.0
      %3019 = vadd.xlane.f32.xlu0 %v3018
      %v3020 = vpop.xlane.xlu0 %3019
      %v3021 = vsel %vm1329, %v3005, 0.0
      %3022 = vadd.xlane.f32.xlu0 %v3021
      %v3023 = vpop.xlane.xlu0 %3022
      %v3024 = vsel %vm1329, %v3007, 0.0
      %3025 = vadd.xlane.f32.xlu0 %v3024
      %v3026 = vpop.xlane.xlu0 %3025
      %v3027 = vsel %vm1329, %v3009, 0.0
      %3028 = vadd.xlane.f32.xlu0 %v3027
      %v3029 = vpop.xlane.xlu0 %3028
      %v3030 = vsel %vm1329, %v3011, 0.0
      %3031 = vadd.xlane.f32.xlu0 %v3030
      %v3032 = vpop.xlane.xlu0 %3031
      %v3033 = vsel %vm1329, %v3013, 0.0
      %3034 = vadd.xlane.f32.xlu0 %v3033
      %v3035 = vpop.xlane.xlu0 %3034
      %v3036 = vsel %vm1329, %v3015, 0.0
      %3037 = vadd.xlane.f32.xlu0 %v3036
      %v3038 = vpop.xlane.xlu0 %3037
      %v3039 = vsel %vm1329, %v3017, 0.0
      %3040 = vadd.xlane.f32.xlu0 %v3039
      %v3041 = vpop.xlane.xlu0 %3040
      %v3042 = vrcp.pop %v3020
      %v3043 = vrcp.pop %v3023
      %v3044 = vrcp.pop %v3026
      %v3045 = vrcp.pop %v3029
      %v3046 = vrcp.pop %v3032
      %v3047 = vrcp.pop %v3035
      %v3048 = vrcp.pop %v3038
      %v3049 = vrcp.pop %v3041
      %v3050 = vmul.f32 %v3003, %v3042
      %v3051 = vmul.f32 %v3005, %v3043
      %v3052 = vmul.f32 %v3007, %v3044
      %v3053 = vmul.f32 %v3009, %v3045
      %v3054 = vmul.f32 %v3011, %v3046
      %v3055 = vmul.f32 %v3013, %v3047
      %v3056 = vmul.f32 %v3015, %v3048
      %v3057 = vmul.f32 %v3017, %v3049
      %3058 = vrot.lane.b32.xlu0 %v1113, 48
      %v3059 = vpop.permute.xlu0 %3058
      %3060 = vrot.lane.b32.xlu0 %v1118, 48
      %v3061 = vpop.permute.xlu0 %3060
      %3062 = vrot.lane.b32.xlu0 %v1123, 48
      %v3063 = vpop.permute.xlu0 %3062
      %3064 = vrot.lane.b32.xlu0 %v1128, 48
      %v3065 = vpop.permute.xlu0 %3064
      %3066 = vrot.lane.b32.xlu0 %v1133, 48
      %v3067 = vpop.permute.xlu0 %3066
      %3068 = vrot.lane.b32.xlu0 %v1138, 48
      %v3069 = vpop.permute.xlu0 %3068
      %3070 = vrot.lane.b32.xlu0 %v1143, 48
      %v3071 = vpop.permute.xlu0 %3070
      %3072 = vrot.lane.b32.xlu0 %v1148, 48
      %v3073 = vpop.permute.xlu0 %3072
      %v3083 = vsel %vm1329, %v3050, 0
      %v3086 = vsel %vm1329, %v3051, 0
      %v3089 = vsel %vm1329, %v3052, 0
      %v3092 = vsel %vm1329, %v3053, 0
      %v3095 = vsel %vm1329, %v3054, 0
      %v3098 = vsel %vm1329, %v3055, 0
      %v3101 = vsel %vm1329, %v3056, 0
      %v3104 = vsel %vm1329, %v3057, 0
      %3106 = vmatprep.subr.mxu0 0.0
      %3107 = vmatpush1.msra.mxu0 %v3059
      %3108 = vmatprep.subr.mxu0 0.0
      %3109 = vmatpush1.msra.mxu0 %v3061
      %3110 = vmatprep.subr.mxu0 0.0
      %3111 = vmatpush1.msra.mxu0 %v3063
      %3112 = vmatprep.subr.mxu0 0.0
      %3113 = vmatpush1.msra.mxu0 %v3065
      %3114 = vmatprep.subr.mxu0 0.0
      %3115 = vmatpush1.msra.mxu0 %v3067
      %3116 = vmatprep.subr.mxu0 0.0
      %3117 = vmatpush1.msra.mxu0 %v3069
      %3118 = vmatprep.subr.mxu0 0.0
      %3119 = vmatpush1.msra.mxu0 %v3071
      %3120 = vmatprep.subr.mxu0 0.0
      %3121 = vmatpush1.msra.mxu0 %v3073
      %3122 = vmatprep.subr.mxu0 0.0
      %3123 = vmatpush1.msra.mxu0 0.0
      %3124 = vmatprep.subr.mxu0 0.0
      %3125 = vmatpush1.msra.mxu0 0.0
      %3126 = vmatprep.subr.mxu0 0.0
      %3127 = vmatpush1.msra.mxu0 0.0
      %3128 = vmatprep.subr.mxu0 0.0
      %3129 = vmatpush1.msra.mxu0 0.0
      %3130 = vmatprep.subr.mxu0 0.0
      %3131 = vmatpush1.msra.mxu0 0.0
      %3132 = vmatprep.subr.mxu0 0.0
      %3133 = vmatpush1.msra.mxu0 0.0
      %3134 = vmatprep.subr.mxu0 0.0
      %3135 = vmatpush1.msra.mxu0 0.0
      %3136 = vmatprep.subr.mxu0 0.0
      %3137 = vmatpush1.msra.mxu0 0.0
      %3138 = vmatprep.subr.mxu0 0.0
      %3139 = vmatpush1.msra.mxu0 0.0
      %3140 = vmatprep.subr.mxu0 0.0
      %3141 = vmatpush1.msra.mxu0 0.0
      %3142 = vmatprep.subr.mxu0 0.0
      %3143 = vmatpush1.msra.mxu0 0.0
      %3144 = vmatprep.subr.mxu0 0.0
      %3145 = vmatpush1.msra.mxu0 0.0
      %3146 = vmatprep.subr.mxu0 0.0
      %3147 = vmatpush1.msra.mxu0 0.0
      %3148 = vmatprep.subr.mxu0 0.0
      %3149 = vmatpush1.msra.mxu0 0.0
      %3150 = vmatprep.subr.mxu0 0.0
      %3151 = vmatpush1.msra.mxu0 0.0
      %3152 = vmatprep.subr.mxu0 0.0
      %3153 = vmatpush1.msra.mxu0 0.0
      %3154 = vmatprep.subr.mxu0 0.0
      %3155 = vmatpush1.msra.mxu0 0.0
      %3156 = vmatprep.subr.mxu0 0.0
      %3157 = vmatpush1.msra.mxu0 0.0
      %3158 = vmatprep.subr.mxu0 0.0
      %3159 = vmatpush1.msra.mxu0 0.0
      %3160 = vmatprep.subr.mxu0 0.0
      %3161 = vmatpush1.msra.mxu0 0.0
      %3162 = vmatprep.subr.mxu0 0.0
      %3163 = vmatpush1.msra.mxu0 0.0
      %3164 = vmatprep.subr.mxu0 0.0
      %3165 = vmatpush1.msra.mxu0 0.0
      %3166 = vmatprep.subr.mxu0 0.0
      %3167 = vmatpush1.msra.mxu0 0.0
      %3168 = vmatprep.subr.mxu0 0.0
      %3169 = vmatpush1.msra.mxu0 0.0
      %3170 = vmatprep.mubr.f32.mxu0 0.0
      %3171 = vmatmul.mubr.f32.gmra.mrb[0].mxu0 %v3083
      %v3172 = vpop.f32.mrb[0].mxu0
      %v3173 = vadd.f32 0.0, %v3172
      %v3174 = vpop.f32.mrb[0].mxu0
      %3175 = vmatprep.mubr.f32.mxu0 0.0
      %3176 = vmatmul.mubr.f32.gmra.mrb[0].mxu0 %v3086
      %v3177 = vpop.f32.mrb[0].mxu0
      %v3178 = vadd.f32 0.0, %v3177
      %v3179 = vpop.f32.mrb[0].mxu0
      %3180 = vmatprep.mubr.f32.mxu0 0.0
      %3181 = vmatmul.mubr.f32.gmra.mrb[0].mxu0 %v3089
      %v3182 = vpop.f32.mrb[0].mxu0
      %v3183 = vadd.f32 0.0, %v3182
      %v3184 = vpop.f32.mrb[0].mxu0
      %3185 = vmatprep.mubr.f32.mxu0 0.0
      %3186 = vmatmul.mubr.f32.gmra.mrb[0].mxu0 %v3092
      %v3187 = vpop.f32.mrb[0].mxu0
      %v3188 = vadd.f32 0.0, %v3187
      %v3189 = vpop.f32.mrb[0].mxu0
      %3190 = vmatprep.mubr.f32.mxu0 0.0
      %3191 = vmatmul.mubr.f32.gmra.mrb[0].mxu0 %v3095
      %v3192 = vpop.f32.mrb[0].mxu0
      %v3193 = vadd.f32 0.0, %v3192
      %v3194 = vpop.f32.mrb[0].mxu0
      %3195 = vmatprep.mubr.f32.mxu0 0.0
      %3196 = vmatmul.mubr.f32.gmra.mrb[0].mxu0 %v3098
      %v3197 = vpop.f32.mrb[0].mxu0
      %v3198 = vadd.f32 0.0, %v3197
      %v3199 = vpop.f32.mrb[0].mxu0
      %3200 = vmatprep.mubr.f32.mxu0 0.0
      %3201 = vmatmul.mubr.f32.gmra.mrb[0].mxu0 %v3101
      %v3202 = vpop.f32.mrb[0].mxu0
      %v3203 = vadd.f32 0.0, %v3202
      %v3204 = vpop.f32.mrb[0].mxu0
      %3205 = vmatprep.mubr.f32.mxu0 0.0
      %3206 = vmatmul.mubr.f32.gmra.mrb[0].mxu0 %v3104
      %v3207 = vpop.f32.mrb[0].mxu0
      %v3208 = vadd.f32 0.0, %v3207
      %v3209 = vpop.f32.mrb[0].mxu0
      %3210 = vdwg.mxu0
      %3211 = vrot.lane.b32.xlu0 %v1151, 108
      %v3212 = vpop.permute.xlu0 %3211
      %3213 = vrot.lane.b32.xlu0 %v1152, 108
      %v3214 = vpop.permute.xlu0 %3213
      %3215 = vrot.lane.b32.xlu0 %v1153, 108
      %v3216 = vpop.permute.xlu0 %3215
      %3217 = vrot.lane.b32.xlu0 %v1154, 108
      %v3218 = vpop.permute.xlu0 %3217
      %3219 = vrot.lane.b32.xlu0 %v1155, 108
      %v3220 = vpop.permute.xlu0 %3219
      %3221 = vrot.lane.b32.xlu0 %v1156, 108
      %v3222 = vpop.permute.xlu0 %3221
      %3223 = vrot.lane.b32.xlu0 %v1157, 108
      %v3224 = vpop.permute.xlu0 %3223
      %3225 = vrot.lane.b32.xlu0 %v1158, 108
      %v3226 = vpop.permute.xlu0 %3225
      %3227 = vrot.lane.b32.xlu0 %v1113, 76
      %v3228 = vpop.permute.xlu0 %3227
      %3229 = vrot.lane.b32.xlu0 %v1118, 76
      %v3230 = vpop.permute.xlu0 %3229
      %3231 = vrot.lane.b32.xlu0 %v1123, 76
      %v3232 = vpop.permute.xlu0 %3231
      %3233 = vrot.lane.b32.xlu0 %v1128, 76
      %v3234 = vpop.permute.xlu0 %3233
      %3235 = vrot.lane.b32.xlu0 %v1133, 76
      %v3236 = vpop.permute.xlu0 %3235
      %3237 = vrot.lane.b32.xlu0 %v1138, 76
      %v3238 = vpop.permute.xlu0 %3237
      %3239 = vrot.lane.b32.xlu0 %v1143, 76
      %v3240 = vpop.permute.xlu0 %3239
      %3241 = vrot.lane.b32.xlu0 %v1148, 76
      %v3242 = vpop.permute.xlu0 %3241
      %v3243 = vsel %vm1183, %v3212, 0
      %v3245 = vsel %vm1183, %v3214, 0
      %v3247 = vsel %vm1183, %v3216, 0
      %v3249 = vsel %vm1183, %v3218, 0
      %v3251 = vsel %vm1183, %v3220, 0
      %v3253 = vsel %vm1183, %v3222, 0
      %v3255 = vsel %vm1183, %v3224, 0
      %v3257 = vsel %vm1183, %v3226, 0
      %v3259 = vsel %vm1183, %v3228, 0
      %v3261 = vsel %vm1183, %v3230, 0
      %v3263 = vsel %vm1183, %v3232, 0
      %v3265 = vsel %vm1183, %v3234, 0
      %v3267 = vsel %vm1183, %v3236, 0
      %v3269 = vsel %vm1183, %v3238, 0
      %v3271 = vsel %vm1183, %v3240, 0
      %v3273 = vsel %vm1183, %v3242, 0
      %3275 = vmatprep.subr.mxu0 0.0
      %3276 = vmatpush1.xpose.msra.mxu0 %v3259
      %3277 = vmatprep.subr.mxu0 0.0
      %3278 = vmatpush1.xpose.msra.mxu0 %v3261
      %3279 = vmatprep.subr.mxu0 0.0
      %3280 = vmatpush1.xpose.msra.mxu0 %v3263
      %3281 = vmatprep.subr.mxu0 0.0
      %3282 = vmatpush1.xpose.msra.mxu0 %v3265
      %3283 = vmatprep.subr.mxu0 0.0
      %3284 = vmatpush1.xpose.msra.mxu0 %v3267
      %3285 = vmatprep.subr.mxu0 0.0
      %3286 = vmatpush1.xpose.msra.mxu0 %v3269
      %3287 = vmatprep.subr.mxu0 0.0
      %3288 = vmatpush1.xpose.msra.mxu0 %v3271
      %3289 = vmatprep.subr.mxu0 0.0
      %3290 = vmatpush1.xpose.msra.mxu0 %v3273
      %3291 = vmatprep.subr.mxu0 0.0
      %3292 = vmatpush1.xpose.msra.mxu0 0.0
      %3293 = vmatprep.subr.mxu0 0.0
      %3294 = vmatpush1.xpose.msra.mxu0 0.0
      %3295 = vmatprep.subr.mxu0 0.0
      %3296 = vmatpush1.xpose.msra.mxu0 0.0
      %3297 = vmatprep.subr.mxu0 0.0
      %3298 = vmatpush1.xpose.msra.mxu0 0.0
      %3299 = vmatprep.subr.mxu0 0.0
      %3300 = vmatpush1.xpose.msra.mxu0 0.0
      %3301 = vmatprep.subr.mxu0 0.0
      %3302 = vmatpush1.xpose.msra.mxu0 0.0
      %3303 = vmatprep.subr.mxu0 0.0
      %3304 = vmatpush1.xpose.msra.mxu0 0.0
      %3305 = vmatprep.subr.mxu0 0.0
      %3306 = vmatpush1.xpose.msra.mxu0 0.0
      %3307 = vmatprep.subr.mxu0 0.0
      %3308 = vmatpush1.xpose.msra.mxu0 0.0
      %3309 = vmatprep.subr.mxu0 0.0
      %3310 = vmatpush1.xpose.msra.mxu0 0.0
      %3311 = vmatprep.subr.mxu0 0.0
      %3312 = vmatpush1.xpose.msra.mxu0 0.0
      %3313 = vmatprep.subr.mxu0 0.0
      %3314 = vmatpush1.xpose.msra.mxu0 0.0
      %3315 = vmatprep.subr.mxu0 0.0
      %3316 = vmatpush1.xpose.msra.mxu0 0.0
      %3317 = vmatprep.subr.mxu0 0.0
      %3318 = vmatpush1.xpose.msra.mxu0 0.0
      %3319 = vmatprep.subr.mxu0 0.0
      %3320 = vmatpush1.xpose.msra.mxu0 0.0
      %3321 = vmatprep.subr.mxu0 0.0
      %3322 = vmatpush1.xpose.msra.mxu0 0.0
      %3323 = vmatprep.subr.mxu0 0.0
      %3324 = vmatpush1.xpose.msra.mxu0 0.0
      %3325 = vmatprep.subr.mxu0 0.0
      %3326 = vmatpush1.xpose.msra.mxu0 0.0
      %3327 = vmatprep.subr.mxu0 0.0
      %3328 = vmatpush1.xpose.msra.mxu0 0.0
      %3329 = vmatprep.subr.mxu0 0.0
      %3330 = vmatpush1.xpose.msra.mxu0 0.0
      %3331 = vmatprep.subr.mxu0 0.0
      %3332 = vmatpush1.xpose.msra.mxu0 0.0
      %3333 = vmatprep.subr.mxu0 0.0
      %3334 = vmatpush1.xpose.msra.mxu0 0.0
      %3335 = vmatprep.subr.mxu0 0.0
      %3336 = vmatpush1.xpose.msra.mxu0 0.0
      %3337 = vmatprep.subr.mxu0 0.0
      %3338 = vmatpush1.xpose.msra.mxu0 0.0
      %3339 = vmatprep.mubr.f32.mxu0 0.0
      %3340 = vmatmul.mubr.f32.gmra.mrb[0].mxu0 %v3243
      %v3341 = vpop.f32.mrb[0].mxu0
      %v3342 = vadd.f32 0.0, %v3341
      %v3343 = vpop.f32.mrb[0].mxu0
      %3344 = vmatprep.mubr.f32.mxu0 0.0
      %3345 = vmatmul.mubr.f32.gmra.mrb[0].mxu0 %v3245
      %v3346 = vpop.f32.mrb[0].mxu0
      %v3347 = vadd.f32 0.0, %v3346
      %v3348 = vpop.f32.mrb[0].mxu0
      %3349 = vmatprep.mubr.f32.mxu0 0.0
      %3350 = vmatmul.mubr.f32.gmra.mrb[0].mxu0 %v3247
      %v3351 = vpop.f32.mrb[0].mxu0
      %v3352 = vadd.f32 0.0, %v3351
      %v3353 = vpop.f32.mrb[0].mxu0
      %3354 = vmatprep.mubr.f32.mxu0 0.0
      %3355 = vmatmul.mubr.f32.gmra.mrb[0].mxu0 %v3249
      %v3356 = vpop.f32.mrb[0].mxu0
      %v3357 = vadd.f32 0.0, %v3356
      %v3358 = vpop.f32.mrb[0].mxu0
      %3359 = vmatprep.mubr.f32.mxu0 0.0
      %3360 = vmatmul.mubr.f32.gmra.mrb[0].mxu0 %v3251
      %v3361 = vpop.f32.mrb[0].mxu0
      %v3362 = vadd.f32 0.0, %v3361
      %v3363 = vpop.f32.mrb[0].mxu0
      %3364 = vmatprep.mubr.f32.mxu0 0.0
      %3365 = vmatmul.mubr.f32.gmra.mrb[0].mxu0 %v3253
      %v3366 = vpop.f32.mrb[0].mxu0
      %v3367 = vadd.f32 0.0, %v3366
      %v3368 = vpop.f32.mrb[0].mxu0
      %3369 = vmatprep.mubr.f32.mxu0 0.0
      %3370 = vmatmul.mubr.f32.gmra.mrb[0].mxu0 %v3255
      %v3371 = vpop.f32.mrb[0].mxu0
      %v3372 = vadd.f32 0.0, %v3371
      %v3373 = vpop.f32.mrb[0].mxu0
      %3374 = vmatprep.mubr.f32.mxu0 0.0
      %3375 = vmatmul.mubr.f32.gmra.mrb[0].mxu0 %v3257
      %v3376 = vpop.f32.mrb[0].mxu0
      %v3377 = vadd.f32 0.0, %v3376
      %v3378 = vpop.f32.mrb[0].mxu0
      %3379 = vdwg.mxu0
      %v3380 = vsel %vm1329, %v3342, -inf
      %3381 = vmax.xlane.f32.xlu0 %v3380
      %v3382 = vpop.xlane.xlu0 %3381
      %v3383 = vsel %vm1329, %v3347, -inf
      %3384 = vmax.xlane.f32.xlu0 %v3383
      %v3385 = vpop.xlane.xlu0 %3384
      %v3386 = vsel %vm1329, %v3352, -inf
      %3387 = vmax.xlane.f32.xlu0 %v3386
      %v3388 = vpop.xlane.xlu0 %3387
      %v3389 = vsel %vm1329, %v3357, -inf
      %3390 = vmax.xlane.f32.xlu0 %v3389
      %v3391 = vpop.xlane.xlu0 %3390
      %v3392 = vsel %vm1329, %v3362, -inf
      %3393 = vmax.xlane.f32.xlu0 %v3392
      %v3394 = vpop.xlane.xlu0 %3393
      %v3395 = vsel %vm1329, %v3367, -inf
      %3396 = vmax.xlane.f32.xlu0 %v3395
      %v3397 = vpop.xlane.xlu0 %3396
      %v3398 = vsel %vm1329, %v3372, -inf
      %3399 = vmax.xlane.f32.xlu0 %v3398
      %v3400 = vpop.xlane.xlu0 %3399
      %v3401 = vsel %vm1329, %v3377, -inf
      %3402 = vmax.xlane.f32.xlu0 %v3401
      %v3403 = vpop.xlane.xlu0 %3402
      %v3404 = vsub.f32 %v3342, %v3382
      %v3405 = vsub.f32 %v3347, %v3385
      %v3406 = vsub.f32 %v3352, %v3388
      %v3407 = vsub.f32 %v3357, %v3391
      %v3408 = vsub.f32 %v3362, %v3394
      %v3409 = vsub.f32 %v3367, %v3397
      %v3410 = vsub.f32 %v3372, %v3400
      %v3411 = vsub.f32 %v3377, %v3403
      %v3412 = vmul.f32 %v3404, 1.442695
      %v3413 = vpow.pop %v3412
      %v3414 = vmul.f32 %v3405, 1.442695
      %v3415 = vpow.pop %v3414
      %v3416 = vmul.f32 %v3406, 1.442695
      %v3417 = vpow.pop %v3416
      %v3418 = vmul.f32 %v3407, 1.442695
      %v3419 = vpow.pop %v3418
      %v3420 = vmul.f32 %v3408, 1.442695
      %v3421 = vpow.pop %v3420
      %v3422 = vmul.f32 %v3409, 1.442695
      %v3423 = vpow.pop %v3422
      %v3424 = vmul.f32 %v3410, 1.442695
      %v3425 = vpow.pop %v3424
      %v3426 = vmul.f32 %v3411, 1.442695
      %v3427 = vpow.pop %v3426
      %v3428 = vsel %vm1329, %v3413, 0.0
      %3429 = vadd.xlane.f32.xlu0 %v3428
      %v3430 = vpop.xlane.xlu0 %3429
      %v3431 = vsel %vm1329, %v3415, 0.0
      %3432 = vadd.xlane.f32.xlu0 %v3431
      %v3433 = vpop.xlane.xlu0 %3432
      %v3434 = vsel %vm1329, %v3417, 0.0
      %3435 = vadd.xlane.f32.xlu0 %v3434
      %v3436 = vpop.xlane.xlu0 %3435
      %v3437 = vsel %vm1329, %v3419, 0.0
      %3438 = vadd.xlane.f32.xlu0 %v3437
      %v3439 = vpop.xlane.xlu0 %3438
      %v3440 = vsel %vm1329, %v3421, 0.0
      %3441 = vadd.xlane.f32.xlu0 %v3440
      %v3442 = vpop.xlane.xlu0 %3441
      %v3443 = vsel %vm1329, %v3423, 0.0
      %3444 = vadd.xlane.f32.xlu0 %v3443
      %v3445 = vpop.xlane.xlu0 %3444
      %v3446 = vsel %vm1329, %v3425, 0.0
      %3447 = vadd.xlane.f32.xlu0 %v3446
      %v3448 = vpop.xlane.xlu0 %3447
      %v3449 = vsel %vm1329, %v3427, 0.0
      %3450 = vadd.xlane.f32.xlu0 %v3449
      %v3451 = vpop.xlane.xlu0 %3450
      %v3452 = vrcp.pop %v3430
      %v3453 = vrcp.pop %v3433
      %v3454 = vrcp.pop %v3436
      %v3455 = vrcp.pop %v3439
      %v3456 = vrcp.pop %v3442
      %v3457 = vrcp.pop %v3445
      %v3458 = vrcp.pop %v3448
      %v3459 = vrcp.pop %v3451
      %v3460 = vmul.f32 %v3413, %v3452
      %v3461 = vmul.f32 %v3415, %v3453
      %v3462 = vmul.f32 %v3417, %v3454
      %v3463 = vmul.f32 %v3419, %v3455
      %v3464 = vmul.f32 %v3421, %v3456
      %v3465 = vmul.f32 %v3423, %v3457
      %v3466 = vmul.f32 %v3425, %v3458
      %v3467 = vmul.f32 %v3427, %v3459
      %3468 = vrot.lane.b32.xlu0 %v1113, 44
      %v3469 = vpop.permute.xlu0 %3468
      %3470 = vrot.lane.b32.xlu0 %v1118, 44
      %v3471 = vpop.permute.xlu0 %3470
      %3472 = vrot.lane.b32.xlu0 %v1123, 44
      %v3473 = vpop.permute.xlu0 %3472
      %3474 = vrot.lane.b32.xlu0 %v1128, 44
      %v3475 = vpop.permute.xlu0 %3474
      %3476 = vrot.lane.b32.xlu0 %v1133, 44
      %v3477 = vpop.permute.xlu0 %3476
      %3478 = vrot.lane.b32.xlu0 %v1138, 44
      %v3479 = vpop.permute.xlu0 %3478
      %3480 = vrot.lane.b32.xlu0 %v1143, 44
      %v3481 = vpop.permute.xlu0 %3480
      %3482 = vrot.lane.b32.xlu0 %v1148, 44
      %v3483 = vpop.permute.xlu0 %3482
      %v3493 = vsel %vm1329, %v3460, 0
      %v3496 = vsel %vm1329, %v3461, 0
      %v3499 = vsel %vm1329, %v3462, 0
      %v3502 = vsel %vm1329, %v3463, 0
      %v3505 = vsel %vm1329, %v3464, 0
      %v3508 = vsel %vm1329, %v3465, 0
      %v3511 = vsel %vm1329, %v3466, 0
      %v3514 = vsel %vm1329, %v3467, 0
      %3516 = vmatprep.subr.mxu0 0.0
      %3517 = vmatpush1.msra.mxu0 %v3469
      %3518 = vmatprep.subr.mxu0 0.0
      %3519 = vmatpush1.msra.mxu0 %v3471
      %3520 = vmatprep.subr.mxu0 0.0
      %3521 = vmatpush1.msra.mxu0 %v3473
      %3522 = vmatprep.subr.mxu0 0.0
      %3523 = vmatpush1.msra.mxu0 %v3475
      %3524 = vmatprep.subr.mxu0 0.0
      %3525 = vmatpush1.msra.mxu0 %v3477
      %3526 = vmatprep.subr.mxu0 0.0
      %3527 = vmatpush1.msra.mxu0 %v3479
      %3528 = vmatprep.subr.mxu0 0.0
      %3529 = vmatpush1.msra.mxu0 %v3481
      %3530 = vmatprep.subr.mxu0 0.0
      %3531 = vmatpush1.msra.mxu0 %v3483
      %3532 = vmatprep.subr.mxu0 0.0
      %3533 = vmatpush1.msra.mxu0 0.0
      %3534 = vmatprep.subr.mxu0 0.0
      %3535 = vmatpush1.msra.mxu0 0.0
      %3536 = vmatprep.subr.mxu0 0.0
      %3537 = vmatpush1.msra.mxu0 0.0
      %3538 = vmatprep.subr.mxu0 0.0
      %3539 = vmatpush1.msra.mxu0 0.0
      %3540 = vmatprep.subr.mxu0 0.0
      %3541 = vmatpush1.msra.mxu0 0.0
      %3542 = vmatprep.subr.mxu0 0.0
      %3543 = vmatpush1.msra.mxu0 0.0
      %3544 = vmatprep.subr.mxu0 0.0
      %3545 = vmatpush1.msra.mxu0 0.0
      %3546 = vmatprep.subr.mxu0 0.0
      %3547 = vmatpush1.msra.mxu0 0.0
      %3548 = vmatprep.subr.mxu0 0.0
      %3549 = vmatpush1.msra.mxu0 0.0
      %3550 = vmatprep.subr.mxu0 0.0
      %3551 = vmatpush1.msra.mxu0 0.0
      %3552 = vmatprep.subr.mxu0 0.0
      %3553 = vmatpush1.msra.mxu0 0.0
      %3554 = vmatprep.subr.mxu0 0.0
      %3555 = vmatpush1.msra.mxu0 0.0
      %3556 = vmatprep.subr.mxu0 0.0
      %3557 = vmatpush1.msra.mxu0 0.0
      %3558 = vmatprep.subr.mxu0 0.0
      %3559 = vmatpush1.msra.mxu0 0.0
      %3560 = vmatprep.subr.mxu0 0.0
      %3561 = vmatpush1.msra.mxu0 0.0
      %3562 = vmatprep.subr.mxu0 0.0
      %3563 = vmatpush1.msra.mxu0 0.0
      %3564 = vmatprep.subr.mxu0 0.0
      %3565 = vmatpush1.msra.mxu0 0.0
      %3566 = vmatprep.subr.mxu0 0.0
      %3567 = vmatpush1.msra.mxu0 0.0
      %3568 = vmatprep.subr.mxu0 0.0
      %3569 = vmatpush1.msra.mxu0 0.0
      %3570 = vmatprep.subr.mxu0 0.0
      %3571 = vmatpush1.msra.mxu0 0.0
      %3572 = vmatprep.subr.mxu0 0.0
      %3573 = vmatpush1.msra.mxu0 0.0
      %3574 = vmatprep.subr.mxu0 0.0
      %3575 = vmatpush1.msra.mxu0 0.0
      %3576 = vmatprep.subr.mxu0 0.0
      %3577 = vmatpush1.msra.mxu0 0.0
      %3578 = vmatprep.subr.mxu0 0.0
      %3579 = vmatpush1.msra.mxu0 0.0
      %3580 = vmatprep.mubr.f32.mxu0 0.0
      %3581 = vmatmul.mubr.f32.gmra.mrb[0].mxu0 %v3493
      %v3582 = vpop.f32.mrb[0].mxu0
      %v3583 = vadd.f32 0.0, %v3582
      %v3584 = vpop.f32.mrb[0].mxu0
      %3585 = vmatprep.mubr.f32.mxu0 0.0
      %3586 = vmatmul.mubr.f32.gmra.mrb[0].mxu0 %v3496
      %v3587 = vpop.f32.mrb[0].mxu0
      %v3588 = vadd.f32 0.0, %v3587
      %v3589 = vpop.f32.mrb[0].mxu0
      %3590 = vmatprep.mubr.f32.mxu0 0.0
      %3591 = vmatmul.mubr.f32.gmra.mrb[0].mxu0 %v3499
      %v3592 = vpop.f32.mrb[0].mxu0
      %v3593 = vadd.f32 0.0, %v3592
      %v3594 = vpop.f32.mrb[0].mxu0
      %3595 = vmatprep.mubr.f32.mxu0 0.0
      %3596 = vmatmul.mubr.f32.gmra.mrb[0].mxu0 %v3502
      %v3597 = vpop.f32.mrb[0].mxu0
      %v3598 = vadd.f32 0.0, %v3597
      %v3599 = vpop.f32.mrb[0].mxu0
      %3600 = vmatprep.mubr.f32.mxu0 0.0
      %3601 = vmatmul.mubr.f32.gmra.mrb[0].mxu0 %v3505
      %v3602 = vpop.f32.mrb[0].mxu0
      %v3603 = vadd.f32 0.0, %v3602
      %v3604 = vpop.f32.mrb[0].mxu0
      %3605 = vmatprep.mubr.f32.mxu0 0.0
      %3606 = vmatmul.mubr.f32.gmra.mrb[0].mxu0 %v3508
      %v3607 = vpop.f32.mrb[0].mxu0
      %v3608 = vadd.f32 0.0, %v3607
      %v3609 = vpop.f32.mrb[0].mxu0
      %3610 = vmatprep.mubr.f32.mxu0 0.0
      %3611 = vmatmul.mubr.f32.gmra.mrb[0].mxu0 %v3511
      %v3612 = vpop.f32.mrb[0].mxu0
      %v3613 = vadd.f32 0.0, %v3612
      %v3614 = vpop.f32.mrb[0].mxu0
      %3615 = vmatprep.mubr.f32.mxu0 0.0
      %3616 = vmatmul.mubr.f32.gmra.mrb[0].mxu0 %v3514
      %v3617 = vpop.f32.mrb[0].mxu0
      %v3618 = vadd.f32 0.0, %v3617
      %v3619 = vpop.f32.mrb[0].mxu0
      %3620 = vdwg.mxu0
      %3621 = vrot.lane.b32.xlu0 %v1151, 104
      %v3622 = vpop.permute.xlu0 %3621
      %3623 = vrot.lane.b32.xlu0 %v1152, 104
      %v3624 = vpop.permute.xlu0 %3623
      %3625 = vrot.lane.b32.xlu0 %v1153, 104
      %v3626 = vpop.permute.xlu0 %3625
      %3627 = vrot.lane.b32.xlu0 %v1154, 104
      %v3628 = vpop.permute.xlu0 %3627
      %3629 = vrot.lane.b32.xlu0 %v1155, 104
      %v3630 = vpop.permute.xlu0 %3629
      %3631 = vrot.lane.b32.xlu0 %v1156, 104
      %v3632 = vpop.permute.xlu0 %3631
      %3633 = vrot.lane.b32.xlu0 %v1157, 104
      %v3634 = vpop.permute.xlu0 %3633
      %3635 = vrot.lane.b32.xlu0 %v1158, 104
      %v3636 = vpop.permute.xlu0 %3635
      %3637 = vrot.lane.b32.xlu0 %v1113, 72
      %v3638 = vpop.permute.xlu0 %3637
      %3639 = vrot.lane.b32.xlu0 %v1118, 72
      %v3640 = vpop.permute.xlu0 %3639
      %3641 = vrot.lane.b32.xlu0 %v1123, 72
      %v3642 = vpop.permute.xlu0 %3641
      %3643 = vrot.lane.b32.xlu0 %v1128, 72
      %v3644 = vpop.permute.xlu0 %3643
      %3645 = vrot.lane.b32.xlu0 %v1133, 72
      %v3646 = vpop.permute.xlu0 %3645
      %3647 = vrot.lane.b32.xlu0 %v1138, 72
      %v3648 = vpop.permute.xlu0 %3647
      %3649 = vrot.lane.b32.xlu0 %v1143, 72
      %v3650 = vpop.permute.xlu0 %3649
      %3651 = vrot.lane.b32.xlu0 %v1148, 72
      %v3652 = vpop.permute.xlu0 %3651
      %v3653 = vsel %vm1183, %v3622, 0
      %v3655 = vsel %vm1183, %v3624, 0
      %v3657 = vsel %vm1183, %v3626, 0
      %v3659 = vsel %vm1183, %v3628, 0
      %v3661 = vsel %vm1183, %v3630, 0
      %v3663 = vsel %vm1183, %v3632, 0
      %v3665 = vsel %vm1183, %v3634, 0
      %v3667 = vsel %vm1183, %v3636, 0
      %v3669 = vsel %vm1183, %v3638, 0
      %v3671 = vsel %vm1183, %v3640, 0
      %v3673 = vsel %vm1183, %v3642, 0
      %v3675 = vsel %vm1183, %v3644, 0
      %v3677 = vsel %vm1183, %v3646, 0
      %v3679 = vsel %vm1183, %v3648, 0
      %v3681 = vsel %vm1183, %v3650, 0
      %v3683 = vsel %vm1183, %v3652, 0
      %3685 = vmatprep.subr.mxu0 0.0
      %3686 = vmatpush1.xpose.msra.mxu0 %v3669
      %3687 = vmatprep.subr.mxu0 0.0
      %3688 = vmatpush1.xpose.msra.mxu0 %v3671
      %3689 = vmatprep.subr.mxu0 0.0
      %3690 = vmatpush1.xpose.msra.mxu0 %v3673
      %3691 = vmatprep.subr.mxu0 0.0
      %3692 = vmatpush1.xpose.msra.mxu0 %v3675
      %3693 = vmatprep.subr.mxu0 0.0
      %3694 = vmatpush1.xpose.msra.mxu0 %v3677
      %3695 = vmatprep.subr.mxu0 0.0
      %3696 = vmatpush1.xpose.msra.mxu0 %v3679
      %3697 = vmatprep.subr.mxu0 0.0
      %3698 = vmatpush1.xpose.msra.mxu0 %v3681
      %3699 = vmatprep.subr.mxu0 0.0
      %3700 = vmatpush1.xpose.msra.mxu0 %v3683
      %3701 = vmatprep.subr.mxu0 0.0
      %3702 = vmatpush1.xpose.msra.mxu0 0.0
      %3703 = vmatprep.subr.mxu0 0.0
      %3704 = vmatpush1.xpose.msra.mxu0 0.0
      %3705 = vmatprep.subr.mxu0 0.0
      %3706 = vmatpush1.xpose.msra.mxu0 0.0
      %3707 = vmatprep.subr.mxu0 0.0
      %3708 = vmatpush1.xpose.msra.mxu0 0.0
      %3709 = vmatprep.subr.mxu0 0.0
      %3710 = vmatpush1.xpose.msra.mxu0 0.0
      %3711 = vmatprep.subr.mxu0 0.0
      %3712 = vmatpush1.xpose.msra.mxu0 0.0
      %3713 = vmatprep.subr.mxu0 0.0
      %3714 = vmatpush1.xpose.msra.mxu0 0.0
      %3715 = vmatprep.subr.mxu0 0.0
      %3716 = vmatpush1.xpose.msra.mxu0 0.0
      %3717 = vmatprep.subr.mxu0 0.0
      %3718 = vmatpush1.xpose.msra.mxu0 0.0
      %3719 = vmatprep.subr.mxu0 0.0
      %3720 = vmatpush1.xpose.msra.mxu0 0.0
      %3721 = vmatprep.subr.mxu0 0.0
      %3722 = vmatpush1.xpose.msra.mxu0 0.0
      %3723 = vmatprep.subr.mxu0 0.0
      %3724 = vmatpush1.xpose.msra.mxu0 0.0
      %3725 = vmatprep.subr.mxu0 0.0
      %3726 = vmatpush1.xpose.msra.mxu0 0.0
      %3727 = vmatprep.subr.mxu0 0.0
      %3728 = vmatpush1.xpose.msra.mxu0 0.0
      %3729 = vmatprep.subr.mxu0 0.0
      %3730 = vmatpush1.xpose.msra.mxu0 0.0
      %3731 = vmatprep.subr.mxu0 0.0
      %3732 = vmatpush1.xpose.msra.mxu0 0.0
      %3733 = vmatprep.subr.mxu0 0.0
      %3734 = vmatpush1.xpose.msra.mxu0 0.0
      %3735 = vmatprep.subr.mxu0 0.0
      %3736 = vmatpush1.xpose.msra.mxu0 0.0
      %3737 = vmatprep.subr.mxu0 0.0
      %3738 = vmatpush1.xpose.msra.mxu0 0.0
      %3739 = vmatprep.subr.mxu0 0.0
      %3740 = vmatpush1.xpose.msra.mxu0 0.0
      %3741 = vmatprep.subr.mxu0 0.0
      %3742 = vmatpush1.xpose.msra.mxu0 0.0
      %3743 = vmatprep.subr.mxu0 0.0
      %3744 = vmatpush1.xpose.msra.mxu0 0.0
      %3745 = vmatprep.subr.mxu0 0.0
      %3746 = vmatpush1.xpose.msra.mxu0 0.0
      %3747 = vmatprep.subr.mxu0 0.0
      %3748 = vmatpush1.xpose.msra.mxu0 0.0
      %3749 = vmatprep.mubr.f32.mxu0 0.0
      %3750 = vmatmul.mubr.f32.gmra.mrb[0].mxu0 %v3653
      %v3751 = vpop.f32.mrb[0].mxu0
      %v3752 = vadd.f32 0.0, %v3751
      %v3753 = vpop.f32.mrb[0].mxu0
      %3754 = vmatprep.mubr.f32.mxu0 0.0
      %3755 = vmatmul.mubr.f32.gmra.mrb[0].mxu0 %v3655
      %v3756 = vpop.f32.mrb[0].mxu0
      %v3757 = vadd.f32 0.0, %v3756
      %v3758 = vpop.f32.mrb[0].mxu0
      %3759 = vmatprep.mubr.f32.mxu0 0.0
      %3760 = vmatmul.mubr.f32.gmra.mrb[0].mxu0 %v3657
      %v3761 = vpop.f32.mrb[0].mxu0
      %v3762 = vadd.f32 0.0, %v3761
      %v3763 = vpop.f32.mrb[0].mxu0
      %3764 = vmatprep.mubr.f32.mxu0 0.0
      %3765 = vmatmul.mubr.f32.gmra.mrb[0].mxu0 %v3659
      %v3766 = vpop.f32.mrb[0].mxu0
      %v3767 = vadd.f32 0.0, %v3766
      %v3768 = vpop.f32.mrb[0].mxu0
      %3769 = vmatprep.mubr.f32.mxu0 0.0
      %3770 = vmatmul.mubr.f32.gmra.mrb[0].mxu0 %v3661
      %v3771 = vpop.f32.mrb[0].mxu0
      %v3772 = vadd.f32 0.0, %v3771
      %v3773 = vpop.f32.mrb[0].mxu0
      %3774 = vmatprep.mubr.f32.mxu0 0.0
      %3775 = vmatmul.mubr.f32.gmra.mrb[0].mxu0 %v3663
      %v3776 = vpop.f32.mrb[0].mxu0
      %v3777 = vadd.f32 0.0, %v3776
      %v3778 = vpop.f32.mrb[0].mxu0
      %3779 = vmatprep.mubr.f32.mxu0 0.0
      %3780 = vmatmul.mubr.f32.gmra.mrb[0].mxu0 %v3665
      %v3781 = vpop.f32.mrb[0].mxu0
      %v3782 = vadd.f32 0.0, %v3781
      %v3783 = vpop.f32.mrb[0].mxu0
      %3784 = vmatprep.mubr.f32.mxu0 0.0
      %3785 = vmatmul.mubr.f32.gmra.mrb[0].mxu0 %v3667
      %v3786 = vpop.f32.mrb[0].mxu0
      %v3787 = vadd.f32 0.0, %v3786
      %v3788 = vpop.f32.mrb[0].mxu0
      %3789 = vdwg.mxu0
      %v3790 = vsel %vm1329, %v3752, -inf
      %3791 = vmax.xlane.f32.xlu0 %v3790
      %v3792 = vpop.xlane.xlu0 %3791
      %v3793 = vsel %vm1329, %v3757, -inf
      %3794 = vmax.xlane.f32.xlu0 %v3793
      %v3795 = vpop.xlane.xlu0 %3794
      %v3796 = vsel %vm1329, %v3762, -inf
      %3797 = vmax.xlane.f32.xlu0 %v3796
      %v3798 = vpop.xlane.xlu0 %3797
      %v3799 = vsel %vm1329, %v3767, -inf
      %3800 = vmax.xlane.f32.xlu0 %v3799
      %v3801 = vpop.xlane.xlu0 %3800
      %v3802 = vsel %vm1329, %v3772, -inf
      %3803 = vmax.xlane.f32.xlu0 %v3802
      %v3804 = vpop.xlane.xlu0 %3803
      %v3805 = vsel %vm1329, %v3777, -inf
      %3806 = vmax.xlane.f32.xlu0 %v3805
      %v3807 = vpop.xlane.xlu0 %3806
      %v3808 = vsel %vm1329, %v3782, -inf
      %3809 = vmax.xlane.f32.xlu0 %v3808
      %v3810 = vpop.xlane.xlu0 %3809
      %v3811 = vsel %vm1329, %v3787, -inf
      %3812 = vmax.xlane.f32.xlu0 %v3811
      %v3813 = vpop.xlane.xlu0 %3812
      %v3814 = vsub.f32 %v3752, %v3792
      %v3815 = vsub.f32 %v3757, %v3795
      %v3816 = vsub.f32 %v3762, %v3798
      %v3817 = vsub.f32 %v3767, %v3801
      %v3818 = vsub.f32 %v3772, %v3804
      %v3819 = vsub.f32 %v3777, %v3807
      %v3820 = vsub.f32 %v3782, %v3810
      %v3821 = vsub.f32 %v3787, %v3813
      %v3822 = vmul.f32 %v3814, 1.442695
      %v3823 = vpow.pop %v3822
      %v3824 = vmul.f32 %v3815, 1.442695
      %v3825 = vpow.pop %v3824
      %v3826 = vmul.f32 %v3816, 1.442695
      %v3827 = vpow.pop %v3826
      %v3828 = vmul.f32 %v3817, 1.442695
      %v3829 = vpow.pop %v3828
      %v3830 = vmul.f32 %v3818, 1.442695
      %v3831 = vpow.pop %v3830
      %v3832 = vmul.f32 %v3819, 1.442695
      %v3833 = vpow.pop %v3832
      %v3834 = vmul.f32 %v3820, 1.442695
      %v3835 = vpow.pop %v3834
      %v3836 = vmul.f32 %v3821, 1.442695
      %v3837 = vpow.pop %v3836
      %v3838 = vsel %vm1329, %v3823, 0.0
      %3839 = vadd.xlane.f32.xlu0 %v3838
      %v3840 = vpop.xlane.xlu0 %3839
      %v3841 = vsel %vm1329, %v3825, 0.0
      %3842 = vadd.xlane.f32.xlu0 %v3841
      %v3843 = vpop.xlane.xlu0 %3842
      %v3844 = vsel %vm1329, %v3827, 0.0
      %3845 = vadd.xlane.f32.xlu0 %v3844
      %v3846 = vpop.xlane.xlu0 %3845
      %v3847 = vsel %vm1329, %v3829, 0.0
      %3848 = vadd.xlane.f32.xlu0 %v3847
      %v3849 = vpop.xlane.xlu0 %3848
      %v3850 = vsel %vm1329, %v3831, 0.0
      %3851 = vadd.xlane.f32.xlu0 %v3850
      %v3852 = vpop.xlane.xlu0 %3851
      %v3853 = vsel %vm1329, %v3833, 0.0
      %3854 = vadd.xlane.f32.xlu0 %v3853
      %v3855 = vpop.xlane.xlu0 %3854
      %v3856 = vsel %vm1329, %v3835, 0.0
      %3857 = vadd.xlane.f32.xlu0 %v3856
      %v3858 = vpop.xlane.xlu0 %3857
      %v3859 = vsel %vm1329, %v3837, 0.0
      %3860 = vadd.xlane.f32.xlu0 %v3859
      %v3861 = vpop.xlane.xlu0 %3860
      %v3862 = vrcp.pop %v3840
      %v3863 = vrcp.pop %v3843
      %v3864 = vrcp.pop %v3846
      %v3865 = vrcp.pop %v3849
      %v3866 = vrcp.pop %v3852
      %v3867 = vrcp.pop %v3855
      %v3868 = vrcp.pop %v3858
      %v3869 = vrcp.pop %v3861
      %v3870 = vmul.f32 %v3823, %v3862
      %v3871 = vmul.f32 %v3825, %v3863
      %v3872 = vmul.f32 %v3827, %v3864
      %v3873 = vmul.f32 %v3829, %v3865
      %v3874 = vmul.f32 %v3831, %v3866
      %v3875 = vmul.f32 %v3833, %v3867
      %v3876 = vmul.f32 %v3835, %v3868
      %v3877 = vmul.f32 %v3837, %v3869
      %3878 = vrot.lane.b32.xlu0 %v1113, 40
      %v3879 = vpop.permute.xlu0 %3878
      %3880 = vrot.lane.b32.xlu0 %v1118, 40
      %v3881 = vpop.permute.xlu0 %3880
      %3882 = vrot.lane.b32.xlu0 %v1123, 40
      %v3883 = vpop.permute.xlu0 %3882
      %3884 = vrot.lane.b32.xlu0 %v1128, 40
      %v3885 = vpop.permute.xlu0 %3884
      %3886 = vrot.lane.b32.xlu0 %v1133, 40
      %v3887 = vpop.permute.xlu0 %3886
      %3888 = vrot.lane.b32.xlu0 %v1138, 40
      %v3889 = vpop.permute.xlu0 %3888
      %3890 = vrot.lane.b32.xlu0 %v1143, 40
      %v3891 = vpop.permute.xlu0 %3890
      %3892 = vrot.lane.b32.xlu0 %v1148, 40
      %v3893 = vpop.permute.xlu0 %3892
      %v3903 = vsel %vm1329, %v3870, 0
      %v3906 = vsel %vm1329, %v3871, 0
      %v3909 = vsel %vm1329, %v3872, 0
      %v3912 = vsel %vm1329, %v3873, 0
      %v3915 = vsel %vm1329, %v3874, 0
      %v3918 = vsel %vm1329, %v3875, 0
      %v3921 = vsel %vm1329, %v3876, 0
      %v3924 = vsel %vm1329, %v3877, 0
      %3926 = vmatprep.subr.mxu0 0.0
      %3927 = vmatpush1.msra.mxu0 %v3879
      %3928 = vmatprep.subr.mxu0 0.0
      %3929 = vmatpush1.msra.mxu0 %v3881
      %3930 = vmatprep.subr.mxu0 0.0
      %3931 = vmatpush1.msra.mxu0 %v3883
      %3932 = vmatprep.subr.mxu0 0.0
      %3933 = vmatpush1.msra.mxu0 %v3885
      %3934 = vmatprep.subr.mxu0 0.0
      %3935 = vmatpush1.msra.mxu0 %v3887
      %3936 = vmatprep.subr.mxu0 0.0
      %3937 = vmatpush1.msra.mxu0 %v3889
      %3938 = vmatprep.subr.mxu0 0.0
      %3939 = vmatpush1.msra.mxu0 %v3891
      %3940 = vmatprep.subr.mxu0 0.0
      %3941 = vmatpush1.msra.mxu0 %v3893
      %3942 = vmatprep.subr.mxu0 0.0
      %3943 = vmatpush1.msra.mxu0 0.0
      %3944 = vmatprep.subr.mxu0 0.0
      %3945 = vmatpush1.msra.mxu0 0.0
      %3946 = vmatprep.subr.mxu0 0.0
      %3947 = vmatpush1.msra.mxu0 0.0
      %3948 = vmatprep.subr.mxu0 0.0
      %3949 = vmatpush1.msra.mxu0 0.0
      %3950 = vmatprep.subr.mxu0 0.0
      %3951 = vmatpush1.msra.mxu0 0.0
      %3952 = vmatprep.subr.mxu0 0.0
      %3953 = vmatpush1.msra.mxu0 0.0
      %3954 = vmatprep.subr.mxu0 0.0
      %3955 = vmatpush1.msra.mxu0 0.0
      %3956 = vmatprep.subr.mxu0 0.0
      %3957 = vmatpush1.msra.mxu0 0.0
      %3958 = vmatprep.subr.mxu0 0.0
      %3959 = vmatpush1.msra.mxu0 0.0
      %3960 = vmatprep.subr.mxu0 0.0
      %3961 = vmatpush1.msra.mxu0 0.0
      %3962 = vmatprep.subr.mxu0 0.0
      %3963 = vmatpush1.msra.mxu0 0.0
      %3964 = vmatprep.subr.mxu0 0.0
      %3965 = vmatpush1.msra.mxu0 0.0
      %3966 = vmatprep.subr.mxu0 0.0
      %3967 = vmatpush1.msra.mxu0 0.0
      %3968 = vmatprep.subr.mxu0 0.0
      %3969 = vmatpush1.msra.mxu0 0.0
      %3970 = vmatprep.subr.mxu0 0.0
      %3971 = vmatpush1.msra.mxu0 0.0
      %3972 = vmatprep.subr.mxu0 0.0
      %3973 = vmatpush1.msra.mxu0 0.0
      %3974 = vmatprep.subr.mxu0 0.0
      %3975 = vmatpush1.msra.mxu0 0.0
      %3976 = vmatprep.subr.mxu0 0.0
      %3977 = vmatpush1.msra.mxu0 0.0
      %3978 = vmatprep.subr.mxu0 0.0
      %3979 = vmatpush1.msra.mxu0 0.0
      %3980 = vmatprep.subr.mxu0 0.0
      %3981 = vmatpush1.msra.mxu0 0.0
      %3982 = vmatprep.subr.mxu0 0.0
      %3983 = vmatpush1.msra.mxu0 0.0
      %3984 = vmatprep.subr.mxu0 0.0
      %3985 = vmatpush1.msra.mxu0 0.0
      %3986 = vmatprep.subr.mxu0 0.0
      %3987 = vmatpush1.msra.mxu0 0.0
      %3988 = vmatprep.subr.mxu0 0.0
      %3989 = vmatpush1.msra.mxu0 0.0
      %3990 = vmatprep.mubr.f32.mxu0 0.0
      %3991 = vmatmul.mubr.f32.gmra.mrb[0].mxu0 %v3903
      %v3992 = vpop.f32.mrb[0].mxu0
      %v3993 = vadd.f32 0.0, %v3992
      %v3994 = vpop.f32.mrb[0].mxu0
      %3995 = vmatprep.mubr.f32.mxu0 0.0
      %3996 = vmatmul.mubr.f32.gmra.mrb[0].mxu0 %v3906
      %v3997 = vpop.f32.mrb[0].mxu0
      %v3998 = vadd.f32 0.0, %v3997
      %v3999 = vpop.f32.mrb[0].mxu0
      %4000 = vmatprep.mubr.f32.mxu0 0.0
      %4001 = vmatmul.mubr.f32.gmra.mrb[0].mxu0 %v3909
      %v4002 = vpop.f32.mrb[0].mxu0
      %v4003 = vadd.f32 0.0, %v4002
      %v4004 = vpop.f32.mrb[0].mxu0
      %4005 = vmatprep.mubr.f32.mxu0 0.0
      %4006 = vmatmul.mubr.f32.gmra.mrb[0].mxu0 %v3912
      %v4007 = vpop.f32.mrb[0].mxu0
      %v4008 = vadd.f32 0.0, %v4007
      %v4009 = vpop.f32.mrb[0].mxu0
      %4010 = vmatprep.mubr.f32.mxu0 0.0
      %4011 = vmatmul.mubr.f32.gmra.mrb[0].mxu0 %v3915
      %v4012 = vpop.f32.mrb[0].mxu0
      %v4013 = vadd.f32 0.0, %v4012
      %v4014 = vpop.f32.mrb[0].mxu0
      %4015 = vmatprep.mubr.f32.mxu0 0.0
      %4016 = vmatmul.mubr.f32.gmra.mrb[0].mxu0 %v3918
      %v4017 = vpop.f32.mrb[0].mxu0
      %v4018 = vadd.f32 0.0, %v4017
      %v4019 = vpop.f32.mrb[0].mxu0
      %4020 = vmatprep.mubr.f32.mxu0 0.0
      %4021 = vmatmul.mubr.f32.gmra.mrb[0].mxu0 %v3921
      %v4022 = vpop.f32.mrb[0].mxu0
      %v4023 = vadd.f32 0.0, %v4022
      %v4024 = vpop.f32.mrb[0].mxu0
      %4025 = vmatprep.mubr.f32.mxu0 0.0
      %4026 = vmatmul.mubr.f32.gmra.mrb[0].mxu0 %v3924
      %v4027 = vpop.f32.mrb[0].mxu0
      %v4028 = vadd.f32 0.0, %v4027
      %v4029 = vpop.f32.mrb[0].mxu0
      %4030 = vdwg.mxu0
      %4031 = vrot.lane.b32.xlu0 %v1151, 100
      %v4032 = vpop.permute.xlu0 %4031
      %4033 = vrot.lane.b32.xlu0 %v1152, 100
      %v4034 = vpop.permute.xlu0 %4033
      %4035 = vrot.lane.b32.xlu0 %v1153, 100
      %v4036 = vpop.permute.xlu0 %4035
      %4037 = vrot.lane.b32.xlu0 %v1154, 100
      %v4038 = vpop.permute.xlu0 %4037
      %4039 = vrot.lane.b32.xlu0 %v1155, 100
      %v4040 = vpop.permute.xlu0 %4039
      %4041 = vrot.lane.b32.xlu0 %v1156, 100
      %v4042 = vpop.permute.xlu0 %4041
      %4043 = vrot.lane.b32.xlu0 %v1157, 100
      %v4044 = vpop.permute.xlu0 %4043
      %4045 = vrot.lane.b32.xlu0 %v1158, 100
      %v4046 = vpop.permute.xlu0 %4045
      %4047 = vrot.lane.b32.xlu0 %v1113, 68
      %v4048 = vpop.permute.xlu0 %4047
      %4049 = vrot.lane.b32.xlu0 %v1118, 68
      %v4050 = vpop.permute.xlu0 %4049
      %4051 = vrot.lane.b32.xlu0 %v1123, 68
      %v4052 = vpop.permute.xlu0 %4051
      %4053 = vrot.lane.b32.xlu0 %v1128, 68
      %v4054 = vpop.permute.xlu0 %4053
      %4055 = vrot.lane.b32.xlu0 %v1133, 68
      %v4056 = vpop.permute.xlu0 %4055
      %4057 = vrot.lane.b32.xlu0 %v1138, 68
      %v4058 = vpop.permute.xlu0 %4057
      %4059 = vrot.lane.b32.xlu0 %v1143, 68
      %v4060 = vpop.permute.xlu0 %4059
      %4061 = vrot.lane.b32.xlu0 %v1148, 68
      %v4062 = vpop.permute.xlu0 %4061
      %v4063 = vsel %vm1183, %v4032, 0
      %v4065 = vsel %vm1183, %v4034, 0
      %v4067 = vsel %vm1183, %v4036, 0
      %v4069 = vsel %vm1183, %v4038, 0
      %v4071 = vsel %vm1183, %v4040, 0
      %v4073 = vsel %vm1183, %v4042, 0
      %v4075 = vsel %vm1183, %v4044, 0
      %v4077 = vsel %vm1183, %v4046, 0
      %v4079 = vsel %vm1183, %v4048, 0
      %v4081 = vsel %vm1183, %v4050, 0
      %v4083 = vsel %vm1183, %v4052, 0
      %v4085 = vsel %vm1183, %v4054, 0
      %v4087 = vsel %vm1183, %v4056, 0
      %v4089 = vsel %vm1183, %v4058, 0
      %v4091 = vsel %vm1183, %v4060, 0
      %v4093 = vsel %vm1183, %v4062, 0
      %4095 = vmatprep.subr.mxu0 0.0
      %4096 = vmatpush1.xpose.msra.mxu0 %v4079
      %4097 = vmatprep.subr.mxu0 0.0
      %4098 = vmatpush1.xpose.msra.mxu0 %v4081
      %4099 = vmatprep.subr.mxu0 0.0
      %4100 = vmatpush1.xpose.msra.mxu0 %v4083
      %4101 = vmatprep.subr.mxu0 0.0
      %4102 = vmatpush1.xpose.msra.mxu0 %v4085
      %4103 = vmatprep.subr.mxu0 0.0
      %4104 = vmatpush1.xpose.msra.mxu0 %v4087
      %4105 = vmatprep.subr.mxu0 0.0
      %4106 = vmatpush1.xpose.msra.mxu0 %v4089
      %4107 = vmatprep.subr.mxu0 0.0
      %4108 = vmatpush1.xpose.msra.mxu0 %v4091
      %4109 = vmatprep.subr.mxu0 0.0
      %4110 = vmatpush1.xpose.msra.mxu0 %v4093
      %4111 = vmatprep.subr.mxu0 0.0
      %4112 = vmatpush1.xpose.msra.mxu0 0.0
      %4113 = vmatprep.subr.mxu0 0.0
      %4114 = vmatpush1.xpose.msra.mxu0 0.0
      %4115 = vmatprep.subr.mxu0 0.0
      %4116 = vmatpush1.xpose.msra.mxu0 0.0
      %4117 = vmatprep.subr.mxu0 0.0
      %4118 = vmatpush1.xpose.msra.mxu0 0.0
      %4119 = vmatprep.subr.mxu0 0.0
      %4120 = vmatpush1.xpose.msra.mxu0 0.0
      %4121 = vmatprep.subr.mxu0 0.0
      %4122 = vmatpush1.xpose.msra.mxu0 0.0
      %4123 = vmatprep.subr.mxu0 0.0
      %4124 = vmatpush1.xpose.msra.mxu0 0.0
      %4125 = vmatprep.subr.mxu0 0.0
      %4126 = vmatpush1.xpose.msra.mxu0 0.0
      %4127 = vmatprep.subr.mxu0 0.0
      %4128 = vmatpush1.xpose.msra.mxu0 0.0
      %4129 = vmatprep.subr.mxu0 0.0
      %4130 = vmatpush1.xpose.msra.mxu0 0.0
      %4131 = vmatprep.subr.mxu0 0.0
      %4132 = vmatpush1.xpose.msra.mxu0 0.0
      %4133 = vmatprep.subr.mxu0 0.0
      %4134 = vmatpush1.xpose.msra.mxu0 0.0
      %4135 = vmatprep.subr.mxu0 0.0
      %4136 = vmatpush1.xpose.msra.mxu0 0.0
      %4137 = vmatprep.subr.mxu0 0.0
      %4138 = vmatpush1.xpose.msra.mxu0 0.0
      %4139 = vmatprep.subr.mxu0 0.0
      %4140 = vmatpush1.xpose.msra.mxu0 0.0
      %4141 = vmatprep.subr.mxu0 0.0
      %4142 = vmatpush1.xpose.msra.mxu0 0.0
      %4143 = vmatprep.subr.mxu0 0.0
      %4144 = vmatpush1.xpose.msra.mxu0 0.0
      %4145 = vmatprep.subr.mxu0 0.0
      %4146 = vmatpush1.xpose.msra.mxu0 0.0
      %4147 = vmatprep.subr.mxu0 0.0
      %4148 = vmatpush1.xpose.msra.mxu0 0.0
      %4149 = vmatprep.subr.mxu0 0.0
      %4150 = vmatpush1.xpose.msra.mxu0 0.0
      %4151 = vmatprep.subr.mxu0 0.0
      %4152 = vmatpush1.xpose.msra.mxu0 0.0
      %4153 = vmatprep.subr.mxu0 0.0
      %4154 = vmatpush1.xpose.msra.mxu0 0.0
      %4155 = vmatprep.subr.mxu0 0.0
      %4156 = vmatpush1.xpose.msra.mxu0 0.0
      %4157 = vmatprep.subr.mxu0 0.0
      %4158 = vmatpush1.xpose.msra.mxu0 0.0
      %4159 = vmatprep.mubr.f32.mxu0 0.0
      %4160 = vmatmul.mubr.f32.gmra.mrb[0].mxu0 %v4063
      %v4161 = vpop.f32.mrb[0].mxu0
      %v4162 = vadd.f32 0.0, %v4161
      %v4163 = vpop.f32.mrb[0].mxu0
      %4164 = vmatprep.mubr.f32.mxu0 0.0
      %4165 = vmatmul.mubr.f32.gmra.mrb[0].mxu0 %v4065
      %v4166 = vpop.f32.mrb[0].mxu0
      %v4167 = vadd.f32 0.0, %v4166
      %v4168 = vpop.f32.mrb[0].mxu0
      %4169 = vmatprep.mubr.f32.mxu0 0.0
      %4170 = vmatmul.mubr.f32.gmra.mrb[0].mxu0 %v4067
      %v4171 = vpop.f32.mrb[0].mxu0
      %v4172 = vadd.f32 0.0, %v4171
      %v4173 = vpop.f32.mrb[0].mxu0
      %4174 = vmatprep.mubr.f32.mxu0 0.0
      %4175 = vmatmul.mubr.f32.gmra.mrb[0].mxu0 %v4069
      %v4176 = vpop.f32.mrb[0].mxu0
      %v4177 = vadd.f32 0.0, %v4176
      %v4178 = vpop.f32.mrb[0].mxu0
      %4179 = vmatprep.mubr.f32.mxu0 0.0
      %4180 = vmatmul.mubr.f32.gmra.mrb[0].mxu0 %v4071
      %v4181 = vpop.f32.mrb[0].mxu0
      %v4182 = vadd.f32 0.0, %v4181
      %v4183 = vpop.f32.mrb[0].mxu0
      %4184 = vmatprep.mubr.f32.mxu0 0.0
      %4185 = vmatmul.mubr.f32.gmra.mrb[0].mxu0 %v4073
      %v4186 = vpop.f32.mrb[0].mxu0
      %v4187 = vadd.f32 0.0, %v4186
      %v4188 = vpop.f32.mrb[0].mxu0
      %4189 = vmatprep.mubr.f32.mxu0 0.0
      %4190 = vmatmul.mubr.f32.gmra.mrb[0].mxu0 %v4075
      %v4191 = vpop.f32.mrb[0].mxu0
      %v4192 = vadd.f32 0.0, %v4191
      %v4193 = vpop.f32.mrb[0].mxu0
      %4194 = vmatprep.mubr.f32.mxu0 0.0
      %4195 = vmatmul.mubr.f32.gmra.mrb[0].mxu0 %v4077
      %v4196 = vpop.f32.mrb[0].mxu0
      %v4197 = vadd.f32 0.0, %v4196
      %v4198 = vpop.f32.mrb[0].mxu0
      %4199 = vdwg.mxu0
      %v4200 = vsel %vm1329, %v4162, -inf
      %4201 = vmax.xlane.f32.xlu0 %v4200
      %v4202 = vpop.xlane.xlu0 %4201
      %v4203 = vsel %vm1329, %v4167, -inf
      %4204 = vmax.xlane.f32.xlu0 %v4203
      %v4205 = vpop.xlane.xlu0 %4204
      %v4206 = vsel %vm1329, %v4172, -inf
      %4207 = vmax.xlane.f32.xlu0 %v4206
      %v4208 = vpop.xlane.xlu0 %4207
      %v4209 = vsel %vm1329, %v4177, -inf
      %4210 = vmax.xlane.f32.xlu0 %v4209
      %v4211 = vpop.xlane.xlu0 %4210
      %v4212 = vsel %vm1329, %v4182, -inf
      %4213 = vmax.xlane.f32.xlu0 %v4212
      %v4214 = vpop.xlane.xlu0 %4213
      %v4215 = vsel %vm1329, %v4187, -inf
      %4216 = vmax.xlane.f32.xlu0 %v4215
      %v4217 = vpop.xlane.xlu0 %4216
      %v4218 = vsel %vm1329, %v4192, -inf
      %4219 = vmax.xlane.f32.xlu0 %v4218
      %v4220 = vpop.xlane.xlu0 %4219
      %v4221 = vsel %vm1329, %v4197, -inf
      %4222 = vmax.xlane.f32.xlu0 %v4221
      %v4223 = vpop.xlane.xlu0 %4222
      %v4224 = vsub.f32 %v4162, %v4202
      %v4225 = vsub.f32 %v4167, %v4205
      %v4226 = vsub.f32 %v4172, %v4208
      %v4227 = vsub.f32 %v4177, %v4211
      %v4228 = vsub.f32 %v4182, %v4214
      %v4229 = vsub.f32 %v4187, %v4217
      %v4230 = vsub.f32 %v4192, %v4220
      %v4231 = vsub.f32 %v4197, %v4223
      %v4232 = vmul.f32 %v4224, 1.442695
      %v4233 = vpow.pop %v4232
      %v4234 = vmul.f32 %v4225, 1.442695
      %v4235 = vpow.pop %v4234
      %v4236 = vmul.f32 %v4226, 1.442695
      %v4237 = vpow.pop %v4236
      %v4238 = vmul.f32 %v4227, 1.442695
      %v4239 = vpow.pop %v4238
      %v4240 = vmul.f32 %v4228, 1.442695
      %v4241 = vpow.pop %v4240
      %v4242 = vmul.f32 %v4229, 1.442695
      %v4243 = vpow.pop %v4242
      %v4244 = vmul.f32 %v4230, 1.442695
      %v4245 = vpow.pop %v4244
      %v4246 = vmul.f32 %v4231, 1.442695
      %v4247 = vpow.pop %v4246
      %v4248 = vsel %vm1329, %v4233, 0.0
      %4249 = vadd.xlane.f32.xlu0 %v4248
      %v4250 = vpop.xlane.xlu0 %4249
      %v4251 = vsel %vm1329, %v4235, 0.0
      %4252 = vadd.xlane.f32.xlu0 %v4251
      %v4253 = vpop.xlane.xlu0 %4252
      %v4254 = vsel %vm1329, %v4237, 0.0
      %4255 = vadd.xlane.f32.xlu0 %v4254
      %v4256 = vpop.xlane.xlu0 %4255
      %v4257 = vsel %vm1329, %v4239, 0.0
      %4258 = vadd.xlane.f32.xlu0 %v4257
      %v4259 = vpop.xlane.xlu0 %4258
      %v4260 = vsel %vm1329, %v4241, 0.0
      %4261 = vadd.xlane.f32.xlu0 %v4260
      %v4262 = vpop.xlane.xlu0 %4261
      %v4263 = vsel %vm1329, %v4243, 0.0
      %4264 = vadd.xlane.f32.xlu0 %v4263
      %v4265 = vpop.xlane.xlu0 %4264
      %v4266 = vsel %vm1329, %v4245, 0.0
      %4267 = vadd.xlane.f32.xlu0 %v4266
      %v4268 = vpop.xlane.xlu0 %4267
      %v4269 = vsel %vm1329, %v4247, 0.0
      %4270 = vadd.xlane.f32.xlu0 %v4269
      %v4271 = vpop.xlane.xlu0 %4270
      %v4272 = vrcp.pop %v4250
      %v4273 = vrcp.pop %v4253
      %v4274 = vrcp.pop %v4256
      %v4275 = vrcp.pop %v4259
      %v4276 = vrcp.pop %v4262
      %v4277 = vrcp.pop %v4265
      %v4278 = vrcp.pop %v4268
      %v4279 = vrcp.pop %v4271
      %v4280 = vmul.f32 %v4233, %v4272
      %v4281 = vmul.f32 %v4235, %v4273
      %v4282 = vmul.f32 %v4237, %v4274
      %v4283 = vmul.f32 %v4239, %v4275
      %v4284 = vmul.f32 %v4241, %v4276
      %v4285 = vmul.f32 %v4243, %v4277
      %v4286 = vmul.f32 %v4245, %v4278
      %v4287 = vmul.f32 %v4247, %v4279
      %4288 = vrot.lane.b32.xlu0 %v1113, 36
      %v4289 = vpop.permute.xlu0 %4288
      %4290 = vrot.lane.b32.xlu0 %v1118, 36
      %v4291 = vpop.permute.xlu0 %4290
      %4292 = vrot.lane.b32.xlu0 %v1123, 36
      %v4293 = vpop.permute.xlu0 %4292
      %4294 = vrot.lane.b32.xlu0 %v1128, 36
      %v4295 = vpop.permute.xlu0 %4294
      %4296 = vrot.lane.b32.xlu0 %v1133, 36
      %v4297 = vpop.permute.xlu0 %4296
      %4298 = vrot.lane.b32.xlu0 %v1138, 36
      %v4299 = vpop.permute.xlu0 %4298
      %4300 = vrot.lane.b32.xlu0 %v1143, 36
      %v4301 = vpop.permute.xlu0 %4300
      %4302 = vrot.lane.b32.xlu0 %v1148, 36
      %v4303 = vpop.permute.xlu0 %4302
      %v4313 = vsel %vm1329, %v4280, 0
      %v4316 = vsel %vm1329, %v4281, 0
      %v4319 = vsel %vm1329, %v4282, 0
      %v4322 = vsel %vm1329, %v4283, 0
      %v4325 = vsel %vm1329, %v4284, 0
      %v4328 = vsel %vm1329, %v4285, 0
      %v4331 = vsel %vm1329, %v4286, 0
      %v4334 = vsel %vm1329, %v4287, 0
      %4336 = vmatprep.subr.mxu0 0.0
      %4337 = vmatpush1.msra.mxu0 %v4289
      %4338 = vmatprep.subr.mxu0 0.0
      %4339 = vmatpush1.msra.mxu0 %v4291
      %4340 = vmatprep.subr.mxu0 0.0
      %4341 = vmatpush1.msra.mxu0 %v4293
      %4342 = vmatprep.subr.mxu0 0.0
      %4343 = vmatpush1.msra.mxu0 %v4295
      %4344 = vmatprep.subr.mxu0 0.0
      %4345 = vmatpush1.msra.mxu0 %v4297
      %4346 = vmatprep.subr.mxu0 0.0
      %4347 = vmatpush1.msra.mxu0 %v4299
      %4348 = vmatprep.subr.mxu0 0.0
      %4349 = vmatpush1.msra.mxu0 %v4301
      %4350 = vmatprep.subr.mxu0 0.0
      %4351 = vmatpush1.msra.mxu0 %v4303
      %4352 = vmatprep.subr.mxu0 0.0
      %4353 = vmatpush1.msra.mxu0 0.0
      %4354 = vmatprep.subr.mxu0 0.0
      %4355 = vmatpush1.msra.mxu0 0.0
      %4356 = vmatprep.subr.mxu0 0.0
      %4357 = vmatpush1.msra.mxu0 0.0
      %4358 = vmatprep.subr.mxu0 0.0
      %4359 = vmatpush1.msra.mxu0 0.0
      %4360 = vmatprep.subr.mxu0 0.0
      %4361 = vmatpush1.msra.mxu0 0.0
      %4362 = vmatprep.subr.mxu0 0.0
      %4363 = vmatpush1.msra.mxu0 0.0
      %4364 = vmatprep.subr.mxu0 0.0
      %4365 = vmatpush1.msra.mxu0 0.0
      %4366 = vmatprep.subr.mxu0 0.0
      %4367 = vmatpush1.msra.mxu0 0.0
      %4368 = vmatprep.subr.mxu0 0.0
      %4369 = vmatpush1.msra.mxu0 0.0
      %4370 = vmatprep.subr.mxu0 0.0
      %4371 = vmatpush1.msra.mxu0 0.0
      %4372 = vmatprep.subr.mxu0 0.0
      %4373 = vmatpush1.msra.mxu0 0.0
      %4374 = vmatprep.subr.mxu0 0.0
      %4375 = vmatpush1.msra.mxu0 0.0
      %4376 = vmatprep.subr.mxu0 0.0
      %4377 = vmatpush1.msra.mxu0 0.0
      %4378 = vmatprep.subr.mxu0 0.0
      %4379 = vmatpush1.msra.mxu0 0.0
      %4380 = vmatprep.subr.mxu0 0.0
      %4381 = vmatpush1.msra.mxu0 0.0
      %4382 = vmatprep.subr.mxu0 0.0
      %4383 = vmatpush1.msra.mxu0 0.0
      %4384 = vmatprep.subr.mxu0 0.0
      %4385 = vmatpush1.msra.mxu0 0.0
      %4386 = vmatprep.subr.mxu0 0.0
      %4387 = vmatpush1.msra.mxu0 0.0
      %4388 = vmatprep.subr.mxu0 0.0
      %4389 = vmatpush1.msra.mxu0 0.0
      %4390 = vmatprep.subr.mxu0 0.0
      %4391 = vmatpush1.msra.mxu0 0.0
      %4392 = vmatprep.subr.mxu0 0.0
      %4393 = vmatpush1.msra.mxu0 0.0
      %4394 = vmatprep.subr.mxu0 0.0
      %4395 = vmatpush1.msra.mxu0 0.0
      %4396 = vmatprep.subr.mxu0 0.0
      %4397 = vmatpush1.msra.mxu0 0.0
      %4398 = vmatprep.subr.mxu0 0.0
      %4399 = vmatpush1.msra.mxu0 0.0
      %4400 = vmatprep.mubr.f32.mxu0 0.0
      %4401 = vmatmul.mubr.f32.gmra.mrb[0].mxu0 %v4313
      %v4402 = vpop.f32.mrb[0].mxu0
      %v4403 = vadd.f32 0.0, %v4402
      %v4404 = vpop.f32.mrb[0].mxu0
      %4405 = vmatprep.mubr.f32.mxu0 0.0
      %4406 = vmatmul.mubr.f32.gmra.mrb[0].mxu0 %v4316
      %v4407 = vpop.f32.mrb[0].mxu0
      %v4408 = vadd.f32 0.0, %v4407
      %v4409 = vpop.f32.mrb[0].mxu0
      %4410 = vmatprep.mubr.f32.mxu0 0.0
      %4411 = vmatmul.mubr.f32.gmra.mrb[0].mxu0 %v4319
      %v4412 = vpop.f32.mrb[0].mxu0
      %v4413 = vadd.f32 0.0, %v4412
      %v4414 = vpop.f32.mrb[0].mxu0
      %4415 = vmatprep.mubr.f32.mxu0 0.0
      %4416 = vmatmul.mubr.f32.gmra.mrb[0].mxu0 %v4322
      %v4417 = vpop.f32.mrb[0].mxu0
      %v4418 = vadd.f32 0.0, %v4417
      %v4419 = vpop.f32.mrb[0].mxu0
      %4420 = vmatprep.mubr.f32.mxu0 0.0
      %4421 = vmatmul.mubr.f32.gmra.mrb[0].mxu0 %v4325
      %v4422 = vpop.f32.mrb[0].mxu0
      %v4423 = vadd.f32 0.0, %v4422
      %v4424 = vpop.f32.mrb[0].mxu0
      %4425 = vmatprep.mubr.f32.mxu0 0.0
      %4426 = vmatmul.mubr.f32.gmra.mrb[0].mxu0 %v4328
      %v4427 = vpop.f32.mrb[0].mxu0
      %v4428 = vadd.f32 0.0, %v4427
      %v4429 = vpop.f32.mrb[0].mxu0
      %4430 = vmatprep.mubr.f32.mxu0 0.0
      %4431 = vmatmul.mubr.f32.gmra.mrb[0].mxu0 %v4331
      %v4432 = vpop.f32.mrb[0].mxu0
      %v4433 = vadd.f32 0.0, %v4432
      %v4434 = vpop.f32.mrb[0].mxu0
      %4435 = vmatprep.mubr.f32.mxu0 0.0
      %4436 = vmatmul.mubr.f32.gmra.mrb[0].mxu0 %v4334
      %v4437 = vpop.f32.mrb[0].mxu0
      %v4438 = vadd.f32 0.0, %v4437
      %v4439 = vpop.f32.mrb[0].mxu0
      %4440 = vdwg.mxu0
      %4449 = vrot.lane.b32.xlu0 %v1943, 4
      %v4450 = vpop.permute.xlu0 %4449
      %4451 = vrot.lane.b32.xlu0 %v1948, 4
      %v4452 = vpop.permute.xlu0 %4451
      %4453 = vrot.lane.b32.xlu0 %v1953, 4
      %v4454 = vpop.permute.xlu0 %4453
      %4455 = vrot.lane.b32.xlu0 %v1958, 4
      %v4456 = vpop.permute.xlu0 %4455
      %4457 = vrot.lane.b32.xlu0 %v1963, 4
      %v4458 = vpop.permute.xlu0 %4457
      %4459 = vrot.lane.b32.xlu0 %v1968, 4
      %v4460 = vpop.permute.xlu0 %4459
      %4461 = vrot.lane.b32.xlu0 %v1973, 4
      %v4462 = vpop.permute.xlu0 %4461
      %4463 = vrot.lane.b32.xlu0 %v1978, 4
      %v4464 = vpop.permute.xlu0 %4463
      %4481 = vrot.lane.b32.xlu0 %v2353, 8
      %v4482 = vpop.permute.xlu0 %4481
      %4483 = vrot.lane.b32.xlu0 %v2358, 8
      %v4484 = vpop.permute.xlu0 %4483
      %4485 = vrot.lane.b32.xlu0 %v2363, 8
      %v4486 = vpop.permute.xlu0 %4485
      %4487 = vrot.lane.b32.xlu0 %v2368, 8
      %v4488 = vpop.permute.xlu0 %4487
      %4489 = vrot.lane.b32.xlu0 %v2373, 8
      %v4490 = vpop.permute.xlu0 %4489
      %4491 = vrot.lane.b32.xlu0 %v2378, 8
      %v4492 = vpop.permute.xlu0 %4491
      %4493 = vrot.lane.b32.xlu0 %v2383, 8
      %v4494 = vpop.permute.xlu0 %4493
      %4495 = vrot.lane.b32.xlu0 %v2388, 8
      %v4496 = vpop.permute.xlu0 %4495
      %4513 = vrot.lane.b32.xlu0 %v2763, 12
      %v4514 = vpop.permute.xlu0 %4513
      %4515 = vrot.lane.b32.xlu0 %v2768, 12
      %v4516 = vpop.permute.xlu0 %4515
      %4517 = vrot.lane.b32.xlu0 %v2773, 12
      %v4518 = vpop.permute.xlu0 %4517
      %4519 = vrot.lane.b32.xlu0 %v2778, 12
      %v4520 = vpop.permute.xlu0 %4519
      %4521 = vrot.lane.b32.xlu0 %v2783, 12
      %v4522 = vpop.permute.xlu0 %4521
      %4523 = vrot.lane.b32.xlu0 %v2788, 12
      %v4524 = vpop.permute.xlu0 %4523
      %4525 = vrot.lane.b32.xlu0 %v2793, 12
      %v4526 = vpop.permute.xlu0 %4525
      %4527 = vrot.lane.b32.xlu0 %v2798, 12
      %v4528 = vpop.permute.xlu0 %4527
      %4545 = vrot.lane.b32.xlu0 %v3173, 16
      %v4546 = vpop.permute.xlu0 %4545
      %4547 = vrot.lane.b32.xlu0 %v3178, 16
      %v4548 = vpop.permute.xlu0 %4547
      %4549 = vrot.lane.b32.xlu0 %v3183, 16
      %v4550 = vpop.permute.xlu0 %4549
      %4551 = vrot.lane.b32.xlu0 %v3188, 16
      %v4552 = vpop.permute.xlu0 %4551
      %4553 = vrot.lane.b32.xlu0 %v3193, 16
      %v4554 = vpop.permute.xlu0 %4553
      %4555 = vrot.lane.b32.xlu0 %v3198, 16
      %v4556 = vpop.permute.xlu0 %4555
      %4557 = vrot.lane.b32.xlu0 %v3203, 16
      %v4558 = vpop.permute.xlu0 %4557
      %4559 = vrot.lane.b32.xlu0 %v3208, 16
      %v4560 = vpop.permute.xlu0 %4559
      %4577 = vrot.lane.b32.xlu0 %v3583, 20
      %v4578 = vpop.permute.xlu0 %4577
      %4579 = vrot.lane.b32.xlu0 %v3588, 20
      %v4580 = vpop.permute.xlu0 %4579
      %4581 = vrot.lane.b32.xlu0 %v3593, 20
      %v4582 = vpop.permute.xlu0 %4581
      %4583 = vrot.lane.b32.xlu0 %v3598, 20
      %v4584 = vpop.permute.xlu0 %4583
      %4585 = vrot.lane.b32.xlu0 %v3603, 20
      %v4586 = vpop.permute.xlu0 %4585
      %4587 = vrot.lane.b32.xlu0 %v3608, 20
      %v4588 = vpop.permute.xlu0 %4587
      %4589 = vrot.lane.b32.xlu0 %v3613, 20
      %v4590 = vpop.permute.xlu0 %4589
      %4591 = vrot.lane.b32.xlu0 %v3618, 20
      %v4592 = vpop.permute.xlu0 %4591
      %4609 = vrot.lane.b32.xlu0 %v3993, 24
      %v4610 = vpop.permute.xlu0 %4609
      %4611 = vrot.lane.b32.xlu0 %v3998, 24
      %v4612 = vpop.permute.xlu0 %4611
      %4613 = vrot.lane.b32.xlu0 %v4003, 24
      %v4614 = vpop.permute.xlu0 %4613
      %4615 = vrot.lane.b32.xlu0 %v4008, 24
      %v4616 = vpop.permute.xlu0 %4615
      %4617 = vrot.lane.b32.xlu0 %v4013, 24
      %v4618 = vpop.permute.xlu0 %4617
      %4619 = vrot.lane.b32.xlu0 %v4018, 24
      %v4620 = vpop.permute.xlu0 %4619
      %4621 = vrot.lane.b32.xlu0 %v4023, 24
      %v4622 = vpop.permute.xlu0 %4621
      %4623 = vrot.lane.b32.xlu0 %v4028, 24
      %v4624 = vpop.permute.xlu0 %4623
      %4641 = vrot.lane.b32.xlu0 %v4403, 28
      %v4642 = vpop.permute.xlu0 %4641
      %4643 = vrot.lane.b32.xlu0 %v4408, 28
      %v4644 = vpop.permute.xlu0 %4643
      %4645 = vrot.lane.b32.xlu0 %v4413, 28
      %v4646 = vpop.permute.xlu0 %4645
      %4647 = vrot.lane.b32.xlu0 %v4418, 28
      %v4648 = vpop.permute.xlu0 %4647
      %4649 = vrot.lane.b32.xlu0 %v4423, 28
      %v4650 = vpop.permute.xlu0 %4649
      %4651 = vrot.lane.b32.xlu0 %v4428, 28
      %v4652 = vpop.permute.xlu0 %4651
      %4653 = vrot.lane.b32.xlu0 %v4433, 28
      %v4654 = vpop.permute.xlu0 %4653
      %4655 = vrot.lane.b32.xlu0 %v4438, 28
      %v4656 = vpop.permute.xlu0 %4655
      %v4665 = vsel %vm1183, %v1533, %v4450
      %v4666 = vsel %vm1183, %v1538, %v4452
      %v4667 = vsel %vm1183, %v1543, %v4454
      %v4668 = vsel %vm1183, %v1548, %v4456
      %v4669 = vsel %vm1183, %v1553, %v4458
      %v4670 = vsel %vm1183, %v1558, %v4460
      %v4671 = vsel %vm1183, %v1563, %v4462
      %v4672 = vsel %vm1183, %v1568, %v4464
      %vm4673 = vcmask 64512
      %v4674 = vsel %vm4673, %v4665, %v4482
      %v4675 = vsel %vm4673, %v4666, %v4484
      %v4676 = vsel %vm4673, %v4667, %v4486
      %v4677 = vsel %vm4673, %v4668, %v4488
      %v4678 = vsel %vm4673, %v4669, %v4490
      %v4679 = vsel %vm4673, %v4670, %v4492
      %v4680 = vsel %vm4673, %v4671, %v4494
      %v4681 = vsel %vm4673, %v4672, %v4496
      %vm4682 = vcmask 97280
      %v4683 = vsel %vm4682, %v4674, %v4514
      %v4684 = vsel %vm4682, %v4675, %v4516
      %v4685 = vsel %vm4682, %v4676, %v4518
      %v4686 = vsel %vm4682, %v4677, %v4520
      %v4687 = vsel %vm4682, %v4678, %v4522
      %v4688 = vsel %vm4682, %v4679, %v4524
      %v4689 = vsel %vm4682, %v4680, %v4526
      %v4690 = vsel %vm4682, %v4681, %v4528
      %vm4691 = vcmask 130048
      %v4692 = vsel %vm4691, %v4683, %v4546
      %v4693 = vsel %vm4691, %v4684, %v4548
      %v4694 = vsel %vm4691, %v4685, %v4550
      %v4695 = vsel %vm4691, %v4686, %v4552
      %v4696 = vsel %vm4691, %v4687, %v4554
      %v4697 = vsel %vm4691, %v4688, %v4556
      %v4698 = vsel %vm4691, %v4689, %v4558
      %v4699 = vsel %vm4691, %v4690, %v4560
      %vm4700 = vcmask 162816
      %v4701 = vsel %vm4700, %v4692, %v4578
      %v4702 = vsel %vm4700, %v4693, %v4580
      %v4703 = vsel %vm4700, %v4694, %v4582
      %v4704 = vsel %vm4700, %v4695, %v4584
      %v4705 = vsel %vm4700, %v4696, %v4586
      %v4706 = vsel %vm4700, %v4697, %v4588
      %v4707 = vsel %vm4700, %v4698, %v4590
      %v4708 = vsel %vm4700, %v4699, %v4592
      %vm4709 = vcmask 195584
      %v4710 = vsel %vm4709, %v4701, %v4610
      %v4711 = vsel %vm4709, %v4702, %v4612
      %v4712 = vsel %vm4709, %v4703, %v4614
      %v4713 = vsel %vm4709, %v4704, %v4616
      %v4714 = vsel %vm4709, %v4705, %v4618
      %v4715 = vsel %vm4709, %v4706, %v4620
      %v4716 = vsel %vm4709, %v4707, %v4622
      %v4717 = vsel %vm4709, %v4708, %v4624
      %vm4718 = vcmask 228352
      %v4719 = vsel %vm4718, %v4710, %v4642
      %v4720 = vsel %vm4718, %v4711, %v4644
      %v4721 = vsel %vm4718, %v4712, %v4646
      %v4722 = vsel %vm4718, %v4713, %v4648
      %v4723 = vsel %vm4718, %v4714, %v4650
      %v4724 = vsel %vm4718, %v4715, %v4652
      %v4725 = vsel %vm4718, %v4716, %v4654
      %v4726 = vsel %vm4718, %v4717, %v4656
      %v4727 = vld [vmem:[%s4] sm:$0xff]
      %v4728 = vld [vmem:[%s4 + $0x8] sm:$0xff]
      %v4729 = vld [vmem:[%s4 + $0x10] sm:$0xff]
      %v4730 = vld [vmem:[%s4 + $0x18] sm:$0xff]
      %v4731 = vld [vmem:[%s5] sm:$0x1]
      %v4733 = vlaneseq
      %v4734 = vshrl.u32 %v4733, 7
      %v4735 = vsub.s32 0, %v4734
      %v4736 = vrot.slane %v4731, %v4735
      %v4739 = vsel %vm1021, %v4719, 0
      %v4742 = vsel %vm1021, %v4720, 0
      %v4745 = vsel %vm1021, %v4721, 0
      %v4748 = vsel %vm1021, %v4722, 0
      %v4751 = vsel %vm1021, %v4723, 0
      %v4754 = vsel %vm1021, %v4724, 0
      %v4757 = vsel %vm1021, %v4725, 0
      %v4760 = vsel %vm1021, %v4726, 0
      %4762 = vmatprep.subr.mxu0 0.0
      %4763 = vmatpush1.msra.mxu0 %v4727
      %4764 = vmatprep.subr.mxu0 0.0
      %4765 = vmatpush1.msra.mxu0 %v4728
      %4766 = vmatprep.subr.mxu0 0.0
      %4767 = vmatpush1.msra.mxu0 %v4729
      %4768 = vmatprep.subr.mxu0 0.0
      %4769 = vmatpush1.msra.mxu0 %v4730
      %4770 = vmatprep.subr.mxu0 0.0
      %4771 = vmatpush1.msra.mxu0 0.0
      %4772 = vmatprep.subr.mxu0 0.0
      %4773 = vmatpush1.msra.mxu0 0.0
      %4774 = vmatprep.subr.mxu0 0.0
      %4775 = vmatpush1.msra.mxu0 0.0
      %4776 = vmatprep.subr.mxu0 0.0
      %4777 = vmatpush1.msra.mxu0 0.0
      %4778 = vmatprep.subr.mxu0 0.0
      %4779 = vmatpush1.msra.mxu0 0.0
      %4780 = vmatprep.subr.mxu0 0.0
      %4781 = vmatpush1.msra.mxu0 0.0
      %4782 = vmatprep.subr.mxu0 0.0
      %4783 = vmatpush1.msra.mxu0 0.0
      %4784 = vmatprep.subr.mxu0 0.0
      %4785 = vmatpush1.msra.mxu0 0.0
      %4786 = vmatprep.subr.mxu0 0.0
      %4787 = vmatpush1.msra.mxu0 0.0
      %4788 = vmatprep.subr.mxu0 0.0
      %4789 = vmatpush1.msra.mxu0 0.0
      %4790 = vmatprep.subr.mxu0 0.0
      %4791 = vmatpush1.msra.mxu0 0.0
      %4792 = vmatprep.subr.mxu0 0.0
      %4793 = vmatpush1.msra.mxu0 0.0
      %4794 = vmatprep.subr.mxu0 0.0
      %4795 = vmatpush1.msra.mxu0 0.0
      %4796 = vmatprep.subr.mxu0 0.0
      %4797 = vmatpush1.msra.mxu0 0.0
      %4798 = vmatprep.subr.mxu0 0.0
      %4799 = vmatpush1.msra.mxu0 0.0
      %4800 = vmatprep.subr.mxu0 0.0
      %4801 = vmatpush1.msra.mxu0 0.0
      %4802 = vmatprep.subr.mxu0 0.0
      %4803 = vmatpush1.msra.mxu0 0.0
      %4804 = vmatprep.subr.mxu0 0.0
      %4805 = vmatpush1.msra.mxu0 0.0
      %4806 = vmatprep.subr.mxu0 0.0
      %4807 = vmatpush1.msra.mxu0 0.0
      %4808 = vmatprep.subr.mxu0 0.0
      %4809 = vmatpush1.msra.mxu0 0.0
      %4810 = vmatprep.subr.mxu0 0.0
      %4811 = vmatpush1.msra.mxu0 0.0
      %4812 = vmatprep.subr.mxu0 0.0
      %4813 = vmatpush1.msra.mxu0 0.0
      %4814 = vmatprep.subr.mxu0 0.0
      %4815 = vmatpush1.msra.mxu0 0.0
      %4816 = vmatprep.subr.mxu0 0.0
      %4817 = vmatpush1.msra.mxu0 0.0
      %4818 = vmatprep.subr.mxu0 0.0
      %4819 = vmatpush1.msra.mxu0 0.0
      %4820 = vmatprep.subr.mxu0 0.0
      %4821 = vmatpush1.msra.mxu0 0.0
      %4822 = vmatprep.subr.mxu0 0.0
      %4823 = vmatpush1.msra.mxu0 0.0
      %4824 = vmatprep.subr.mxu0 0.0
      %4825 = vmatpush1.msra.mxu0 0.0
      %4826 = vmatprep.mubr.f32.mxu0 0.0
      %4827 = vmatmul.mubr.f32.gmra.mrb[0].mxu0 %v4739
      %v4828 = vpop.f32.mrb[0].mxu0
      %v4829 = vadd.f32 %v4736, %v4828
      %v4830 = vpop.f32.mrb[0].mxu0
      %4831 = vmatprep.mubr.f32.mxu0 0.0
      %4832 = vmatmul.mubr.f32.gmra.mrb[0].mxu0 %v4742
      %v4833 = vpop.f32.mrb[0].mxu0
      %v4834 = vadd.f32 %v4736, %v4833
      %v4835 = vpop.f32.mrb[0].mxu0
      %4836 = vmatprep.mubr.f32.mxu0 0.0
      %4837 = vmatmul.mubr.f32.gmra.mrb[0].mxu0 %v4745
      %v4838 = vpop.f32.mrb[0].mxu0
      %v4839 = vadd.f32 %v4736, %v4838
      %v4840 = vpop.f32.mrb[0].mxu0
      %4841 = vmatprep.mubr.f32.mxu0 0.0
      %4842 = vmatmul.mubr.f32.gmra.mrb[0].mxu0 %v4748
      %v4843 = vpop.f32.mrb[0].mxu0
      %v4844 = vadd.f32 %v4736, %v4843
      %v4845 = vpop.f32.mrb[0].mxu0
      %4846 = vmatprep.mubr.f32.mxu0 0.0
      %4847 = vmatmul.mubr.f32.gmra.mrb[0].mxu0 %v4751
      %v4848 = vpop.f32.mrb[0].mxu0
      %v4849 = vadd.f32 %v4736, %v4848
      %v4850 = vpop.f32.mrb[0].mxu0
      %4851 = vmatprep.mubr.f32.mxu0 0.0
      %4852 = vmatmul.mubr.f32.gmra.mrb[0].mxu0 %v4754
      %v4853 = vpop.f32.mrb[0].mxu0
      %v4854 = vadd.f32 %v4736, %v4853
      %v4855 = vpop.f32.mrb[0].mxu0
      %4856 = vmatprep.mubr.f32.mxu0 0.0
      %4857 = vmatmul.mubr.f32.gmra.mrb[0].mxu0 %v4757
      %v4858 = vpop.f32.mrb[0].mxu0
      %v4859 = vadd.f32 %v4736, %v4858
      %v4860 = vpop.f32.mrb[0].mxu0
      %4861 = vmatprep.mubr.f32.mxu0 0.0
      %4862 = vmatmul.mubr.f32.gmra.mrb[0].mxu0 %v4760
      %v4863 = vpop.f32.mrb[0].mxu0
      %v4864 = vadd.f32 %v4736, %v4863
      %v4865 = vpop.f32.mrb[0].mxu0
      %4866 = vdwg.mxu0
      %v4867 = vadd.f32 %v972, %v4829
      %v4868 = vadd.f32 %v977, %v4834
      %v4869 = vadd.f32 %v982, %v4839
      %v4870 = vadd.f32 %v987, %v4844
      %v4871 = vadd.f32 %v992, %v4849
      %v4872 = vadd.f32 %v997, %v4854
      %v4873 = vadd.f32 %v1002, %v4859
      %v4874 = vadd.f32 %v1007, %v4864
      %v4875 = vld [vmem:[%s6] sm:$0x1]
      %v4876 = vld [vmem:[%s7] sm:$0x1]
      %v4877 = vsel %vm1021, %v4867, 0.0
      %4878 = vadd.xlane.f32.xlu0 %v4877
      %v4879 = vpop.xlane.xlu0 %4878
      %v4880 = vsel %vm1021, %v4868, 0.0
      %4881 = vadd.xlane.f32.xlu0 %v4880
      %v4882 = vpop.xlane.xlu0 %4881
      %v4883 = vsel %vm1021, %v4869, 0.0
      %4884 = vadd.xlane.f32.xlu0 %v4883
      %v4885 = vpop.xlane.xlu0 %4884
      %v4886 = vsel %vm1021, %v4870, 0.0
      %4887 = vadd.xlane.f32.xlu0 %v4886
      %v4888 = vpop.xlane.xlu0 %4887
      %v4889 = vsel %vm1021, %v4871, 0.0
      %4890 = vadd.xlane.f32.xlu0 %v4889
      %v4891 = vpop.xlane.xlu0 %4890
      %v4892 = vsel %vm1021, %v4872, 0.0
      %4893 = vadd.xlane.f32.xlu0 %v4892
      %v4894 = vpop.xlane.xlu0 %4893
      %v4895 = vsel %vm1021, %v4873, 0.0
      %4896 = vadd.xlane.f32.xlu0 %v4895
      %v4897 = vpop.xlane.xlu0 %4896
      %v4898 = vsel %vm1021, %v4874, 0.0
      %4899 = vadd.xlane.f32.xlu0 %v4898
      %v4900 = vpop.xlane.xlu0 %4899
      %v4901 = vrcp.pop 32.0
      %v4902 = vmul.f32 %v4879, %v4901
      %v4903 = vmul.f32 %v4882, %v4901
      %v4904 = vmul.f32 %v4885, %v4901
      %v4905 = vmul.f32 %v4888, %v4901
      %v4906 = vmul.f32 %v4891, %v4901
      %v4907 = vmul.f32 %v4894, %v4901
      %v4908 = vmul.f32 %v4897, %v4901
      %v4909 = vmul.f32 %v4900, %v4901
      %v4910 = vsub.f32 %v4867, %v4902
      %v4911 = vsub.f32 %v4868, %v4903
      %v4912 = vsub.f32 %v4869, %v4904
      %v4913 = vsub.f32 %v4870, %v4905
      %v4914 = vsub.f32 %v4871, %v4906
      %v4915 = vsub.f32 %v4872, %v4907
      %v4916 = vsub.f32 %v4873, %v4908
      %v4917 = vsub.f32 %v4874, %v4909
      %v4918 = vmul.f32 %v4910, %v4910
      %v4919 = vmul.f32 %v4911, %v4911
      %v4920 = vmul.f32 %v4912, %v4912
      %v4921 = vmul.f32 %v4913, %v4913
      %v4922 = vmul.f32 %v4914, %v4914
      %v4923 = vmul.f32 %v4915, %v4915
      %v4924 = vmul.f32 %v4916, %v4916
      %v4925 = vmul.f32 %v4917, %v4917
      %v4926 = vsel %vm1021, %v4918, 0.0
      %4927 = vadd.xlane.f32.xlu0 %v4926
      %v4928 = vpop.xlane.xlu0 %4927
      %v4929 = vsel %vm1021, %v4919, 0.0
      %4930 = vadd.xlane.f32.xlu0 %v4929
      %v4931 = vpop.xlane.xlu0 %4930
      %v4932 = vsel %vm1021, %v4920, 0.0
      %4933 = vadd.xlane.f32.xlu0 %v4932
      %v4934 = vpop.xlane.xlu0 %4933
      %v4935 = vsel %vm1021, %v4921, 0.0
      %4936 = vadd.xlane.f32.xlu0 %v4935
      %v4937 = vpop.xlane.xlu0 %4936
      %v4938 = vsel %vm1021, %v4922, 0.0
      %4939 = vadd.xlane.f32.xlu0 %v4938
      %v4940 = vpop.xlane.xlu0 %4939
      %v4941 = vsel %vm1021, %v4923, 0.0
      %4942 = vadd.xlane.f32.xlu0 %v4941
      %v4943 = vpop.xlane.xlu0 %4942
      %v4944 = vsel %vm1021, %v4924, 0.0
      %4945 = vadd.xlane.f32.xlu0 %v4944
      %v4946 = vpop.xlane.xlu0 %4945
      %v4947 = vsel %vm1021, %v4925, 0.0
      %4948 = vadd.xlane.f32.xlu0 %v4947
      %v4949 = vpop.xlane.xlu0 %4948
      %v4950 = vmul.f32 %v4928, %v4901
      %v4951 = vmul.f32 %v4931, %v4901
      %v4952 = vmul.f32 %v4934, %v4901
      %v4953 = vmul.f32 %v4937, %v4901
      %v4954 = vmul.f32 %v4940, %v4901
      %v4955 = vmul.f32 %v4943, %v4901
      %v4956 = vmul.f32 %v4946, %v4901
      %v4957 = vmul.f32 %v4949, %v4901
      %v4958 = vadd.f32 %v4950, 1e-05
      %v4959 = vadd.f32 %v4951, 1e-05
      %v4960 = vadd.f32 %v4952, 1e-05
      %v4961 = vadd.f32 %v4953, 1e-05
      %v4962 = vadd.f32 %v4954, 1e-05
      %v4963 = vadd.f32 %v4955, 1e-05
      %v4964 = vadd.f32 %v4956, 1e-05
      %v4965 = vadd.f32 %v4957, 1e-05
      %v4966 = vrsqrt.pop %v4958
      %v4967 = vrsqrt.pop %v4959
      %v4968 = vrsqrt.pop %v4960
      %v4969 = vrsqrt.pop %v4961
      %v4970 = vrsqrt.pop %v4962
      %v4971 = vrsqrt.pop %v4963
      %v4972 = vrsqrt.pop %v4964
      %v4973 = vrsqrt.pop %v4965
      %v4974 = vmul.f32 %v4910, %v4966
      %v4975 = vmul.f32 %v4911, %v4967
      %v4976 = vmul.f32 %v4912, %v4968
      %v4977 = vmul.f32 %v4913, %v4969
      %v4978 = vmul.f32 %v4914, %v4970
      %v4979 = vmul.f32 %v4915, %v4971
      %v4980 = vmul.f32 %v4916, %v4972
      %v4981 = vmul.f32 %v4917, %v4973
      %v4983 = vlaneseq
      %v4984 = vshrl.u32 %v4983, 7
      %v4985 = vsub.s32 0, %v4984
      %v4986 = vrot.slane %v4875, %v4985
      %v4988 = vmul.f32 %v4974, %v4986
      %v4989 = vmul.f32 %v4975, %v4986
      %v4990 = vmul.f32 %v4976, %v4986
      %v4991 = vmul.f32 %v4977, %v4986
      %v4992 = vmul.f32 %v4978, %v4986
      %v4993 = vmul.f32 %v4979, %v4986
      %v4994 = vmul.f32 %v4980, %v4986
      %v4995 = vmul.f32 %v4981, %v4986
      %v4997 = vlaneseq
      %v4998 = vshrl.u32 %v4997, 7
      %v4999 = vsub.s32 0, %v4998
      %v5000 = vrot.slane %v4876, %v4999
      %v5002 = vadd.f32 %v4988, %v5000
      %v5003 = vadd.f32 %v4989, %v5000
      %v5004 = vadd.f32 %v4990, %v5000
      %v5005 = vadd.f32 %v4991, %v5000
      %v5006 = vadd.f32 %v4992, %v5000
      %v5007 = vadd.f32 %v4993, %v5000
      %v5008 = vadd.f32 %v4994, %v5000
      %v5009 = vadd.f32 %v4995, %v5000
      %v5010 = vld [vmem:[%s8] sm:$0xff]
      %v5011 = vld [vmem:[%s8 + $0x8] sm:$0xff]
      %v5012 = vld [vmem:[%s8 + $0x10] sm:$0xff]
      %v5013 = vld [vmem:[%s8 + $0x18] sm:$0xff]
      %v5014 = vld [vmem:[%s9] sm:$0x1]
      %v5016 = vlaneseq
      %v5017 = vshrl.u32 %v5016, 7
      %v5018 = vsub.s32 0, %v5017
      %v5019 = vrot.slane %v5014, %v5018
      %v5022 = vsel %vm1021, %v5002, 0
      %v5025 = vsel %vm1021, %v5003, 0
      %v5028 = vsel %vm1021, %v5004, 0
      %v5031 = vsel %vm1021, %v5005, 0
      %v5034 = vsel %vm1021, %v5006, 0
      %v5037 = vsel %vm1021, %v5007, 0
      %v5040 = vsel %vm1021, %v5008, 0
      %v5043 = vsel %vm1021, %v5009, 0
      %5045 = vmatprep.subr.mxu0 0.0
      %5046 = vmatpush1.msra.mxu0 %v5010
      %5047 = vmatprep.subr.mxu0 0.0
      %5048 = vmatpush1.msra.mxu0 %v5011
      %5049 = vmatprep.subr.mxu0 0.0
      %5050 = vmatpush1.msra.mxu0 %v5012
      %5051 = vmatprep.subr.mxu0 0.0
      %5052 = vmatpush1.msra.mxu0 %v5013
      %5053 = vmatprep.subr.mxu0 0.0
      %5054 = vmatpush1.msra.mxu0 0.0
      %5055 = vmatprep.subr.mxu0 0.0
      %5056 = vmatpush1.msra.mxu0 0.0
      %5057 = vmatprep.subr.mxu0 0.0
      %5058 = vmatpush1.msra.mxu0 0.0
      %5059 = vmatprep.subr.mxu0 0.0
      %5060 = vmatpush1.msra.mxu0 0.0
      %5061 = vmatprep.subr.mxu0 0.0
      %5062 = vmatpush1.msra.mxu0 0.0
      %5063 = vmatprep.subr.mxu0 0.0
      %5064 = vmatpush1.msra.mxu0 0.0
      %5065 = vmatprep.subr.mxu0 0.0
      %5066 = vmatpush1.msra.mxu0 0.0
      %5067 = vmatprep.subr.mxu0 0.0
      %5068 = vmatpush1.msra.mxu0 0.0
      %5069 = vmatprep.subr.mxu0 0.0
      %5070 = vmatpush1.msra.mxu0 0.0
      %5071 = vmatprep.subr.mxu0 0.0
      %5072 = vmatpush1.msra.mxu0 0.0
      %5073 = vmatprep.subr.mxu0 0.0
      %5074 = vmatpush1.msra.mxu0 0.0
      %5075 = vmatprep.subr.mxu0 0.0
      %5076 = vmatpush1.msra.mxu0 0.0
      %5077 = vmatprep.subr.mxu0 0.0
      %5078 = vmatpush1.msra.mxu0 0.0
      %5079 = vmatprep.subr.mxu0 0.0
      %5080 = vmatpush1.msra.mxu0 0.0
      %5081 = vmatprep.subr.mxu0 0.0
      %5082 = vmatpush1.msra.mxu0 0.0
      %5083 = vmatprep.subr.mxu0 0.0
      %5084 = vmatpush1.msra.mxu0 0.0
      %5085 = vmatprep.subr.mxu0 0.0
      %5086 = vmatpush1.msra.mxu0 0.0
      %5087 = vmatprep.subr.mxu0 0.0
      %5088 = vmatpush1.msra.mxu0 0.0
      %5089 = vmatprep.subr.mxu0 0.0
      %5090 = vmatpush1.msra.mxu0 0.0
      %5091 = vmatprep.subr.mxu0 0.0
      %5092 = vmatpush1.msra.mxu0 0.0
      %5093 = vmatprep.subr.mxu0 0.0
      %5094 = vmatpush1.msra.mxu0 0.0
      %5095 = vmatprep.subr.mxu0 0.0
      %5096 = vmatpush1.msra.mxu0 0.0
      %5097 = vmatprep.subr.mxu0 0.0
      %5098 = vmatpush1.msra.mxu0 0.0
      %5099 = vmatprep.subr.mxu0 0.0
      %5100 = vmatpush1.msra.mxu0 0.0
      %5101 = vmatprep.subr.mxu0 0.0
      %5102 = vmatpush1.msra.mxu0 0.0
      %5103 = vmatprep.subr.mxu0 0.0
      %5104 = vmatpush1.msra.mxu0 0.0
      %5105 = vmatprep.subr.mxu0 0.0
      %5106 = vmatpush1.msra.mxu0 0.0
      %5107 = vmatprep.subr.mxu0 0.0
      %5108 = vmatpush1.msra.mxu0 0.0
      %5109 = vmatprep.mubr.f32.mxu0 0.0
      %5110 = vmatmul.mubr.f32.gmra.mrb[0].mxu0 %v5022
      %v5111 = vpop.f32.mrb[0].mxu0
      %v5112 = vadd.f32 %v5019, %v5111
      %v5113 = vpop.f32.mrb[0].mxu0
      %5114 = vmatprep.mubr.f32.mxu0 0.0
      %5115 = vmatmul.mubr.f32.gmra.mrb[0].mxu0 %v5025
      %v5116 = vpop.f32.mrb[0].mxu0
      %v5117 = vadd.f32 %v5019, %v5116
      %v5118 = vpop.f32.mrb[0].mxu0
      %5119 = vmatprep.mubr.f32.mxu0 0.0
      %5120 = vmatmul.mubr.f32.gmra.mrb[0].mxu0 %v5028
      %v5121 = vpop.f32.mrb[0].mxu0
      %v5122 = vadd.f32 %v5019, %v5121
      %v5123 = vpop.f32.mrb[0].mxu0
      %5124 = vmatprep.mubr.f32.mxu0 0.0
      %5125 = vmatmul.mubr.f32.gmra.mrb[0].mxu0 %v5031
      %v5126 = vpop.f32.mrb[0].mxu0
      %v5127 = vadd.f32 %v5019, %v5126
      %v5128 = vpop.f32.mrb[0].mxu0
      %5129 = vmatprep.mubr.f32.mxu0 0.0
      %5130 = vmatmul.mubr.f32.gmra.mrb[0].mxu0 %v5034
      %v5131 = vpop.f32.mrb[0].mxu0
      %v5132 = vadd.f32 %v5019, %v5131
      %v5133 = vpop.f32.mrb[0].mxu0
      %5134 = vmatprep.mubr.f32.mxu0 0.0
      %5135 = vmatmul.mubr.f32.gmra.mrb[0].mxu0 %v5037
      %v5136 = vpop.f32.mrb[0].mxu0
      %v5137 = vadd.f32 %v5019, %v5136
      %v5138 = vpop.f32.mrb[0].mxu0
      %5139 = vmatprep.mubr.f32.mxu0 0.0
      %5140 = vmatmul.mubr.f32.gmra.mrb[0].mxu0 %v5040
      %v5141 = vpop.f32.mrb[0].mxu0
      %v5142 = vadd.f32 %v5019, %v5141
      %v5143 = vpop.f32.mrb[0].mxu0
      %5144 = vmatprep.mubr.f32.mxu0 0.0
      %5145 = vmatmul.mubr.f32.gmra.mrb[0].mxu0 %v5043
      %v5146 = vpop.f32.mrb[0].mxu0
      %v5147 = vadd.f32 %v5019, %v5146
      %v5148 = vpop.f32.mrb[0].mxu0
      %5149 = vdwg.mxu0
      %v5150 = vmax.f32 %v5112, 0.0
      %v5151 = vmax.f32 %v5117, 0.0
      %v5152 = vmax.f32 %v5122, 0.0
      %v5153 = vmax.f32 %v5127, 0.0
      %v5154 = vmax.f32 %v5132, 0.0
      %v5155 = vmax.f32 %v5137, 0.0
      %v5156 = vmax.f32 %v5142, 0.0
      %v5157 = vmax.f32 %v5147, 0.0
      %v5158 = vld [vmem:[%s10] sm:$0xff]
      %v5159 = vld [vmem:[%s10 + $0x8] sm:$0xff]
      %v5160 = vld [vmem:[%s10 + $0x10] sm:$0xff]
      %v5161 = vld [vmem:[%s10 + $0x18] sm:$0xff]
      %v5162 = vld [vmem:[%s10 + $0x20] sm:$0xff]
      %v5163 = vld [vmem:[%s10 + $0x28] sm:$0xff]
      %v5164 = vld [vmem:[%s10 + $0x30] sm:$0xff]
      %v5165 = vld [vmem:[%s10 + $0x38] sm:$0xff]
      %v5166 = vld [vmem:[%s11] sm:$0x1]
      %v5168 = vlaneseq
      %v5169 = vshrl.u32 %v5168, 7
      %v5170 = vsub.s32 0, %v5169
      %v5171 = vrot.slane %v5166, %v5170
      %v5174 = vsel %vm1329, %v5150, 0
      %v5177 = vsel %vm1329, %v5151, 0
      %v5180 = vsel %vm1329, %v5152, 0
      %v5183 = vsel %vm1329, %v5153, 0
      %v5186 = vsel %vm1329, %v5154, 0
      %v5189 = vsel %vm1329, %v5155, 0
      %v5192 = vsel %vm1329, %v5156, 0
      %v5195 = vsel %vm1329, %v5157, 0
      %5197 = vmatprep.subr.mxu0 0.0
      %5198 = vmatpush1.msra.mxu0 %v5158
      %5199 = vmatprep.subr.mxu0 0.0
      %5200 = vmatpush1.msra.mxu0 %v5159
      %5201 = vmatprep.subr.mxu0 0.0
      %5202 = vmatpush1.msra.mxu0 %v5160
      %5203 = vmatprep.subr.mxu0 0.0
      %5204 = vmatpush1.msra.mxu0 %v5161
      %5205 = vmatprep.subr.mxu0 0.0
      %5206 = vmatpush1.msra.mxu0 %v5162
      %5207 = vmatprep.subr.mxu0 0.0
      %5208 = vmatpush1.msra.mxu0 %v5163
      %5209 = vmatprep.subr.mxu0 0.0
      %5210 = vmatpush1.msra.mxu0 %v5164
      %5211 = vmatprep.subr.mxu0 0.0
      %5212 = vmatpush1.msra.mxu0 %v5165
      %5213 = vmatprep.subr.mxu0 0.0
      %5214 = vmatpush1.msra.mxu0 0.0
      %5215 = vmatprep.subr.mxu0 0.0
      %5216 = vmatpush1.msra.mxu0 0.0
      %5217 = vmatprep.subr.mxu0 0.0
      %5218 = vmatpush1.msra.mxu0 0.0
      %5219 = vmatprep.subr.mxu0 0.0
      %5220 = vmatpush1.msra.mxu0 0.0
      %5221 = vmatprep.subr.mxu0 0.0
      %5222 = vmatpush1.msra.mxu0 0.0
      %5223 = vmatprep.subr.mxu0 0.0
      %5224 = vmatpush1.msra.mxu0 0.0
      %5225 = vmatprep.subr.mxu0 0.0
      %5226 = vmatpush1.msra.mxu0 0.0
      %5227 = vmatprep.subr.mxu0 0.0
      %5228 = vmatpush1.msra.mxu0 0.0
      %5229 = vmatprep.subr.mxu0 0.0
      %5230 = vmatpush1.msra.mxu0 0.0
      %5231 = vmatprep.subr.mxu0 0.0
      %5232 = vmatpush1.msra.mxu0 0.0
      %5233 = vmatprep.subr.mxu0 0.0
      %5234 = vmatpush1.msra.mxu0 0.0
      %5235 = vmatprep.subr.mxu0 0.0
      %5236 = vmatpush1.msra.mxu0 0.0
      %5237 = vmatprep.subr.mxu0 0.0
      %5238 = vmatpush1.msra.mxu0 0.0
      %5239 = vmatprep.subr.mxu0 0.0
      %5240 = vmatpush1.msra.mxu0 0.0
      %5241 = vmatprep.subr.mxu0 0.0
      %5242 = vmatpush1.msra.mxu0 0.0
      %5243 = vmatprep.subr.mxu0 0.0
      %5244 = vmatpush1.msra.mxu0 0.0
      %5245 = vmatprep.subr.mxu0 0.0
      %5246 = vmatpush1.msra.mxu0 0.0
      %5247 = vmatprep.subr.mxu0 0.0
      %5248 = vmatpush1.msra.mxu0 0.0
      %5249 = vmatprep.subr.mxu0 0.0
      %5250 = vmatpush1.msra.mxu0 0.0
      %5251 = vmatprep.subr.mxu0 0.0
      %5252 = vmatpush1.msra.mxu0 0.0
      %5253 = vmatprep.subr.mxu0 0.0
      %5254 = vmatpush1.msra.mxu0 0.0
      %5255 = vmatprep.subr.mxu0 0.0
      %5256 = vmatpush1.msra.mxu0 0.0
      %5257 = vmatprep.subr.mxu0 0.0
      %5258 = vmatpush1.msra.mxu0 0.0
      %5259 = vmatprep.subr.mxu0 0.0
      %5260 = vmatpush1.msra.mxu0 0.0
      %5261 = vmatprep.mubr.f32.mxu0 0.0
      %5262 = vmatmul.mubr.f32.gmra.mrb[0].mxu0 %v5174
      %v5263 = vpop.f32.mrb[0].mxu0
      %v5264 = vadd.f32 %v5171, %v5263
      %v5265 = vpop.f32.mrb[0].mxu0
      %5266 = vmatprep.mubr.f32.mxu0 0.0
      %5267 = vmatmul.mubr.f32.gmra.mrb[0].mxu0 %v5177
      %v5268 = vpop.f32.mrb[0].mxu0
      %v5269 = vadd.f32 %v5171, %v5268
      %v5270 = vpop.f32.mrb[0].mxu0
      %5271 = vmatprep.mubr.f32.mxu0 0.0
      %5272 = vmatmul.mubr.f32.gmra.mrb[0].mxu0 %v5180
      %v5273 = vpop.f32.mrb[0].mxu0
      %v5274 = vadd.f32 %v5171, %v5273
      %v5275 = vpop.f32.mrb[0].mxu0
      %5276 = vmatprep.mubr.f32.mxu0 0.0
      %5277 = vmatmul.mubr.f32.gmra.mrb[0].mxu0 %v5183
      %v5278 = vpop.f32.mrb[0].mxu0
      %v5279 = vadd.f32 %v5171, %v5278
      %v5280 = vpop.f32.mrb[0].mxu0
      %5281 = vmatprep.mubr.f32.mxu0 0.0
      %5282 = vmatmul.mubr.f32.gmra.mrb[0].mxu0 %v5186
      %v5283 = vpop.f32.mrb[0].mxu0
      %v5284 = vadd.f32 %v5171, %v5283
      %v5285 = vpop.f32.mrb[0].mxu0
      %5286 = vmatprep.mubr.f32.mxu0 0.0
      %5287 = vmatmul.mubr.f32.gmra.mrb[0].mxu0 %v5189
      %v5288 = vpop.f32.mrb[0].mxu0
      %v5289 = vadd.f32 %v5171, %v5288
      %v5290 = vpop.f32.mrb[0].mxu0
      %5291 = vmatprep.mubr.f32.mxu0 0.0
      %5292 = vmatmul.mubr.f32.gmra.mrb[0].mxu0 %v5192
      %v5293 = vpop.f32.mrb[0].mxu0
      %v5294 = vadd.f32 %v5171, %v5293
      %v5295 = vpop.f32.mrb[0].mxu0
      %5296 = vmatprep.mubr.f32.mxu0 0.0
      %5297 = vmatmul.mubr.f32.gmra.mrb[0].mxu0 %v5195
      %v5298 = vpop.f32.mrb[0].mxu0
      %v5299 = vadd.f32 %v5171, %v5298
      %v5300 = vpop.f32.mrb[0].mxu0
      %5301 = vdwg.mxu0
      %v5302 = vadd.f32 %v5002, %v5264
      %v5303 = vadd.f32 %v5003, %v5269
      %v5304 = vadd.f32 %v5004, %v5274
      %v5305 = vadd.f32 %v5005, %v5279
      %v5306 = vadd.f32 %v5006, %v5284
      %v5307 = vadd.f32 %v5007, %v5289
      %v5308 = vadd.f32 %v5008, %v5294
      %v5309 = vadd.f32 %v5009, %v5299
      %v5310 = vld [vmem:[%s12] sm:$0x1]
      %v5311 = vld [vmem:[%s13] sm:$0x1]
      %v5312 = vsel %vm1021, %v5302, 0.0
      %5313 = vadd.xlane.f32.xlu0 %v5312
      %v5314 = vpop.xlane.xlu0 %5313
      %v5315 = vsel %vm1021, %v5303, 0.0
      %5316 = vadd.xlane.f32.xlu0 %v5315
      %v5317 = vpop.xlane.xlu0 %5316
      %v5318 = vsel %vm1021, %v5304, 0.0
      %5319 = vadd.xlane.f32.xlu0 %v5318
      %v5320 = vpop.xlane.xlu0 %5319
      %v5321 = vsel %vm1021, %v5305, 0.0
      %5322 = vadd.xlane.f32.xlu0 %v5321
      %v5323 = vpop.xlane.xlu0 %5322
      %v5324 = vsel %vm1021, %v5306, 0.0
      %5325 = vadd.xlane.f32.xlu0 %v5324
      %v5326 = vpop.xlane.xlu0 %5325
      %v5327 = vsel %vm1021, %v5307, 0.0
      %5328 = vadd.xlane.f32.xlu0 %v5327
      %v5329 = vpop.xlane.xlu0 %5328
      %v5330 = vsel %vm1021, %v5308, 0.0
      %5331 = vadd.xlane.f32.xlu0 %v5330
      %v5332 = vpop.xlane.xlu0 %5331
      %v5333 = vsel %vm1021, %v5309, 0.0
      %5334 = vadd.xlane.f32.xlu0 %v5333
      %v5335 = vpop.xlane.xlu0 %5334
      %v5336 = vmul.f32 %v5314, %v4901
      %v5337 = vmul.f32 %v5317, %v4901
      %v5338 = vmul.f32 %v5320, %v4901
      %v5339 = vmul.f32 %v5323, %v4901
      %v5340 = vmul.f32 %v5326, %v4901
      %v5341 = vmul.f32 %v5329, %v4901
      %v5342 = vmul.f32 %v5332, %v4901
      %v5343 = vmul.f32 %v5335, %v4901
      %v5344 = vsub.f32 %v5302, %v5336
      %v5345 = vsub.f32 %v5303, %v5337
      %v5346 = vsub.f32 %v5304, %v5338
      %v5347 = vsub.f32 %v5305, %v5339
      %v5348 = vsub.f32 %v5306, %v5340
      %v5349 = vsub.f32 %v5307, %v5341
      %v5350 = vsub.f32 %v5308, %v5342
      %v5351 = vsub.f32 %v5309, %v5343
      %v5352 = vmul.f32 %v5344, %v5344
      %v5353 = vmul.f32 %v5345, %v5345
      %v5354 = vmul.f32 %v5346, %v5346
      %v5355 = vmul.f32 %v5347, %v5347
      %v5356 = vmul.f32 %v5348, %v5348
      %v5357 = vmul.f32 %v5349, %v5349
      %v5358 = vmul.f32 %v5350, %v5350
      %v5359 = vmul.f32 %v5351, %v5351
      %v5360 = vsel %vm1021, %v5352, 0.0
      %5361 = vadd.xlane.f32.xlu0 %v5360
      %v5362 = vpop.xlane.xlu0 %5361
      %v5363 = vsel %vm1021, %v5353, 0.0
      %5364 = vadd.xlane.f32.xlu0 %v5363
      %v5365 = vpop.xlane.xlu0 %5364
      %v5366 = vsel %vm1021, %v5354, 0.0
      %5367 = vadd.xlane.f32.xlu0 %v5366
      %v5368 = vpop.xlane.xlu0 %5367
      %v5369 = vsel %vm1021, %v5355, 0.0
      %5370 = vadd.xlane.f32.xlu0 %v5369
      %v5371 = vpop.xlane.xlu0 %5370
      %v5372 = vsel %vm1021, %v5356, 0.0
      %5373 = vadd.xlane.f32.xlu0 %v5372
      %v5374 = vpop.xlane.xlu0 %5373
      %v5375 = vsel %vm1021, %v5357, 0.0
      %5376 = vadd.xlane.f32.xlu0 %v5375
      %v5377 = vpop.xlane.xlu0 %5376
      %v5378 = vsel %vm1021, %v5358, 0.0
      %5379 = vadd.xlane.f32.xlu0 %v5378
      %v5380 = vpop.xlane.xlu0 %5379
      %v5381 = vsel %vm1021, %v5359, 0.0
      %5382 = vadd.xlane.f32.xlu0 %v5381
      %v5383 = vpop.xlane.xlu0 %5382
      %v5384 = vmul.f32 %v5362, %v4901
      %v5385 = vmul.f32 %v5365, %v4901
      %v5386 = vmul.f32 %v5368, %v4901
      %v5387 = vmul.f32 %v5371, %v4901
      %v5388 = vmul.f32 %v5374, %v4901
      %v5389 = vmul.f32 %v5377, %v4901
      %v5390 = vmul.f32 %v5380, %v4901
      %v5391 = vmul.f32 %v5383, %v4901
      %v5392 = vadd.f32 %v5384, 1e-05
      %v5393 = vadd.f32 %v5385, 1e-05
      %v5394 = vadd.f32 %v5386, 1e-05
      %v5395 = vadd.f32 %v5387, 1e-05
      %v5396 = vadd.f32 %v5388, 1e-05
      %v5397 = vadd.f32 %v5389, 1e-05
      %v5398 = vadd.f32 %v5390, 1e-05
      %v5399 = vadd.f32 %v5391, 1e-05
      %v5400 = vrsqrt.pop %v5392
      %v5401 = vrsqrt.pop %v5393
      %v5402 = vrsqrt.pop %v5394
      %v5403 = vrsqrt.pop %v5395
      %v5404 = vrsqrt.pop %v5396
      %v5405 = vrsqrt.pop %v5397
      %v5406 = vrsqrt.pop %v5398
      %v5407 = vrsqrt.pop %v5399
      %v5408 = vmul.f32 %v5344, %v5400
      %v5409 = vmul.f32 %v5345, %v5401
      %v5410 = vmul.f32 %v5346, %v5402
      %v5411 = vmul.f32 %v5347, %v5403
      %v5412 = vmul.f32 %v5348, %v5404
      %v5413 = vmul.f32 %v5349, %v5405
      %v5414 = vmul.f32 %v5350, %v5406
      %v5415 = vmul.f32 %v5351, %v5407
      %v5417 = vlaneseq
      %v5418 = vshrl.u32 %v5417, 7
      %v5419 = vsub.s32 0, %v5418
      %v5420 = vrot.slane %v5310, %v5419
      %v5422 = vmul.f32 %v5408, %v5420
      %v5423 = vmul.f32 %v5409, %v5420
      %v5424 = vmul.f32 %v5410, %v5420
      %v5425 = vmul.f32 %v5411, %v5420
      %v5426 = vmul.f32 %v5412, %v5420
      %v5427 = vmul.f32 %v5413, %v5420
      %v5428 = vmul.f32 %v5414, %v5420
      %v5429 = vmul.f32 %v5415, %v5420
      %v5431 = vlaneseq
      %v5432 = vshrl.u32 %v5431, 7
      %v5433 = vsub.s32 0, %v5432
      %v5434 = vrot.slane %v5311, %v5433
      %v5436 = vadd.f32 %v5422, %v5434
      %v5437 = vadd.f32 %v5423, %v5434
      %v5438 = vadd.f32 %v5424, %v5434
      %v5439 = vadd.f32 %v5425, %v5434
      %v5440 = vadd.f32 %v5426, %v5434
      %v5441 = vadd.f32 %v5427, %v5434
      %v5442 = vadd.f32 %v5428, %v5434
      %v5443 = vadd.f32 %v5429, %v5434
      %s5444 = scalar_lea.vmem %s2, 32
      %v5445 = vld [vmem:[%s5444] sm:$0xff]
      %v5446 = vld [vmem:[%s5444 + $0x8] sm:$0xff]
      %v5447 = vld [vmem:[%s5444 + $0x10] sm:$0xff]
      %v5448 = vld [vmem:[%s5444 + $0x18] sm:$0xff]
      %s5449 = scalar_lea.vmem %s3, 1
      %v5450 = vld [vmem:[%s5449] sm:$0x1]
      %v5452 = vlaneseq
      %v5453 = vshrl.u32 %v5452, 7
      %v5454 = vsub.s32 0, %v5453
      %v5455 = vrot.slane %v5450, %v5454
      %v5458 = vsel %vm1021, %v5436, 0
      %v5461 = vsel %vm1021, %v5437, 0
      %v5464 = vsel %vm1021, %v5438, 0
      %v5467 = vsel %vm1021, %v5439, 0
      %v5470 = vsel %vm1021, %v5440, 0
      %v5473 = vsel %vm1021, %v5441, 0
      %v5476 = vsel %vm1021, %v5442, 0
      %v5479 = vsel %vm1021, %v5443, 0
      %5481 = vmatprep.subr.mxu0 0.0
      %5482 = vmatpush1.msra.mxu0 %v5445
      %5483 = vmatprep.subr.mxu0 0.0
      %5484 = vmatpush1.msra.mxu0 %v5446
      %5485 = vmatprep.subr.mxu0 0.0
      %5486 = vmatpush1.msra.mxu0 %v5447
      %5487 = vmatprep.subr.mxu0 0.0
      %5488 = vmatpush1.msra.mxu0 %v5448
      %5489 = vmatprep.subr.mxu0 0.0
      %5490 = vmatpush1.msra.mxu0 0.0
      %5491 = vmatprep.subr.mxu0 0.0
      %5492 = vmatpush1.msra.mxu0 0.0
      %5493 = vmatprep.subr.mxu0 0.0
      %5494 = vmatpush1.msra.mxu0 0.0
      %5495 = vmatprep.subr.mxu0 0.0
      %5496 = vmatpush1.msra.mxu0 0.0
      %5497 = vmatprep.subr.mxu0 0.0
      %5498 = vmatpush1.msra.mxu0 0.0
      %5499 = vmatprep.subr.mxu0 0.0
      %5500 = vmatpush1.msra.mxu0 0.0
      %5501 = vmatprep.subr.mxu0 0.0
      %5502 = vmatpush1.msra.mxu0 0.0
      %5503 = vmatprep.subr.mxu0 0.0
      %5504 = vmatpush1.msra.mxu0 0.0
      %5505 = vmatprep.subr.mxu0 0.0
      %5506 = vmatpush1.msra.mxu0 0.0
      %5507 = vmatprep.subr.mxu0 0.0
      %5508 = vmatpush1.msra.mxu0 0.0
      %5509 = vmatprep.subr.mxu0 0.0
      %5510 = vmatpush1.msra.mxu0 0.0
      %5511 = vmatprep.subr.mxu0 0.0
      %5512 = vmatpush1.msra.mxu0 0.0
      %5513 = vmatprep.subr.mxu0 0.0
      %5514 = vmatpush1.msra.mxu0 0.0
      %5515 = vmatprep.subr.mxu0 0.0
      %5516 = vmatpush1.msra.mxu0 0.0
      %5517 = vmatprep.subr.mxu0 0.0
      %5518 = vmatpush1.msra.mxu0 0.0
      %5519 = vmatprep.subr.mxu0 0.0
      %5520 = vmatpush1.msra.mxu0 0.0
      %5521 = vmatprep.subr.mxu0 0.0
      %5522 = vmatpush1.msra.mxu0 0.0
      %5523 = vmatprep.subr.mxu0 0.0
      %5524 = vmatpush1.msra.mxu0 0.0
      %5525 = vmatprep.subr.mxu0 0.0
      %5526 = vmatpush1.msra.mxu0 0.0
      %5527 = vmatprep.subr.mxu0 0.0
      %5528 = vmatpush1.msra.mxu0 0.0
      %5529 = vmatprep.subr.mxu0 0.0
      %5530 = vmatpush1.msra.mxu0 0.0
      %5531 = vmatprep.subr.mxu0 0.0
      %5532 = vmatpush1.msra.mxu0 0.0
      %5533 = vmatprep.subr.mxu0 0.0
      %5534 = vmatpush1.msra.mxu0 0.0
      %5535 = vmatprep.subr.mxu0 0.0
      %5536 = vmatpush1.msra.mxu0 0.0
      %5537 = vmatprep.subr.mxu0 0.0
      %5538 = vmatpush1.msra.mxu0 0.0
      %5539 = vmatprep.subr.mxu0 0.0
      %5540 = vmatpush1.msra.mxu0 0.0
      %5541 = vmatprep.subr.mxu0 0.0
      %5542 = vmatpush1.msra.mxu0 0.0
      %5543 = vmatprep.subr.mxu0 0.0
      %5544 = vmatpush1.msra.mxu0 0.0
      %5545 = vmatprep.mubr.f32.mxu0 0.0
      %5546 = vmatmul.mubr.f32.gmra.mrb[0].mxu0 %v5458
      %v5547 = vpop.f32.mrb[0].mxu0
      %v5548 = vadd.f32 %v5455, %v5547
      %v5549 = vpop.f32.mrb[0].mxu0
      %5550 = vmatprep.mubr.f32.mxu0 0.0
      %5551 = vmatmul.mubr.f32.gmra.mrb[0].mxu0 %v5461
      %v5552 = vpop.f32.mrb[0].mxu0
      %v5553 = vadd.f32 %v5455, %v5552
      %v5554 = vpop.f32.mrb[0].mxu0
      %5555 = vmatprep.mubr.f32.mxu0 0.0
      %5556 = vmatmul.mubr.f32.gmra.mrb[0].mxu0 %v5464
      %v5557 = vpop.f32.mrb[0].mxu0
      %v5558 = vadd.f32 %v5455, %v5557
      %v5559 = vpop.f32.mrb[0].mxu0
      %5560 = vmatprep.mubr.f32.mxu0 0.0
      %5561 = vmatmul.mubr.f32.gmra.mrb[0].mxu0 %v5467
      %v5562 = vpop.f32.mrb[0].mxu0
      %v5563 = vadd.f32 %v5455, %v5562
      %v5564 = vpop.f32.mrb[0].mxu0
      %5565 = vmatprep.mubr.f32.mxu0 0.0
      %5566 = vmatmul.mubr.f32.gmra.mrb[0].mxu0 %v5470
      %v5567 = vpop.f32.mrb[0].mxu0
      %v5568 = vadd.f32 %v5455, %v5567
      %v5569 = vpop.f32.mrb[0].mxu0
      %5570 = vmatprep.mubr.f32.mxu0 0.0
      %5571 = vmatmul.mubr.f32.gmra.mrb[0].mxu0 %v5473
      %v5572 = vpop.f32.mrb[0].mxu0
      %v5573 = vadd.f32 %v5455, %v5572
      %v5574 = vpop.f32.mrb[0].mxu0
      %5575 = vmatprep.mubr.f32.mxu0 0.0
      %5576 = vmatmul.mubr.f32.gmra.mrb[0].mxu0 %v5476
      %v5577 = vpop.f32.mrb[0].mxu0
      %v5578 = vadd.f32 %v5455, %v5577
      %v5579 = vpop.f32.mrb[0].mxu0
      %5580 = vmatprep.mubr.f32.mxu0 0.0
      %5581 = vmatmul.mubr.f32.gmra.mrb[0].mxu0 %v5479
      %v5582 = vpop.f32.mrb[0].mxu0
      %v5583 = vadd.f32 %v5455, %v5582
      %v5584 = vpop.f32.mrb[0].mxu0
      %5585 = vdwg.mxu0
      %v5586 = vmul.f32 %v5548, 0.5
      %v5587 = vmul.f32 %v5553, 0.5
      %v5588 = vmul.f32 %v5558, 0.5
      %v5589 = vmul.f32 %v5563, 0.5
      %v5590 = vmul.f32 %v5568, 0.5
      %v5591 = vmul.f32 %v5573, 0.5
      %v5592 = vmul.f32 %v5578, 0.5
      %v5593 = vmul.f32 %v5583, 0.5
      %5602 = vrot.lane.b32.xlu0 %v5548, 96
      %v5603 = vpop.permute.xlu0 %5602
      %5604 = vrot.lane.b32.xlu0 %v5553, 96
      %v5605 = vpop.permute.xlu0 %5604
      %5606 = vrot.lane.b32.xlu0 %v5558, 96
      %v5607 = vpop.permute.xlu0 %5606
      %5608 = vrot.lane.b32.xlu0 %v5563, 96
      %v5609 = vpop.permute.xlu0 %5608
      %5610 = vrot.lane.b32.xlu0 %v5568, 96
      %v5611 = vpop.permute.xlu0 %5610
      %5612 = vrot.lane.b32.xlu0 %v5573, 96
      %v5613 = vpop.permute.xlu0 %5612
      %5614 = vrot.lane.b32.xlu0 %v5578, 96
      %v5615 = vpop.permute.xlu0 %5614
      %5616 = vrot.lane.b32.xlu0 %v5583, 96
      %v5617 = vpop.permute.xlu0 %5616
      %v5619 = vsel %vm1183, %v5586, 0
      %v5622 = vsel %vm1183, %v5587, 0
      %v5625 = vsel %vm1183, %v5588, 0
      %v5628 = vsel %vm1183, %v5589, 0
      %v5631 = vsel %vm1183, %v5590, 0
      %v5634 = vsel %vm1183, %v5591, 0
      %v5637 = vsel %vm1183, %v5592, 0
      %v5640 = vsel %vm1183, %v5593, 0
      %v5642 = vsel %vm1183, %v5603, 0
      %v5644 = vsel %vm1183, %v5605, 0
      %v5646 = vsel %vm1183, %v5607, 0
      %v5648 = vsel %vm1183, %v5609, 0
      %v5650 = vsel %vm1183, %v5611, 0
      %v5652 = vsel %vm1183, %v5613, 0
      %v5654 = vsel %vm1183, %v5615, 0
      %v5656 = vsel %vm1183, %v5617, 0
      %5658 = vmatprep.subr.mxu0 0.0
      %5659 = vmatpush1.xpose.msra.mxu0 %v5642
      %5660 = vmatprep.subr.mxu0 0.0
      %5661 = vmatpush1.xpose.msra.mxu0 %v5644
      %5662 = vmatprep.subr.mxu0 0.0
      %5663 = vmatpush1.xpose.msra.mxu0 %v5646
      %5664 = vmatprep.subr.mxu0 0.0
      %5665 = vmatpush1.xpose.msra.mxu0 %v5648
      %5666 = vmatprep.subr.mxu0 0.0
      %5667 = vmatpush1.xpose.msra.mxu0 %v5650
      %5668 = vmatprep.subr.mxu0 0.0
      %5669 = vmatpush1.xpose.msra.mxu0 %v5652
      %5670 = vmatprep.subr.mxu0 0.0
      %5671 = vmatpush1.xpose.msra.mxu0 %v5654
      %5672 = vmatprep.subr.mxu0 0.0
      %5673 = vmatpush1.xpose.msra.mxu0 %v5656
      %5674 = vmatprep.subr.mxu0 0.0
      %5675 = vmatpush1.xpose.msra.mxu0 0.0
      %5676 = vmatprep.subr.mxu0 0.0
      %5677 = vmatpush1.xpose.msra.mxu0 0.0
      %5678 = vmatprep.subr.mxu0 0.0
      %5679 = vmatpush1.xpose.msra.mxu0 0.0
      %5680 = vmatprep.subr.mxu0 0.0
      %5681 = vmatpush1.xpose.msra.mxu0 0.0
      %5682 = vmatprep.subr.mxu0 0.0
      %5683 = vmatpush1.xpose.msra.mxu0 0.0
      %5684 = vmatprep.subr.mxu0 0.0
      %5685 = vmatpush1.xpose.msra.mxu0 0.0
      %5686 = vmatprep.subr.mxu0 0.0
      %5687 = vmatpush1.xpose.msra.mxu0 0.0
      %5688 = vmatprep.subr.mxu0 0.0
      %5689 = vmatpush1.xpose.msra.mxu0 0.0
      %5690 = vmatprep.subr.mxu0 0.0
      %5691 = vmatpush1.xpose.msra.mxu0 0.0
      %5692 = vmatprep.subr.mxu0 0.0
      %5693 = vmatpush1.xpose.msra.mxu0 0.0
      %5694 = vmatprep.subr.mxu0 0.0
      %5695 = vmatpush1.xpose.msra.mxu0 0.0
      %5696 = vmatprep.subr.mxu0 0.0
      %5697 = vmatpush1.xpose.msra.mxu0 0.0
      %5698 = vmatprep.subr.mxu0 0.0
      %5699 = vmatpush1.xpose.msra.mxu0 0.0
      %5700 = vmatprep.subr.mxu0 0.0
      %5701 = vmatpush1.xpose.msra.mxu0 0.0
      %5702 = vmatprep.subr.mxu0 0.0
      %5703 = vmatpush1.xpose.msra.mxu0 0.0
      %5704 = vmatprep.subr.mxu0 0.0
      %5705 = vmatpush1.xpose.msra.mxu0 0.0
      %5706 = vmatprep.subr.mxu0 0.0
      %5707 = vmatpush1.xpose.msra.mxu0 0.0
      %5708 = vmatprep.subr.mxu0 0.0
      %5709 = vmatpush1.xpose.msra.mxu0 0.0
      %5710 = vmatprep.subr.mxu0 0.0
      %5711 = vmatpush1.xpose.msra.mxu0 0.0
      %5712 = vmatprep.subr.mxu0 0.0
      %5713 = vmatpush1.xpose.msra.mxu0 0.0
      %5714 = vmatprep.subr.mxu0 0.0
      %5715 = vmatpush1.xpose.msra.mxu0 0.0
      %5716 = vmatprep.subr.mxu0 0.0
      %5717 = vmatpush1.xpose.msra.mxu0 0.0
      %5718 = vmatprep.subr.mxu0 0.0
      %5719 = vmatpush1.xpose.msra.mxu0 0.0
      %5720 = vmatprep.subr.mxu0 0.0
      %5721 = vmatpush1.xpose.msra.mxu0 0.0
      %5722 = vmatprep.mubr.f32.mxu0 0.0
      %5723 = vmatmul.mubr.f32.gmra.mrb[0].mxu0 %v5619
      %v5724 = vpop.f32.mrb[0].mxu0
      %v5725 = vadd.f32 0.0, %v5724
      %v5726 = vpop.f32.mrb[0].mxu0
      %5727 = vmatprep.mubr.f32.mxu0 0.0
      %5728 = vmatmul.mubr.f32.gmra.mrb[0].mxu0 %v5622
      %v5729 = vpop.f32.mrb[0].mxu0
      %v5730 = vadd.f32 0.0, %v5729
      %v5731 = vpop.f32.mrb[0].mxu0
      %5732 = vmatprep.mubr.f32.mxu0 0.0
      %5733 = vmatmul.mubr.f32.gmra.mrb[0].mxu0 %v5625
      %v5734 = vpop.f32.mrb[0].mxu0
      %v5735 = vadd.f32 0.0, %v5734
      %v5736 = vpop.f32.mrb[0].mxu0
      %5737 = vmatprep.mubr.f32.mxu0 0.0
      %5738 = vmatmul.mubr.f32.gmra.mrb[0].mxu0 %v5628
      %v5739 = vpop.f32.mrb[0].mxu0
      %v5740 = vadd.f32 0.0, %v5739
      %v5741 = vpop.f32.mrb[0].mxu0
      %5742 = vmatprep.mubr.f32.mxu0 0.0
      %5743 = vmatmul.mubr.f32.gmra.mrb[0].mxu0 %v5631
      %v5744 = vpop.f32.mrb[0].mxu0
      %v5745 = vadd.f32 0.0, %v5744
      %v5746 = vpop.f32.mrb[0].mxu0
      %5747 = vmatprep.mubr.f32.mxu0 0.0
      %5748 = vmatmul.mubr.f32.gmra.mrb[0].mxu0 %v5634
      %v5749 = vpop.f32.mrb[0].mxu0
      %v5750 = vadd.f32 0.0, %v5749
      %v5751 = vpop.f32.mrb[0].mxu0
      %5752 = vmatprep.mubr.f32.mxu0 0.0
      %5753 = vmatmul.mubr.f32.gmra.mrb[0].mxu0 %v5637
      %v5754 = vpop.f32.mrb[0].mxu0
      %v5755 = vadd.f32 0.0, %v5754
      %v5756 = vpop.f32.mrb[0].mxu0
      %5757 = vmatprep.mubr.f32.mxu0 0.0
      %5758 = vmatmul.mubr.f32.gmra.mrb[0].mxu0 %v5640
      %v5759 = vpop.f32.mrb[0].mxu0
      %v5760 = vadd.f32 0.0, %v5759
      %v5761 = vpop.f32.mrb[0].mxu0
      %5762 = vdwg.mxu0
      %v5763 = vsel %vm1329, %v5725, -inf
      %5764 = vmax.xlane.f32.xlu0 %v5763
      %v5765 = vpop.xlane.xlu0 %5764
      %v5766 = vsel %vm1329, %v5730, -inf
      %5767 = vmax.xlane.f32.xlu0 %v5766
      %v5768 = vpop.xlane.xlu0 %5767
      %v5769 = vsel %vm1329, %v5735, -inf
      %5770 = vmax.xlane.f32.xlu0 %v5769
      %v5771 = vpop.xlane.xlu0 %5770
      %v5772 = vsel %vm1329, %v5740, -inf
      %5773 = vmax.xlane.f32.xlu0 %v5772
      %v5774 = vpop.xlane.xlu0 %5773
      %v5775 = vsel %vm1329, %v5745, -inf
      %5776 = vmax.xlane.f32.xlu0 %v5775
      %v5777 = vpop.xlane.xlu0 %5776
      %v5778 = vsel %vm1329, %v5750, -inf
      %5779 = vmax.xlane.f32.xlu0 %v5778
      %v5780 = vpop.xlane.xlu0 %5779
      %v5781 = vsel %vm1329, %v5755, -inf
      %5782 = vmax.xlane.f32.xlu0 %v5781
      %v5783 = vpop.xlane.xlu0 %5782
      %v5784 = vsel %vm1329, %v5760, -inf
      %5785 = vmax.xlane.f32.xlu0 %v5784
      %v5786 = vpop.xlane.xlu0 %5785
      %v5787 = vsub.f32 %v5725, %v5765
      %v5788 = vsub.f32 %v5730, %v5768
      %v5789 = vsub.f32 %v5735, %v5771
      %v5790 = vsub.f32 %v5740, %v5774
      %v5791 = vsub.f32 %v5745, %v5777
      %v5792 = vsub.f32 %v5750, %v5780
      %v5793 = vsub.f32 %v5755, %v5783
      %v5794 = vsub.f32 %v5760, %v5786
      %v5795 = vmul.f32 %v5787, 1.442695
      %v5796 = vpow.pop %v5795
      %v5797 = vmul.f32 %v5788, 1.442695
      %v5798 = vpow.pop %v5797
      %v5799 = vmul.f32 %v5789, 1.442695
      %v5800 = vpow.pop %v5799
      %v5801 = vmul.f32 %v5790, 1.442695
      %v5802 = vpow.pop %v5801
      %v5803 = vmul.f32 %v5791, 1.442695
      %v5804 = vpow.pop %v5803
      %v5805 = vmul.f32 %v5792, 1.442695
      %v5806 = vpow.pop %v5805
      %v5807 = vmul.f32 %v5793, 1.442695
      %v5808 = vpow.pop %v5807
      %v5809 = vmul.f32 %v5794, 1.442695
      %v5810 = vpow.pop %v5809
      %v5811 = vsel %vm1329, %v5796, 0.0
      %5812 = vadd.xlane.f32.xlu0 %v5811
      %v5813 = vpop.xlane.xlu0 %5812
      %v5814 = vsel %vm1329, %v5798, 0.0
      %5815 = vadd.xlane.f32.xlu0 %v5814
      %v5816 = vpop.xlane.xlu0 %5815
      %v5817 = vsel %vm1329, %v5800, 0.0
      %5818 = vadd.xlane.f32.xlu0 %v5817
      %v5819 = vpop.xlane.xlu0 %5818
      %v5820 = vsel %vm1329, %v5802, 0.0
      %5821 = vadd.xlane.f32.xlu0 %v5820
      %v5822 = vpop.xlane.xlu0 %5821
      %v5823 = vsel %vm1329, %v5804, 0.0
      %5824 = vadd.xlane.f32.xlu0 %v5823
      %v5825 = vpop.xlane.xlu0 %5824
      %v5826 = vsel %vm1329, %v5806, 0.0
      %5827 = vadd.xlane.f32.xlu0 %v5826
      %v5828 = vpop.xlane.xlu0 %5827
      %v5829 = vsel %vm1329, %v5808, 0.0
      %5830 = vadd.xlane.f32.xlu0 %v5829
      %v5831 = vpop.xlane.xlu0 %5830
      %v5832 = vsel %vm1329, %v5810, 0.0
      %5833 = vadd.xlane.f32.xlu0 %v5832
      %v5834 = vpop.xlane.xlu0 %5833
      %v5835 = vrcp.pop %v5813
      %v5836 = vrcp.pop %v5816
      %v5837 = vrcp.pop %v5819
      %v5838 = vrcp.pop %v5822
      %v5839 = vrcp.pop %v5825
      %v5840 = vrcp.pop %v5828
      %v5841 = vrcp.pop %v5831
      %v5842 = vrcp.pop %v5834
      %v5843 = vmul.f32 %v5796, %v5835
      %v5844 = vmul.f32 %v5798, %v5836
      %v5845 = vmul.f32 %v5800, %v5837
      %v5846 = vmul.f32 %v5802, %v5838
      %v5847 = vmul.f32 %v5804, %v5839
      %v5848 = vmul.f32 %v5806, %v5840
      %v5849 = vmul.f32 %v5808, %v5841
      %v5850 = vmul.f32 %v5810, %v5842
      %5851 = vrot.lane.b32.xlu0 %v5548, 64
      %v5852 = vpop.permute.xlu0 %5851
      %5853 = vrot.lane.b32.xlu0 %v5553, 64
      %v5854 = vpop.permute.xlu0 %5853
      %5855 = vrot.lane.b32.xlu0 %v5558, 64
      %v5856 = vpop.permute.xlu0 %5855
      %5857 = vrot.lane.b32.xlu0 %v5563, 64
      %v5858 = vpop.permute.xlu0 %5857
      %5859 = vrot.lane.b32.xlu0 %v5568, 64
      %v5860 = vpop.permute.xlu0 %5859
      %5861 = vrot.lane.b32.xlu0 %v5573, 64
      %v5862 = vpop.permute.xlu0 %5861
      %5863 = vrot.lane.b32.xlu0 %v5578, 64
      %v5864 = vpop.permute.xlu0 %5863
      %5865 = vrot.lane.b32.xlu0 %v5583, 64
      %v5866 = vpop.permute.xlu0 %5865
      %v5876 = vsel %vm1329, %v5843, 0
      %v5879 = vsel %vm1329, %v5844, 0
      %v5882 = vsel %vm1329, %v5845, 0
      %v5885 = vsel %vm1329, %v5846, 0
      %v5888 = vsel %vm1329, %v5847, 0
      %v5891 = vsel %vm1329, %v5848, 0
      %v5894 = vsel %vm1329, %v5849, 0
      %v5897 = vsel %vm1329, %v5850, 0
      %5899 = vmatprep.subr.mxu0 0.0
      %5900 = vmatpush1.msra.mxu0 %v5852
      %5901 = vmatprep.subr.mxu0 0.0
      %5902 = vmatpush1.msra.mxu0 %v5854
      %5903 = vmatprep.subr.mxu0 0.0
      %5904 = vmatpush1.msra.mxu0 %v5856
      %5905 = vmatprep.subr.mxu0 0.0
      %5906 = vmatpush1.msra.mxu0 %v5858
      %5907 = vmatprep.subr.mxu0 0.0
      %5908 = vmatpush1.msra.mxu0 %v5860
      %5909 = vmatprep.subr.mxu0 0.0
      %5910 = vmatpush1.msra.mxu0 %v5862
      %5911 = vmatprep.subr.mxu0 0.0
      %5912 = vmatpush1.msra.mxu0 %v5864
      %5913 = vmatprep.subr.mxu0 0.0
      %5914 = vmatpush1.msra.mxu0 %v5866
      %5915 = vmatprep.subr.mxu0 0.0
      %5916 = vmatpush1.msra.mxu0 0.0
      %5917 = vmatprep.subr.mxu0 0.0
      %5918 = vmatpush1.msra.mxu0 0.0
      %5919 = vmatprep.subr.mxu0 0.0
      %5920 = vmatpush1.msra.mxu0 0.0
      %5921 = vmatprep.subr.mxu0 0.0
      %5922 = vmatpush1.msra.mxu0 0.0
      %5923 = vmatprep.subr.mxu0 0.0
      %5924 = vmatpush1.msra.mxu0 0.0
      %5925 = vmatprep.subr.mxu0 0.0
      %5926 = vmatpush1.msra.mxu0 0.0
      %5927 = vmatprep.subr.mxu0 0.0
      %5928 = vmatpush1.msra.mxu0 0.0
      %5929 = vmatprep.subr.mxu0 0.0
      %5930 = vmatpush1.msra.mxu0 0.0
      %5931 = vmatprep.subr.mxu0 0.0
      %5932 = vmatpush1.msra.mxu0 0.0
      %5933 = vmatprep.subr.mxu0 0.0
      %5934 = vmatpush1.msra.mxu0 0.0
      %5935 = vmatprep.subr.mxu0 0.0
      %5936 = vmatpush1.msra.mxu0 0.0
      %5937 = vmatprep.subr.mxu0 0.0
      %5938 = vmatpush1.msra.mxu0 0.0
      %5939 = vmatprep.subr.mxu0 0.0
      %5940 = vmatpush1.msra.mxu0 0.0
      %5941 = vmatprep.subr.mxu0 0.0
      %5942 = vmatpush1.msra.mxu0 0.0
      %5943 = vmatprep.subr.mxu0 0.0
      %5944 = vmatpush1.msra.mxu0 0.0
      %5945 = vmatprep.subr.mxu0 0.0
      %5946 = vmatpush1.msra.mxu0 0.0
      %5947 = vmatprep.subr.mxu0 0.0
      %5948 = vmatpush1.msra.mxu0 0.0
      %5949 = vmatprep.subr.mxu0 0.0
      %5950 = vmatpush1.msra.mxu0 0.0
      %5951 = vmatprep.subr.mxu0 0.0
      %5952 = vmatpush1.msra.mxu0 0.0
      %5953 = vmatprep.subr.mxu0 0.0
      %5954 = vmatpush1.msra.mxu0 0.0
      %5955 = vmatprep.subr.mxu0 0.0
      %5956 = vmatpush1.msra.mxu0 0.0
      %5957 = vmatprep.subr.mxu0 0.0
      %5958 = vmatpush1.msra.mxu0 0.0
      %5959 = vmatprep.subr.mxu0 0.0
      %5960 = vmatpush1.msra.mxu0 0.0
      %5961 = vmatprep.subr.mxu0 0.0
      %5962 = vmatpush1.msra.mxu0 0.0
      %5963 = vmatprep.mubr.f32.mxu0 0.0
      %5964 = vmatmul.mubr.f32.gmra.mrb[0].mxu0 %v5876
      %v5965 = vpop.f32.mrb[0].mxu0
      %v5966 = vadd.f32 0.0, %v5965
      %v5967 = vpop.f32.mrb[0].mxu0
      %5968 = vmatprep.mubr.f32.mxu0 0.0
      %5969 = vmatmul.mubr.f32.gmra.mrb[0].mxu0 %v5879
      %v5970 = vpop.f32.mrb[0].mxu0
      %v5971 = vadd.f32 0.0, %v5970
      %v5972 = vpop.f32.mrb[0].mxu0
      %5973 = vmatprep.mubr.f32.mxu0 0.0
      %5974 = vmatmul.mubr.f32.gmra.mrb[0].mxu0 %v5882
      %v5975 = vpop.f32.mrb[0].mxu0
      %v5976 = vadd.f32 0.0, %v5975
      %v5977 = vpop.f32.mrb[0].mxu0
      %5978 = vmatprep.mubr.f32.mxu0 0.0
      %5979 = vmatmul.mubr.f32.gmra.mrb[0].mxu0 %v5885
      %v5980 = vpop.f32.mrb[0].mxu0
      %v5981 = vadd.f32 0.0, %v5980
      %v5982 = vpop.f32.mrb[0].mxu0
      %5983 = vmatprep.mubr.f32.mxu0 0.0
      %5984 = vmatmul.mubr.f32.gmra.mrb[0].mxu0 %v5888
      %v5985 = vpop.f32.mrb[0].mxu0
      %v5986 = vadd.f32 0.0, %v5985
      %v5987 = vpop.f32.mrb[0].mxu0
      %5988 = vmatprep.mubr.f32.mxu0 0.0
      %5989 = vmatmul.mubr.f32.gmra.mrb[0].mxu0 %v5891
      %v5990 = vpop.f32.mrb[0].mxu0
      %v5991 = vadd.f32 0.0, %v5990
      %v5992 = vpop.f32.mrb[0].mxu0
      %5993 = vmatprep.mubr.f32.mxu0 0.0
      %5994 = vmatmul.mubr.f32.gmra.mrb[0].mxu0 %v5894
      %v5995 = vpop.f32.mrb[0].mxu0
      %v5996 = vadd.f32 0.0, %v5995
      %v5997 = vpop.f32.mrb[0].mxu0
      %5998 = vmatprep.mubr.f32.mxu0 0.0
      %5999 = vmatmul.mubr.f32.gmra.mrb[0].mxu0 %v5897
      %v6000 = vpop.f32.mrb[0].mxu0
      %v6001 = vadd.f32 0.0, %v6000
      %v6002 = vpop.f32.mrb[0].mxu0
      %6003 = vdwg.mxu0
      %6004 = vrot.lane.b32.xlu0 %v5586, 124
      %v6005 = vpop.permute.xlu0 %6004
      %6006 = vrot.lane.b32.xlu0 %v5587, 124
      %v6007 = vpop.permute.xlu0 %6006
      %6008 = vrot.lane.b32.xlu0 %v5588, 124
      %v6009 = vpop.permute.xlu0 %6008
      %6010 = vrot.lane.b32.xlu0 %v5589, 124
      %v6011 = vpop.permute.xlu0 %6010
      %6012 = vrot.lane.b32.xlu0 %v5590, 124
      %v6013 = vpop.permute.xlu0 %6012
      %6014 = vrot.lane.b32.xlu0 %v5591, 124
      %v6015 = vpop.permute.xlu0 %6014
      %6016 = vrot.lane.b32.xlu0 %v5592, 124
      %v6017 = vpop.permute.xlu0 %6016
      %6018 = vrot.lane.b32.xlu0 %v5593, 124
      %v6019 = vpop.permute.xlu0 %6018
      %6020 = vrot.lane.b32.xlu0 %v5548, 92
      %v6021 = vpop.permute.xlu0 %6020
      %6022 = vrot.lane.b32.xlu0 %v5553, 92
      %v6023 = vpop.permute.xlu0 %6022
      %6024 = vrot.lane.b32.xlu0 %v5558, 92
      %v6025 = vpop.permute.xlu0 %6024
      %6026 = vrot.lane.b32.xlu0 %v5563, 92
      %v6027 = vpop.permute.xlu0 %6026
      %6028 = vrot.lane.b32.xlu0 %v5568, 92
      %v6029 = vpop.permute.xlu0 %6028
      %6030 = vrot.lane.b32.xlu0 %v5573, 92
      %v6031 = vpop.permute.xlu0 %6030
      %6032 = vrot.lane.b32.xlu0 %v5578, 92
      %v6033 = vpop.permute.xlu0 %6032
      %6034 = vrot.lane.b32.xlu0 %v5583, 92
      %v6035 = vpop.permute.xlu0 %6034
      %v6036 = vsel %vm1183, %v6005, 0
      %v6038 = vsel %vm1183, %v6007, 0
      %v6040 = vsel %vm1183, %v6009, 0
      %v6042 = vsel %vm1183, %v6011, 0
      %v6044 = vsel %vm1183, %v6013, 0
      %v6046 = vsel %vm1183, %v6015, 0
      %v6048 = vsel %vm1183, %v6017, 0
      %v6050 = vsel %vm1183, %v6019, 0
      %v6052 = vsel %vm1183, %v6021, 0
      %v6054 = vsel %vm1183, %v6023, 0
      %v6056 = vsel %vm1183, %v6025, 0
      %v6058 = vsel %vm1183, %v6027, 0
      %v6060 = vsel %vm1183, %v6029, 0
      %v6062 = vsel %vm1183, %v6031, 0
      %v6064 = vsel %vm1183, %v6033, 0
      %v6066 = vsel %vm1183, %v6035, 0
      %6068 = vmatprep.subr.mxu0 0.0
      %6069 = vmatpush1.xpose.msra.mxu0 %v6052
      %6070 = vmatprep.subr.mxu0 0.0
      %6071 = vmatpush1.xpose.msra.mxu0 %v6054
      %6072 = vmatprep.subr.mxu0 0.0
      %6073 = vmatpush1.xpose.msra.mxu0 %v6056
      %6074 = vmatprep.subr.mxu0 0.0
      %6075 = vmatpush1.xpose.msra.mxu0 %v6058
      %6076 = vmatprep.subr.mxu0 0.0
      %6077 = vmatpush1.xpose.msra.mxu0 %v6060
      %6078 = vmatprep.subr.mxu0 0.0
      %6079 = vmatpush1.xpose.msra.mxu0 %v6062
      %6080 = vmatprep.subr.mxu0 0.0
      %6081 = vmatpush1.xpose.msra.mxu0 %v6064
      %6082 = vmatprep.subr.mxu0 0.0
      %6083 = vmatpush1.xpose.msra.mxu0 %v6066
      %6084 = vmatprep.subr.mxu0 0.0
      %6085 = vmatpush1.xpose.msra.mxu0 0.0
      %6086 = vmatprep.subr.mxu0 0.0
      %6087 = vmatpush1.xpose.msra.mxu0 0.0
      %6088 = vmatprep.subr.mxu0 0.0
      %6089 = vmatpush1.xpose.msra.mxu0 0.0
      %6090 = vmatprep.subr.mxu0 0.0
      %6091 = vmatpush1.xpose.msra.mxu0 0.0
      %6092 = vmatprep.subr.mxu0 0.0
      %6093 = vmatpush1.xpose.msra.mxu0 0.0
      %6094 = vmatprep.subr.mxu0 0.0
      %6095 = vmatpush1.xpose.msra.mxu0 0.0
      %6096 = vmatprep.subr.mxu0 0.0
      %6097 = vmatpush1.xpose.msra.mxu0 0.0
      %6098 = vmatprep.subr.mxu0 0.0
      %6099 = vmatpush1.xpose.msra.mxu0 0.0
      %6100 = vmatprep.subr.mxu0 0.0
      %6101 = vmatpush1.xpose.msra.mxu0 0.0
      %6102 = vmatprep.subr.mxu0 0.0
      %6103 = vmatpush1.xpose.msra.mxu0 0.0
      %6104 = vmatprep.subr.mxu0 0.0
      %6105 = vmatpush1.xpose.msra.mxu0 0.0
      %6106 = vmatprep.subr.mxu0 0.0
      %6107 = vmatpush1.xpose.msra.mxu0 0.0
      %6108 = vmatprep.subr.mxu0 0.0
      %6109 = vmatpush1.xpose.msra.mxu0 0.0
      %6110 = vmatprep.subr.mxu0 0.0
      %6111 = vmatpush1.xpose.msra.mxu0 0.0
      %6112 = vmatprep.subr.mxu0 0.0
      %6113 = vmatpush1.xpose.msra.mxu0 0.0
      %6114 = vmatprep.subr.mxu0 0.0
      %6115 = vmatpush1.xpose.msra.mxu0 0.0
      %6116 = vmatprep.subr.mxu0 0.0
      %6117 = vmatpush1.xpose.msra.mxu0 0.0
      %6118 = vmatprep.subr.mxu0 0.0
      %6119 = vmatpush1.xpose.msra.mxu0 0.0
      %6120 = vmatprep.subr.mxu0 0.0
      %6121 = vmatpush1.xpose.msra.mxu0 0.0
      %6122 = vmatprep.subr.mxu0 0.0
      %6123 = vmatpush1.xpose.msra.mxu0 0.0
      %6124 = vmatprep.subr.mxu0 0.0
      %6125 = vmatpush1.xpose.msra.mxu0 0.0
      %6126 = vmatprep.subr.mxu0 0.0
      %6127 = vmatpush1.xpose.msra.mxu0 0.0
      %6128 = vmatprep.subr.mxu0 0.0
      %6129 = vmatpush1.xpose.msra.mxu0 0.0
      %6130 = vmatprep.subr.mxu0 0.0
      %6131 = vmatpush1.xpose.msra.mxu0 0.0
      %6132 = vmatprep.mubr.f32.mxu0 0.0
      %6133 = vmatmul.mubr.f32.gmra.mrb[0].mxu0 %v6036
      %v6134 = vpop.f32.mrb[0].mxu0
      %v6135 = vadd.f32 0.0, %v6134
      %v6136 = vpop.f32.mrb[0].mxu0
      %6137 = vmatprep.mubr.f32.mxu0 0.0
      %6138 = vmatmul.mubr.f32.gmra.mrb[0].mxu0 %v6038
      %v6139 = vpop.f32.mrb[0].mxu0
      %v6140 = vadd.f32 0.0, %v6139
      %v6141 = vpop.f32.mrb[0].mxu0
      %6142 = vmatprep.mubr.f32.mxu0 0.0
      %6143 = vmatmul.mubr.f32.gmra.mrb[0].mxu0 %v6040
      %v6144 = vpop.f32.mrb[0].mxu0
      %v6145 = vadd.f32 0.0, %v6144
      %v6146 = vpop.f32.mrb[0].mxu0
      %6147 = vmatprep.mubr.f32.mxu0 0.0
      %6148 = vmatmul.mubr.f32.gmra.mrb[0].mxu0 %v6042
      %v6149 = vpop.f32.mrb[0].mxu0
      %v6150 = vadd.f32 0.0, %v6149
      %v6151 = vpop.f32.mrb[0].mxu0
      %6152 = vmatprep.mubr.f32.mxu0 0.0
      %6153 = vmatmul.mubr.f32.gmra.mrb[0].mxu0 %v6044
      %v6154 = vpop.f32.mrb[0].mxu0
      %v6155 = vadd.f32 0.0, %v6154
      %v6156 = vpop.f32.mrb[0].mxu0
      %6157 = vmatprep.mubr.f32.mxu0 0.0
      %6158 = vmatmul.mubr.f32.gmra.mrb[0].mxu0 %v6046
      %v6159 = vpop.f32.mrb[0].mxu0
      %v6160 = vadd.f32 0.0, %v6159
      %v6161 = vpop.f32.mrb[0].mxu0
      %6162 = vmatprep.mubr.f32.mxu0 0.0
      %6163 = vmatmul.mubr.f32.gmra.mrb[0].mxu0 %v6048
      %v6164 = vpop.f32.mrb[0].mxu0
      %v6165 = vadd.f32 0.0, %v6164
      %v6166 = vpop.f32.mrb[0].mxu0
      %6167 = vmatprep.mubr.f32.mxu0 0.0
      %6168 = vmatmul.mubr.f32.gmra.mrb[0].mxu0 %v6050
      %v6169 = vpop.f32.mrb[0].mxu0
      %v6170 = vadd.f32 0.0, %v6169
      %v6171 = vpop.f32.mrb[0].mxu0
      %6172 = vdwg.mxu0
      %v6173 = vsel %vm1329, %v6135, -inf
      %6174 = vmax.xlane.f32.xlu0 %v6173
      %v6175 = vpop.xlane.xlu0 %6174
      %v6176 = vsel %vm1329, %v6140, -inf
      %6177 = vmax.xlane.f32.xlu0 %v6176
      %v6178 = vpop.xlane.xlu0 %6177
      %v6179 = vsel %vm1329, %v6145, -inf
      %6180 = vmax.xlane.f32.xlu0 %v6179
      %v6181 = vpop.xlane.xlu0 %6180
      %v6182 = vsel %vm1329, %v6150, -inf
      %6183 = vmax.xlane.f32.xlu0 %v6182
      %v6184 = vpop.xlane.xlu0 %6183
      %v6185 = vsel %vm1329, %v6155, -inf
      %6186 = vmax.xlane.f32.xlu0 %v6185
      %v6187 = vpop.xlane.xlu0 %6186
      %v6188 = vsel %vm1329, %v6160, -inf
      %6189 = vmax.xlane.f32.xlu0 %v6188
      %v6190 = vpop.xlane.xlu0 %6189
      %v6191 = vsel %vm1329, %v6165, -inf
      %6192 = vmax.xlane.f32.xlu0 %v6191
      %v6193 = vpop.xlane.xlu0 %6192
      %v6194 = vsel %vm1329, %v6170, -inf
      %6195 = vmax.xlane.f32.xlu0 %v6194
      %v6196 = vpop.xlane.xlu0 %6195
      %v6197 = vsub.f32 %v6135, %v6175
      %v6198 = vsub.f32 %v6140, %v6178
      %v6199 = vsub.f32 %v6145, %v6181
      %v6200 = vsub.f32 %v6150, %v6184
      %v6201 = vsub.f32 %v6155, %v6187
      %v6202 = vsub.f32 %v6160, %v6190
      %v6203 = vsub.f32 %v6165, %v6193
      %v6204 = vsub.f32 %v6170, %v6196
      %v6205 = vmul.f32 %v6197, 1.442695
      %v6206 = vpow.pop %v6205
      %v6207 = vmul.f32 %v6198, 1.442695
      %v6208 = vpow.pop %v6207
      %v6209 = vmul.f32 %v6199, 1.442695
      %v6210 = vpow.pop %v6209
      %v6211 = vmul.f32 %v6200, 1.442695
      %v6212 = vpow.pop %v6211
      %v6213 = vmul.f32 %v6201, 1.442695
      %v6214 = vpow.pop %v6213
      %v6215 = vmul.f32 %v6202, 1.442695
      %v6216 = vpow.pop %v6215
      %v6217 = vmul.f32 %v6203, 1.442695
      %v6218 = vpow.pop %v6217
      %v6219 = vmul.f32 %v6204, 1.442695
      %v6220 = vpow.pop %v6219
      %v6221 = vsel %vm1329, %v6206, 0.0
      %6222 = vadd.xlane.f32.xlu0 %v6221
      %v6223 = vpop.xlane.xlu0 %6222
      %v6224 = vsel %vm1329, %v6208, 0.0
      %6225 = vadd.xlane.f32.xlu0 %v6224
      %v6226 = vpop.xlane.xlu0 %6225
      %v6227 = vsel %vm1329, %v6210, 0.0
      %6228 = vadd.xlane.f32.xlu0 %v6227
      %v6229 = vpop.xlane.xlu0 %6228
      %v6230 = vsel %vm1329, %v6212, 0.0
      %6231 = vadd.xlane.f32.xlu0 %v6230
      %v6232 = vpop.xlane.xlu0 %6231
      %v6233 = vsel %vm1329, %v6214, 0.0
      %6234 = vadd.xlane.f32.xlu0 %v6233
      %v6235 = vpop.xlane.xlu0 %6234
      %v6236 = vsel %vm1329, %v6216, 0.0
      %6237 = vadd.xlane.f32.xlu0 %v6236
      %v6238 = vpop.xlane.xlu0 %6237
      %v6239 = vsel %vm1329, %v6218, 0.0
      %6240 = vadd.xlane.f32.xlu0 %v6239
      %v6241 = vpop.xlane.xlu0 %6240
      %v6242 = vsel %vm1329, %v6220, 0.0
      %6243 = vadd.xlane.f32.xlu0 %v6242
      %v6244 = vpop.xlane.xlu0 %6243
      %v6245 = vrcp.pop %v6223
      %v6246 = vrcp.pop %v6226
      %v6247 = vrcp.pop %v6229
      %v6248 = vrcp.pop %v6232
      %v6249 = vrcp.pop %v6235
      %v6250 = vrcp.pop %v6238
      %v6251 = vrcp.pop %v6241
      %v6252 = vrcp.pop %v6244
      %v6253 = vmul.f32 %v6206, %v6245
      %v6254 = vmul.f32 %v6208, %v6246
      %v6255 = vmul.f32 %v6210, %v6247
      %v6256 = vmul.f32 %v6212, %v6248
      %v6257 = vmul.f32 %v6214, %v6249
      %v6258 = vmul.f32 %v6216, %v6250
      %v6259 = vmul.f32 %v6218, %v6251
      %v6260 = vmul.f32 %v6220, %v6252
      %6261 = vrot.lane.b32.xlu0 %v5548, 60
      %v6262 = vpop.permute.xlu0 %6261
      %6263 = vrot.lane.b32.xlu0 %v5553, 60
      %v6264 = vpop.permute.xlu0 %6263
      %6265 = vrot.lane.b32.xlu0 %v5558, 60
      %v6266 = vpop.permute.xlu0 %6265
      %6267 = vrot.lane.b32.xlu0 %v5563, 60
      %v6268 = vpop.permute.xlu0 %6267
      %6269 = vrot.lane.b32.xlu0 %v5568, 60
      %v6270 = vpop.permute.xlu0 %6269
      %6271 = vrot.lane.b32.xlu0 %v5573, 60
      %v6272 = vpop.permute.xlu0 %6271
      %6273 = vrot.lane.b32.xlu0 %v5578, 60
      %v6274 = vpop.permute.xlu0 %6273
      %6275 = vrot.lane.b32.xlu0 %v5583, 60
      %v6276 = vpop.permute.xlu0 %6275
      %v6286 = vsel %vm1329, %v6253, 0
      %v6289 = vsel %vm1329, %v6254, 0
      %v6292 = vsel %vm1329, %v6255, 0
      %v6295 = vsel %vm1329, %v6256, 0
      %v6298 = vsel %vm1329, %v6257, 0
      %v6301 = vsel %vm1329, %v6258, 0
      %v6304 = vsel %vm1329, %v6259, 0
      %v6307 = vsel %vm1329, %v6260, 0
      %6309 = vmatprep.subr.mxu0 0.0
      %6310 = vmatpush1.msra.mxu0 %v6262
      %6311 = vmatprep.subr.mxu0 0.0
      %6312 = vmatpush1.msra.mxu0 %v6264
      %6313 = vmatprep.subr.mxu0 0.0
      %6314 = vmatpush1.msra.mxu0 %v6266
      %6315 = vmatprep.subr.mxu0 0.0
      %6316 = vmatpush1.msra.mxu0 %v6268
      %6317 = vmatprep.subr.mxu0 0.0
      %6318 = vmatpush1.msra.mxu0 %v6270
      %6319 = vmatprep.subr.mxu0 0.0
      %6320 = vmatpush1.msra.mxu0 %v6272
      %6321 = vmatprep.subr.mxu0 0.0
      %6322 = vmatpush1.msra.mxu0 %v6274
      %6323 = vmatprep.subr.mxu0 0.0
      %6324 = vmatpush1.msra.mxu0 %v6276
      %6325 = vmatprep.subr.mxu0 0.0
      %6326 = vmatpush1.msra.mxu0 0.0
      %6327 = vmatprep.subr.mxu0 0.0
      %6328 = vmatpush1.msra.mxu0 0.0
      %6329 = vmatprep.subr.mxu0 0.0
      %6330 = vmatpush1.msra.mxu0 0.0
      %6331 = vmatprep.subr.mxu0 0.0
      %6332 = vmatpush1.msra.mxu0 0.0
      %6333 = vmatprep.subr.mxu0 0.0
      %6334 = vmatpush1.msra.mxu0 0.0
      %6335 = vmatprep.subr.mxu0 0.0
      %6336 = vmatpush1.msra.mxu0 0.0
      %6337 = vmatprep.subr.mxu0 0.0
      %6338 = vmatpush1.msra.mxu0 0.0
      %6339 = vmatprep.subr.mxu0 0.0
      %6340 = vmatpush1.msra.mxu0 0.0
      %6341 = vmatprep.subr.mxu0 0.0
      %6342 = vmatpush1.msra.mxu0 0.0
      %6343 = vmatprep.subr.mxu0 0.0
      %6344 = vmatpush1.msra.mxu0 0.0
      %6345 = vmatprep.subr.mxu0 0.0
      %6346 = vmatpush1.msra.mxu0 0.0
      %6347 = vmatprep.subr.mxu0 0.0
      %6348 = vmatpush1.msra.mxu0 0.0
      %6349 = vmatprep.subr.mxu0 0.0
      %6350 = vmatpush1.msra.mxu0 0.0
      %6351 = vmatprep.subr.mxu0 0.0
      %6352 = vmatpush1.msra.mxu0 0.0
      %6353 = vmatprep.subr.mxu0 0.0
      %6354 = vmatpush1.msra.mxu0 0.0
      %6355 = vmatprep.subr.mxu0 0.0
      %6356 = vmatpush1.msra.mxu0 0.0
      %6357 = vmatprep.subr.mxu0 0.0
      %6358 = vmatpush1.msra.mxu0 0.0
      %6359 = vmatprep.subr.mxu0 0.0
      %6360 = vmatpush1.msra.mxu0 0.0
      %6361 = vmatprep.subr.mxu0 0.0
      %6362 = vmatpush1.msra.mxu0 0.0
      %6363 = vmatprep.subr.mxu0 0.0
      %6364 = vmatpush1.msra.mxu0 0.0
      %6365 = vmatprep.subr.mxu0 0.0
      %6366 = vmatpush1.msra.mxu0 0.0
      %6367 = vmatprep.subr.mxu0 0.0
      %6368 = vmatpush1.msra.mxu0 0.0
      %6369 = vmatprep.subr.mxu0 0.0
      %6370 = vmatpush1.msra.mxu0 0.0
      %6371 = vmatprep.subr.mxu0 0.0
      %6372 = vmatpush1.msra.mxu0 0.0
      %6373 = vmatprep.mubr.f32.mxu0 0.0
      %6374 = vmatmul.mubr.f32.gmra.mrb[0].mxu0 %v6286
      %v6375 = vpop.f32.mrb[0].mxu0
      %v6376 = vadd.f32 0.0, %v6375
      %v6377 = vpop.f32.mrb[0].mxu0
      %6378 = vmatprep.mubr.f32.mxu0 0.0
      %6379 = vmatmul.mubr.f32.gmra.mrb[0].mxu0 %v6289
      %v6380 = vpop.f32.mrb[0].mxu0
      %v6381 = vadd.f32 0.0, %v6380
      %v6382 = vpop.f32.mrb[0].mxu0
      %6383 = vmatprep.mubr.f32.mxu0 0.0
      %6384 = vmatmul.mubr.f32.gmra.mrb[0].mxu0 %v6292
      %v6385 = vpop.f32.mrb[0].mxu0
      %v6386 = vadd.f32 0.0, %v6385
      %v6387 = vpop.f32.mrb[0].mxu0
      %6388 = vmatprep.mubr.f32.mxu0 0.0
      %6389 = vmatmul.mubr.f32.gmra.mrb[0].mxu0 %v6295
      %v6390 = vpop.f32.mrb[0].mxu0
      %v6391 = vadd.f32 0.0, %v6390
      %v6392 = vpop.f32.mrb[0].mxu0
      %6393 = vmatprep.mubr.f32.mxu0 0.0
      %6394 = vmatmul.mubr.f32.gmra.mrb[0].mxu0 %v6298
      %v6395 = vpop.f32.mrb[0].mxu0
      %v6396 = vadd.f32 0.0, %v6395
      %v6397 = vpop.f32.mrb[0].mxu0
      %6398 = vmatprep.mubr.f32.mxu0 0.0
      %6399 = vmatmul.mubr.f32.gmra.mrb[0].mxu0 %v6301
      %v6400 = vpop.f32.mrb[0].mxu0
      %v6401 = vadd.f32 0.0, %v6400
      %v6402 = vpop.f32.mrb[0].mxu0
      %6403 = vmatprep.mubr.f32.mxu0 0.0
      %6404 = vmatmul.mubr.f32.gmra.mrb[0].mxu0 %v6304
      %v6405 = vpop.f32.mrb[0].mxu0
      %v6406 = vadd.f32 0.0, %v6405
      %v6407 = vpop.f32.mrb[0].mxu0
      %6408 = vmatprep.mubr.f32.mxu0 0.0
      %6409 = vmatmul.mubr.f32.gmra.mrb[0].mxu0 %v6307
      %v6410 = vpop.f32.mrb[0].mxu0
      %v6411 = vadd.f32 0.0, %v6410
      %v6412 = vpop.f32.mrb[0].mxu0
      %6413 = vdwg.mxu0
      %6414 = vrot.lane.b32.xlu0 %v5586, 120
      %v6415 = vpop.permute.xlu0 %6414
      %6416 = vrot.lane.b32.xlu0 %v5587, 120
      %v6417 = vpop.permute.xlu0 %6416
      %6418 = vrot.lane.b32.xlu0 %v5588, 120
      %v6419 = vpop.permute.xlu0 %6418
      %6420 = vrot.lane.b32.xlu0 %v5589, 120
      %v6421 = vpop.permute.xlu0 %6420
      %6422 = vrot.lane.b32.xlu0 %v5590, 120
      %v6423 = vpop.permute.xlu0 %6422
      %6424 = vrot.lane.b32.xlu0 %v5591, 120
      %v6425 = vpop.permute.xlu0 %6424
      %6426 = vrot.lane.b32.xlu0 %v5592, 120
      %v6427 = vpop.permute.xlu0 %6426
      %6428 = vrot.lane.b32.xlu0 %v5593, 120
      %v6429 = vpop.permute.xlu0 %6428
      %6430 = vrot.lane.b32.xlu0 %v5548, 88
      %v6431 = vpop.permute.xlu0 %6430
      %6432 = vrot.lane.b32.xlu0 %v5553, 88
      %v6433 = vpop.permute.xlu0 %6432
      %6434 = vrot.lane.b32.xlu0 %v5558, 88
      %v6435 = vpop.permute.xlu0 %6434
      %6436 = vrot.lane.b32.xlu0 %v5563, 88
      %v6437 = vpop.permute.xlu0 %6436
      %6438 = vrot.lane.b32.xlu0 %v5568, 88
      %v6439 = vpop.permute.xlu0 %6438
      %6440 = vrot.lane.b32.xlu0 %v5573, 88
      %v6441 = vpop.permute.xlu0 %6440
      %6442 = vrot.lane.b32.xlu0 %v5578, 88
      %v6443 = vpop.permute.xlu0 %6442
      %6444 = vrot.lane.b32.xlu0 %v5583, 88
      %v6445 = vpop.permute.xlu0 %6444
      %v6446 = vsel %vm1183, %v6415, 0
      %v6448 = vsel %vm1183, %v6417, 0
      %v6450 = vsel %vm1183, %v6419, 0
      %v6452 = vsel %vm1183, %v6421, 0
      %v6454 = vsel %vm1183, %v6423, 0
      %v6456 = vsel %vm1183, %v6425, 0
      %v6458 = vsel %vm1183, %v6427, 0
      %v6460 = vsel %vm1183, %v6429, 0
      %v6462 = vsel %vm1183, %v6431, 0
      %v6464 = vsel %vm1183, %v6433, 0
      %v6466 = vsel %vm1183, %v6435, 0
      %v6468 = vsel %vm1183, %v6437, 0
      %v6470 = vsel %vm1183, %v6439, 0
      %v6472 = vsel %vm1183, %v6441, 0
      %v6474 = vsel %vm1183, %v6443, 0
      %v6476 = vsel %vm1183, %v6445, 0
      %6478 = vmatprep.subr.mxu0 0.0
      %6479 = vmatpush1.xpose.msra.mxu0 %v6462
      %6480 = vmatprep.subr.mxu0 0.0
      %6481 = vmatpush1.xpose.msra.mxu0 %v6464
      %6482 = vmatprep.subr.mxu0 0.0
      %6483 = vmatpush1.xpose.msra.mxu0 %v6466
      %6484 = vmatprep.subr.mxu0 0.0
      %6485 = vmatpush1.xpose.msra.mxu0 %v6468
      %6486 = vmatprep.subr.mxu0 0.0
      %6487 = vmatpush1.xpose.msra.mxu0 %v6470
      %6488 = vmatprep.subr.mxu0 0.0
      %6489 = vmatpush1.xpose.msra.mxu0 %v6472
      %6490 = vmatprep.subr.mxu0 0.0
      %6491 = vmatpush1.xpose.msra.mxu0 %v6474
      %6492 = vmatprep.subr.mxu0 0.0
      %6493 = vmatpush1.xpose.msra.mxu0 %v6476
      %6494 = vmatprep.subr.mxu0 0.0
      %6495 = vmatpush1.xpose.msra.mxu0 0.0
      %6496 = vmatprep.subr.mxu0 0.0
      %6497 = vmatpush1.xpose.msra.mxu0 0.0
      %6498 = vmatprep.subr.mxu0 0.0
      %6499 = vmatpush1.xpose.msra.mxu0 0.0
      %6500 = vmatprep.subr.mxu0 0.0
      %6501 = vmatpush1.xpose.msra.mxu0 0.0
      %6502 = vmatprep.subr.mxu0 0.0
      %6503 = vmatpush1.xpose.msra.mxu0 0.0
      %6504 = vmatprep.subr.mxu0 0.0
      %6505 = vmatpush1.xpose.msra.mxu0 0.0
      %6506 = vmatprep.subr.mxu0 0.0
      %6507 = vmatpush1.xpose.msra.mxu0 0.0
      %6508 = vmatprep.subr.mxu0 0.0
      %6509 = vmatpush1.xpose.msra.mxu0 0.0
      %6510 = vmatprep.subr.mxu0 0.0
      %6511 = vmatpush1.xpose.msra.mxu0 0.0
      %6512 = vmatprep.subr.mxu0 0.0
      %6513 = vmatpush1.xpose.msra.mxu0 0.0
      %6514 = vmatprep.subr.mxu0 0.0
      %6515 = vmatpush1.xpose.msra.mxu0 0.0
      %6516 = vmatprep.subr.mxu0 0.0
      %6517 = vmatpush1.xpose.msra.mxu0 0.0
      %6518 = vmatprep.subr.mxu0 0.0
      %6519 = vmatpush1.xpose.msra.mxu0 0.0
      %6520 = vmatprep.subr.mxu0 0.0
      %6521 = vmatpush1.xpose.msra.mxu0 0.0
      %6522 = vmatprep.subr.mxu0 0.0
      %6523 = vmatpush1.xpose.msra.mxu0 0.0
      %6524 = vmatprep.subr.mxu0 0.0
      %6525 = vmatpush1.xpose.msra.mxu0 0.0
      %6526 = vmatprep.subr.mxu0 0.0
      %6527 = vmatpush1.xpose.msra.mxu0 0.0
      %6528 = vmatprep.subr.mxu0 0.0
      %6529 = vmatpush1.xpose.msra.mxu0 0.0
      %6530 = vmatprep.subr.mxu0 0.0
      %6531 = vmatpush1.xpose.msra.mxu0 0.0
      %6532 = vmatprep.subr.mxu0 0.0
      %6533 = vmatpush1.xpose.msra.mxu0 0.0
      %6534 = vmatprep.subr.mxu0 0.0
      %6535 = vmatpush1.xpose.msra.mxu0 0.0
      %6536 = vmatprep.subr.mxu0 0.0
      %6537 = vmatpush1.xpose.msra.mxu0 0.0
      %6538 = vmatprep.subr.mxu0 0.0
      %6539 = vmatpush1.xpose.msra.mxu0 0.0
      %6540 = vmatprep.subr.mxu0 0.0
      %6541 = vmatpush1.xpose.msra.mxu0 0.0
      %6542 = vmatprep.mubr.f32.mxu0 0.0
      %6543 = vmatmul.mubr.f32.gmra.mrb[0].mxu0 %v6446
      %v6544 = vpop.f32.mrb[0].mxu0
      %v6545 = vadd.f32 0.0, %v6544
      %v6546 = vpop.f32.mrb[0].mxu0
      %6547 = vmatprep.mubr.f32.mxu0 0.0
      %6548 = vmatmul.mubr.f32.gmra.mrb[0].mxu0 %v6448
      %v6549 = vpop.f32.mrb[0].mxu0
      %v6550 = vadd.f32 0.0, %v6549
      %v6551 = vpop.f32.mrb[0].mxu0
      %6552 = vmatprep.mubr.f32.mxu0 0.0
      %6553 = vmatmul.mubr.f32.gmra.mrb[0].mxu0 %v6450
      %v6554 = vpop.f32.mrb[0].mxu0
      %v6555 = vadd.f32 0.0, %v6554
      %v6556 = vpop.f32.mrb[0].mxu0
      %6557 = vmatprep.mubr.f32.mxu0 0.0
      %6558 = vmatmul.mubr.f32.gmra.mrb[0].mxu0 %v6452
      %v6559 = vpop.f32.mrb[0].mxu0
      %v6560 = vadd.f32 0.0, %v6559
      %v6561 = vpop.f32.mrb[0].mxu0
      %6562 = vmatprep.mubr.f32.mxu0 0.0
      %6563 = vmatmul.mubr.f32.gmra.mrb[0].mxu0 %v6454
      %v6564 = vpop.f32.mrb[0].mxu0
      %v6565 = vadd.f32 0.0, %v6564
      %v6566 = vpop.f32.mrb[0].mxu0
      %6567 = vmatprep.mubr.f32.mxu0 0.0
      %6568 = vmatmul.mubr.f32.gmra.mrb[0].mxu0 %v6456
      %v6569 = vpop.f32.mrb[0].mxu0
      %v6570 = vadd.f32 0.0, %v6569
      %v6571 = vpop.f32.mrb[0].mxu0
      %6572 = vmatprep.mubr.f32.mxu0 0.0
      %6573 = vmatmul.mubr.f32.gmra.mrb[0].mxu0 %v6458
      %v6574 = vpop.f32.mrb[0].mxu0
      %v6575 = vadd.f32 0.0, %v6574
      %v6576 = vpop.f32.mrb[0].mxu0
      %6577 = vmatprep.mubr.f32.mxu0 0.0
      %6578 = vmatmul.mubr.f32.gmra.mrb[0].mxu0 %v6460
      %v6579 = vpop.f32.mrb[0].mxu0
      %v6580 = vadd.f32 0.0, %v6579
      %v6581 = vpop.f32.mrb[0].mxu0
      %6582 = vdwg.mxu0
      %v6583 = vsel %vm1329, %v6545, -inf
      %6584 = vmax.xlane.f32.xlu0 %v6583
      %v6585 = vpop.xlane.xlu0 %6584
      %v6586 = vsel %vm1329, %v6550, -inf
      %6587 = vmax.xlane.f32.xlu0 %v6586
      %v6588 = vpop.xlane.xlu0 %6587
      %v6589 = vsel %vm1329, %v6555, -inf
      %6590 = vmax.xlane.f32.xlu0 %v6589
      %v6591 = vpop.xlane.xlu0 %6590
      %v6592 = vsel %vm1329, %v6560, -inf
      %6593 = vmax.xlane.f32.xlu0 %v6592
      %v6594 = vpop.xlane.xlu0 %6593
      %v6595 = vsel %vm1329, %v6565, -inf
      %6596 = vmax.xlane.f32.xlu0 %v6595
      %v6597 = vpop.xlane.xlu0 %6596
      %v6598 = vsel %vm1329, %v6570, -inf
      %6599 = vmax.xlane.f32.xlu0 %v6598
      %v6600 = vpop.xlane.xlu0 %6599
      %v6601 = vsel %vm1329, %v6575, -inf
      %6602 = vmax.xlane.f32.xlu0 %v6601
      %v6603 = vpop.xlane.xlu0 %6602
      %v6604 = vsel %vm1329, %v6580, -inf
      %6605 = vmax.xlane.f32.xlu0 %v6604
      %v6606 = vpop.xlane.xlu0 %6605
      %v6607 = vsub.f32 %v6545, %v6585
      %v6608 = vsub.f32 %v6550, %v6588
      %v6609 = vsub.f32 %v6555, %v6591
      %v6610 = vsub.f32 %v6560, %v6594
      %v6611 = vsub.f32 %v6565, %v6597
      %v6612 = vsub.f32 %v6570, %v6600
      %v6613 = vsub.f32 %v6575, %v6603
      %v6614 = vsub.f32 %v6580, %v6606
      %v6615 = vmul.f32 %v6607, 1.442695
      %v6616 = vpow.pop %v6615
      %v6617 = vmul.f32 %v6608, 1.442695
      %v6618 = vpow.pop %v6617
      %v6619 = vmul.f32 %v6609, 1.442695
      %v6620 = vpow.pop %v6619
      %v6621 = vmul.f32 %v6610, 1.442695
      %v6622 = vpow.pop %v6621
      %v6623 = vmul.f32 %v6611, 1.442695
      %v6624 = vpow.pop %v6623
      %v6625 = vmul.f32 %v6612, 1.442695
      %v6626 = vpow.pop %v6625
      %v6627 = vmul.f32 %v6613, 1.442695
      %v6628 = vpow.pop %v6627
      %v6629 = vmul.f32 %v6614, 1.442695
      %v6630 = vpow.pop %v6629
      %v6631 = vsel %vm1329, %v6616, 0.0
      %6632 = vadd.xlane.f32.xlu0 %v6631
      %v6633 = vpop.xlane.xlu0 %6632
      %v6634 = vsel %vm1329, %v6618, 0.0
      %6635 = vadd.xlane.f32.xlu0 %v6634
      %v6636 = vpop.xlane.xlu0 %6635
      %v6637 = vsel %vm1329, %v6620, 0.0
      %6638 = vadd.xlane.f32.xlu0 %v6637
      %v6639 = vpop.xlane.xlu0 %6638
      %v6640 = vsel %vm1329, %v6622, 0.0
      %6641 = vadd.xlane.f32.xlu0 %v6640
      %v6642 = vpop.xlane.xlu0 %6641
      %v6643 = vsel %vm1329, %v6624, 0.0
      %6644 = vadd.xlane.f32.xlu0 %v6643
      %v6645 = vpop.xlane.xlu0 %6644
      %v6646 = vsel %vm1329, %v6626, 0.0
      %6647 = vadd.xlane.f32.xlu0 %v6646
      %v6648 = vpop.xlane.xlu0 %6647
      %v6649 = vsel %vm1329, %v6628, 0.0
      %6650 = vadd.xlane.f32.xlu0 %v6649
      %v6651 = vpop.xlane.xlu0 %6650
      %v6652 = vsel %vm1329, %v6630, 0.0
      %6653 = vadd.xlane.f32.xlu0 %v6652
      %v6654 = vpop.xlane.xlu0 %6653
      %v6655 = vrcp.pop %v6633
      %v6656 = vrcp.pop %v6636
      %v6657 = vrcp.pop %v6639
      %v6658 = vrcp.pop %v6642
      %v6659 = vrcp.pop %v6645
      %v6660 = vrcp.pop %v6648
      %v6661 = vrcp.pop %v6651
      %v6662 = vrcp.pop %v6654
      %v6663 = vmul.f32 %v6616, %v6655
      %v6664 = vmul.f32 %v6618, %v6656
      %v6665 = vmul.f32 %v6620, %v6657
      %v6666 = vmul.f32 %v6622, %v6658
      %v6667 = vmul.f32 %v6624, %v6659
      %v6668 = vmul.f32 %v6626, %v6660
      %v6669 = vmul.f32 %v6628, %v6661
      %v6670 = vmul.f32 %v6630, %v6662
      %6671 = vrot.lane.b32.xlu0 %v5548, 56
      %v6672 = vpop.permute.xlu0 %6671
      %6673 = vrot.lane.b32.xlu0 %v5553, 56
      %v6674 = vpop.permute.xlu0 %6673
      %6675 = vrot.lane.b32.xlu0 %v5558, 56
      %v6676 = vpop.permute.xlu0 %6675
      %6677 = vrot.lane.b32.xlu0 %v5563, 56
      %v6678 = vpop.permute.xlu0 %6677
      %6679 = vrot.lane.b32.xlu0 %v5568, 56
      %v6680 = vpop.permute.xlu0 %6679
      %6681 = vrot.lane.b32.xlu0 %v5573, 56
      %v6682 = vpop.permute.xlu0 %6681
      %6683 = vrot.lane.b32.xlu0 %v5578, 56
      %v6684 = vpop.permute.xlu0 %6683
      %6685 = vrot.lane.b32.xlu0 %v5583, 56
      %v6686 = vpop.permute.xlu0 %6685
      %v6696 = vsel %vm1329, %v6663, 0
      %v6699 = vsel %vm1329, %v6664, 0
      %v6702 = vsel %vm1329, %v6665, 0
      %v6705 = vsel %vm1329, %v6666, 0
      %v6708 = vsel %vm1329, %v6667, 0
      %v6711 = vsel %vm1329, %v6668, 0
      %v6714 = vsel %vm1329, %v6669, 0
      %v6717 = vsel %vm1329, %v6670, 0
      %6719 = vmatprep.subr.mxu0 0.0
      %6720 = vmatpush1.msra.mxu0 %v6672
      %6721 = vmatprep.subr.mxu0 0.0
      %6722 = vmatpush1.msra.mxu0 %v6674
      %6723 = vmatprep.subr.mxu0 0.0
      %6724 = vmatpush1.msra.mxu0 %v6676
      %6725 = vmatprep.subr.mxu0 0.0
      %6726 = vmatpush1.msra.mxu0 %v6678
      %6727 = vmatprep.subr.mxu0 0.0
      %6728 = vmatpush1.msra.mxu0 %v6680
      %6729 = vmatprep.subr.mxu0 0.0
      %6730 = vmatpush1.msra.mxu0 %v6682
      %6731 = vmatprep.subr.mxu0 0.0
      %6732 = vmatpush1.msra.mxu0 %v6684
      %6733 = vmatprep.subr.mxu0 0.0
      %6734 = vmatpush1.msra.mxu0 %v6686
      %6735 = vmatprep.subr.mxu0 0.0
      %6736 = vmatpush1.msra.mxu0 0.0
      %6737 = vmatprep.subr.mxu0 0.0
      %6738 = vmatpush1.msra.mxu0 0.0
      %6739 = vmatprep.subr.mxu0 0.0
      %6740 = vmatpush1.msra.mxu0 0.0
      %6741 = vmatprep.subr.mxu0 0.0
      %6742 = vmatpush1.msra.mxu0 0.0
      %6743 = vmatprep.subr.mxu0 0.0
      %6744 = vmatpush1.msra.mxu0 0.0
      %6745 = vmatprep.subr.mxu0 0.0
      %6746 = vmatpush1.msra.mxu0 0.0
      %6747 = vmatprep.subr.mxu0 0.0
      %6748 = vmatpush1.msra.mxu0 0.0
      %6749 = vmatprep.subr.mxu0 0.0
      %6750 = vmatpush1.msra.mxu0 0.0
      %6751 = vmatprep.subr.mxu0 0.0
      %6752 = vmatpush1.msra.mxu0 0.0
      %6753 = vmatprep.subr.mxu0 0.0
      %6754 = vmatpush1.msra.mxu0 0.0
      %6755 = vmatprep.subr.mxu0 0.0
      %6756 = vmatpush1.msra.mxu0 0.0
      %6757 = vmatprep.subr.mxu0 0.0
      %6758 = vmatpush1.msra.mxu0 0.0
      %6759 = vmatprep.subr.mxu0 0.0
      %6760 = vmatpush1.msra.mxu0 0.0
      %6761 = vmatprep.subr.mxu0 0.0
      %6762 = vmatpush1.msra.mxu0 0.0
      %6763 = vmatprep.subr.mxu0 0.0
      %6764 = vmatpush1.msra.mxu0 0.0
      %6765 = vmatprep.subr.mxu0 0.0
      %6766 = vmatpush1.msra.mxu0 0.0
      %6767 = vmatprep.subr.mxu0 0.0
      %6768 = vmatpush1.msra.mxu0 0.0
      %6769 = vmatprep.subr.mxu0 0.0
      %6770 = vmatpush1.msra.mxu0 0.0
      %6771 = vmatprep.subr.mxu0 0.0
      %6772 = vmatpush1.msra.mxu0 0.0
      %6773 = vmatprep.subr.mxu0 0.0
      %6774 = vmatpush1.msra.mxu0 0.0
      %6775 = vmatprep.subr.mxu0 0.0
      %6776 = vmatpush1.msra.mxu0 0.0
      %6777 = vmatprep.subr.mxu0 0.0
      %6778 = vmatpush1.msra.mxu0 0.0
      %6779 = vmatprep.subr.mxu0 0.0
      %6780 = vmatpush1.msra.mxu0 0.0
      %6781 = vmatprep.subr.mxu0 0.0
      %6782 = vmatpush1.msra.mxu0 0.0
      %6783 = vmatprep.mubr.f32.mxu0 0.0
      %6784 = vmatmul.mubr.f32.gmra.mrb[0].mxu0 %v6696
      %v6785 = vpop.f32.mrb[0].mxu0
      %v6786 = vadd.f32 0.0, %v6785
      %v6787 = vpop.f32.mrb[0].mxu0
      %6788 = vmatprep.mubr.f32.mxu0 0.0
      %6789 = vmatmul.mubr.f32.gmra.mrb[0].mxu0 %v6699
      %v6790 = vpop.f32.mrb[0].mxu0
      %v6791 = vadd.f32 0.0, %v6790
      %v6792 = vpop.f32.mrb[0].mxu0
      %6793 = vmatprep.mubr.f32.mxu0 0.0
      %6794 = vmatmul.mubr.f32.gmra.mrb[0].mxu0 %v6702
      %v6795 = vpop.f32.mrb[0].mxu0
      %v6796 = vadd.f32 0.0, %v6795
      %v6797 = vpop.f32.mrb[0].mxu0
      %6798 = vmatprep.mubr.f32.mxu0 0.0
      %6799 = vmatmul.mubr.f32.gmra.mrb[0].mxu0 %v6705
      %v6800 = vpop.f32.mrb[0].mxu0
      %v6801 = vadd.f32 0.0, %v6800
      %v6802 = vpop.f32.mrb[0].mxu0
      %6803 = vmatprep.mubr.f32.mxu0 0.0
      %6804 = vmatmul.mubr.f32.gmra.mrb[0].mxu0 %v6708
      %v6805 = vpop.f32.mrb[0].mxu0
      %v6806 = vadd.f32 0.0, %v6805
      %v6807 = vpop.f32.mrb[0].mxu0
      %6808 = vmatprep.mubr.f32.mxu0 0.0
      %6809 = vmatmul.mubr.f32.gmra.mrb[0].mxu0 %v6711
      %v6810 = vpop.f32.mrb[0].mxu0
      %v6811 = vadd.f32 0.0, %v6810
      %v6812 = vpop.f32.mrb[0].mxu0
      %6813 = vmatprep.mubr.f32.mxu0 0.0
      %6814 = vmatmul.mubr.f32.gmra.mrb[0].mxu0 %v6714
      %v6815 = vpop.f32.mrb[0].mxu0
      %v6816 = vadd.f32 0.0, %v6815
      %v6817 = vpop.f32.mrb[0].mxu0
      %6818 = vmatprep.mubr.f32.mxu0 0.0
      %6819 = vmatmul.mubr.f32.gmra.mrb[0].mxu0 %v6717
      %v6820 = vpop.f32.mrb[0].mxu0
      %v6821 = vadd.f32 0.0, %v6820
      %v6822 = vpop.f32.mrb[0].mxu0
      %6823 = vdwg.mxu0
      %6824 = vrot.lane.b32.xlu0 %v5586, 116
      %v6825 = vpop.permute.xlu0 %6824
      %6826 = vrot.lane.b32.xlu0 %v5587, 116
      %v6827 = vpop.permute.xlu0 %6826
      %6828 = vrot.lane.b32.xlu0 %v5588, 116
      %v6829 = vpop.permute.xlu0 %6828
      %6830 = vrot.lane.b32.xlu0 %v5589, 116
      %v6831 = vpop.permute.xlu0 %6830
      %6832 = vrot.lane.b32.xlu0 %v5590, 116
      %v6833 = vpop.permute.xlu0 %6832
      %6834 = vrot.lane.b32.xlu0 %v5591, 116
      %v6835 = vpop.permute.xlu0 %6834
      %6836 = vrot.lane.b32.xlu0 %v5592, 116
      %v6837 = vpop.permute.xlu0 %6836
      %6838 = vrot.lane.b32.xlu0 %v5593, 116
      %v6839 = vpop.permute.xlu0 %6838
      %6840 = vrot.lane.b32.xlu0 %v5548, 84
      %v6841 = vpop.permute.xlu0 %6840
      %6842 = vrot.lane.b32.xlu0 %v5553, 84
      %v6843 = vpop.permute.xlu0 %6842
      %6844 = vrot.lane.b32.xlu0 %v5558, 84
      %v6845 = vpop.permute.xlu0 %6844
      %6846 = vrot.lane.b32.xlu0 %v5563, 84
      %v6847 = vpop.permute.xlu0 %6846
      %6848 = vrot.lane.b32.xlu0 %v5568, 84
      %v6849 = vpop.permute.xlu0 %6848
      %6850 = vrot.lane.b32.xlu0 %v5573, 84
      %v6851 = vpop.permute.xlu0 %6850
      %6852 = vrot.lane.b32.xlu0 %v5578, 84
      %v6853 = vpop.permute.xlu0 %6852
      %6854 = vrot.lane.b32.xlu0 %v5583, 84
      %v6855 = vpop.permute.xlu0 %6854
      %v6856 = vsel %vm1183, %v6825, 0
      %v6858 = vsel %vm1183, %v6827, 0
      %v6860 = vsel %vm1183, %v6829, 0
      %v6862 = vsel %vm1183, %v6831, 0
      %v6864 = vsel %vm1183, %v6833, 0
      %v6866 = vsel %vm1183, %v6835, 0
      %v6868 = vsel %vm1183, %v6837, 0
      %v6870 = vsel %vm1183, %v6839, 0
      %v6872 = vsel %vm1183, %v6841, 0
      %v6874 = vsel %vm1183, %v6843, 0
      %v6876 = vsel %vm1183, %v6845, 0
      %v6878 = vsel %vm1183, %v6847, 0
      %v6880 = vsel %vm1183, %v6849, 0
      %v6882 = vsel %vm1183, %v6851, 0
      %v6884 = vsel %vm1183, %v6853, 0
      %v6886 = vsel %vm1183, %v6855, 0
      %6888 = vmatprep.subr.mxu0 0.0
      %6889 = vmatpush1.xpose.msra.mxu0 %v6872
      %6890 = vmatprep.subr.mxu0 0.0
      %6891 = vmatpush1.xpose.msra.mxu0 %v6874
      %6892 = vmatprep.subr.mxu0 0.0
      %6893 = vmatpush1.xpose.msra.mxu0 %v6876
      %6894 = vmatprep.subr.mxu0 0.0
      %6895 = vmatpush1.xpose.msra.mxu0 %v6878
      %6896 = vmatprep.subr.mxu0 0.0
      %6897 = vmatpush1.xpose.msra.mxu0 %v6880
      %6898 = vmatprep.subr.mxu0 0.0
      %6899 = vmatpush1.xpose.msra.mxu0 %v6882
      %6900 = vmatprep.subr.mxu0 0.0
      %6901 = vmatpush1.xpose.msra.mxu0 %v6884
      %6902 = vmatprep.subr.mxu0 0.0
      %6903 = vmatpush1.xpose.msra.mxu0 %v6886
      %6904 = vmatprep.subr.mxu0 0.0
      %6905 = vmatpush1.xpose.msra.mxu0 0.0
      %6906 = vmatprep.subr.mxu0 0.0
      %6907 = vmatpush1.xpose.msra.mxu0 0.0
      %6908 = vmatprep.subr.mxu0 0.0
      %6909 = vmatpush1.xpose.msra.mxu0 0.0
      %6910 = vmatprep.subr.mxu0 0.0
      %6911 = vmatpush1.xpose.msra.mxu0 0.0
      %6912 = vmatprep.subr.mxu0 0.0
      %6913 = vmatpush1.xpose.msra.mxu0 0.0
      %6914 = vmatprep.subr.mxu0 0.0
      %6915 = vmatpush1.xpose.msra.mxu0 0.0
      %6916 = vmatprep.subr.mxu0 0.0
      %6917 = vmatpush1.xpose.msra.mxu0 0.0
      %6918 = vmatprep.subr.mxu0 0.0
      %6919 = vmatpush1.xpose.msra.mxu0 0.0
      %6920 = vmatprep.subr.mxu0 0.0
      %6921 = vmatpush1.xpose.msra.mxu0 0.0
      %6922 = vmatprep.subr.mxu0 0.0
      %6923 = vmatpush1.xpose.msra.mxu0 0.0
      %6924 = vmatprep.subr.mxu0 0.0
      %6925 = vmatpush1.xpose.msra.mxu0 0.0
      %6926 = vmatprep.subr.mxu0 0.0
      %6927 = vmatpush1.xpose.msra.mxu0 0.0
      %6928 = vmatprep.subr.mxu0 0.0
      %6929 = vmatpush1.xpose.msra.mxu0 0.0
      %6930 = vmatprep.subr.mxu0 0.0
      %6931 = vmatpush1.xpose.msra.mxu0 0.0
      %6932 = vmatprep.subr.mxu0 0.0
      %6933 = vmatpush1.xpose.msra.mxu0 0.0
      %6934 = vmatprep.subr.mxu0 0.0
      %6935 = vmatpush1.xpose.msra.mxu0 0.0
      %6936 = vmatprep.subr.mxu0 0.0
      %6937 = vmatpush1.xpose.msra.mxu0 0.0
      %6938 = vmatprep.subr.mxu0 0.0
      %6939 = vmatpush1.xpose.msra.mxu0 0.0
      %6940 = vmatprep.subr.mxu0 0.0
      %6941 = vmatpush1.xpose.msra.mxu0 0.0
      %6942 = vmatprep.subr.mxu0 0.0
      %6943 = vmatpush1.xpose.msra.mxu0 0.0
      %6944 = vmatprep.subr.mxu0 0.0
      %6945 = vmatpush1.xpose.msra.mxu0 0.0
      %6946 = vmatprep.subr.mxu0 0.0
      %6947 = vmatpush1.xpose.msra.mxu0 0.0
      %6948 = vmatprep.subr.mxu0 0.0
      %6949 = vmatpush1.xpose.msra.mxu0 0.0
      %6950 = vmatprep.subr.mxu0 0.0
      %6951 = vmatpush1.xpose.msra.mxu0 0.0
      %6952 = vmatprep.mubr.f32.mxu0 0.0
      %6953 = vmatmul.mubr.f32.gmra.mrb[0].mxu0 %v6856
      %v6954 = vpop.f32.mrb[0].mxu0
      %v6955 = vadd.f32 0.0, %v6954
      %v6956 = vpop.f32.mrb[0].mxu0
      %6957 = vmatprep.mubr.f32.mxu0 0.0
      %6958 = vmatmul.mubr.f32.gmra.mrb[0].mxu0 %v6858
      %v6959 = vpop.f32.mrb[0].mxu0
      %v6960 = vadd.f32 0.0, %v6959
      %v6961 = vpop.f32.mrb[0].mxu0
      %6962 = vmatprep.mubr.f32.mxu0 0.0
      %6963 = vmatmul.mubr.f32.gmra.mrb[0].mxu0 %v6860
      %v6964 = vpop.f32.mrb[0].mxu0
      %v6965 = vadd.f32 0.0, %v6964
      %v6966 = vpop.f32.mrb[0].mxu0
      %6967 = vmatprep.mubr.f32.mxu0 0.0
      %6968 = vmatmul.mubr.f32.gmra.mrb[0].mxu0 %v6862
      %v6969 = vpop.f32.mrb[0].mxu0
      %v6970 = vadd.f32 0.0, %v6969
      %v6971 = vpop.f32.mrb[0].mxu0
      %6972 = vmatprep.mubr.f32.mxu0 0.0
      %6973 = vmatmul.mubr.f32.gmra.mrb[0].mxu0 %v6864
      %v6974 = vpop.f32.mrb[0].mxu0
      %v6975 = vadd.f32 0.0, %v6974
      %v6976 = vpop.f32.mrb[0].mxu0
      %6977 = vmatprep.mubr.f32.mxu0 0.0
      %6978 = vmatmul.mubr.f32.gmra.mrb[0].mxu0 %v6866
      %v6979 = vpop.f32.mrb[0].mxu0
      %v6980 = vadd.f32 0.0, %v6979
      %v6981 = vpop.f32.mrb[0].mxu0
      %6982 = vmatprep.mubr.f32.mxu0 0.0
      %6983 = vmatmul.mubr.f32.gmra.mrb[0].mxu0 %v6868
      %v6984 = vpop.f32.mrb[0].mxu0
      %v6985 = vadd.f32 0.0, %v6984
      %v6986 = vpop.f32.mrb[0].mxu0
      %6987 = vmatprep.mubr.f32.mxu0 0.0
      %6988 = vmatmul.mubr.f32.gmra.mrb[0].mxu0 %v6870
      %v6989 = vpop.f32.mrb[0].mxu0
      %v6990 = vadd.f32 0.0, %v6989
      %v6991 = vpop.f32.mrb[0].mxu0
      %6992 = vdwg.mxu0
      %v6993 = vsel %vm1329, %v6955, -inf
      %6994 = vmax.xlane.f32.xlu0 %v6993
      %v6995 = vpop.xlane.xlu0 %6994
      %v6996 = vsel %vm1329, %v6960, -inf
      %6997 = vmax.xlane.f32.xlu0 %v6996
      %v6998 = vpop.xlane.xlu0 %6997
      %v6999 = vsel %vm1329, %v6965, -inf
      %7000 = vmax.xlane.f32.xlu0 %v6999
      %v7001 = vpop.xlane.xlu0 %7000
      %v7002 = vsel %vm1329, %v6970, -inf
      %7003 = vmax.xlane.f32.xlu0 %v7002
      %v7004 = vpop.xlane.xlu0 %7003
      %v7005 = vsel %vm1329, %v6975, -inf
      %7006 = vmax.xlane.f32.xlu0 %v7005
      %v7007 = vpop.xlane.xlu0 %7006
      %v7008 = vsel %vm1329, %v6980, -inf
      %7009 = vmax.xlane.f32.xlu0 %v7008
      %v7010 = vpop.xlane.xlu0 %7009
      %v7011 = vsel %vm1329, %v6985, -inf
      %7012 = vmax.xlane.f32.xlu0 %v7011
      %v7013 = vpop.xlane.xlu0 %7012
      %v7014 = vsel %vm1329, %v6990, -inf
      %7015 = vmax.xlane.f32.xlu0 %v7014
      %v7016 = vpop.xlane.xlu0 %7015
      %v7017 = vsub.f32 %v6955, %v6995
      %v7018 = vsub.f32 %v6960, %v6998
      %v7019 = vsub.f32 %v6965, %v7001
      %v7020 = vsub.f32 %v6970, %v7004
      %v7021 = vsub.f32 %v6975, %v7007
      %v7022 = vsub.f32 %v6980, %v7010
      %v7023 = vsub.f32 %v6985, %v7013
      %v7024 = vsub.f32 %v6990, %v7016
      %v7025 = vmul.f32 %v7017, 1.442695
      %v7026 = vpow.pop %v7025
      %v7027 = vmul.f32 %v7018, 1.442695
      %v7028 = vpow.pop %v7027
      %v7029 = vmul.f32 %v7019, 1.442695
      %v7030 = vpow.pop %v7029
      %v7031 = vmul.f32 %v7020, 1.442695
      %v7032 = vpow.pop %v7031
      %v7033 = vmul.f32 %v7021, 1.442695
      %v7034 = vpow.pop %v7033
      %v7035 = vmul.f32 %v7022, 1.442695
      %v7036 = vpow.pop %v7035
      %v7037 = vmul.f32 %v7023, 1.442695
      %v7038 = vpow.pop %v7037
      %v7039 = vmul.f32 %v7024, 1.442695
      %v7040 = vpow.pop %v7039
      %v7041 = vsel %vm1329, %v7026, 0.0
      %7042 = vadd.xlane.f32.xlu0 %v7041
      %v7043 = vpop.xlane.xlu0 %7042
      %v7044 = vsel %vm1329, %v7028, 0.0
      %7045 = vadd.xlane.f32.xlu0 %v7044
      %v7046 = vpop.xlane.xlu0 %7045
      %v7047 = vsel %vm1329, %v7030, 0.0
      %7048 = vadd.xlane.f32.xlu0 %v7047
      %v7049 = vpop.xlane.xlu0 %7048
      %v7050 = vsel %vm1329, %v7032, 0.0
      %7051 = vadd.xlane.f32.xlu0 %v7050
      %v7052 = vpop.xlane.xlu0 %7051
      %v7053 = vsel %vm1329, %v7034, 0.0
      %7054 = vadd.xlane.f32.xlu0 %v7053
      %v7055 = vpop.xlane.xlu0 %7054
      %v7056 = vsel %vm1329, %v7036, 0.0
      %7057 = vadd.xlane.f32.xlu0 %v7056
      %v7058 = vpop.xlane.xlu0 %7057
      %v7059 = vsel %vm1329, %v7038, 0.0
      %7060 = vadd.xlane.f32.xlu0 %v7059
      %v7061 = vpop.xlane.xlu0 %7060
      %v7062 = vsel %vm1329, %v7040, 0.0
      %7063 = vadd.xlane.f32.xlu0 %v7062
      %v7064 = vpop.xlane.xlu0 %7063
      %v7065 = vrcp.pop %v7043
      %v7066 = vrcp.pop %v7046
      %v7067 = vrcp.pop %v7049
      %v7068 = vrcp.pop %v7052
      %v7069 = vrcp.pop %v7055
      %v7070 = vrcp.pop %v7058
      %v7071 = vrcp.pop %v7061
      %v7072 = vrcp.pop %v7064
      %v7073 = vmul.f32 %v7026, %v7065
      %v7074 = vmul.f32 %v7028, %v7066
      %v7075 = vmul.f32 %v7030, %v7067
      %v7076 = vmul.f32 %v7032, %v7068
      %v7077 = vmul.f32 %v7034, %v7069
      %v7078 = vmul.f32 %v7036, %v7070
      %v7079 = vmul.f32 %v7038, %v7071
      %v7080 = vmul.f32 %v7040, %v7072
      %7081 = vrot.lane.b32.xlu0 %v5548, 52
      %v7082 = vpop.permute.xlu0 %7081
      %7083 = vrot.lane.b32.xlu0 %v5553, 52
      %v7084 = vpop.permute.xlu0 %7083
      %7085 = vrot.lane.b32.xlu0 %v5558, 52
      %v7086 = vpop.permute.xlu0 %7085
      %7087 = vrot.lane.b32.xlu0 %v5563, 52
      %v7088 = vpop.permute.xlu0 %7087
      %7089 = vrot.lane.b32.xlu0 %v5568, 52
      %v7090 = vpop.permute.xlu0 %7089
      %7091 = vrot.lane.b32.xlu0 %v5573, 52
      %v7092 = vpop.permute.xlu0 %7091
      %7093 = vrot.lane.b32.xlu0 %v5578, 52
      %v7094 = vpop.permute.xlu0 %7093
      %7095 = vrot.lane.b32.xlu0 %v5583, 52
      %v7096 = vpop.permute.xlu0 %7095
      %v7106 = vsel %vm1329, %v7073, 0
      %v7109 = vsel %vm1329, %v7074, 0
      %v7112 = vsel %vm1329, %v7075, 0
      %v7115 = vsel %vm1329, %v7076, 0
      %v7118 = vsel %vm1329, %v7077, 0
      %v7121 = vsel %vm1329, %v7078, 0
      %v7124 = vsel %vm1329, %v7079, 0
      %v7127 = vsel %vm1329, %v7080, 0
      %7129 = vmatprep.subr.mxu0 0.0
      %7130 = vmatpush1.msra.mxu0 %v7082
      %7131 = vmatprep.subr.mxu0 0.0
      %7132 = vmatpush1.msra.mxu0 %v7084
      %7133 = vmatprep.subr.mxu0 0.0
      %7134 = vmatpush1.msra.mxu0 %v7086
      %7135 = vmatprep.subr.mxu0 0.0
      %7136 = vmatpush1.msra.mxu0 %v7088
      %7137 = vmatprep.subr.mxu0 0.0
      %7138 = vmatpush1.msra.mxu0 %v7090
      %7139 = vmatprep.subr.mxu0 0.0
      %7140 = vmatpush1.msra.mxu0 %v7092
      %7141 = vmatprep.subr.mxu0 0.0
      %7142 = vmatpush1.msra.mxu0 %v7094
      %7143 = vmatprep.subr.mxu0 0.0
      %7144 = vmatpush1.msra.mxu0 %v7096
      %7145 = vmatprep.subr.mxu0 0.0
      %7146 = vmatpush1.msra.mxu0 0.0
      %7147 = vmatprep.subr.mxu0 0.0
      %7148 = vmatpush1.msra.mxu0 0.0
      %7149 = vmatprep.subr.mxu0 0.0
      %7150 = vmatpush1.msra.mxu0 0.0
      %7151 = vmatprep.subr.mxu0 0.0
      %7152 = vmatpush1.msra.mxu0 0.0
      %7153 = vmatprep.subr.mxu0 0.0
      %7154 = vmatpush1.msra.mxu0 0.0
      %7155 = vmatprep.subr.mxu0 0.0
      %7156 = vmatpush1.msra.mxu0 0.0
      %7157 = vmatprep.subr.mxu0 0.0
      %7158 = vmatpush1.msra.mxu0 0.0
      %7159 = vmatprep.subr.mxu0 0.0
      %7160 = vmatpush1.msra.mxu0 0.0
      %7161 = vmatprep.subr.mxu0 0.0
      %7162 = vmatpush1.msra.mxu0 0.0
      %7163 = vmatprep.subr.mxu0 0.0
      %7164 = vmatpush1.msra.mxu0 0.0
      %7165 = vmatprep.subr.mxu0 0.0
      %7166 = vmatpush1.msra.mxu0 0.0
      %7167 = vmatprep.subr.mxu0 0.0
      %7168 = vmatpush1.msra.mxu0 0.0
      %7169 = vmatprep.subr.mxu0 0.0
      %7170 = vmatpush1.msra.mxu0 0.0
      %7171 = vmatprep.subr.mxu0 0.0
      %7172 = vmatpush1.msra.mxu0 0.0
      %7173 = vmatprep.subr.mxu0 0.0
      %7174 = vmatpush1.msra.mxu0 0.0
      %7175 = vmatprep.subr.mxu0 0.0
      %7176 = vmatpush1.msra.mxu0 0.0
      %7177 = vmatprep.subr.mxu0 0.0
      %7178 = vmatpush1.msra.mxu0 0.0
      %7179 = vmatprep.subr.mxu0 0.0
      %7180 = vmatpush1.msra.mxu0 0.0
      %7181 = vmatprep.subr.mxu0 0.0
      %7182 = vmatpush1.msra.mxu0 0.0
      %7183 = vmatprep.subr.mxu0 0.0
      %7184 = vmatpush1.msra.mxu0 0.0
      %7185 = vmatprep.subr.mxu0 0.0
      %7186 = vmatpush1.msra.mxu0 0.0
      %7187 = vmatprep.subr.mxu0 0.0
      %7188 = vmatpush1.msra.mxu0 0.0
      %7189 = vmatprep.subr.mxu0 0.0
      %7190 = vmatpush1.msra.mxu0 0.0
      %7191 = vmatprep.subr.mxu0 0.0
      %7192 = vmatpush1.msra.mxu0 0.0
      %7193 = vmatprep.mubr.f32.mxu0 0.0
      %7194 = vmatmul.mubr.f32.gmra.mrb[0].mxu0 %v7106
      %v7195 = vpop.f32.mrb[0].mxu0
      %v7196 = vadd.f32 0.0, %v7195
      %v7197 = vpop.f32.mrb[0].mxu0
      %7198 = vmatprep.mubr.f32.mxu0 0.0
      %7199 = vmatmul.mubr.f32.gmra.mrb[0].mxu0 %v7109
      %v7200 = vpop.f32.mrb[0].mxu0
      %v7201 = vadd.f32 0.0, %v7200
      %v7202 = vpop.f32.mrb[0].mxu0
      %7203 = vmatprep.mubr.f32.mxu0 0.0
      %7204 = vmatmul.mubr.f32.gmra.mrb[0].mxu0 %v7112
      %v7205 = vpop.f32.mrb[0].mxu0
      %v7206 = vadd.f32 0.0, %v7205
      %v7207 = vpop.f32.mrb[0].mxu0
      %7208 = vmatprep.mubr.f32.mxu0 0.0
      %7209 = vmatmul.mubr.f32.gmra.mrb[0].mxu0 %v7115
      %v7210 = vpop.f32.mrb[0].mxu0
      %v7211 = vadd.f32 0.0, %v7210
      %v7212 = vpop.f32.mrb[0].mxu0
      %7213 = vmatprep.mubr.f32.mxu0 0.0
      %7214 = vmatmul.mubr.f32.gmra.mrb[0].mxu0 %v7118
      %v7215 = vpop.f32.mrb[0].mxu0
      %v7216 = vadd.f32 0.0, %v7215
      %v7217 = vpop.f32.mrb[0].mxu0
      %7218 = vmatprep.mubr.f32.mxu0 0.0
      %7219 = vmatmul.mubr.f32.gmra.mrb[0].mxu0 %v7121
      %v7220 = vpop.f32.mrb[0].mxu0
      %v7221 = vadd.f32 0.0, %v7220
      %v7222 = vpop.f32.mrb[0].mxu0
      %7223 = vmatprep.mubr.f32.mxu0 0.0
      %7224 = vmatmul.mubr.f32.gmra.mrb[0].mxu0 %v7124
      %v7225 = vpop.f32.mrb[0].mxu0
      %v7226 = vadd.f32 0.0, %v7225
      %v7227 = vpop.f32.mrb[0].mxu0
      %7228 = vmatprep.mubr.f32.mxu0 0.0
      %7229 = vmatmul.mubr.f32.gmra.mrb[0].mxu0 %v7127
      %v7230 = vpop.f32.mrb[0].mxu0
      %v7231 = vadd.f32 0.0, %v7230
      %v7232 = vpop.f32.mrb[0].mxu0
      %7233 = vdwg.mxu0
      %7234 = vrot.lane.b32.xlu0 %v5586, 112
      %v7235 = vpop.permute.xlu0 %7234
      %7236 = vrot.lane.b32.xlu0 %v5587, 112
      %v7237 = vpop.permute.xlu0 %7236
      %7238 = vrot.lane.b32.xlu0 %v5588, 112
      %v7239 = vpop.permute.xlu0 %7238
      %7240 = vrot.lane.b32.xlu0 %v5589, 112
      %v7241 = vpop.permute.xlu0 %7240
      %7242 = vrot.lane.b32.xlu0 %v5590, 112
      %v7243 = vpop.permute.xlu0 %7242
      %7244 = vrot.lane.b32.xlu0 %v5591, 112
      %v7245 = vpop.permute.xlu0 %7244
      %7246 = vrot.lane.b32.xlu0 %v5592, 112
      %v7247 = vpop.permute.xlu0 %7246
      %7248 = vrot.lane.b32.xlu0 %v5593, 112
      %v7249 = vpop.permute.xlu0 %7248
      %7250 = vrot.lane.b32.xlu0 %v5548, 80
      %v7251 = vpop.permute.xlu0 %7250
      %7252 = vrot.lane.b32.xlu0 %v5553, 80
      %v7253 = vpop.permute.xlu0 %7252
      %7254 = vrot.lane.b32.xlu0 %v5558, 80
      %v7255 = vpop.permute.xlu0 %7254
      %7256 = vrot.lane.b32.xlu0 %v5563, 80
      %v7257 = vpop.permute.xlu0 %7256
      %7258 = vrot.lane.b32.xlu0 %v5568, 80
      %v7259 = vpop.permute.xlu0 %7258
      %7260 = vrot.lane.b32.xlu0 %v5573, 80
      %v7261 = vpop.permute.xlu0 %7260
      %7262 = vrot.lane.b32.xlu0 %v5578, 80
      %v7263 = vpop.permute.xlu0 %7262
      %7264 = vrot.lane.b32.xlu0 %v5583, 80
      %v7265 = vpop.permute.xlu0 %7264
      %v7266 = vsel %vm1183, %v7235, 0
      %v7268 = vsel %vm1183, %v7237, 0
      %v7270 = vsel %vm1183, %v7239, 0
      %v7272 = vsel %vm1183, %v7241, 0
      %v7274 = vsel %vm1183, %v7243, 0
      %v7276 = vsel %vm1183, %v7245, 0
      %v7278 = vsel %vm1183, %v7247, 0
      %v7280 = vsel %vm1183, %v7249, 0
      %v7282 = vsel %vm1183, %v7251, 0
      %v7284 = vsel %vm1183, %v7253, 0
      %v7286 = vsel %vm1183, %v7255, 0
      %v7288 = vsel %vm1183, %v7257, 0
      %v7290 = vsel %vm1183, %v7259, 0
      %v7292 = vsel %vm1183, %v7261, 0
      %v7294 = vsel %vm1183, %v7263, 0
      %v7296 = vsel %vm1183, %v7265, 0
      %7298 = vmatprep.subr.mxu0 0.0
      %7299 = vmatpush1.xpose.msra.mxu0 %v7282
      %7300 = vmatprep.subr.mxu0 0.0
      %7301 = vmatpush1.xpose.msra.mxu0 %v7284
      %7302 = vmatprep.subr.mxu0 0.0
      %7303 = vmatpush1.xpose.msra.mxu0 %v7286
      %7304 = vmatprep.subr.mxu0 0.0
      %7305 = vmatpush1.xpose.msra.mxu0 %v7288
      %7306 = vmatprep.subr.mxu0 0.0
      %7307 = vmatpush1.xpose.msra.mxu0 %v7290
      %7308 = vmatprep.subr.mxu0 0.0
      %7309 = vmatpush1.xpose.msra.mxu0 %v7292
      %7310 = vmatprep.subr.mxu0 0.0
      %7311 = vmatpush1.xpose.msra.mxu0 %v7294
      %7312 = vmatprep.subr.mxu0 0.0
      %7313 = vmatpush1.xpose.msra.mxu0 %v7296
      %7314 = vmatprep.subr.mxu0 0.0
      %7315 = vmatpush1.xpose.msra.mxu0 0.0
      %7316 = vmatprep.subr.mxu0 0.0
      %7317 = vmatpush1.xpose.msra.mxu0 0.0
      %7318 = vmatprep.subr.mxu0 0.0
      %7319 = vmatpush1.xpose.msra.mxu0 0.0
      %7320 = vmatprep.subr.mxu0 0.0
      %7321 = vmatpush1.xpose.msra.mxu0 0.0
      %7322 = vmatprep.subr.mxu0 0.0
      %7323 = vmatpush1.xpose.msra.mxu0 0.0
      %7324 = vmatprep.subr.mxu0 0.0
      %7325 = vmatpush1.xpose.msra.mxu0 0.0
      %7326 = vmatprep.subr.mxu0 0.0
      %7327 = vmatpush1.xpose.msra.mxu0 0.0
      %7328 = vmatprep.subr.mxu0 0.0
      %7329 = vmatpush1.xpose.msra.mxu0 0.0
      %7330 = vmatprep.subr.mxu0 0.0
      %7331 = vmatpush1.xpose.msra.mxu0 0.0
      %7332 = vmatprep.subr.mxu0 0.0
      %7333 = vmatpush1.xpose.msra.mxu0 0.0
      %7334 = vmatprep.subr.mxu0 0.0
      %7335 = vmatpush1.xpose.msra.mxu0 0.0
      %7336 = vmatprep.subr.mxu0 0.0
      %7337 = vmatpush1.xpose.msra.mxu0 0.0
      %7338 = vmatprep.subr.mxu0 0.0
      %7339 = vmatpush1.xpose.msra.mxu0 0.0
      %7340 = vmatprep.subr.mxu0 0.0
      %7341 = vmatpush1.xpose.msra.mxu0 0.0
      %7342 = vmatprep.subr.mxu0 0.0
      %7343 = vmatpush1.xpose.msra.mxu0 0.0
      %7344 = vmatprep.subr.mxu0 0.0
      %7345 = vmatpush1.xpose.msra.mxu0 0.0
      %7346 = vmatprep.subr.mxu0 0.0
      %7347 = vmatpush1.xpose.msra.mxu0 0.0
      %7348 = vmatprep.subr.mxu0 0.0
      %7349 = vmatpush1.xpose.msra.mxu0 0.0
      %7350 = vmatprep.subr.mxu0 0.0
      %7351 = vmatpush1.xpose.msra.mxu0 0.0
      %7352 = vmatprep.subr.mxu0 0.0
      %7353 = vmatpush1.xpose.msra.mxu0 0.0
      %7354 = vmatprep.subr.mxu0 0.0
      %7355 = vmatpush1.xpose.msra.mxu0 0.0
      %7356 = vmatprep.subr.mxu0 0.0
      %7357 = vmatpush1.xpose.msra.mxu0 0.0
      %7358 = vmatprep.subr.mxu0 0.0
      %7359 = vmatpush1.xpose.msra.mxu0 0.0
      %7360 = vmatprep.subr.mxu0 0.0
      %7361 = vmatpush1.xpose.msra.mxu0 0.0
      %7362 = vmatprep.mubr.f32.mxu0 0.0
      %7363 = vmatmul.mubr.f32.gmra.mrb[0].mxu0 %v7266
      %v7364 = vpop.f32.mrb[0].mxu0
      %v7365 = vadd.f32 0.0, %v7364
      %v7366 = vpop.f32.mrb[0].mxu0
      %7367 = vmatprep.mubr.f32.mxu0 0.0
      %7368 = vmatmul.mubr.f32.gmra.mrb[0].mxu0 %v7268
      %v7369 = vpop.f32.mrb[0].mxu0
      %v7370 = vadd.f32 0.0, %v7369
      %v7371 = vpop.f32.mrb[0].mxu0
      %7372 = vmatprep.mubr.f32.mxu0 0.0
      %7373 = vmatmul.mubr.f32.gmra.mrb[0].mxu0 %v7270
      %v7374 = vpop.f32.mrb[0].mxu0
      %v7375 = vadd.f32 0.0, %v7374
      %v7376 = vpop.f32.mrb[0].mxu0
      %7377 = vmatprep.mubr.f32.mxu0 0.0
      %7378 = vmatmul.mubr.f32.gmra.mrb[0].mxu0 %v7272
      %v7379 = vpop.f32.mrb[0].mxu0
      %v7380 = vadd.f32 0.0, %v7379
      %v7381 = vpop.f32.mrb[0].mxu0
      %7382 = vmatprep.mubr.f32.mxu0 0.0
      %7383 = vmatmul.mubr.f32.gmra.mrb[0].mxu0 %v7274
      %v7384 = vpop.f32.mrb[0].mxu0
      %v7385 = vadd.f32 0.0, %v7384
      %v7386 = vpop.f32.mrb[0].mxu0
      %7387 = vmatprep.mubr.f32.mxu0 0.0
      %7388 = vmatmul.mubr.f32.gmra.mrb[0].mxu0 %v7276
      %v7389 = vpop.f32.mrb[0].mxu0
      %v7390 = vadd.f32 0.0, %v7389
      %v7391 = vpop.f32.mrb[0].mxu0
      %7392 = vmatprep.mubr.f32.mxu0 0.0
      %7393 = vmatmul.mubr.f32.gmra.mrb[0].mxu0 %v7278
      %v7394 = vpop.f32.mrb[0].mxu0
      %v7395 = vadd.f32 0.0, %v7394
      %v7396 = vpop.f32.mrb[0].mxu0
      %7397 = vmatprep.mubr.f32.mxu0 0.0
      %7398 = vmatmul.mubr.f32.gmra.mrb[0].mxu0 %v7280
      %v7399 = vpop.f32.mrb[0].mxu0
      %v7400 = vadd.f32 0.0, %v7399
      %v7401 = vpop.f32.mrb[0].mxu0
      %7402 = vdwg.mxu0
      %v7403 = vsel %vm1329, %v7365, -inf
      %7404 = vmax.xlane.f32.xlu0 %v7403
      %v7405 = vpop.xlane.xlu0 %7404
      %v7406 = vsel %vm1329, %v7370, -inf
      %7407 = vmax.xlane.f32.xlu0 %v7406
      %v7408 = vpop.xlane.xlu0 %7407
      %v7409 = vsel %vm1329, %v7375, -inf
      %7410 = vmax.xlane.f32.xlu0 %v7409
      %v7411 = vpop.xlane.xlu0 %7410
      %v7412 = vsel %vm1329, %v7380, -inf
      %7413 = vmax.xlane.f32.xlu0 %v7412
      %v7414 = vpop.xlane.xlu0 %7413
      %v7415 = vsel %vm1329, %v7385, -inf
      %7416 = vmax.xlane.f32.xlu0 %v7415
      %v7417 = vpop.xlane.xlu0 %7416
      %v7418 = vsel %vm1329, %v7390, -inf
      %7419 = vmax.xlane.f32.xlu0 %v7418
      %v7420 = vpop.xlane.xlu0 %7419
      %v7421 = vsel %vm1329, %v7395, -inf
      %7422 = vmax.xlane.f32.xlu0 %v7421
      %v7423 = vpop.xlane.xlu0 %7422
      %v7424 = vsel %vm1329, %v7400, -inf
      %7425 = vmax.xlane.f32.xlu0 %v7424
      %v7426 = vpop.xlane.xlu0 %7425
      %v7427 = vsub.f32 %v7365, %v7405
      %v7428 = vsub.f32 %v7370, %v7408
      %v7429 = vsub.f32 %v7375, %v7411
      %v7430 = vsub.f32 %v7380, %v7414
      %v7431 = vsub.f32 %v7385, %v7417
      %v7432 = vsub.f32 %v7390, %v7420
      %v7433 = vsub.f32 %v7395, %v7423
      %v7434 = vsub.f32 %v7400, %v7426
      %v7435 = vmul.f32 %v7427, 1.442695
      %v7436 = vpow.pop %v7435
      %v7437 = vmul.f32 %v7428, 1.442695
      %v7438 = vpow.pop %v7437
      %v7439 = vmul.f32 %v7429, 1.442695
      %v7440 = vpow.pop %v7439
      %v7441 = vmul.f32 %v7430, 1.442695
      %v7442 = vpow.pop %v7441
      %v7443 = vmul.f32 %v7431, 1.442695
      %v7444 = vpow.pop %v7443
      %v7445 = vmul.f32 %v7432, 1.442695
      %v7446 = vpow.pop %v7445
      %v7447 = vmul.f32 %v7433, 1.442695
      %v7448 = vpow.pop %v7447
      %v7449 = vmul.f32 %v7434, 1.442695
      %v7450 = vpow.pop %v7449
      %v7451 = vsel %vm1329, %v7436, 0.0
      %7452 = vadd.xlane.f32.xlu0 %v7451
      %v7453 = vpop.xlane.xlu0 %7452
      %v7454 = vsel %vm1329, %v7438, 0.0
      %7455 = vadd.xlane.f32.xlu0 %v7454
      %v7456 = vpop.xlane.xlu0 %7455
      %v7457 = vsel %vm1329, %v7440, 0.0
      %7458 = vadd.xlane.f32.xlu0 %v7457
      %v7459 = vpop.xlane.xlu0 %7458
      %v7460 = vsel %vm1329, %v7442, 0.0
      %7461 = vadd.xlane.f32.xlu0 %v7460
      %v7462 = vpop.xlane.xlu0 %7461
      %v7463 = vsel %vm1329, %v7444, 0.0
      %7464 = vadd.xlane.f32.xlu0 %v7463
      %v7465 = vpop.xlane.xlu0 %7464
      %v7466 = vsel %vm1329, %v7446, 0.0
      %7467 = vadd.xlane.f32.xlu0 %v7466
      %v7468 = vpop.xlane.xlu0 %7467
      %v7469 = vsel %vm1329, %v7448, 0.0
      %7470 = vadd.xlane.f32.xlu0 %v7469
      %v7471 = vpop.xlane.xlu0 %7470
      %v7472 = vsel %vm1329, %v7450, 0.0
      %7473 = vadd.xlane.f32.xlu0 %v7472
      %v7474 = vpop.xlane.xlu0 %7473
      %v7475 = vrcp.pop %v7453
      %v7476 = vrcp.pop %v7456
      %v7477 = vrcp.pop %v7459
      %v7478 = vrcp.pop %v7462
      %v7479 = vrcp.pop %v7465
      %v7480 = vrcp.pop %v7468
      %v7481 = vrcp.pop %v7471
      %v7482 = vrcp.pop %v7474
      %v7483 = vmul.f32 %v7436, %v7475
      %v7484 = vmul.f32 %v7438, %v7476
      %v7485 = vmul.f32 %v7440, %v7477
      %v7486 = vmul.f32 %v7442, %v7478
      %v7487 = vmul.f32 %v7444, %v7479
      %v7488 = vmul.f32 %v7446, %v7480
      %v7489 = vmul.f32 %v7448, %v7481
      %v7490 = vmul.f32 %v7450, %v7482
      %7491 = vrot.lane.b32.xlu0 %v5548, 48
      %v7492 = vpop.permute.xlu0 %7491
      %7493 = vrot.lane.b32.xlu0 %v5553, 48
      %v7494 = vpop.permute.xlu0 %7493
      %7495 = vrot.lane.b32.xlu0 %v5558, 48
      %v7496 = vpop.permute.xlu0 %7495
      %7497 = vrot.lane.b32.xlu0 %v5563, 48
      %v7498 = vpop.permute.xlu0 %7497
      %7499 = vrot.lane.b32.xlu0 %v5568, 48
      %v7500 = vpop.permute.xlu0 %7499
      %7501 = vrot.lane.b32.xlu0 %v5573, 48
      %v7502 = vpop.permute.xlu0 %7501
      %7503 = vrot.lane.b32.xlu0 %v5578, 48
      %v7504 = vpop.permute.xlu0 %7503
      %7505 = vrot.lane.b32.xlu0 %v5583, 48
      %v7506 = vpop.permute.xlu0 %7505
      %v7516 = vsel %vm1329, %v7483, 0
      %v7519 = vsel %vm1329, %v7484, 0
      %v7522 = vsel %vm1329, %v7485, 0
      %v7525 = vsel %vm1329, %v7486, 0
      %v7528 = vsel %vm1329, %v7487, 0
      %v7531 = vsel %vm1329, %v7488, 0
      %v7534 = vsel %vm1329, %v7489, 0
      %v7537 = vsel %vm1329, %v7490, 0
      %7539 = vmatprep.subr.mxu0 0.0
      %7540 = vmatpush1.msra.mxu0 %v7492
      %7541 = vmatprep.subr.mxu0 0.0
      %7542 = vmatpush1.msra.mxu0 %v7494
      %7543 = vmatprep.subr.mxu0 0.0
      %7544 = vmatpush1.msra.mxu0 %v7496
      %7545 = vmatprep.subr.mxu0 0.0
      %7546 = vmatpush1.msra.mxu0 %v7498
      %7547 = vmatprep.subr.mxu0 0.0
      %7548 = vmatpush1.msra.mxu0 %v7500
      %7549 = vmatprep.subr.mxu0 0.0
      %7550 = vmatpush1.msra.mxu0 %v7502
      %7551 = vmatprep.subr.mxu0 0.0
      %7552 = vmatpush1.msra.mxu0 %v7504
      %7553 = vmatprep.subr.mxu0 0.0
      %7554 = vmatpush1.msra.mxu0 %v7506
      %7555 = vmatprep.subr.mxu0 0.0
      %7556 = vmatpush1.msra.mxu0 0.0
      %7557 = vmatprep.subr.mxu0 0.0
      %7558 = vmatpush1.msra.mxu0 0.0
      %7559 = vmatprep.subr.mxu0 0.0
      %7560 = vmatpush1.msra.mxu0 0.0
      %7561 = vmatprep.subr.mxu0 0.0
      %7562 = vmatpush1.msra.mxu0 0.0
      %7563 = vmatprep.subr.mxu0 0.0
      %7564 = vmatpush1.msra.mxu0 0.0
      %7565 = vmatprep.subr.mxu0 0.0
      %7566 = vmatpush1.msra.mxu0 0.0
      %7567 = vmatprep.subr.mxu0 0.0
      %7568 = vmatpush1.msra.mxu0 0.0
      %7569 = vmatprep.subr.mxu0 0.0
      %7570 = vmatpush1.msra.mxu0 0.0
      %7571 = vmatprep.subr.mxu0 0.0
      %7572 = vmatpush1.msra.mxu0 0.0
      %7573 = vmatprep.subr.mxu0 0.0
      %7574 = vmatpush1.msra.mxu0 0.0
      %7575 = vmatprep.subr.mxu0 0.0
      %7576 = vmatpush1.msra.mxu0 0.0
      %7577 = vmatprep.subr.mxu0 0.0
      %7578 = vmatpush1.msra.mxu0 0.0
      %7579 = vmatprep.subr.mxu0 0.0
      %7580 = vmatpush1.msra.mxu0 0.0
      %7581 = vmatprep.subr.mxu0 0.0
      %7582 = vmatpush1.msra.mxu0 0.0
      %7583 = vmatprep.subr.mxu0 0.0
      %7584 = vmatpush1.msra.mxu0 0.0
      %7585 = vmatprep.subr.mxu0 0.0
      %7586 = vmatpush1.msra.mxu0 0.0
      %7587 = vmatprep.subr.mxu0 0.0
      %7588 = vmatpush1.msra.mxu0 0.0
      %7589 = vmatprep.subr.mxu0 0.0
      %7590 = vmatpush1.msra.mxu0 0.0
      %7591 = vmatprep.subr.mxu0 0.0
      %7592 = vmatpush1.msra.mxu0 0.0
      %7593 = vmatprep.subr.mxu0 0.0
      %7594 = vmatpush1.msra.mxu0 0.0
      %7595 = vmatprep.subr.mxu0 0.0
      %7596 = vmatpush1.msra.mxu0 0.0
      %7597 = vmatprep.subr.mxu0 0.0
      %7598 = vmatpush1.msra.mxu0 0.0
      %7599 = vmatprep.subr.mxu0 0.0
      %7600 = vmatpush1.msra.mxu0 0.0
      %7601 = vmatprep.subr.mxu0 0.0
      %7602 = vmatpush1.msra.mxu0 0.0
      %7603 = vmatprep.mubr.f32.mxu0 0.0
      %7604 = vmatmul.mubr.f32.gmra.mrb[0].mxu0 %v7516
      %v7605 = vpop.f32.mrb[0].mxu0
      %v7606 = vadd.f32 0.0, %v7605
      %v7607 = vpop.f32.mrb[0].mxu0
      %7608 = vmatprep.mubr.f32.mxu0 0.0
      %7609 = vmatmul.mubr.f32.gmra.mrb[0].mxu0 %v7519
      %v7610 = vpop.f32.mrb[0].mxu0
      %v7611 = vadd.f32 0.0, %v7610
      %v7612 = vpop.f32.mrb[0].mxu0
      %7613 = vmatprep.mubr.f32.mxu0 0.0
      %7614 = vmatmul.mubr.f32.gmra.mrb[0].mxu0 %v7522
      %v7615 = vpop.f32.mrb[0].mxu0
      %v7616 = vadd.f32 0.0, %v7615
      %v7617 = vpop.f32.mrb[0].mxu0
      %7618 = vmatprep.mubr.f32.mxu0 0.0
      %7619 = vmatmul.mubr.f32.gmra.mrb[0].mxu0 %v7525
      %v7620 = vpop.f32.mrb[0].mxu0
      %v7621 = vadd.f32 0.0, %v7620
      %v7622 = vpop.f32.mrb[0].mxu0
      %7623 = vmatprep.mubr.f32.mxu0 0.0
      %7624 = vmatmul.mubr.f32.gmra.mrb[0].mxu0 %v7528
      %v7625 = vpop.f32.mrb[0].mxu0
      %v7626 = vadd.f32 0.0, %v7625
      %v7627 = vpop.f32.mrb[0].mxu0
      %7628 = vmatprep.mubr.f32.mxu0 0.0
      %7629 = vmatmul.mubr.f32.gmra.mrb[0].mxu0 %v7531
      %v7630 = vpop.f32.mrb[0].mxu0
      %v7631 = vadd.f32 0.0, %v7630
      %v7632 = vpop.f32.mrb[0].mxu0
      %7633 = vmatprep.mubr.f32.mxu0 0.0
      %7634 = vmatmul.mubr.f32.gmra.mrb[0].mxu0 %v7534
      %v7635 = vpop.f32.mrb[0].mxu0
      %v7636 = vadd.f32 0.0, %v7635
      %v7637 = vpop.f32.mrb[0].mxu0
      %7638 = vmatprep.mubr.f32.mxu0 0.0
      %7639 = vmatmul.mubr.f32.gmra.mrb[0].mxu0 %v7537
      %v7640 = vpop.f32.mrb[0].mxu0
      %v7641 = vadd.f32 0.0, %v7640
      %v7642 = vpop.f32.mrb[0].mxu0
      %7643 = vdwg.mxu0
      %7644 = vrot.lane.b32.xlu0 %v5586, 108
      %v7645 = vpop.permute.xlu0 %7644
      %7646 = vrot.lane.b32.xlu0 %v5587, 108
      %v7647 = vpop.permute.xlu0 %7646
      %7648 = vrot.lane.b32.xlu0 %v5588, 108
      %v7649 = vpop.permute.xlu0 %7648
      %7650 = vrot.lane.b32.xlu0 %v5589, 108
      %v7651 = vpop.permute.xlu0 %7650
      %7652 = vrot.lane.b32.xlu0 %v5590, 108
      %v7653 = vpop.permute.xlu0 %7652
      %7654 = vrot.lane.b32.xlu0 %v5591, 108
      %v7655 = vpop.permute.xlu0 %7654
      %7656 = vrot.lane.b32.xlu0 %v5592, 108
      %v7657 = vpop.permute.xlu0 %7656
      %7658 = vrot.lane.b32.xlu0 %v5593, 108
      %v7659 = vpop.permute.xlu0 %7658
      %7660 = vrot.lane.b32.xlu0 %v5548, 76
      %v7661 = vpop.permute.xlu0 %7660
      %7662 = vrot.lane.b32.xlu0 %v5553, 76
      %v7663 = vpop.permute.xlu0 %7662
      %7664 = vrot.lane.b32.xlu0 %v5558, 76
      %v7665 = vpop.permute.xlu0 %7664
      %7666 = vrot.lane.b32.xlu0 %v5563, 76
      %v7667 = vpop.permute.xlu0 %7666
      %7668 = vrot.lane.b32.xlu0 %v5568, 76
      %v7669 = vpop.permute.xlu0 %7668
      %7670 = vrot.lane.b32.xlu0 %v5573, 76
      %v7671 = vpop.permute.xlu0 %7670
      %7672 = vrot.lane.b32.xlu0 %v5578, 76
      %v7673 = vpop.permute.xlu0 %7672
      %7674 = vrot.lane.b32.xlu0 %v5583, 76
      %v7675 = vpop.permute.xlu0 %7674
      %v7676 = vsel %vm1183, %v7645, 0
      %v7678 = vsel %vm1183, %v7647, 0
      %v7680 = vsel %vm1183, %v7649, 0
      %v7682 = vsel %vm1183, %v7651, 0
      %v7684 = vsel %vm1183, %v7653, 0
      %v7686 = vsel %vm1183, %v7655, 0
      %v7688 = vsel %vm1183, %v7657, 0
      %v7690 = vsel %vm1183, %v7659, 0
      %v7692 = vsel %vm1183, %v7661, 0
      %v7694 = vsel %vm1183, %v7663, 0
      %v7696 = vsel %vm1183, %v7665, 0
      %v7698 = vsel %vm1183, %v7667, 0
      %v7700 = vsel %vm1183, %v7669, 0
      %v7702 = vsel %vm1183, %v7671, 0
      %v7704 = vsel %vm1183, %v7673, 0
      %v7706 = vsel %vm1183, %v7675, 0
      %7708 = vmatprep.subr.mxu0 0.0
      %7709 = vmatpush1.xpose.msra.mxu0 %v7692
      %7710 = vmatprep.subr.mxu0 0.0
      %7711 = vmatpush1.xpose.msra.mxu0 %v7694
      %7712 = vmatprep.subr.mxu0 0.0
      %7713 = vmatpush1.xpose.msra.mxu0 %v7696
      %7714 = vmatprep.subr.mxu0 0.0
      %7715 = vmatpush1.xpose.msra.mxu0 %v7698
      %7716 = vmatprep.subr.mxu0 0.0
      %7717 = vmatpush1.xpose.msra.mxu0 %v7700
      %7718 = vmatprep.subr.mxu0 0.0
      %7719 = vmatpush1.xpose.msra.mxu0 %v7702
      %7720 = vmatprep.subr.mxu0 0.0
      %7721 = vmatpush1.xpose.msra.mxu0 %v7704
      %7722 = vmatprep.subr.mxu0 0.0
      %7723 = vmatpush1.xpose.msra.mxu0 %v7706
      %7724 = vmatprep.subr.mxu0 0.0
      %7725 = vmatpush1.xpose.msra.mxu0 0.0
      %7726 = vmatprep.subr.mxu0 0.0
      %7727 = vmatpush1.xpose.msra.mxu0 0.0
      %7728 = vmatprep.subr.mxu0 0.0
      %7729 = vmatpush1.xpose.msra.mxu0 0.0
      %7730 = vmatprep.subr.mxu0 0.0
      %7731 = vmatpush1.xpose.msra.mxu0 0.0
      %7732 = vmatprep.subr.mxu0 0.0
      %7733 = vmatpush1.xpose.msra.mxu0 0.0
      %7734 = vmatprep.subr.mxu0 0.0
      %7735 = vmatpush1.xpose.msra.mxu0 0.0
      %7736 = vmatprep.subr.mxu0 0.0
      %7737 = vmatpush1.xpose.msra.mxu0 0.0
      %7738 = vmatprep.subr.mxu0 0.0
      %7739 = vmatpush1.xpose.msra.mxu0 0.0
      %7740 = vmatprep.subr.mxu0 0.0
      %7741 = vmatpush1.xpose.msra.mxu0 0.0
      %7742 = vmatprep.subr.mxu0 0.0
      %7743 = vmatpush1.xpose.msra.mxu0 0.0
      %7744 = vmatprep.subr.mxu0 0.0
      %7745 = vmatpush1.xpose.msra.mxu0 0.0
      %7746 = vmatprep.subr.mxu0 0.0
      %7747 = vmatpush1.xpose.msra.mxu0 0.0
      %7748 = vmatprep.subr.mxu0 0.0
      %7749 = vmatpush1.xpose.msra.mxu0 0.0
      %7750 = vmatprep.subr.mxu0 0.0
      %7751 = vmatpush1.xpose.msra.mxu0 0.0
      %7752 = vmatprep.subr.mxu0 0.0
      %7753 = vmatpush1.xpose.msra.mxu0 0.0
      %7754 = vmatprep.subr.mxu0 0.0
      %7755 = vmatpush1.xpose.msra.mxu0 0.0
      %7756 = vmatprep.subr.mxu0 0.0
      %7757 = vmatpush1.xpose.msra.mxu0 0.0
      %7758 = vmatprep.subr.mxu0 0.0
      %7759 = vmatpush1.xpose.msra.mxu0 0.0
      %7760 = vmatprep.subr.mxu0 0.0
      %7761 = vmatpush1.xpose.msra.mxu0 0.0
      %7762 = vmatprep.subr.mxu0 0.0
      %7763 = vmatpush1.xpose.msra.mxu0 0.0
      %7764 = vmatprep.subr.mxu0 0.0
      %7765 = vmatpush1.xpose.msra.mxu0 0.0
      %7766 = vmatprep.subr.mxu0 0.0
      %7767 = vmatpush1.xpose.msra.mxu0 0.0
      %7768 = vmatprep.subr.mxu0 0.0
      %7769 = vmatpush1.xpose.msra.mxu0 0.0
      %7770 = vmatprep.subr.mxu0 0.0
      %7771 = vmatpush1.xpose.msra.mxu0 0.0
      %7772 = vmatprep.mubr.f32.mxu0 0.0
      %7773 = vmatmul.mubr.f32.gmra.mrb[0].mxu0 %v7676
      %v7774 = vpop.f32.mrb[0].mxu0
      %v7775 = vadd.f32 0.0, %v7774
      %v7776 = vpop.f32.mrb[0].mxu0
      %7777 = vmatprep.mubr.f32.mxu0 0.0
      %7778 = vmatmul.mubr.f32.gmra.mrb[0].mxu0 %v7678
      %v7779 = vpop.f32.mrb[0].mxu0
      %v7780 = vadd.f32 0.0, %v7779
      %v7781 = vpop.f32.mrb[0].mxu0
      %7782 = vmatprep.mubr.f32.mxu0 0.0
      %7783 = vmatmul.mubr.f32.gmra.mrb[0].mxu0 %v7680
      %v7784 = vpop.f32.mrb[0].mxu0
      %v7785 = vadd.f32 0.0, %v7784
      %v7786 = vpop.f32.mrb[0].mxu0
      %7787 = vmatprep.mubr.f32.mxu0 0.0
      %7788 = vmatmul.mubr.f32.gmra.mrb[0].mxu0 %v7682
      %v7789 = vpop.f32.mrb[0].mxu0
      %v7790 = vadd.f32 0.0, %v7789
      %v7791 = vpop.f32.mrb[0].mxu0
      %7792 = vmatprep.mubr.f32.mxu0 0.0
      %7793 = vmatmul.mubr.f32.gmra.mrb[0].mxu0 %v7684
      %v7794 = vpop.f32.mrb[0].mxu0
      %v7795 = vadd.f32 0.0, %v7794
      %v7796 = vpop.f32.mrb[0].mxu0
      %7797 = vmatprep.mubr.f32.mxu0 0.0
      %7798 = vmatmul.mubr.f32.gmra.mrb[0].mxu0 %v7686
      %v7799 = vpop.f32.mrb[0].mxu0
      %v7800 = vadd.f32 0.0, %v7799
      %v7801 = vpop.f32.mrb[0].mxu0
      %7802 = vmatprep.mubr.f32.mxu0 0.0
      %7803 = vmatmul.mubr.f32.gmra.mrb[0].mxu0 %v7688
      %v7804 = vpop.f32.mrb[0].mxu0
      %v7805 = vadd.f32 0.0, %v7804
      %v7806 = vpop.f32.mrb[0].mxu0
      %7807 = vmatprep.mubr.f32.mxu0 0.0
      %7808 = vmatmul.mubr.f32.gmra.mrb[0].mxu0 %v7690
      %v7809 = vpop.f32.mrb[0].mxu0
      %v7810 = vadd.f32 0.0, %v7809
      %v7811 = vpop.f32.mrb[0].mxu0
      %7812 = vdwg.mxu0
      %v7813 = vsel %vm1329, %v7775, -inf
      %7814 = vmax.xlane.f32.xlu0 %v7813
      %v7815 = vpop.xlane.xlu0 %7814
      %v7816 = vsel %vm1329, %v7780, -inf
      %7817 = vmax.xlane.f32.xlu0 %v7816
      %v7818 = vpop.xlane.xlu0 %7817
      %v7819 = vsel %vm1329, %v7785, -inf
      %7820 = vmax.xlane.f32.xlu0 %v7819
      %v7821 = vpop.xlane.xlu0 %7820
      %v7822 = vsel %vm1329, %v7790, -inf
      %7823 = vmax.xlane.f32.xlu0 %v7822
      %v7824 = vpop.xlane.xlu0 %7823
      %v7825 = vsel %vm1329, %v7795, -inf
      %7826 = vmax.xlane.f32.xlu0 %v7825
      %v7827 = vpop.xlane.xlu0 %7826
      %v7828 = vsel %vm1329, %v7800, -inf
      %7829 = vmax.xlane.f32.xlu0 %v7828
      %v7830 = vpop.xlane.xlu0 %7829
      %v7831 = vsel %vm1329, %v7805, -inf
      %7832 = vmax.xlane.f32.xlu0 %v7831
      %v7833 = vpop.xlane.xlu0 %7832
      %v7834 = vsel %vm1329, %v7810, -inf
      %7835 = vmax.xlane.f32.xlu0 %v7834
      %v7836 = vpop.xlane.xlu0 %7835
      %v7837 = vsub.f32 %v7775, %v7815
      %v7838 = vsub.f32 %v7780, %v7818
      %v7839 = vsub.f32 %v7785, %v7821
      %v7840 = vsub.f32 %v7790, %v7824
      %v7841 = vsub.f32 %v7795, %v7827
      %v7842 = vsub.f32 %v7800, %v7830
      %v7843 = vsub.f32 %v7805, %v7833
      %v7844 = vsub.f32 %v7810, %v7836
      %v7845 = vmul.f32 %v7837, 1.442695
      %v7846 = vpow.pop %v7845
      %v7847 = vmul.f32 %v7838, 1.442695
      %v7848 = vpow.pop %v7847
      %v7849 = vmul.f32 %v7839, 1.442695
      %v7850 = vpow.pop %v7849
      %v7851 = vmul.f32 %v7840, 1.442695
      %v7852 = vpow.pop %v7851
      %v7853 = vmul.f32 %v7841, 1.442695
      %v7854 = vpow.pop %v7853
      %v7855 = vmul.f32 %v7842, 1.442695
      %v7856 = vpow.pop %v7855
      %v7857 = vmul.f32 %v7843, 1.442695
      %v7858 = vpow.pop %v7857
      %v7859 = vmul.f32 %v7844, 1.442695
      %v7860 = vpow.pop %v7859
      %v7861 = vsel %vm1329, %v7846, 0.0
      %7862 = vadd.xlane.f32.xlu0 %v7861
      %v7863 = vpop.xlane.xlu0 %7862
      %v7864 = vsel %vm1329, %v7848, 0.0
      %7865 = vadd.xlane.f32.xlu0 %v7864
      %v7866 = vpop.xlane.xlu0 %7865
      %v7867 = vsel %vm1329, %v7850, 0.0
      %7868 = vadd.xlane.f32.xlu0 %v7867
      %v7869 = vpop.xlane.xlu0 %7868
      %v7870 = vsel %vm1329, %v7852, 0.0
      %7871 = vadd.xlane.f32.xlu0 %v7870
      %v7872 = vpop.xlane.xlu0 %7871
      %v7873 = vsel %vm1329, %v7854, 0.0
      %7874 = vadd.xlane.f32.xlu0 %v7873
      %v7875 = vpop.xlane.xlu0 %7874
      %v7876 = vsel %vm1329, %v7856, 0.0
      %7877 = vadd.xlane.f32.xlu0 %v7876
      %v7878 = vpop.xlane.xlu0 %7877
      %v7879 = vsel %vm1329, %v7858, 0.0
      %7880 = vadd.xlane.f32.xlu0 %v7879
      %v7881 = vpop.xlane.xlu0 %7880
      %v7882 = vsel %vm1329, %v7860, 0.0
      %7883 = vadd.xlane.f32.xlu0 %v7882
      %v7884 = vpop.xlane.xlu0 %7883
      %v7885 = vrcp.pop %v7863
      %v7886 = vrcp.pop %v7866
      %v7887 = vrcp.pop %v7869
      %v7888 = vrcp.pop %v7872
      %v7889 = vrcp.pop %v7875
      %v7890 = vrcp.pop %v7878
      %v7891 = vrcp.pop %v7881
      %v7892 = vrcp.pop %v7884
      %v7893 = vmul.f32 %v7846, %v7885
      %v7894 = vmul.f32 %v7848, %v7886
      %v7895 = vmul.f32 %v7850, %v7887
      %v7896 = vmul.f32 %v7852, %v7888
      %v7897 = vmul.f32 %v7854, %v7889
      %v7898 = vmul.f32 %v7856, %v7890
      %v7899 = vmul.f32 %v7858, %v7891
      %v7900 = vmul.f32 %v7860, %v7892
      %7901 = vrot.lane.b32.xlu0 %v5548, 44
      %v7902 = vpop.permute.xlu0 %7901
      %7903 = vrot.lane.b32.xlu0 %v5553, 44
      %v7904 = vpop.permute.xlu0 %7903
      %7905 = vrot.lane.b32.xlu0 %v5558, 44
      %v7906 = vpop.permute.xlu0 %7905
      %7907 = vrot.lane.b32.xlu0 %v5563, 44
      %v7908 = vpop.permute.xlu0 %7907
      %7909 = vrot.lane.b32.xlu0 %v5568, 44
      %v7910 = vpop.permute.xlu0 %7909
      %7911 = vrot.lane.b32.xlu0 %v5573, 44
      %v7912 = vpop.permute.xlu0 %7911
      %7913 = vrot.lane.b32.xlu0 %v5578, 44
      %v7914 = vpop.permute.xlu0 %7913
      %7915 = vrot.lane.b32.xlu0 %v5583, 44
      %v7916 = vpop.permute.xlu0 %7915
      %v7926 = vsel %vm1329, %v7893, 0
      %v7929 = vsel %vm1329, %v7894, 0
      %v7932 = vsel %vm1329, %v7895, 0
      %v7935 = vsel %vm1329, %v7896, 0
      %v7938 = vsel %vm1329, %v7897, 0
      %v7941 = vsel %vm1329, %v7898, 0
      %v7944 = vsel %vm1329, %v7899, 0
      %v7947 = vsel %vm1329, %v7900, 0
      %7949 = vmatprep.subr.mxu0 0.0
      %7950 = vmatpush1.msra.mxu0 %v7902
      %7951 = vmatprep.subr.mxu0 0.0
      %7952 = vmatpush1.msra.mxu0 %v7904
      %7953 = vmatprep.subr.mxu0 0.0
      %7954 = vmatpush1.msra.mxu0 %v7906
      %7955 = vmatprep.subr.mxu0 0.0
      %7956 = vmatpush1.msra.mxu0 %v7908
      %7957 = vmatprep.subr.mxu0 0.0
      %7958 = vmatpush1.msra.mxu0 %v7910
      %7959 = vmatprep.subr.mxu0 0.0
      %7960 = vmatpush1.msra.mxu0 %v7912
      %7961 = vmatprep.subr.mxu0 0.0
      %7962 = vmatpush1.msra.mxu0 %v7914
      %7963 = vmatprep.subr.mxu0 0.0
      %7964 = vmatpush1.msra.mxu0 %v7916
      %7965 = vmatprep.subr.mxu0 0.0
      %7966 = vmatpush1.msra.mxu0 0.0
      %7967 = vmatprep.subr.mxu0 0.0
      %7968 = vmatpush1.msra.mxu0 0.0
      %7969 = vmatprep.subr.mxu0 0.0
      %7970 = vmatpush1.msra.mxu0 0.0
      %7971 = vmatprep.subr.mxu0 0.0
      %7972 = vmatpush1.msra.mxu0 0.0
      %7973 = vmatprep.subr.mxu0 0.0
      %7974 = vmatpush1.msra.mxu0 0.0
      %7975 = vmatprep.subr.mxu0 0.0
      %7976 = vmatpush1.msra.mxu0 0.0
      %7977 = vmatprep.subr.mxu0 0.0
      %7978 = vmatpush1.msra.mxu0 0.0
      %7979 = vmatprep.subr.mxu0 0.0
      %7980 = vmatpush1.msra.mxu0 0.0
      %7981 = vmatprep.subr.mxu0 0.0
      %7982 = vmatpush1.msra.mxu0 0.0
      %7983 = vmatprep.subr.mxu0 0.0
      %7984 = vmatpush1.msra.mxu0 0.0
      %7985 = vmatprep.subr.mxu0 0.0
      %7986 = vmatpush1.msra.mxu0 0.0
      %7987 = vmatprep.subr.mxu0 0.0
      %7988 = vmatpush1.msra.mxu0 0.0
      %7989 = vmatprep.subr.mxu0 0.0
      %7990 = vmatpush1.msra.mxu0 0.0
      %7991 = vmatprep.subr.mxu0 0.0
      %7992 = vmatpush1.msra.mxu0 0.0
      %7993 = vmatprep.subr.mxu0 0.0
      %7994 = vmatpush1.msra.mxu0 0.0
      %7995 = vmatprep.subr.mxu0 0.0
      %7996 = vmatpush1.msra.mxu0 0.0
      %7997 = vmatprep.subr.mxu0 0.0
      %7998 = vmatpush1.msra.mxu0 0.0
      %7999 = vmatprep.subr.mxu0 0.0
      %8000 = vmatpush1.msra.mxu0 0.0
      %8001 = vmatprep.subr.mxu0 0.0
      %8002 = vmatpush1.msra.mxu0 0.0
      %8003 = vmatprep.subr.mxu0 0.0
      %8004 = vmatpush1.msra.mxu0 0.0
      %8005 = vmatprep.subr.mxu0 0.0
      %8006 = vmatpush1.msra.mxu0 0.0
      %8007 = vmatprep.subr.mxu0 0.0
      %8008 = vmatpush1.msra.mxu0 0.0
      %8009 = vmatprep.subr.mxu0 0.0
      %8010 = vmatpush1.msra.mxu0 0.0
      %8011 = vmatprep.subr.mxu0 0.0
      %8012 = vmatpush1.msra.mxu0 0.0
      %8013 = vmatprep.mubr.f32.mxu0 0.0
      %8014 = vmatmul.mubr.f32.gmra.mrb[0].mxu0 %v7926
      %v8015 = vpop.f32.mrb[0].mxu0
      %v8016 = vadd.f32 0.0, %v8015
      %v8017 = vpop.f32.mrb[0].mxu0
      %8018 = vmatprep.mubr.f32.mxu0 0.0
      %8019 = vmatmul.mubr.f32.gmra.mrb[0].mxu0 %v7929
      %v8020 = vpop.f32.mrb[0].mxu0
      %v8021 = vadd.f32 0.0, %v8020
      %v8022 = vpop.f32.mrb[0].mxu0
      %8023 = vmatprep.mubr.f32.mxu0 0.0
      %8024 = vmatmul.mubr.f32.gmra.mrb[0].mxu0 %v7932
      %v8025 = vpop.f32.mrb[0].mxu0
      %v8026 = vadd.f32 0.0, %v8025
      %v8027 = vpop.f32.mrb[0].mxu0
      %8028 = vmatprep.mubr.f32.mxu0 0.0
      %8029 = vmatmul.mubr.f32.gmra.mrb[0].mxu0 %v7935
      %v8030 = vpop.f32.mrb[0].mxu0
      %v8031 = vadd.f32 0.0, %v8030
      %v8032 = vpop.f32.mrb[0].mxu0
      %8033 = vmatprep.mubr.f32.mxu0 0.0
      %8034 = vmatmul.mubr.f32.gmra.mrb[0].mxu0 %v7938
      %v8035 = vpop.f32.mrb[0].mxu0
      %v8036 = vadd.f32 0.0, %v8035
      %v8037 = vpop.f32.mrb[0].mxu0
      %8038 = vmatprep.mubr.f32.mxu0 0.0
      %8039 = vmatmul.mubr.f32.gmra.mrb[0].mxu0 %v7941
      %v8040 = vpop.f32.mrb[0].mxu0
      %v8041 = vadd.f32 0.0, %v8040
      %v8042 = vpop.f32.mrb[0].mxu0
      %8043 = vmatprep.mubr.f32.mxu0 0.0
      %8044 = vmatmul.mubr.f32.gmra.mrb[0].mxu0 %v7944
      %v8045 = vpop.f32.mrb[0].mxu0
      %v8046 = vadd.f32 0.0, %v8045
      %v8047 = vpop.f32.mrb[0].mxu0
      %8048 = vmatprep.mubr.f32.mxu0 0.0
      %8049 = vmatmul.mubr.f32.gmra.mrb[0].mxu0 %v7947
      %v8050 = vpop.f32.mrb[0].mxu0
      %v8051 = vadd.f32 0.0, %v8050
      %v8052 = vpop.f32.mrb[0].mxu0
      %8053 = vdwg.mxu0
      %8054 = vrot.lane.b32.xlu0 %v5586, 104
      %v8055 = vpop.permute.xlu0 %8054
      %8056 = vrot.lane.b32.xlu0 %v5587, 104
      %v8057 = vpop.permute.xlu0 %8056
      %8058 = vrot.lane.b32.xlu0 %v5588, 104
      %v8059 = vpop.permute.xlu0 %8058
      %8060 = vrot.lane.b32.xlu0 %v5589, 104
      %v8061 = vpop.permute.xlu0 %8060
      %8062 = vrot.lane.b32.xlu0 %v5590, 104
      %v8063 = vpop.permute.xlu0 %8062
      %8064 = vrot.lane.b32.xlu0 %v5591, 104
      %v8065 = vpop.permute.xlu0 %8064
      %8066 = vrot.lane.b32.xlu0 %v5592, 104
      %v8067 = vpop.permute.xlu0 %8066
      %8068 = vrot.lane.b32.xlu0 %v5593, 104
      %v8069 = vpop.permute.xlu0 %8068
      %8070 = vrot.lane.b32.xlu0 %v5548, 72
      %v8071 = vpop.permute.xlu0 %8070
      %8072 = vrot.lane.b32.xlu0 %v5553, 72
      %v8073 = vpop.permute.xlu0 %8072
      %8074 = vrot.lane.b32.xlu0 %v5558, 72
      %v8075 = vpop.permute.xlu0 %8074
      %8076 = vrot.lane.b32.xlu0 %v5563, 72
      %v8077 = vpop.permute.xlu0 %8076
      %8078 = vrot.lane.b32.xlu0 %v5568, 72
      %v8079 = vpop.permute.xlu0 %8078
      %8080 = vrot.lane.b32.xlu0 %v5573, 72
      %v8081 = vpop.permute.xlu0 %8080
      %8082 = vrot.lane.b32.xlu0 %v5578, 72
      %v8083 = vpop.permute.xlu0 %8082
      %8084 = vrot.lane.b32.xlu0 %v5583, 72
      %v8085 = vpop.permute.xlu0 %8084
      %v8086 = vsel %vm1183, %v8055, 0
      %v8088 = vsel %vm1183, %v8057, 0
      %v8090 = vsel %vm1183, %v8059, 0
      %v8092 = vsel %vm1183, %v8061, 0
      %v8094 = vsel %vm1183, %v8063, 0
      %v8096 = vsel %vm1183, %v8065, 0
      %v8098 = vsel %vm1183, %v8067, 0
      %v8100 = vsel %vm1183, %v8069, 0
      %v8102 = vsel %vm1183, %v8071, 0
      %v8104 = vsel %vm1183, %v8073, 0
      %v8106 = vsel %vm1183, %v8075, 0
      %v8108 = vsel %vm1183, %v8077, 0
      %v8110 = vsel %vm1183, %v8079, 0
      %v8112 = vsel %vm1183, %v8081, 0
      %v8114 = vsel %vm1183, %v8083, 0
      %v8116 = vsel %vm1183, %v8085, 0
      %8118 = vmatprep.subr.mxu0 0.0
      %8119 = vmatpush1.xpose.msra.mxu0 %v8102
      %8120 = vmatprep.subr.mxu0 0.0
      %8121 = vmatpush1.xpose.msra.mxu0 %v8104
      %8122 = vmatprep.subr.mxu0 0.0
      %8123 = vmatpush1.xpose.msra.mxu0 %v8106
      %8124 = vmatprep.subr.mxu0 0.0
      %8125 = vmatpush1.xpose.msra.mxu0 %v8108
      %8126 = vmatprep.subr.mxu0 0.0
      %8127 = vmatpush1.xpose.msra.mxu0 %v8110
      %8128 = vmatprep.subr.mxu0 0.0
      %8129 = vmatpush1.xpose.msra.mxu0 %v8112
      %8130 = vmatprep.subr.mxu0 0.0
      %8131 = vmatpush1.xpose.msra.mxu0 %v8114
      %8132 = vmatprep.subr.mxu0 0.0
      %8133 = vmatpush1.xpose.msra.mxu0 %v8116
      %8134 = vmatprep.subr.mxu0 0.0
      %8135 = vmatpush1.xpose.msra.mxu0 0.0
      %8136 = vmatprep.subr.mxu0 0.0
      %8137 = vmatpush1.xpose.msra.mxu0 0.0
      %8138 = vmatprep.subr.mxu0 0.0
      %8139 = vmatpush1.xpose.msra.mxu0 0.0
      %8140 = vmatprep.subr.mxu0 0.0
      %8141 = vmatpush1.xpose.msra.mxu0 0.0
      %8142 = vmatprep.subr.mxu0 0.0
      %8143 = vmatpush1.xpose.msra.mxu0 0.0
      %8144 = vmatprep.subr.mxu0 0.0
      %8145 = vmatpush1.xpose.msra.mxu0 0.0
      %8146 = vmatprep.subr.mxu0 0.0
      %8147 = vmatpush1.xpose.msra.mxu0 0.0
      %8148 = vmatprep.subr.mxu0 0.0
      %8149 = vmatpush1.xpose.msra.mxu0 0.0
      %8150 = vmatprep.subr.mxu0 0.0
      %8151 = vmatpush1.xpose.msra.mxu0 0.0
      %8152 = vmatprep.subr.mxu0 0.0
      %8153 = vmatpush1.xpose.msra.mxu0 0.0
      %8154 = vmatprep.subr.mxu0 0.0
      %8155 = vmatpush1.xpose.msra.mxu0 0.0
      %8156 = vmatprep.subr.mxu0 0.0
      %8157 = vmatpush1.xpose.msra.mxu0 0.0
      %8158 = vmatprep.subr.mxu0 0.0
      %8159 = vmatpush1.xpose.msra.mxu0 0.0
      %8160 = vmatprep.subr.mxu0 0.0
      %8161 = vmatpush1.xpose.msra.mxu0 0.0
      %8162 = vmatprep.subr.mxu0 0.0
      %8163 = vmatpush1.xpose.msra.mxu0 0.0
      %8164 = vmatprep.subr.mxu0 0.0
      %8165 = vmatpush1.xpose.msra.mxu0 0.0
      %8166 = vmatprep.subr.mxu0 0.0
      %8167 = vmatpush1.xpose.msra.mxu0 0.0
      %8168 = vmatprep.subr.mxu0 0.0
      %8169 = vmatpush1.xpose.msra.mxu0 0.0
      %8170 = vmatprep.subr.mxu0 0.0
      %8171 = vmatpush1.xpose.msra.mxu0 0.0
      %8172 = vmatprep.subr.mxu0 0.0
      %8173 = vmatpush1.xpose.msra.mxu0 0.0
      %8174 = vmatprep.subr.mxu0 0.0
      %8175 = vmatpush1.xpose.msra.mxu0 0.0
      %8176 = vmatprep.subr.mxu0 0.0
      %8177 = vmatpush1.xpose.msra.mxu0 0.0
      %8178 = vmatprep.subr.mxu0 0.0
      %8179 = vmatpush1.xpose.msra.mxu0 0.0
      %8180 = vmatprep.subr.mxu0 0.0
      %8181 = vmatpush1.xpose.msra.mxu0 0.0
      %8182 = vmatprep.mubr.f32.mxu0 0.0
      %8183 = vmatmul.mubr.f32.gmra.mrb[0].mxu0 %v8086
      %v8184 = vpop.f32.mrb[0].mxu0
      %v8185 = vadd.f32 0.0, %v8184
      %v8186 = vpop.f32.mrb[0].mxu0
      %8187 = vmatprep.mubr.f32.mxu0 0.0
      %8188 = vmatmul.mubr.f32.gmra.mrb[0].mxu0 %v8088
      %v8189 = vpop.f32.mrb[0].mxu0
      %v8190 = vadd.f32 0.0, %v8189
      %v8191 = vpop.f32.mrb[0].mxu0
      %8192 = vmatprep.mubr.f32.mxu0 0.0
      %8193 = vmatmul.mubr.f32.gmra.mrb[0].mxu0 %v8090
      %v8194 = vpop.f32.mrb[0].mxu0
      %v8195 = vadd.f32 0.0, %v8194
      %v8196 = vpop.f32.mrb[0].mxu0
      %8197 = vmatprep.mubr.f32.mxu0 0.0
      %8198 = vmatmul.mubr.f32.gmra.mrb[0].mxu0 %v8092
      %v8199 = vpop.f32.mrb[0].mxu0
      %v8200 = vadd.f32 0.0, %v8199
      %v8201 = vpop.f32.mrb[0].mxu0
      %8202 = vmatprep.mubr.f32.mxu0 0.0
      %8203 = vmatmul.mubr.f32.gmra.mrb[0].mxu0 %v8094
      %v8204 = vpop.f32.mrb[0].mxu0
      %v8205 = vadd.f32 0.0, %v8204
      %v8206 = vpop.f32.mrb[0].mxu0
      %8207 = vmatprep.mubr.f32.mxu0 0.0
      %8208 = vmatmul.mubr.f32.gmra.mrb[0].mxu0 %v8096
      %v8209 = vpop.f32.mrb[0].mxu0
      %v8210 = vadd.f32 0.0, %v8209
      %v8211 = vpop.f32.mrb[0].mxu0
      %8212 = vmatprep.mubr.f32.mxu0 0.0
      %8213 = vmatmul.mubr.f32.gmra.mrb[0].mxu0 %v8098
      %v8214 = vpop.f32.mrb[0].mxu0
      %v8215 = vadd.f32 0.0, %v8214
      %v8216 = vpop.f32.mrb[0].mxu0
      %8217 = vmatprep.mubr.f32.mxu0 0.0
      %8218 = vmatmul.mubr.f32.gmra.mrb[0].mxu0 %v8100
      %v8219 = vpop.f32.mrb[0].mxu0
      %v8220 = vadd.f32 0.0, %v8219
      %v8221 = vpop.f32.mrb[0].mxu0
      %8222 = vdwg.mxu0
      %v8223 = vsel %vm1329, %v8185, -inf
      %8224 = vmax.xlane.f32.xlu0 %v8223
      %v8225 = vpop.xlane.xlu0 %8224
      %v8226 = vsel %vm1329, %v8190, -inf
      %8227 = vmax.xlane.f32.xlu0 %v8226
      %v8228 = vpop.xlane.xlu0 %8227
      %v8229 = vsel %vm1329, %v8195, -inf
      %8230 = vmax.xlane.f32.xlu0 %v8229
      %v8231 = vpop.xlane.xlu0 %8230
      %v8232 = vsel %vm1329, %v8200, -inf
      %8233 = vmax.xlane.f32.xlu0 %v8232
      %v8234 = vpop.xlane.xlu0 %8233
      %v8235 = vsel %vm1329, %v8205, -inf
      %8236 = vmax.xlane.f32.xlu0 %v8235
      %v8237 = vpop.xlane.xlu0 %8236
      %v8238 = vsel %vm1329, %v8210, -inf
      %8239 = vmax.xlane.f32.xlu0 %v8238
      %v8240 = vpop.xlane.xlu0 %8239
      %v8241 = vsel %vm1329, %v8215, -inf
      %8242 = vmax.xlane.f32.xlu0 %v8241
      %v8243 = vpop.xlane.xlu0 %8242
      %v8244 = vsel %vm1329, %v8220, -inf
      %8245 = vmax.xlane.f32.xlu0 %v8244
      %v8246 = vpop.xlane.xlu0 %8245
      %v8247 = vsub.f32 %v8185, %v8225
      %v8248 = vsub.f32 %v8190, %v8228
      %v8249 = vsub.f32 %v8195, %v8231
      %v8250 = vsub.f32 %v8200, %v8234
      %v8251 = vsub.f32 %v8205, %v8237
      %v8252 = vsub.f32 %v8210, %v8240
      %v8253 = vsub.f32 %v8215, %v8243
      %v8254 = vsub.f32 %v8220, %v8246
      %v8255 = vmul.f32 %v8247, 1.442695
      %v8256 = vpow.pop %v8255
      %v8257 = vmul.f32 %v8248, 1.442695
      %v8258 = vpow.pop %v8257
      %v8259 = vmul.f32 %v8249, 1.442695
      %v8260 = vpow.pop %v8259
      %v8261 = vmul.f32 %v8250, 1.442695
      %v8262 = vpow.pop %v8261
      %v8263 = vmul.f32 %v8251, 1.442695
      %v8264 = vpow.pop %v8263
      %v8265 = vmul.f32 %v8252, 1.442695
      %v8266 = vpow.pop %v8265
      %v8267 = vmul.f32 %v8253, 1.442695
      %v8268 = vpow.pop %v8267
      %v8269 = vmul.f32 %v8254, 1.442695
      %v8270 = vpow.pop %v8269
      %v8271 = vsel %vm1329, %v8256, 0.0
      %8272 = vadd.xlane.f32.xlu0 %v8271
      %v8273 = vpop.xlane.xlu0 %8272
      %v8274 = vsel %vm1329, %v8258, 0.0
      %8275 = vadd.xlane.f32.xlu0 %v8274
      %v8276 = vpop.xlane.xlu0 %8275
      %v8277 = vsel %vm1329, %v8260, 0.0
      %8278 = vadd.xlane.f32.xlu0 %v8277
      %v8279 = vpop.xlane.xlu0 %8278
      %v8280 = vsel %vm1329, %v8262, 0.0
      %8281 = vadd.xlane.f32.xlu0 %v8280
      %v8282 = vpop.xlane.xlu0 %8281
      %v8283 = vsel %vm1329, %v8264, 0.0
      %8284 = vadd.xlane.f32.xlu0 %v8283
      %v8285 = vpop.xlane.xlu0 %8284
      %v8286 = vsel %vm1329, %v8266, 0.0
      %8287 = vadd.xlane.f32.xlu0 %v8286
      %v8288 = vpop.xlane.xlu0 %8287
      %v8289 = vsel %vm1329, %v8268, 0.0
      %8290 = vadd.xlane.f32.xlu0 %v8289
      %v8291 = vpop.xlane.xlu0 %8290
      %v8292 = vsel %vm1329, %v8270, 0.0
      %8293 = vadd.xlane.f32.xlu0 %v8292
      %v8294 = vpop.xlane.xlu0 %8293
      %v8295 = vrcp.pop %v8273
      %v8296 = vrcp.pop %v8276
      %v8297 = vrcp.pop %v8279
      %v8298 = vrcp.pop %v8282
      %v8299 = vrcp.pop %v8285
      %v8300 = vrcp.pop %v8288
      %v8301 = vrcp.pop %v8291
      %v8302 = vrcp.pop %v8294
      %v8303 = vmul.f32 %v8256, %v8295
      %v8304 = vmul.f32 %v8258, %v8296
      %v8305 = vmul.f32 %v8260, %v8297
      %v8306 = vmul.f32 %v8262, %v8298
      %v8307 = vmul.f32 %v8264, %v8299
      %v8308 = vmul.f32 %v8266, %v8300
      %v8309 = vmul.f32 %v8268, %v8301
      %v8310 = vmul.f32 %v8270, %v8302
      %8311 = vrot.lane.b32.xlu0 %v5548, 40
      %v8312 = vpop.permute.xlu0 %8311
      %8313 = vrot.lane.b32.xlu0 %v5553, 40
      %v8314 = vpop.permute.xlu0 %8313
      %8315 = vrot.lane.b32.xlu0 %v5558, 40
      %v8316 = vpop.permute.xlu0 %8315
      %8317 = vrot.lane.b32.xlu0 %v5563, 40
      %v8318 = vpop.permute.xlu0 %8317
      %8319 = vrot.lane.b32.xlu0 %v5568, 40
      %v8320 = vpop.permute.xlu0 %8319
      %8321 = vrot.lane.b32.xlu0 %v5573, 40
      %v8322 = vpop.permute.xlu0 %8321
      %8323 = vrot.lane.b32.xlu0 %v5578, 40
      %v8324 = vpop.permute.xlu0 %8323
      %8325 = vrot.lane.b32.xlu0 %v5583, 40
      %v8326 = vpop.permute.xlu0 %8325
      %v8336 = vsel %vm1329, %v8303, 0
      %v8339 = vsel %vm1329, %v8304, 0
      %v8342 = vsel %vm1329, %v8305, 0
      %v8345 = vsel %vm1329, %v8306, 0
      %v8348 = vsel %vm1329, %v8307, 0
      %v8351 = vsel %vm1329, %v8308, 0
      %v8354 = vsel %vm1329, %v8309, 0
      %v8357 = vsel %vm1329, %v8310, 0
      %8359 = vmatprep.subr.mxu0 0.0
      %8360 = vmatpush1.msra.mxu0 %v8312
      %8361 = vmatprep.subr.mxu0 0.0
      %8362 = vmatpush1.msra.mxu0 %v8314
      %8363 = vmatprep.subr.mxu0 0.0
      %8364 = vmatpush1.msra.mxu0 %v8316
      %8365 = vmatprep.subr.mxu0 0.0
      %8366 = vmatpush1.msra.mxu0 %v8318
      %8367 = vmatprep.subr.mxu0 0.0
      %8368 = vmatpush1.msra.mxu0 %v8320
      %8369 = vmatprep.subr.mxu0 0.0
      %8370 = vmatpush1.msra.mxu0 %v8322
      %8371 = vmatprep.subr.mxu0 0.0
      %8372 = vmatpush1.msra.mxu0 %v8324
      %8373 = vmatprep.subr.mxu0 0.0
      %8374 = vmatpush1.msra.mxu0 %v8326
      %8375 = vmatprep.subr.mxu0 0.0
      %8376 = vmatpush1.msra.mxu0 0.0
      %8377 = vmatprep.subr.mxu0 0.0
      %8378 = vmatpush1.msra.mxu0 0.0
      %8379 = vmatprep.subr.mxu0 0.0
      %8380 = vmatpush1.msra.mxu0 0.0
      %8381 = vmatprep.subr.mxu0 0.0
      %8382 = vmatpush1.msra.mxu0 0.0
      %8383 = vmatprep.subr.mxu0 0.0
      %8384 = vmatpush1.msra.mxu0 0.0
      %8385 = vmatprep.subr.mxu0 0.0
      %8386 = vmatpush1.msra.mxu0 0.0
      %8387 = vmatprep.subr.mxu0 0.0
      %8388 = vmatpush1.msra.mxu0 0.0
      %8389 = vmatprep.subr.mxu0 0.0
      %8390 = vmatpush1.msra.mxu0 0.0
      %8391 = vmatprep.subr.mxu0 0.0
      %8392 = vmatpush1.msra.mxu0 0.0
      %8393 = vmatprep.subr.mxu0 0.0
      %8394 = vmatpush1.msra.mxu0 0.0
      %8395 = vmatprep.subr.mxu0 0.0
      %8396 = vmatpush1.msra.mxu0 0.0
      %8397 = vmatprep.subr.mxu0 0.0
      %8398 = vmatpush1.msra.mxu0 0.0
      %8399 = vmatprep.subr.mxu0 0.0
      %8400 = vmatpush1.msra.mxu0 0.0
      %8401 = vmatprep.subr.mxu0 0.0
      %8402 = vmatpush1.msra.mxu0 0.0
      %8403 = vmatprep.subr.mxu0 0.0
      %8404 = vmatpush1.msra.mxu0 0.0
      %8405 = vmatprep.subr.mxu0 0.0
      %8406 = vmatpush1.msra.mxu0 0.0
      %8407 = vmatprep.subr.mxu0 0.0
      %8408 = vmatpush1.msra.mxu0 0.0
      %8409 = vmatprep.subr.mxu0 0.0
      %8410 = vmatpush1.msra.mxu0 0.0
      %8411 = vmatprep.subr.mxu0 0.0
      %8412 = vmatpush1.msra.mxu0 0.0
      %8413 = vmatprep.subr.mxu0 0.0
      %8414 = vmatpush1.msra.mxu0 0.0
      %8415 = vmatprep.subr.mxu0 0.0
      %8416 = vmatpush1.msra.mxu0 0.0
      %8417 = vmatprep.subr.mxu0 0.0
      %8418 = vmatpush1.msra.mxu0 0.0
      %8419 = vmatprep.subr.mxu0 0.0
      %8420 = vmatpush1.msra.mxu0 0.0
      %8421 = vmatprep.subr.mxu0 0.0
      %8422 = vmatpush1.msra.mxu0 0.0
      %8423 = vmatprep.mubr.f32.mxu0 0.0
      %8424 = vmatmul.mubr.f32.gmra.mrb[0].mxu0 %v8336
      %v8425 = vpop.f32.mrb[0].mxu0
      %v8426 = vadd.f32 0.0, %v8425
      %v8427 = vpop.f32.mrb[0].mxu0
      %8428 = vmatprep.mubr.f32.mxu0 0.0
      %8429 = vmatmul.mubr.f32.gmra.mrb[0].mxu0 %v8339
      %v8430 = vpop.f32.mrb[0].mxu0
      %v8431 = vadd.f32 0.0, %v8430
      %v8432 = vpop.f32.mrb[0].mxu0
      %8433 = vmatprep.mubr.f32.mxu0 0.0
      %8434 = vmatmul.mubr.f32.gmra.mrb[0].mxu0 %v8342
      %v8435 = vpop.f32.mrb[0].mxu0
      %v8436 = vadd.f32 0.0, %v8435
      %v8437 = vpop.f32.mrb[0].mxu0
      %8438 = vmatprep.mubr.f32.mxu0 0.0
      %8439 = vmatmul.mubr.f32.gmra.mrb[0].mxu0 %v8345
      %v8440 = vpop.f32.mrb[0].mxu0
      %v8441 = vadd.f32 0.0, %v8440
      %v8442 = vpop.f32.mrb[0].mxu0
      %8443 = vmatprep.mubr.f32.mxu0 0.0
      %8444 = vmatmul.mubr.f32.gmra.mrb[0].mxu0 %v8348
      %v8445 = vpop.f32.mrb[0].mxu0
      %v8446 = vadd.f32 0.0, %v8445
      %v8447 = vpop.f32.mrb[0].mxu0
      %8448 = vmatprep.mubr.f32.mxu0 0.0
      %8449 = vmatmul.mubr.f32.gmra.mrb[0].mxu0 %v8351
      %v8450 = vpop.f32.mrb[0].mxu0
      %v8451 = vadd.f32 0.0, %v8450
      %v8452 = vpop.f32.mrb[0].mxu0
      %8453 = vmatprep.mubr.f32.mxu0 0.0
      %8454 = vmatmul.mubr.f32.gmra.mrb[0].mxu0 %v8354
      %v8455 = vpop.f32.mrb[0].mxu0
      %v8456 = vadd.f32 0.0, %v8455
      %v8457 = vpop.f32.mrb[0].mxu0
      %8458 = vmatprep.mubr.f32.mxu0 0.0
      %8459 = vmatmul.mubr.f32.gmra.mrb[0].mxu0 %v8357
      %v8460 = vpop.f32.mrb[0].mxu0
      %v8461 = vadd.f32 0.0, %v8460
      %v8462 = vpop.f32.mrb[0].mxu0
      %8463 = vdwg.mxu0
      %8464 = vrot.lane.b32.xlu0 %v5586, 100
      %v8465 = vpop.permute.xlu0 %8464
      %8466 = vrot.lane.b32.xlu0 %v5587, 100
      %v8467 = vpop.permute.xlu0 %8466
      %8468 = vrot.lane.b32.xlu0 %v5588, 100
      %v8469 = vpop.permute.xlu0 %8468
      %8470 = vrot.lane.b32.xlu0 %v5589, 100
      %v8471 = vpop.permute.xlu0 %8470
      %8472 = vrot.lane.b32.xlu0 %v5590, 100
      %v8473 = vpop.permute.xlu0 %8472
      %8474 = vrot.lane.b32.xlu0 %v5591, 100
      %v8475 = vpop.permute.xlu0 %8474
      %8476 = vrot.lane.b32.xlu0 %v5592, 100
      %v8477 = vpop.permute.xlu0 %8476
      %8478 = vrot.lane.b32.xlu0 %v5593, 100
      %v8479 = vpop.permute.xlu0 %8478
      %8480 = vrot.lane.b32.xlu0 %v5548, 68
      %v8481 = vpop.permute.xlu0 %8480
      %8482 = vrot.lane.b32.xlu0 %v5553, 68
      %v8483 = vpop.permute.xlu0 %8482
      %8484 = vrot.lane.b32.xlu0 %v5558, 68
      %v8485 = vpop.permute.xlu0 %8484
      %8486 = vrot.lane.b32.xlu0 %v5563, 68
      %v8487 = vpop.permute.xlu0 %8486
      %8488 = vrot.lane.b32.xlu0 %v5568, 68
      %v8489 = vpop.permute.xlu0 %8488
      %8490 = vrot.lane.b32.xlu0 %v5573, 68
      %v8491 = vpop.permute.xlu0 %8490
      %8492 = vrot.lane.b32.xlu0 %v5578, 68
      %v8493 = vpop.permute.xlu0 %8492
      %8494 = vrot.lane.b32.xlu0 %v5583, 68
      %v8495 = vpop.permute.xlu0 %8494
      %v8496 = vsel %vm1183, %v8465, 0
      %v8498 = vsel %vm1183, %v8467, 0
      %v8500 = vsel %vm1183, %v8469, 0
      %v8502 = vsel %vm1183, %v8471, 0
      %v8504 = vsel %vm1183, %v8473, 0
      %v8506 = vsel %vm1183, %v8475, 0
      %v8508 = vsel %vm1183, %v8477, 0
      %v8510 = vsel %vm1183, %v8479, 0
      %v8512 = vsel %vm1183, %v8481, 0
      %v8514 = vsel %vm1183, %v8483, 0
      %v8516 = vsel %vm1183, %v8485, 0
      %v8518 = vsel %vm1183, %v8487, 0
      %v8520 = vsel %vm1183, %v8489, 0
      %v8522 = vsel %vm1183, %v8491, 0
      %v8524 = vsel %vm1183, %v8493, 0
      %v8526 = vsel %vm1183, %v8495, 0
      %8528 = vmatprep.subr.mxu0 0.0
      %8529 = vmatpush1.xpose.msra.mxu0 %v8512
      %8530 = vmatprep.subr.mxu0 0.0
      %8531 = vmatpush1.xpose.msra.mxu0 %v8514
      %8532 = vmatprep.subr.mxu0 0.0
      %8533 = vmatpush1.xpose.msra.mxu0 %v8516
      %8534 = vmatprep.subr.mxu0 0.0
      %8535 = vmatpush1.xpose.msra.mxu0 %v8518
      %8536 = vmatprep.subr.mxu0 0.0
      %8537 = vmatpush1.xpose.msra.mxu0 %v8520
      %8538 = vmatprep.subr.mxu0 0.0
      %8539 = vmatpush1.xpose.msra.mxu0 %v8522
      %8540 = vmatprep.subr.mxu0 0.0
      %8541 = vmatpush1.xpose.msra.mxu0 %v8524
      %8542 = vmatprep.subr.mxu0 0.0
      %8543 = vmatpush1.xpose.msra.mxu0 %v8526
      %8544 = vmatprep.subr.mxu0 0.0
      %8545 = vmatpush1.xpose.msra.mxu0 0.0
      %8546 = vmatprep.subr.mxu0 0.0
      %8547 = vmatpush1.xpose.msra.mxu0 0.0
      %8548 = vmatprep.subr.mxu0 0.0
      %8549 = vmatpush1.xpose.msra.mxu0 0.0
      %8550 = vmatprep.subr.mxu0 0.0
      %8551 = vmatpush1.xpose.msra.mxu0 0.0
      %8552 = vmatprep.subr.mxu0 0.0
      %8553 = vmatpush1.xpose.msra.mxu0 0.0
      %8554 = vmatprep.subr.mxu0 0.0
      %8555 = vmatpush1.xpose.msra.mxu0 0.0
      %8556 = vmatprep.subr.mxu0 0.0
      %8557 = vmatpush1.xpose.msra.mxu0 0.0
      %8558 = vmatprep.subr.mxu0 0.0
      %8559 = vmatpush1.xpose.msra.mxu0 0.0
      %8560 = vmatprep.subr.mxu0 0.0
      %8561 = vmatpush1.xpose.msra.mxu0 0.0
      %8562 = vmatprep.subr.mxu0 0.0
      %8563 = vmatpush1.xpose.msra.mxu0 0.0
      %8564 = vmatprep.subr.mxu0 0.0
      %8565 = vmatpush1.xpose.msra.mxu0 0.0
      %8566 = vmatprep.subr.mxu0 0.0
      %8567 = vmatpush1.xpose.msra.mxu0 0.0
      %8568 = vmatprep.subr.mxu0 0.0
      %8569 = vmatpush1.xpose.msra.mxu0 0.0
      %8570 = vmatprep.subr.mxu0 0.0
      %8571 = vmatpush1.xpose.msra.mxu0 0.0
      %8572 = vmatprep.subr.mxu0 0.0
      %8573 = vmatpush1.xpose.msra.mxu0 0.0
      %8574 = vmatprep.subr.mxu0 0.0
      %8575 = vmatpush1.xpose.msra.mxu0 0.0
      %8576 = vmatprep.subr.mxu0 0.0
      %8577 = vmatpush1.xpose.msra.mxu0 0.0
      %8578 = vmatprep.subr.mxu0 0.0
      %8579 = vmatpush1.xpose.msra.mxu0 0.0
      %8580 = vmatprep.subr.mxu0 0.0
      %8581 = vmatpush1.xpose.msra.mxu0 0.0
      %8582 = vmatprep.subr.mxu0 0.0
      %8583 = vmatpush1.xpose.msra.mxu0 0.0
      %8584 = vmatprep.subr.mxu0 0.0
      %8585 = vmatpush1.xpose.msra.mxu0 0.0
      %8586 = vmatprep.subr.mxu0 0.0
      %8587 = vmatpush1.xpose.msra.mxu0 0.0
      %8588 = vmatprep.subr.mxu0 0.0
      %8589 = vmatpush1.xpose.msra.mxu0 0.0
      %8590 = vmatprep.subr.mxu0 0.0
      %8591 = vmatpush1.xpose.msra.mxu0 0.0
      %8592 = vmatprep.mubr.f32.mxu0 0.0
      %8593 = vmatmul.mubr.f32.gmra.mrb[0].mxu0 %v8496
      %v8594 = vpop.f32.mrb[0].mxu0
      %v8595 = vadd.f32 0.0, %v8594
      %v8596 = vpop.f32.mrb[0].mxu0
      %8597 = vmatprep.mubr.f32.mxu0 0.0
      %8598 = vmatmul.mubr.f32.gmra.mrb[0].mxu0 %v8498
      %v8599 = vpop.f32.mrb[0].mxu0
      %v8600 = vadd.f32 0.0, %v8599
      %v8601 = vpop.f32.mrb[0].mxu0
      %8602 = vmatprep.mubr.f32.mxu0 0.0
      %8603 = vmatmul.mubr.f32.gmra.mrb[0].mxu0 %v8500
      %v8604 = vpop.f32.mrb[0].mxu0
      %v8605 = vadd.f32 0.0, %v8604
      %v8606 = vpop.f32.mrb[0].mxu0
      %8607 = vmatprep.mubr.f32.mxu0 0.0
      %8608 = vmatmul.mubr.f32.gmra.mrb[0].mxu0 %v8502
      %v8609 = vpop.f32.mrb[0].mxu0
      %v8610 = vadd.f32 0.0, %v8609
      %v8611 = vpop.f32.mrb[0].mxu0
      %8612 = vmatprep.mubr.f32.mxu0 0.0
      %8613 = vmatmul.mubr.f32.gmra.mrb[0].mxu0 %v8504
      %v8614 = vpop.f32.mrb[0].mxu0
      %v8615 = vadd.f32 0.0, %v8614
      %v8616 = vpop.f32.mrb[0].mxu0
      %8617 = vmatprep.mubr.f32.mxu0 0.0
      %8618 = vmatmul.mubr.f32.gmra.mrb[0].mxu0 %v8506
      %v8619 = vpop.f32.mrb[0].mxu0
      %v8620 = vadd.f32 0.0, %v8619
      %v8621 = vpop.f32.mrb[0].mxu0
      %8622 = vmatprep.mubr.f32.mxu0 0.0
      %8623 = vmatmul.mubr.f32.gmra.mrb[0].mxu0 %v8508
      %v8624 = vpop.f32.mrb[0].mxu0
      %v8625 = vadd.f32 0.0, %v8624
      %v8626 = vpop.f32.mrb[0].mxu0
      %8627 = vmatprep.mubr.f32.mxu0 0.0
      %8628 = vmatmul.mubr.f32.gmra.mrb[0].mxu0 %v8510
      %v8629 = vpop.f32.mrb[0].mxu0
      %v8630 = vadd.f32 0.0, %v8629
      %v8631 = vpop.f32.mrb[0].mxu0
      %8632 = vdwg.mxu0
      %v8633 = vsel %vm1329, %v8595, -inf
      %8634 = vmax.xlane.f32.xlu0 %v8633
      %v8635 = vpop.xlane.xlu0 %8634
      %v8636 = vsel %vm1329, %v8600, -inf
      %8637 = vmax.xlane.f32.xlu0 %v8636
      %v8638 = vpop.xlane.xlu0 %8637
      %v8639 = vsel %vm1329, %v8605, -inf
      %8640 = vmax.xlane.f32.xlu0 %v8639
      %v8641 = vpop.xlane.xlu0 %8640
      %v8642 = vsel %vm1329, %v8610, -inf
      %8643 = vmax.xlane.f32.xlu0 %v8642
      %v8644 = vpop.xlane.xlu0 %8643
      %v8645 = vsel %vm1329, %v8615, -inf
      %8646 = vmax.xlane.f32.xlu0 %v8645
      %v8647 = vpop.xlane.xlu0 %8646
      %v8648 = vsel %vm1329, %v8620, -inf
      %8649 = vmax.xlane.f32.xlu0 %v8648
      %v8650 = vpop.xlane.xlu0 %8649
      %v8651 = vsel %vm1329, %v8625, -inf
      %8652 = vmax.xlane.f32.xlu0 %v8651
      %v8653 = vpop.xlane.xlu0 %8652
      %v8654 = vsel %vm1329, %v8630, -inf
      %8655 = vmax.xlane.f32.xlu0 %v8654
      %v8656 = vpop.xlane.xlu0 %8655
      %v8657 = vsub.f32 %v8595, %v8635
      %v8658 = vsub.f32 %v8600, %v8638
      %v8659 = vsub.f32 %v8605, %v8641
      %v8660 = vsub.f32 %v8610, %v8644
      %v8661 = vsub.f32 %v8615, %v8647
      %v8662 = vsub.f32 %v8620, %v8650
      %v8663 = vsub.f32 %v8625, %v8653
      %v8664 = vsub.f32 %v8630, %v8656
      %v8665 = vmul.f32 %v8657, 1.442695
      %v8666 = vpow.pop %v8665
      %v8667 = vmul.f32 %v8658, 1.442695
      %v8668 = vpow.pop %v8667
      %v8669 = vmul.f32 %v8659, 1.442695
      %v8670 = vpow.pop %v8669
      %v8671 = vmul.f32 %v8660, 1.442695
      %v8672 = vpow.pop %v8671
      %v8673 = vmul.f32 %v8661, 1.442695
      %v8674 = vpow.pop %v8673
      %v8675 = vmul.f32 %v8662, 1.442695
      %v8676 = vpow.pop %v8675
      %v8677 = vmul.f32 %v8663, 1.442695
      %v8678 = vpow.pop %v8677
      %v8679 = vmul.f32 %v8664, 1.442695
      %v8680 = vpow.pop %v8679
      %v8681 = vsel %vm1329, %v8666, 0.0
      %8682 = vadd.xlane.f32.xlu0 %v8681
      %v8683 = vpop.xlane.xlu0 %8682
      %v8684 = vsel %vm1329, %v8668, 0.0
      %8685 = vadd.xlane.f32.xlu0 %v8684
      %v8686 = vpop.xlane.xlu0 %8685
      %v8687 = vsel %vm1329, %v8670, 0.0
      %8688 = vadd.xlane.f32.xlu0 %v8687
      %v8689 = vpop.xlane.xlu0 %8688
      %v8690 = vsel %vm1329, %v8672, 0.0
      %8691 = vadd.xlane.f32.xlu0 %v8690
      %v8692 = vpop.xlane.xlu0 %8691
      %v8693 = vsel %vm1329, %v8674, 0.0
      %8694 = vadd.xlane.f32.xlu0 %v8693
      %v8695 = vpop.xlane.xlu0 %8694
      %v8696 = vsel %vm1329, %v8676, 0.0
      %8697 = vadd.xlane.f32.xlu0 %v8696
      %v8698 = vpop.xlane.xlu0 %8697
      %v8699 = vsel %vm1329, %v8678, 0.0
      %8700 = vadd.xlane.f32.xlu0 %v8699
      %v8701 = vpop.xlane.xlu0 %8700
      %v8702 = vsel %vm1329, %v8680, 0.0
      %8703 = vadd.xlane.f32.xlu0 %v8702
      %v8704 = vpop.xlane.xlu0 %8703
      %v8705 = vrcp.pop %v8683
      %v8706 = vrcp.pop %v8686
      %v8707 = vrcp.pop %v8689
      %v8708 = vrcp.pop %v8692
      %v8709 = vrcp.pop %v8695
      %v8710 = vrcp.pop %v8698
      %v8711 = vrcp.pop %v8701
      %v8712 = vrcp.pop %v8704
      %v8713 = vmul.f32 %v8666, %v8705
      %v8714 = vmul.f32 %v8668, %v8706
      %v8715 = vmul.f32 %v8670, %v8707
      %v8716 = vmul.f32 %v8672, %v8708
      %v8717 = vmul.f32 %v8674, %v8709
      %v8718 = vmul.f32 %v8676, %v8710
      %v8719 = vmul.f32 %v8678, %v8711
      %v8720 = vmul.f32 %v8680, %v8712
      %8721 = vrot.lane.b32.xlu0 %v5548, 36
      %v8722 = vpop.permute.xlu0 %8721
      %8723 = vrot.lane.b32.xlu0 %v5553, 36
      %v8724 = vpop.permute.xlu0 %8723
      %8725 = vrot.lane.b32.xlu0 %v5558, 36
      %v8726 = vpop.permute.xlu0 %8725
      %8727 = vrot.lane.b32.xlu0 %v5563, 36
      %v8728 = vpop.permute.xlu0 %8727
      %8729 = vrot.lane.b32.xlu0 %v5568, 36
      %v8730 = vpop.permute.xlu0 %8729
      %8731 = vrot.lane.b32.xlu0 %v5573, 36
      %v8732 = vpop.permute.xlu0 %8731
      %8733 = vrot.lane.b32.xlu0 %v5578, 36
      %v8734 = vpop.permute.xlu0 %8733
      %8735 = vrot.lane.b32.xlu0 %v5583, 36
      %v8736 = vpop.permute.xlu0 %8735
      %v8746 = vsel %vm1329, %v8713, 0
      %v8749 = vsel %vm1329, %v8714, 0
      %v8752 = vsel %vm1329, %v8715, 0
      %v8755 = vsel %vm1329, %v8716, 0
      %v8758 = vsel %vm1329, %v8717, 0
      %v8761 = vsel %vm1329, %v8718, 0
      %v8764 = vsel %vm1329, %v8719, 0
      %v8767 = vsel %vm1329, %v8720, 0
      %8769 = vmatprep.subr.mxu0 0.0
      %8770 = vmatpush1.msra.mxu0 %v8722
      %8771 = vmatprep.subr.mxu0 0.0
      %8772 = vmatpush1.msra.mxu0 %v8724
      %8773 = vmatprep.subr.mxu0 0.0
      %8774 = vmatpush1.msra.mxu0 %v8726
      %8775 = vmatprep.subr.mxu0 0.0
      %8776 = vmatpush1.msra.mxu0 %v8728
      %8777 = vmatprep.subr.mxu0 0.0
      %8778 = vmatpush1.msra.mxu0 %v8730
      %8779 = vmatprep.subr.mxu0 0.0
      %8780 = vmatpush1.msra.mxu0 %v8732
      %8781 = vmatprep.subr.mxu0 0.0
      %8782 = vmatpush1.msra.mxu0 %v8734
      %8783 = vmatprep.subr.mxu0 0.0
      %8784 = vmatpush1.msra.mxu0 %v8736
      %8785 = vmatprep.subr.mxu0 0.0
      %8786 = vmatpush1.msra.mxu0 0.0
      %8787 = vmatprep.subr.mxu0 0.0
      %8788 = vmatpush1.msra.mxu0 0.0
      %8789 = vmatprep.subr.mxu0 0.0
      %8790 = vmatpush1.msra.mxu0 0.0
      %8791 = vmatprep.subr.mxu0 0.0
      %8792 = vmatpush1.msra.mxu0 0.0
      %8793 = vmatprep.subr.mxu0 0.0
      %8794 = vmatpush1.msra.mxu0 0.0
      %8795 = vmatprep.subr.mxu0 0.0
      %8796 = vmatpush1.msra.mxu0 0.0
      %8797 = vmatprep.subr.mxu0 0.0
      %8798 = vmatpush1.msra.mxu0 0.0
      %8799 = vmatprep.subr.mxu0 0.0
      %8800 = vmatpush1.msra.mxu0 0.0
      %8801 = vmatprep.subr.mxu0 0.0
      %8802 = vmatpush1.msra.mxu0 0.0
      %8803 = vmatprep.subr.mxu0 0.0
      %8804 = vmatpush1.msra.mxu0 0.0
      %8805 = vmatprep.subr.mxu0 0.0
      %8806 = vmatpush1.msra.mxu0 0.0
      %8807 = vmatprep.subr.mxu0 0.0
      %8808 = vmatpush1.msra.mxu0 0.0
      %8809 = vmatprep.subr.mxu0 0.0
      %8810 = vmatpush1.msra.mxu0 0.0
      %8811 = vmatprep.subr.mxu0 0.0
      %8812 = vmatpush1.msra.mxu0 0.0
      %8813 = vmatprep.subr.mxu0 0.0
      %8814 = vmatpush1.msra.mxu0 0.0
      %8815 = vmatprep.subr.mxu0 0.0
      %8816 = vmatpush1.msra.mxu0 0.0
      %8817 = vmatprep.subr.mxu0 0.0
      %8818 = vmatpush1.msra.mxu0 0.0
      %8819 = vmatprep.subr.mxu0 0.0
      %8820 = vmatpush1.msra.mxu0 0.0
      %8821 = vmatprep.subr.mxu0 0.0
      %8822 = vmatpush1.msra.mxu0 0.0
      %8823 = vmatprep.subr.mxu0 0.0
      %8824 = vmatpush1.msra.mxu0 0.0
      %8825 = vmatprep.subr.mxu0 0.0
      %8826 = vmatpush1.msra.mxu0 0.0
      %8827 = vmatprep.subr.mxu0 0.0
      %8828 = vmatpush1.msra.mxu0 0.0
      %8829 = vmatprep.subr.mxu0 0.0
      %8830 = vmatpush1.msra.mxu0 0.0
      %8831 = vmatprep.subr.mxu0 0.0
      %8832 = vmatpush1.msra.mxu0 0.0
      %8833 = vmatprep.mubr.f32.mxu0 0.0
      %8834 = vmatmul.mubr.f32.gmra.mrb[0].mxu0 %v8746
      %v8835 = vpop.f32.mrb[0].mxu0
      %v8836 = vadd.f32 0.0, %v8835
      %v8837 = vpop.f32.mrb[0].mxu0
      %8838 = vmatprep.mubr.f32.mxu0 0.0
      %8839 = vmatmul.mubr.f32.gmra.mrb[0].mxu0 %v8749
      %v8840 = vpop.f32.mrb[0].mxu0
      %v8841 = vadd.f32 0.0, %v8840
      %v8842 = vpop.f32.mrb[0].mxu0
      %8843 = vmatprep.mubr.f32.mxu0 0.0
      %8844 = vmatmul.mubr.f32.gmra.mrb[0].mxu0 %v8752
      %v8845 = vpop.f32.mrb[0].mxu0
      %v8846 = vadd.f32 0.0, %v8845
      %v8847 = vpop.f32.mrb[0].mxu0
      %8848 = vmatprep.mubr.f32.mxu0 0.0
      %8849 = vmatmul.mubr.f32.gmra.mrb[0].mxu0 %v8755
      %v8850 = vpop.f32.mrb[0].mxu0
      %v8851 = vadd.f32 0.0, %v8850
      %v8852 = vpop.f32.mrb[0].mxu0
      %8853 = vmatprep.mubr.f32.mxu0 0.0
      %8854 = vmatmul.mubr.f32.gmra.mrb[0].mxu0 %v8758
      %v8855 = vpop.f32.mrb[0].mxu0
      %v8856 = vadd.f32 0.0, %v8855
      %v8857 = vpop.f32.mrb[0].mxu0
      %8858 = vmatprep.mubr.f32.mxu0 0.0
      %8859 = vmatmul.mubr.f32.gmra.mrb[0].mxu0 %v8761
      %v8860 = vpop.f32.mrb[0].mxu0
      %v8861 = vadd.f32 0.0, %v8860
      %v8862 = vpop.f32.mrb[0].mxu0
      %8863 = vmatprep.mubr.f32.mxu0 0.0
      %8864 = vmatmul.mubr.f32.gmra.mrb[0].mxu0 %v8764
      %v8865 = vpop.f32.mrb[0].mxu0
      %v8866 = vadd.f32 0.0, %v8865
      %v8867 = vpop.f32.mrb[0].mxu0
      %8868 = vmatprep.mubr.f32.mxu0 0.0
      %8869 = vmatmul.mubr.f32.gmra.mrb[0].mxu0 %v8767
      %v8870 = vpop.f32.mrb[0].mxu0
      %v8871 = vadd.f32 0.0, %v8870
      %v8872 = vpop.f32.mrb[0].mxu0
      %8873 = vdwg.mxu0
      %8882 = vrot.lane.b32.xlu0 %v6376, 4
      %v8883 = vpop.permute.xlu0 %8882
      %8884 = vrot.lane.b32.xlu0 %v6381, 4
      %v8885 = vpop.permute.xlu0 %8884
      %8886 = vrot.lane.b32.xlu0 %v6386, 4
      %v8887 = vpop.permute.xlu0 %8886
      %8888 = vrot.lane.b32.xlu0 %v6391, 4
      %v8889 = vpop.permute.xlu0 %8888
      %8890 = vrot.lane.b32.xlu0 %v6396, 4
      %v8891 = vpop.permute.xlu0 %8890
      %8892 = vrot.lane.b32.xlu0 %v6401, 4
      %v8893 = vpop.permute.xlu0 %8892
      %8894 = vrot.lane.b32.xlu0 %v6406, 4
      %v8895 = vpop.permute.xlu0 %8894
      %8896 = vrot.lane.b32.xlu0 %v6411, 4
      %v8897 = vpop.permute.xlu0 %8896
      %8914 = vrot.lane.b32.xlu0 %v6786, 8
      %v8915 = vpop.permute.xlu0 %8914
      %8916 = vrot.lane.b32.xlu0 %v6791, 8
      %v8917 = vpop.permute.xlu0 %8916
      %8918 = vrot.lane.b32.xlu0 %v6796, 8
      %v8919 = vpop.permute.xlu0 %8918
      %8920 = vrot.lane.b32.xlu0 %v6801, 8
      %v8921 = vpop.permute.xlu0 %8920
      %8922 = vrot.lane.b32.xlu0 %v6806, 8
      %v8923 = vpop.permute.xlu0 %8922
      %8924 = vrot.lane.b32.xlu0 %v6811, 8
      %v8925 = vpop.permute.xlu0 %8924
      %8926 = vrot.lane.b32.xlu0 %v6816, 8
      %v8927 = vpop.permute.xlu0 %8926
      %8928 = vrot.lane.b32.xlu0 %v6821, 8
      %v8929 = vpop.permute.xlu0 %8928
      %8946 = vrot.lane.b32.xlu0 %v7196, 12
      %v8947 = vpop.permute.xlu0 %8946
      %8948 = vrot.lane.b32.xlu0 %v7201, 12
      %v8949 = vpop.permute.xlu0 %8948
      %8950 = vrot.lane.b32.xlu0 %v7206, 12
      %v8951 = vpop.permute.xlu0 %8950
      %8952 = vrot.lane.b32.xlu0 %v7211, 12
      %v8953 = vpop.permute.xlu0 %8952
      %8954 = vrot.lane.b32.xlu0 %v7216, 12
      %v8955 = vpop.permute.xlu0 %8954
      %8956 = vrot.lane.b32.xlu0 %v7221, 12
      %v8957 = vpop.permute.xlu0 %8956
      %8958 = vrot.lane.b32.xlu0 %v7226, 12
      %v8959 = vpop.permute.xlu0 %8958
      %8960 = vrot.lane.b32.xlu0 %v7231, 12
      %v8961 = vpop.permute.xlu0 %8960
      %8978 = vrot.lane.b32.xlu0 %v7606, 16
      %v8979 = vpop.permute.xlu0 %8978
      %8980 = vrot.lane.b32.xlu0 %v7611, 16
      %v8981 = vpop.permute.xlu0 %8980
      %8982 = vrot.lane.b32.xlu0 %v7616, 16
      %v8983 = vpop.permute.xlu0 %8982
      %8984 = vrot.lane.b32.xlu0 %v7621, 16
      %v8985 = vpop.permute.xlu0 %8984
      %8986 = vrot.lane.b32.xlu0 %v7626, 16
      %v8987 = vpop.permute.xlu0 %8986
      %8988 = vrot.lane.b32.xlu0 %v7631, 16
      %v8989 = vpop.permute.xlu0 %8988
      %8990 = vrot.lane.b32.xlu0 %v7636, 16
      %v8991 = vpop.permute.xlu0 %8990
      %8992 = vrot.lane.b32.xlu0 %v7641, 16
      %v8993 = vpop.permute.xlu0 %8992
      %9010 = vrot.lane.b32.xlu0 %v8016, 20
      %v9011 = vpop.permute.xlu0 %9010
      %9012 = vrot.lane.b32.xlu0 %v8021, 20
      %v9013 = vpop.permute.xlu0 %9012
      %9014 = vrot.lane.b32.xlu0 %v8026, 20
      %v9015 = vpop.permute.xlu0 %9014
      %9016 = vrot.lane.b32.xlu0 %v8031, 20
      %v9017 = vpop.permute.xlu0 %9016
      %9018 = vrot.lane.b32.xlu0 %v8036, 20
      %v9019 = vpop.permute.xlu0 %9018
      %9020 = vrot.lane.b32.xlu0 %v8041, 20
      %v9021 = vpop.permute.xlu0 %9020
      %9022 = vrot.lane.b32.xlu0 %v8046, 20
      %v9023 = vpop.permute.xlu0 %9022
      %9024 = vrot.lane.b32.xlu0 %v8051, 20
      %v9025 = vpop.permute.xlu0 %9024
      %9042 = vrot.lane.b32.xlu0 %v8426, 24
      %v9043 = vpop.permute.xlu0 %9042
      %9044 = vrot.lane.b32.xlu0 %v8431, 24
      %v9045 = vpop.permute.xlu0 %9044
      %9046 = vrot.lane.b32.xlu0 %v8436, 24
      %v9047 = vpop.permute.xlu0 %9046
      %9048 = vrot.lane.b32.xlu0 %v8441, 24
      %v9049 = vpop.permute.xlu0 %9048
      %9050 = vrot.lane.b32.xlu0 %v8446, 24
      %v9051 = vpop.permute.xlu0 %9050
      %9052 = vrot.lane.b32.xlu0 %v8451, 24
      %v9053 = vpop.permute.xlu0 %9052
      %9054 = vrot.lane.b32.xlu0 %v8456, 24
      %v9055 = vpop.permute.xlu0 %9054
      %9056 = vrot.lane.b32.xlu0 %v8461, 24
      %v9057 = vpop.permute.xlu0 %9056
      %9074 = vrot.lane.b32.xlu0 %v8836, 28
      %v9075 = vpop.permute.xlu0 %9074
      %9076 = vrot.lane.b32.xlu0 %v8841, 28
      %v9077 = vpop.permute.xlu0 %9076
      %9078 = vrot.lane.b32.xlu0 %v8846, 28
      %v9079 = vpop.permute.xlu0 %9078
      %9080 = vrot.lane.b32.xlu0 %v8851, 28
      %v9081 = vpop.permute.xlu0 %9080
      %9082 = vrot.lane.b32.xlu0 %v8856, 28
      %v9083 = vpop.permute.xlu0 %9082
      %9084 = vrot.lane.b32.xlu0 %v8861, 28
      %v9085 = vpop.permute.xlu0 %9084
      %9086 = vrot.lane.b32.xlu0 %v8866, 28
      %v9087 = vpop.permute.xlu0 %9086
      %9088 = vrot.lane.b32.xlu0 %v8871, 28
      %v9089 = vpop.permute.xlu0 %9088
      %v9098 = vsel %vm1183, %v5966, %v8883
      %v9099 = vsel %vm1183, %v5971, %v8885
      %v9100 = vsel %vm1183, %v5976, %v8887
      %v9101 = vsel %vm1183, %v5981, %v8889
      %v9102 = vsel %vm1183, %v5986, %v8891
      %v9103 = vsel %vm1183, %v5991, %v8893
      %v9104 = vsel %vm1183, %v5996, %v8895
      %v9105 = vsel %vm1183, %v6001, %v8897
      %v9106 = vsel %vm4673, %v9098, %v8915
      %v9107 = vsel %vm4673, %v9099, %v8917
      %v9108 = vsel %vm4673, %v9100, %v8919
      %v9109 = vsel %vm4673, %v9101, %v8921
      %v9110 = vsel %vm4673, %v9102, %v8923
      %v9111 = vsel %vm4673, %v9103, %v8925
      %v9112 = vsel %vm4673, %v9104, %v8927
      %v9113 = vsel %vm4673, %v9105, %v8929
      %v9114 = vsel %vm4682, %v9106, %v8947
      %v9115 = vsel %vm4682, %v9107, %v8949
      %v9116 = vsel %vm4682, %v9108, %v8951
      %v9117 = vsel %vm4682, %v9109, %v8953
      %v9118 = vsel %vm4682, %v9110, %v8955
      %v9119 = vsel %vm4682, %v9111, %v8957
      %v9120 = vsel %vm4682, %v9112, %v8959
      %v9121 = vsel %vm4682, %v9113, %v8961
      %v9122 = vsel %vm4691, %v9114, %v8979
      %v9123 = vsel %vm4691, %v9115, %v8981
      %v9124 = vsel %vm4691, %v9116, %v8983
      %v9125 = vsel %vm4691, %v9117, %v8985
      %v9126 = vsel %vm4691, %v9118, %v8987
      %v9127 = vsel %vm4691, %v9119, %v8989
      %v9128 = vsel %vm4691, %v9120, %v8991
      %v9129 = vsel %vm4691, %v9121, %v8993
      %v9130 = vsel %vm4700, %v9122, %v9011
      %v9131 = vsel %vm4700, %v9123, %v9013
      %v9132 = vsel %vm4700, %v9124, %v9015
      %v9133 = vsel %vm4700, %v9125, %v9017
      %v9134 = vsel %vm4700, %v9126, %v9019
      %v9135 = vsel %vm4700, %v9127, %v9021
      %v9136 = vsel %vm4700, %v9128, %v9023
      %v9137 = vsel %vm4700, %v9129, %v9025
      %v9138 = vsel %vm4709, %v9130, %v9043
      %v9139 = vsel %vm4709, %v9131, %v9045
      %v9140 = vsel %vm4709, %v9132, %v9047
      %v9141 = vsel %vm4709, %v9133, %v9049
      %v9142 = vsel %vm4709, %v9134, %v9051
      %v9143 = vsel %vm4709, %v9135, %v9053
      %v9144 = vsel %vm4709, %v9136, %v9055
      %v9145 = vsel %vm4709, %v9137, %v9057
      %v9146 = vsel %vm4718, %v9138, %v9075
      %v9147 = vsel %vm4718, %v9139, %v9077
      %v9148 = vsel %vm4718, %v9140, %v9079
      %v9149 = vsel %vm4718, %v9141, %v9081
      %v9150 = vsel %vm4718, %v9142, %v9083
      %v9151 = vsel %vm4718, %v9143, %v9085
      %v9152 = vsel %vm4718, %v9144, %v9087
      %v9153 = vsel %vm4718, %v9145, %v9089
      %s9154 = scalar_lea.vmem %s4, 32
      %v9155 = vld [vmem:[%s9154] sm:$0xff]
      %v9156 = vld [vmem:[%s9154 + $0x8] sm:$0xff]
      %v9157 = vld [vmem:[%s9154 + $0x10] sm:$0xff]
      %v9158 = vld [vmem:[%s9154 + $0x18] sm:$0xff]
      %s9159 = scalar_lea.vmem %s5, 1
      %v9160 = vld [vmem:[%s9159] sm:$0x1]
      %v9162 = vlaneseq
      %v9163 = vshrl.u32 %v9162, 7
      %v9164 = vsub.s32 0, %v9163
      %v9165 = vrot.slane %v9160, %v9164
      %v9168 = vsel %vm1021, %v9146, 0
      %v9171 = vsel %vm1021, %v9147, 0
      %v9174 = vsel %vm1021, %v9148, 0
      %v9177 = vsel %vm1021, %v9149, 0
      %v9180 = vsel %vm1021, %v9150, 0
      %v9183 = vsel %vm1021, %v9151, 0
      %v9186 = vsel %vm1021, %v9152, 0
      %v9189 = vsel %vm1021, %v9153, 0
      %9191 = vmatprep.subr.mxu0 0.0
      %9192 = vmatpush1.msra.mxu0 %v9155
      %9193 = vmatprep.subr.mxu0 0.0
      %9194 = vmatpush1.msra.mxu0 %v9156
      %9195 = vmatprep.subr.mxu0 0.0
      %9196 = vmatpush1.msra.mxu0 %v9157
      %9197 = vmatprep.subr.mxu0 0.0
      %9198 = vmatpush1.msra.mxu0 %v9158
      %9199 = vmatprep.subr.mxu0 0.0
      %9200 = vmatpush1.msra.mxu0 0.0
      %9201 = vmatprep.subr.mxu0 0.0
      %9202 = vmatpush1.msra.mxu0 0.0
      %9203 = vmatprep.subr.mxu0 0.0
      %9204 = vmatpush1.msra.mxu0 0.0
      %9205 = vmatprep.subr.mxu0 0.0
      %9206 = vmatpush1.msra.mxu0 0.0
      %9207 = vmatprep.subr.mxu0 0.0
      %9208 = vmatpush1.msra.mxu0 0.0
      %9209 = vmatprep.subr.mxu0 0.0
      %9210 = vmatpush1.msra.mxu0 0.0
      %9211 = vmatprep.subr.mxu0 0.0
      %9212 = vmatpush1.msra.mxu0 0.0
      %9213 = vmatprep.subr.mxu0 0.0
      %9214 = vmatpush1.msra.mxu0 0.0
      %9215 = vmatprep.subr.mxu0 0.0
      %9216 = vmatpush1.msra.mxu0 0.0
      %9217 = vmatprep.subr.mxu0 0.0
      %9218 = vmatpush1.msra.mxu0 0.0
      %9219 = vmatprep.subr.mxu0 0.0
      %9220 = vmatpush1.msra.mxu0 0.0
      %9221 = vmatprep.subr.mxu0 0.0
      %9222 = vmatpush1.msra.mxu0 0.0
      %9223 = vmatprep.subr.mxu0 0.0
      %9224 = vmatpush1.msra.mxu0 0.0
      %9225 = vmatprep.subr.mxu0 0.0
      %9226 = vmatpush1.msra.mxu0 0.0
      %9227 = vmatprep.subr.mxu0 0.0
      %9228 = vmatpush1.msra.mxu0 0.0
      %9229 = vmatprep.subr.mxu0 0.0
      %9230 = vmatpush1.msra.mxu0 0.0
      %9231 = vmatprep.subr.mxu0 0.0
      %9232 = vmatpush1.msra.mxu0 0.0
      %9233 = vmatprep.subr.mxu0 0.0
      %9234 = vmatpush1.msra.mxu0 0.0
      %9235 = vmatprep.subr.mxu0 0.0
      %9236 = vmatpush1.msra.mxu0 0.0
      %9237 = vmatprep.subr.mxu0 0.0
      %9238 = vmatpush1.msra.mxu0 0.0
      %9239 = vmatprep.subr.mxu0 0.0
      %9240 = vmatpush1.msra.mxu0 0.0
      %9241 = vmatprep.subr.mxu0 0.0
      %9242 = vmatpush1.msra.mxu0 0.0
      %9243 = vmatprep.subr.mxu0 0.0
      %9244 = vmatpush1.msra.mxu0 0.0
      %9245 = vmatprep.subr.mxu0 0.0
      %9246 = vmatpush1.msra.mxu0 0.0
      %9247 = vmatprep.subr.mxu0 0.0
      %9248 = vmatpush1.msra.mxu0 0.0
      %9249 = vmatprep.subr.mxu0 0.0
      %9250 = vmatpush1.msra.mxu0 0.0
      %9251 = vmatprep.subr.mxu0 0.0
      %9252 = vmatpush1.msra.mxu0 0.0
      %9253 = vmatprep.subr.mxu0 0.0
      %9254 = vmatpush1.msra.mxu0 0.0
      %9255 = vmatprep.mubr.f32.mxu0 0.0
      %9256 = vmatmul.mubr.f32.gmra.mrb[0].mxu0 %v9168
      %v9257 = vpop.f32.mrb[0].mxu0
      %v9258 = vadd.f32 %v9165, %v9257
      %v9259 = vpop.f32.mrb[0].mxu0
      %9260 = vmatprep.mubr.f32.mxu0 0.0
      %9261 = vmatmul.mubr.f32.gmra.mrb[0].mxu0 %v9171
      %v9262 = vpop.f32.mrb[0].mxu0
      %v9263 = vadd.f32 %v9165, %v9262
      %v9264 = vpop.f32.mrb[0].mxu0
      %9265 = vmatprep.mubr.f32.mxu0 0.0
      %9266 = vmatmul.mubr.f32.gmra.mrb[0].mxu0 %v9174
      %v9267 = vpop.f32.mrb[0].mxu0
      %v9268 = vadd.f32 %v9165, %v9267
      %v9269 = vpop.f32.mrb[0].mxu0
      %9270 = vmatprep.mubr.f32.mxu0 0.0
      %9271 = vmatmul.mubr.f32.gmra.mrb[0].mxu0 %v9177
      %v9272 = vpop.f32.mrb[0].mxu0
      %v9273 = vadd.f32 %v9165, %v9272
      %v9274 = vpop.f32.mrb[0].mxu0
      %9275 = vmatprep.mubr.f32.mxu0 0.0
      %9276 = vmatmul.mubr.f32.gmra.mrb[0].mxu0 %v9180
      %v9277 = vpop.f32.mrb[0].mxu0
      %v9278 = vadd.f32 %v9165, %v9277
      %v9279 = vpop.f32.mrb[0].mxu0
      %9280 = vmatprep.mubr.f32.mxu0 0.0
      %9281 = vmatmul.mubr.f32.gmra.mrb[0].mxu0 %v9183
      %v9282 = vpop.f32.mrb[0].mxu0
      %v9283 = vadd.f32 %v9165, %v9282
      %v9284 = vpop.f32.mrb[0].mxu0
      %9285 = vmatprep.mubr.f32.mxu0 0.0
      %9286 = vmatmul.mubr.f32.gmra.mrb[0].mxu0 %v9186
      %v9287 = vpop.f32.mrb[0].mxu0
      %v9288 = vadd.f32 %v9165, %v9287
      %v9289 = vpop.f32.mrb[0].mxu0
      %9290 = vmatprep.mubr.f32.mxu0 0.0
      %9291 = vmatmul.mubr.f32.gmra.mrb[0].mxu0 %v9189
      %v9292 = vpop.f32.mrb[0].mxu0
      %v9293 = vadd.f32 %v9165, %v9292
      %v9294 = vpop.f32.mrb[0].mxu0
      %9295 = vdwg.mxu0
      %v9296 = vadd.f32 %v5436, %v9258
      %v9297 = vadd.f32 %v5437, %v9263
      %v9298 = vadd.f32 %v5438, %v9268
      %v9299 = vadd.f32 %v5439, %v9273
      %v9300 = vadd.f32 %v5440, %v9278
      %v9301 = vadd.f32 %v5441, %v9283
      %v9302 = vadd.f32 %v5442, %v9288
      %v9303 = vadd.f32 %v5443, %v9293
      %s9304 = scalar_lea.vmem %s6, 1
      %v9305 = vld [vmem:[%s9304] sm:$0x1]
      %s9306 = scalar_lea.vmem %s7, 1
      %v9307 = vld [vmem:[%s9306] sm:$0x1]
      %v9308 = vsel %vm1021, %v9296, 0.0
      %9309 = vadd.xlane.f32.xlu0 %v9308
      %v9310 = vpop.xlane.xlu0 %9309
      %v9311 = vsel %vm1021, %v9297, 0.0
      %9312 = vadd.xlane.f32.xlu0 %v9311
      %v9313 = vpop.xlane.xlu0 %9312
      %v9314 = vsel %vm1021, %v9298, 0.0
      %9315 = vadd.xlane.f32.xlu0 %v9314
      %v9316 = vpop.xlane.xlu0 %9315
      %v9317 = vsel %vm1021, %v9299, 0.0
      %9318 = vadd.xlane.f32.xlu0 %v9317
      %v9319 = vpop.xlane.xlu0 %9318
      %v9320 = vsel %vm1021, %v9300, 0.0
      %9321 = vadd.xlane.f32.xlu0 %v9320
      %v9322 = vpop.xlane.xlu0 %9321
      %v9323 = vsel %vm1021, %v9301, 0.0
      %9324 = vadd.xlane.f32.xlu0 %v9323
      %v9325 = vpop.xlane.xlu0 %9324
      %v9326 = vsel %vm1021, %v9302, 0.0
      %9327 = vadd.xlane.f32.xlu0 %v9326
      %v9328 = vpop.xlane.xlu0 %9327
      %v9329 = vsel %vm1021, %v9303, 0.0
      %9330 = vadd.xlane.f32.xlu0 %v9329
      %v9331 = vpop.xlane.xlu0 %9330
      %v9332 = vmul.f32 %v9310, %v4901
      %v9333 = vmul.f32 %v9313, %v4901
      %v9334 = vmul.f32 %v9316, %v4901
      %v9335 = vmul.f32 %v9319, %v4901
      %v9336 = vmul.f32 %v9322, %v4901
      %v9337 = vmul.f32 %v9325, %v4901
      %v9338 = vmul.f32 %v9328, %v4901
      %v9339 = vmul.f32 %v9331, %v4901
      %v9340 = vsub.f32 %v9296, %v9332
      %v9341 = vsub.f32 %v9297, %v9333
      %v9342 = vsub.f32 %v9298, %v9334
      %v9343 = vsub.f32 %v9299, %v9335
      %v9344 = vsub.f32 %v9300, %v9336
      %v9345 = vsub.f32 %v9301, %v9337
      %v9346 = vsub.f32 %v9302, %v9338
      %v9347 = vsub.f32 %v9303, %v9339
      %v9348 = vmul.f32 %v9340, %v9340
      %v9349 = vmul.f32 %v9341, %v9341
      %v9350 = vmul.f32 %v9342, %v9342
      %v9351 = vmul.f32 %v9343, %v9343
      %v9352 = vmul.f32 %v9344, %v9344
      %v9353 = vmul.f32 %v9345, %v9345
      %v9354 = vmul.f32 %v9346, %v9346
      %v9355 = vmul.f32 %v9347, %v9347
      %v9356 = vsel %vm1021, %v9348, 0.0
      %9357 = vadd.xlane.f32.xlu0 %v9356
      %v9358 = vpop.xlane.xlu0 %9357
      %v9359 = vsel %vm1021, %v9349, 0.0
      %9360 = vadd.xlane.f32.xlu0 %v9359
      %v9361 = vpop.xlane.xlu0 %9360
      %v9362 = vsel %vm1021, %v9350, 0.0
      %9363 = vadd.xlane.f32.xlu0 %v9362
      %v9364 = vpop.xlane.xlu0 %9363
      %v9365 = vsel %vm1021, %v9351, 0.0
      %9366 = vadd.xlane.f32.xlu0 %v9365
      %v9367 = vpop.xlane.xlu0 %9366
      %v9368 = vsel %vm1021, %v9352, 0.0
      %9369 = vadd.xlane.f32.xlu0 %v9368
      %v9370 = vpop.xlane.xlu0 %9369
      %v9371 = vsel %vm1021, %v9353, 0.0
      %9372 = vadd.xlane.f32.xlu0 %v9371
      %v9373 = vpop.xlane.xlu0 %9372
      %v9374 = vsel %vm1021, %v9354, 0.0
      %9375 = vadd.xlane.f32.xlu0 %v9374
      %v9376 = vpop.xlane.xlu0 %9375
      %v9377 = vsel %vm1021, %v9355, 0.0
      %9378 = vadd.xlane.f32.xlu0 %v9377
      %v9379 = vpop.xlane.xlu0 %9378
      %v9380 = vmul.f32 %v9358, %v4901
      %v9381 = vmul.f32 %v9361, %v4901
      %v9382 = vmul.f32 %v9364, %v4901
      %v9383 = vmul.f32 %v9367, %v4901
      %v9384 = vmul.f32 %v9370, %v4901
      %v9385 = vmul.f32 %v9373, %v4901
      %v9386 = vmul.f32 %v9376, %v4901
      %v9387 = vmul.f32 %v9379, %v4901
      %v9388 = vadd.f32 %v9380, 1e-05
      %v9389 = vadd.f32 %v9381, 1e-05
      %v9390 = vadd.f32 %v9382, 1e-05
      %v9391 = vadd.f32 %v9383, 1e-05
      %v9392 = vadd.f32 %v9384, 1e-05
      %v9393 = vadd.f32 %v9385, 1e-05
      %v9394 = vadd.f32 %v9386, 1e-05
      %v9395 = vadd.f32 %v9387, 1e-05
      %v9396 = vrsqrt.pop %v9388
      %v9397 = vrsqrt.pop %v9389
      %v9398 = vrsqrt.pop %v9390
      %v9399 = vrsqrt.pop %v9391
      %v9400 = vrsqrt.pop %v9392
      %v9401 = vrsqrt.pop %v9393
      %v9402 = vrsqrt.pop %v9394
      %v9403 = vrsqrt.pop %v9395
      %v9404 = vmul.f32 %v9340, %v9396
      %v9405 = vmul.f32 %v9341, %v9397
      %v9406 = vmul.f32 %v9342, %v9398
      %v9407 = vmul.f32 %v9343, %v9399
      %v9408 = vmul.f32 %v9344, %v9400
      %v9409 = vmul.f32 %v9345, %v9401
      %v9410 = vmul.f32 %v9346, %v9402
      %v9411 = vmul.f32 %v9347, %v9403
      %v9413 = vlaneseq
      %v9414 = vshrl.u32 %v9413, 7
      %v9415 = vsub.s32 0, %v9414
      %v9416 = vrot.slane %v9305, %v9415
      %v9418 = vmul.f32 %v9404, %v9416
      %v9419 = vmul.f32 %v9405, %v9416
      %v9420 = vmul.f32 %v9406, %v9416
      %v9421 = vmul.f32 %v9407, %v9416
      %v9422 = vmul.f32 %v9408, %v9416
      %v9423 = vmul.f32 %v9409, %v9416
      %v9424 = vmul.f32 %v9410, %v9416
      %v9425 = vmul.f32 %v9411, %v9416
      %v9427 = vlaneseq
      %v9428 = vshrl.u32 %v9427, 7
      %v9429 = vsub.s32 0, %v9428
      %v9430 = vrot.slane %v9307, %v9429
      %v9432 = vadd.f32 %v9418, %v9430
      %v9433 = vadd.f32 %v9419, %v9430
      %v9434 = vadd.f32 %v9420, %v9430
      %v9435 = vadd.f32 %v9421, %v9430
      %v9436 = vadd.f32 %v9422, %v9430
      %v9437 = vadd.f32 %v9423, %v9430
      %v9438 = vadd.f32 %v9424, %v9430
      %v9439 = vadd.f32 %v9425, %v9430
      %s9440 = scalar_lea.vmem %s8, 32
      %v9441 = vld [vmem:[%s9440] sm:$0xff]
      %v9442 = vld [vmem:[%s9440 + $0x8] sm:$0xff]
      %v9443 = vld [vmem:[%s9440 + $0x10] sm:$0xff]
      %v9444 = vld [vmem:[%s9440 + $0x18] sm:$0xff]
      %s9445 = scalar_lea.vmem %s9, 1
      %v9446 = vld [vmem:[%s9445] sm:$0x1]
      %v9448 = vlaneseq
      %v9449 = vshrl.u32 %v9448, 7
      %v9450 = vsub.s32 0, %v9449
      %v9451 = vrot.slane %v9446, %v9450
      %v9454 = vsel %vm1021, %v9432, 0
      %v9457 = vsel %vm1021, %v9433, 0
      %v9460 = vsel %vm1021, %v9434, 0
      %v9463 = vsel %vm1021, %v9435, 0
      %v9466 = vsel %vm1021, %v9436, 0
      %v9469 = vsel %vm1021, %v9437, 0
      %v9472 = vsel %vm1021, %v9438, 0
      %v9475 = vsel %vm1021, %v9439, 0
      %9477 = vmatprep.subr.mxu0 0.0
      %9478 = vmatpush1.msra.mxu0 %v9441
      %9479 = vmatprep.subr.mxu0 0.0
      %9480 = vmatpush1.msra.mxu0 %v9442
      %9481 = vmatprep.subr.mxu0 0.0
      %9482 = vmatpush1.msra.mxu0 %v9443
      %9483 = vmatprep.subr.mxu0 0.0
      %9484 = vmatpush1.msra.mxu0 %v9444
      %9485 = vmatprep.subr.mxu0 0.0
      %9486 = vmatpush1.msra.mxu0 0.0
      %9487 = vmatprep.subr.mxu0 0.0
      %9488 = vmatpush1.msra.mxu0 0.0
      %9489 = vmatprep.subr.mxu0 0.0
      %9490 = vmatpush1.msra.mxu0 0.0
      %9491 = vmatprep.subr.mxu0 0.0
      %9492 = vmatpush1.msra.mxu0 0.0
      %9493 = vmatprep.subr.mxu0 0.0
      %9494 = vmatpush1.msra.mxu0 0.0
      %9495 = vmatprep.subr.mxu0 0.0
      %9496 = vmatpush1.msra.mxu0 0.0
      %9497 = vmatprep.subr.mxu0 0.0
      %9498 = vmatpush1.msra.mxu0 0.0
      %9499 = vmatprep.subr.mxu0 0.0
      %9500 = vmatpush1.msra.mxu0 0.0
      %9501 = vmatprep.subr.mxu0 0.0
      %9502 = vmatpush1.msra.mxu0 0.0
      %9503 = vmatprep.subr.mxu0 0.0
      %9504 = vmatpush1.msra.mxu0 0.0
      %9505 = vmatprep.subr.mxu0 0.0
      %9506 = vmatpush1.msra.mxu0 0.0
      %9507 = vmatprep.subr.mxu0 0.0
      %9508 = vmatpush1.msra.mxu0 0.0
      %9509 = vmatprep.subr.mxu0 0.0
      %9510 = vmatpush1.msra.mxu0 0.0
      %9511 = vmatprep.subr.mxu0 0.0
      %9512 = vmatpush1.msra.mxu0 0.0
      %9513 = vmatprep.subr.mxu0 0.0
      %9514 = vmatpush1.msra.mxu0 0.0
      %9515 = vmatprep.subr.mxu0 0.0
      %9516 = vmatpush1.msra.mxu0 0.0
      %9517 = vmatprep.subr.mxu0 0.0
      %9518 = vmatpush1.msra.mxu0 0.0
      %9519 = vmatprep.subr.mxu0 0.0
      %9520 = vmatpush1.msra.mxu0 0.0
      %9521 = vmatprep.subr.mxu0 0.0
      %9522 = vmatpush1.msra.mxu0 0.0
      %9523 = vmatprep.subr.mxu0 0.0
      %9524 = vmatpush1.msra.mxu0 0.0
      %9525 = vmatprep.subr.mxu0 0.0
      %9526 = vmatpush1.msra.mxu0 0.0
      %9527 = vmatprep.subr.mxu0 0.0
      %9528 = vmatpush1.msra.mxu0 0.0
      %9529 = vmatprep.subr.mxu0 0.0
      %9530 = vmatpush1.msra.mxu0 0.0
      %9531 = vmatprep.subr.mxu0 0.0
      %9532 = vmatpush1.msra.mxu0 0.0
      %9533 = vmatprep.subr.mxu0 0.0
      %9534 = vmatpush1.msra.mxu0 0.0
      %9535 = vmatprep.subr.mxu0 0.0
      %9536 = vmatpush1.msra.mxu0 0.0
      %9537 = vmatprep.subr.mxu0 0.0
      %9538 = vmatpush1.msra.mxu0 0.0
      %9539 = vmatprep.subr.mxu0 0.0
      %9540 = vmatpush1.msra.mxu0 0.0
      %9541 = vmatprep.mubr.f32.mxu0 0.0
      %9542 = vmatmul.mubr.f32.gmra.mrb[0].mxu0 %v9454
      %v9543 = vpop.f32.mrb[0].mxu0
      %v9544 = vadd.f32 %v9451, %v9543
      %v9545 = vpop.f32.mrb[0].mxu0
      %9546 = vmatprep.mubr.f32.mxu0 0.0
      %9547 = vmatmul.mubr.f32.gmra.mrb[0].mxu0 %v9457
      %v9548 = vpop.f32.mrb[0].mxu0
      %v9549 = vadd.f32 %v9451, %v9548
      %v9550 = vpop.f32.mrb[0].mxu0
      %9551 = vmatprep.mubr.f32.mxu0 0.0
      %9552 = vmatmul.mubr.f32.gmra.mrb[0].mxu0 %v9460
      %v9553 = vpop.f32.mrb[0].mxu0
      %v9554 = vadd.f32 %v9451, %v9553
      %v9555 = vpop.f32.mrb[0].mxu0
      %9556 = vmatprep.mubr.f32.mxu0 0.0
      %9557 = vmatmul.mubr.f32.gmra.mrb[0].mxu0 %v9463
      %v9558 = vpop.f32.mrb[0].mxu0
      %v9559 = vadd.f32 %v9451, %v9558
      %v9560 = vpop.f32.mrb[0].mxu0
      %9561 = vmatprep.mubr.f32.mxu0 0.0
      %9562 = vmatmul.mubr.f32.gmra.mrb[0].mxu0 %v9466
      %v9563 = vpop.f32.mrb[0].mxu0
      %v9564 = vadd.f32 %v9451, %v9563
      %v9565 = vpop.f32.mrb[0].mxu0
      %9566 = vmatprep.mubr.f32.mxu0 0.0
      %9567 = vmatmul.mubr.f32.gmra.mrb[0].mxu0 %v9469
      %v9568 = vpop.f32.mrb[0].mxu0
      %v9569 = vadd.f32 %v9451, %v9568
      %v9570 = vpop.f32.mrb[0].mxu0
      %9571 = vmatprep.mubr.f32.mxu0 0.0
      %9572 = vmatmul.mubr.f32.gmra.mrb[0].mxu0 %v9472
      %v9573 = vpop.f32.mrb[0].mxu0
      %v9574 = vadd.f32 %v9451, %v9573
      %v9575 = vpop.f32.mrb[0].mxu0
      %9576 = vmatprep.mubr.f32.mxu0 0.0
      %9577 = vmatmul.mubr.f32.gmra.mrb[0].mxu0 %v9475
      %v9578 = vpop.f32.mrb[0].mxu0
      %v9579 = vadd.f32 %v9451, %v9578
      %v9580 = vpop.f32.mrb[0].mxu0
      %9581 = vdwg.mxu0
      %v9582 = vmax.f32 %v9544, 0.0
      %v9583 = vmax.f32 %v9549, 0.0
      %v9584 = vmax.f32 %v9554, 0.0
      %v9585 = vmax.f32 %v9559, 0.0
      %v9586 = vmax.f32 %v9564, 0.0
      %v9587 = vmax.f32 %v9569, 0.0
      %v9588 = vmax.f32 %v9574, 0.0
      %v9589 = vmax.f32 %v9579, 0.0
      %s9590 = scalar_lea.vmem %s10, 64
      %v9591 = vld [vmem:[%s9590] sm:$0xff]
      %v9592 = vld [vmem:[%s9590 + $0x8] sm:$0xff]
      %v9593 = vld [vmem:[%s9590 + $0x10] sm:$0xff]
      %v9594 = vld [vmem:[%s9590 + $0x18] sm:$0xff]
      %v9595 = vld [vmem:[%s9590 + $0x20] sm:$0xff]
      %v9596 = vld [vmem:[%s9590 + $0x28] sm:$0xff]
      %v9597 = vld [vmem:[%s9590 + $0x30] sm:$0xff]
      %v9598 = vld [vmem:[%s9590 + $0x38] sm:$0xff]
      %s9599 = scalar_lea.vmem %s11, 1
      %v9600 = vld [vmem:[%s9599] sm:$0x1]
      %v9602 = vlaneseq
      %v9603 = vshrl.u32 %v9602, 7
      %v9604 = vsub.s32 0, %v9603
      %v9605 = vrot.slane %v9600, %v9604
      %v9608 = vsel %vm1329, %v9582, 0
      %v9611 = vsel %vm1329, %v9583, 0
      %v9614 = vsel %vm1329, %v9584, 0
      %v9617 = vsel %vm1329, %v9585, 0
      %v9620 = vsel %vm1329, %v9586, 0
      %v9623 = vsel %vm1329, %v9587, 0
      %v9626 = vsel %vm1329, %v9588, 0
      %v9629 = vsel %vm1329, %v9589, 0
      %9631 = vmatprep.subr.mxu0 0.0
      %9632 = vmatpush1.msra.mxu0 %v9591
      %9633 = vmatprep.subr.mxu0 0.0
      %9634 = vmatpush1.msra.mxu0 %v9592
      %9635 = vmatprep.subr.mxu0 0.0
      %9636 = vmatpush1.msra.mxu0 %v9593
      %9637 = vmatprep.subr.mxu0 0.0
      %9638 = vmatpush1.msra.mxu0 %v9594
      %9639 = vmatprep.subr.mxu0 0.0
      %9640 = vmatpush1.msra.mxu0 %v9595
      %9641 = vmatprep.subr.mxu0 0.0
      %9642 = vmatpush1.msra.mxu0 %v9596
      %9643 = vmatprep.subr.mxu0 0.0
      %9644 = vmatpush1.msra.mxu0 %v9597
      %9645 = vmatprep.subr.mxu0 0.0
      %9646 = vmatpush1.msra.mxu0 %v9598
      %9647 = vmatprep.subr.mxu0 0.0
      %9648 = vmatpush1.msra.mxu0 0.0
      %9649 = vmatprep.subr.mxu0 0.0
      %9650 = vmatpush1.msra.mxu0 0.0
      %9651 = vmatprep.subr.mxu0 0.0
      %9652 = vmatpush1.msra.mxu0 0.0
      %9653 = vmatprep.subr.mxu0 0.0
      %9654 = vmatpush1.msra.mxu0 0.0
      %9655 = vmatprep.subr.mxu0 0.0
      %9656 = vmatpush1.msra.mxu0 0.0
      %9657 = vmatprep.subr.mxu0 0.0
      %9658 = vmatpush1.msra.mxu0 0.0
      %9659 = vmatprep.subr.mxu0 0.0
      %9660 = vmatpush1.msra.mxu0 0.0
      %9661 = vmatprep.subr.mxu0 0.0
      %9662 = vmatpush1.msra.mxu0 0.0
      %9663 = vmatprep.subr.mxu0 0.0
      %9664 = vmatpush1.msra.mxu0 0.0
      %9665 = vmatprep.subr.mxu0 0.0
      %9666 = vmatpush1.msra.mxu0 0.0
      %9667 = vmatprep.subr.mxu0 0.0
      %9668 = vmatpush1.msra.mxu0 0.0
      %9669 = vmatprep.subr.mxu0 0.0
      %9670 = vmatpush1.msra.mxu0 0.0
      %9671 = vmatprep.subr.mxu0 0.0
      %9672 = vmatpush1.msra.mxu0 0.0
      %9673 = vmatprep.subr.mxu0 0.0
      %9674 = vmatpush1.msra.mxu0 0.0
      %9675 = vmatprep.subr.mxu0 0.0
      %9676 = vmatpush1.msra.mxu0 0.0
      %9677 = vmatprep.subr.mxu0 0.0
      %9678 = vmatpush1.msra.mxu0 0.0
      %9679 = vmatprep.subr.mxu0 0.0
      %9680 = vmatpush1.msra.mxu0 0.0
      %9681 = vmatprep.subr.mxu0 0.0
      %9682 = vmatpush1.msra.mxu0 0.0
      %9683 = vmatprep.subr.mxu0 0.0
      %9684 = vmatpush1.msra.mxu0 0.0
      %9685 = vmatprep.subr.mxu0 0.0
      %9686 = vmatpush1.msra.mxu0 0.0
      %9687 = vmatprep.subr.mxu0 0.0
      %9688 = vmatpush1.msra.mxu0 0.0
      %9689 = vmatprep.subr.mxu0 0.0
      %9690 = vmatpush1.msra.mxu0 0.0
      %9691 = vmatprep.subr.mxu0 0.0
      %9692 = vmatpush1.msra.mxu0 0.0
      %9693 = vmatprep.subr.mxu0 0.0
      %9694 = vmatpush1.msra.mxu0 0.0
      %9695 = vmatprep.mubr.f32.mxu0 0.0
      %9696 = vmatmul.mubr.f32.gmra.mrb[0].mxu0 %v9608
      %v9697 = vpop.f32.mrb[0].mxu0
      %v9698 = vadd.f32 %v9605, %v9697
      %v9699 = vpop.f32.mrb[0].mxu0
      %9700 = vmatprep.mubr.f32.mxu0 0.0
      %9701 = vmatmul.mubr.f32.gmra.mrb[0].mxu0 %v9611
      %v9702 = vpop.f32.mrb[0].mxu0
      %v9703 = vadd.f32 %v9605, %v9702
      %v9704 = vpop.f32.mrb[0].mxu0
      %9705 = vmatprep.mubr.f32.mxu0 0.0
      %9706 = vmatmul.mubr.f32.gmra.mrb[0].mxu0 %v9614
      %v9707 = vpop.f32.mrb[0].mxu0
      %v9708 = vadd.f32 %v9605, %v9707
      %v9709 = vpop.f32.mrb[0].mxu0
      %9710 = vmatprep.mubr.f32.mxu0 0.0
      %9711 = vmatmul.mubr.f32.gmra.mrb[0].mxu0 %v9617
      %v9712 = vpop.f32.mrb[0].mxu0
      %v9713 = vadd.f32 %v9605, %v9712
      %v9714 = vpop.f32.mrb[0].mxu0
      %9715 = vmatprep.mubr.f32.mxu0 0.0
      %9716 = vmatmul.mubr.f32.gmra.mrb[0].mxu0 %v9620
      %v9717 = vpop.f32.mrb[0].mxu0
      %v9718 = vadd.f32 %v9605, %v9717
      %v9719 = vpop.f32.mrb[0].mxu0
      %9720 = vmatprep.mubr.f32.mxu0 0.0
      %9721 = vmatmul.mubr.f32.gmra.mrb[0].mxu0 %v9623
      %v9722 = vpop.f32.mrb[0].mxu0
      %v9723 = vadd.f32 %v9605, %v9722
      %v9724 = vpop.f32.mrb[0].mxu0
      %9725 = vmatprep.mubr.f32.mxu0 0.0
      %9726 = vmatmul.mubr.f32.gmra.mrb[0].mxu0 %v9626
      %v9727 = vpop.f32.mrb[0].mxu0
      %v9728 = vadd.f32 %v9605, %v9727
      %v9729 = vpop.f32.mrb[0].mxu0
      %9730 = vmatprep.mubr.f32.mxu0 0.0
      %9731 = vmatmul.mubr.f32.gmra.mrb[0].mxu0 %v9629
      %v9732 = vpop.f32.mrb[0].mxu0
      %v9733 = vadd.f32 %v9605, %v9732
      %v9734 = vpop.f32.mrb[0].mxu0
      %9735 = vdwg.mxu0
      %v9736 = vadd.f32 %v9432, %v9698
      %v9737 = vadd.f32 %v9433, %v9703
      %v9738 = vadd.f32 %v9434, %v9708
      %v9739 = vadd.f32 %v9435, %v9713
      %v9740 = vadd.f32 %v9436, %v9718
      %v9741 = vadd.f32 %v9437, %v9723
      %v9742 = vadd.f32 %v9438, %v9728
      %v9743 = vadd.f32 %v9439, %v9733
      %s9744 = scalar_lea.vmem %s12, 1
      %v9745 = vld [vmem:[%s9744] sm:$0x1]
      %s9746 = scalar_lea.vmem %s13, 1
      %v9747 = vld [vmem:[%s9746] sm:$0x1]
      %v9748 = vsel %vm1021, %v9736, 0.0
      %9749 = vadd.xlane.f32.xlu0 %v9748
      %v9750 = vpop.xlane.xlu0 %9749
      %v9751 = vsel %vm1021, %v9737, 0.0
      %9752 = vadd.xlane.f32.xlu0 %v9751
      %v9753 = vpop.xlane.xlu0 %9752
      %v9754 = vsel %vm1021, %v9738, 0.0
      %9755 = vadd.xlane.f32.xlu0 %v9754
      %v9756 = vpop.xlane.xlu0 %9755
      %v9757 = vsel %vm1021, %v9739, 0.0
      %9758 = vadd.xlane.f32.xlu0 %v9757
      %v9759 = vpop.xlane.xlu0 %9758
      %v9760 = vsel %vm1021, %v9740, 0.0
      %9761 = vadd.xlane.f32.xlu0 %v9760
      %v9762 = vpop.xlane.xlu0 %9761
      %v9763 = vsel %vm1021, %v9741, 0.0
      %9764 = vadd.xlane.f32.xlu0 %v9763
      %v9765 = vpop.xlane.xlu0 %9764
      %v9766 = vsel %vm1021, %v9742, 0.0
      %9767 = vadd.xlane.f32.xlu0 %v9766
      %v9768 = vpop.xlane.xlu0 %9767
      %v9769 = vsel %vm1021, %v9743, 0.0
      %9770 = vadd.xlane.f32.xlu0 %v9769
      %v9771 = vpop.xlane.xlu0 %9770
      %v9772 = vmul.f32 %v9750, %v4901
      %v9773 = vmul.f32 %v9753, %v4901
      %v9774 = vmul.f32 %v9756, %v4901
      %v9775 = vmul.f32 %v9759, %v4901
      %v9776 = vmul.f32 %v9762, %v4901
      %v9777 = vmul.f32 %v9765, %v4901
      %v9778 = vmul.f32 %v9768, %v4901
      %v9779 = vmul.f32 %v9771, %v4901
      %v9780 = vsub.f32 %v9736, %v9772
      %v9781 = vsub.f32 %v9737, %v9773
      %v9782 = vsub.f32 %v9738, %v9774
      %v9783 = vsub.f32 %v9739, %v9775
      %v9784 = vsub.f32 %v9740, %v9776
      %v9785 = vsub.f32 %v9741, %v9777
      %v9786 = vsub.f32 %v9742, %v9778
      %v9787 = vsub.f32 %v9743, %v9779
      %v9788 = vmul.f32 %v9780, %v9780
      %v9789 = vmul.f32 %v9781, %v9781
      %v9790 = vmul.f32 %v9782, %v9782
      %v9791 = vmul.f32 %v9783, %v9783
      %v9792 = vmul.f32 %v9784, %v9784
      %v9793 = vmul.f32 %v9785, %v9785
      %v9794 = vmul.f32 %v9786, %v9786
      %v9795 = vmul.f32 %v9787, %v9787
      %v9796 = vsel %vm1021, %v9788, 0.0
      %9797 = vadd.xlane.f32.xlu0 %v9796
      %v9798 = vpop.xlane.xlu0 %9797
      %v9799 = vsel %vm1021, %v9789, 0.0
      %9800 = vadd.xlane.f32.xlu0 %v9799
      %v9801 = vpop.xlane.xlu0 %9800
      %v9802 = vsel %vm1021, %v9790, 0.0
      %9803 = vadd.xlane.f32.xlu0 %v9802
      %v9804 = vpop.xlane.xlu0 %9803
      %v9805 = vsel %vm1021, %v9791, 0.0
      %9806 = vadd.xlane.f32.xlu0 %v9805
      %v9807 = vpop.xlane.xlu0 %9806
      %v9808 = vsel %vm1021, %v9792, 0.0
      %9809 = vadd.xlane.f32.xlu0 %v9808
      %v9810 = vpop.xlane.xlu0 %9809
      %v9811 = vsel %vm1021, %v9793, 0.0
      %9812 = vadd.xlane.f32.xlu0 %v9811
      %v9813 = vpop.xlane.xlu0 %9812
      %v9814 = vsel %vm1021, %v9794, 0.0
      %9815 = vadd.xlane.f32.xlu0 %v9814
      %v9816 = vpop.xlane.xlu0 %9815
      %v9817 = vsel %vm1021, %v9795, 0.0
      %9818 = vadd.xlane.f32.xlu0 %v9817
      %v9819 = vpop.xlane.xlu0 %9818
      %v9820 = vmul.f32 %v9798, %v4901
      %v9821 = vmul.f32 %v9801, %v4901
      %v9822 = vmul.f32 %v9804, %v4901
      %v9823 = vmul.f32 %v9807, %v4901
      %v9824 = vmul.f32 %v9810, %v4901
      %v9825 = vmul.f32 %v9813, %v4901
      %v9826 = vmul.f32 %v9816, %v4901
      %v9827 = vmul.f32 %v9819, %v4901
      %v9828 = vadd.f32 %v9820, 1e-05
      %v9829 = vadd.f32 %v9821, 1e-05
      %v9830 = vadd.f32 %v9822, 1e-05
      %v9831 = vadd.f32 %v9823, 1e-05
      %v9832 = vadd.f32 %v9824, 1e-05
      %v9833 = vadd.f32 %v9825, 1e-05
      %v9834 = vadd.f32 %v9826, 1e-05
      %v9835 = vadd.f32 %v9827, 1e-05
      %v9836 = vrsqrt.pop %v9828
      %v9837 = vrsqrt.pop %v9829
      %v9838 = vrsqrt.pop %v9830
      %v9839 = vrsqrt.pop %v9831
      %v9840 = vrsqrt.pop %v9832
      %v9841 = vrsqrt.pop %v9833
      %v9842 = vrsqrt.pop %v9834
      %v9843 = vrsqrt.pop %v9835
      %v9844 = vmul.f32 %v9780, %v9836
      %v9845 = vmul.f32 %v9781, %v9837
      %v9846 = vmul.f32 %v9782, %v9838
      %v9847 = vmul.f32 %v9783, %v9839
      %v9848 = vmul.f32 %v9784, %v9840
      %v9849 = vmul.f32 %v9785, %v9841
      %v9850 = vmul.f32 %v9786, %v9842
      %v9851 = vmul.f32 %v9787, %v9843
      %v9853 = vlaneseq
      %v9854 = vshrl.u32 %v9853, 7
      %v9855 = vsub.s32 0, %v9854
      %v9856 = vrot.slane %v9745, %v9855
      %v9858 = vmul.f32 %v9844, %v9856
      %v9859 = vmul.f32 %v9845, %v9856
      %v9860 = vmul.f32 %v9846, %v9856
      %v9861 = vmul.f32 %v9847, %v9856
      %v9862 = vmul.f32 %v9848, %v9856
      %v9863 = vmul.f32 %v9849, %v9856
      %v9864 = vmul.f32 %v9850, %v9856
      %v9865 = vmul.f32 %v9851, %v9856
      %v9867 = vlaneseq
      %v9868 = vshrl.u32 %v9867, 7
      %v9869 = vsub.s32 0, %v9868
      %v9870 = vrot.slane %v9747, %v9869
      %v9872 = vadd.f32 %v9858, %v9870
      %v9873 = vadd.f32 %v9859, %v9870
      %v9874 = vadd.f32 %v9860, %v9870
      %v9875 = vadd.f32 %v9861, %v9870
      %v9876 = vadd.f32 %v9862, %v9870
      %v9877 = vadd.f32 %v9863, %v9870
      %v9878 = vadd.f32 %v9864, %v9870
      %v9879 = vadd.f32 %v9865, %v9870
      %v9880 = vld [vmem:[%s14] sm:$0xff]
      %v9881 = vld [vmem:[%s14 + $0x8] sm:$0xff]
      %v9882 = vld [vmem:[%s14 + $0x10] sm:$0xff]
      %v9883 = vld [vmem:[%s14 + $0x18] sm:$0xff]
      %v9884 = vld [vmem:[#allocation2] sm:$0x1]
      %v9886 = vlaneseq
      %v9887 = vshrl.u32 %v9886, 7
      %v9888 = vsub.s32 0, %v9887
      %v9889 = vrot.slane %v9884, %v9888
      %v9892 = vsel %vm1021, %v9872, 0
      %v9895 = vsel %vm1021, %v9873, 0
      %v9898 = vsel %vm1021, %v9874, 0
      %v9901 = vsel %vm1021, %v9875, 0
      %v9904 = vsel %vm1021, %v9876, 0
      %v9907 = vsel %vm1021, %v9877, 0
      %v9910 = vsel %vm1021, %v9878, 0
      %v9913 = vsel %vm1021, %v9879, 0
      %9915 = vmatprep.subr.mxu0 0.0
      %9916 = vmatpush1.msra.mxu0 %v9880
      %9917 = vmatprep.subr.mxu0 0.0
      %9918 = vmatpush1.msra.mxu0 %v9881
      %9919 = vmatprep.subr.mxu0 0.0
      %9920 = vmatpush1.msra.mxu0 %v9882
      %9921 = vmatprep.subr.mxu0 0.0
      %9922 = vmatpush1.msra.mxu0 %v9883
      %9923 = vmatprep.subr.mxu0 0.0
      %9924 = vmatpush1.msra.mxu0 0.0
      %9925 = vmatprep.subr.mxu0 0.0
      %9926 = vmatpush1.msra.mxu0 0.0
      %9927 = vmatprep.subr.mxu0 0.0
      %9928 = vmatpush1.msra.mxu0 0.0
      %9929 = vmatprep.subr.mxu0 0.0
      %9930 = vmatpush1.msra.mxu0 0.0
      %9931 = vmatprep.subr.mxu0 0.0
      %9932 = vmatpush1.msra.mxu0 0.0
      %9933 = vmatprep.subr.mxu0 0.0
      %9934 = vmatpush1.msra.mxu0 0.0
      %9935 = vmatprep.subr.mxu0 0.0
      %9936 = vmatpush1.msra.mxu0 0.0
      %9937 = vmatprep.subr.mxu0 0.0
      %9938 = vmatpush1.msra.mxu0 0.0
      %9939 = vmatprep.subr.mxu0 0.0
      %9940 = vmatpush1.msra.mxu0 0.0
      %9941 = vmatprep.subr.mxu0 0.0
      %9942 = vmatpush1.msra.mxu0 0.0
      %9943 = vmatprep.subr.mxu0 0.0
      %9944 = vmatpush1.msra.mxu0 0.0
      %9945 = vmatprep.subr.mxu0 0.0
      %9946 = vmatpush1.msra.mxu0 0.0
      %9947 = vmatprep.subr.mxu0 0.0
      %9948 = vmatpush1.msra.mxu0 0.0
      %9949 = vmatprep.subr.mxu0 0.0
      %9950 = vmatpush1.msra.mxu0 0.0
      %9951 = vmatprep.subr.mxu0 0.0
      %9952 = vmatpush1.msra.mxu0 0.0
      %9953 = vmatprep.subr.mxu0 0.0
      %9954 = vmatpush1.msra.mxu0 0.0
      %9955 = vmatprep.subr.mxu0 0.0
      %9956 = vmatpush1.msra.mxu0 0.0
      %9957 = vmatprep.subr.mxu0 0.0
      %9958 = vmatpush1.msra.mxu0 0.0
      %9959 = vmatprep.subr.mxu0 0.0
      %9960 = vmatpush1.msra.mxu0 0.0
      %9961 = vmatprep.subr.mxu0 0.0
      %9962 = vmatpush1.msra.mxu0 0.0
      %9963 = vmatprep.subr.mxu0 0.0
      %9964 = vmatpush1.msra.mxu0 0.0
      %9965 = vmatprep.subr.mxu0 0.0
      %9966 = vmatpush1.msra.mxu0 0.0
      %9967 = vmatprep.subr.mxu0 0.0
      %9968 = vmatpush1.msra.mxu0 0.0
      %9969 = vmatprep.subr.mxu0 0.0
      %9970 = vmatpush1.msra.mxu0 0.0
      %9971 = vmatprep.subr.mxu0 0.0
      %9972 = vmatpush1.msra.mxu0 0.0
      %9973 = vmatprep.subr.mxu0 0.0
      %9974 = vmatpush1.msra.mxu0 0.0
      %9975 = vmatprep.subr.mxu0 0.0
      %9976 = vmatpush1.msra.mxu0 0.0
      %9977 = vmatprep.subr.mxu0 0.0
      %9978 = vmatpush1.msra.mxu0 0.0
      %9979 = vmatprep.mubr.f32.mxu0 0.0
      %9980 = vmatmul.mubr.f32.gmra.mrb[0].mxu0 %v9892
      %v9981 = vpop.f32.mrb[0].mxu0
      %v9982 = vadd.f32 %v9889, %v9981
      %v9983 = vpop.f32.mrb[0].mxu0
      %9984 = vmatprep.mubr.f32.mxu0 0.0
      %9985 = vmatmul.mubr.f32.gmra.mrb[0].mxu0 %v9895
      %v9986 = vpop.f32.mrb[0].mxu0
      %v9987 = vadd.f32 %v9889, %v9986
      %v9988 = vpop.f32.mrb[0].mxu0
      %9989 = vmatprep.mubr.f32.mxu0 0.0
      %9990 = vmatmul.mubr.f32.gmra.mrb[0].mxu0 %v9898
      %v9991 = vpop.f32.mrb[0].mxu0
      %v9992 = vadd.f32 %v9889, %v9991
      %v9993 = vpop.f32.mrb[0].mxu0
      %9994 = vmatprep.mubr.f32.mxu0 0.0
      %9995 = vmatmul.mubr.f32.gmra.mrb[0].mxu0 %v9901
      %v9996 = vpop.f32.mrb[0].mxu0
      %v9997 = vadd.f32 %v9889, %v9996
      %v9998 = vpop.f32.mrb[0].mxu0
      %9999 = vmatprep.mubr.f32.mxu0 0.0
      %10000 = vmatmul.mubr.f32.gmra.mrb[0].mxu0 %v9904
      %v10001 = vpop.f32.mrb[0].mxu0
      %v10002 = vadd.f32 %v9889, %v10001
      %v10003 = vpop.f32.mrb[0].mxu0
      %10004 = vmatprep.mubr.f32.mxu0 0.0
      %10005 = vmatmul.mubr.f32.gmra.mrb[0].mxu0 %v9907
      %v10006 = vpop.f32.mrb[0].mxu0
      %v10007 = vadd.f32 %v9889, %v10006
      %v10008 = vpop.f32.mrb[0].mxu0
      %10009 = vmatprep.mubr.f32.mxu0 0.0
      %10010 = vmatmul.mubr.f32.gmra.mrb[0].mxu0 %v9910
      %v10011 = vpop.f32.mrb[0].mxu0
      %v10012 = vadd.f32 %v9889, %v10011
      %v10013 = vpop.f32.mrb[0].mxu0
      %10014 = vmatprep.mubr.f32.mxu0 0.0
      %10015 = vmatmul.mubr.f32.gmra.mrb[0].mxu0 %v9913
      %v10016 = vpop.f32.mrb[0].mxu0
      %v10017 = vadd.f32 %v9889, %v10016
      %v10018 = vpop.f32.mrb[0].mxu0
      %10019 = vdwg.mxu0
      %v10020 = vld [vmem:[%s16] sm:$0xff]
      %v10021 = vld [vmem:[%s16 + $0x8] sm:$0xff]
      %v10022 = vld [vmem:[%s16 + $0x10] sm:$0xff]
      %v10023 = vld [vmem:[%s16 + $0x18] sm:$0xff]
      %v10024 = vld [vmem:[%s16 + $0x20] sm:$0xff]
      %v10025 = vld [vmem:[%s16 + $0x28] sm:$0xff]
      %v10026 = vld [vmem:[%s16 + $0x30] sm:$0xff]
      %v10027 = vld [vmem:[%s16 + $0x38] sm:$0xff]
      %v10029 = vsel %vm1329, %v10020, 0
      %v10032 = vsel %vm1329, %v10021, 0
      %v10035 = vsel %vm1329, %v10022, 0
      %v10038 = vsel %vm1329, %v10023, 0
      %v10041 = vsel %vm1329, %v10024, 0
      %v10044 = vsel %vm1329, %v10025, 0
      %v10047 = vsel %vm1329, %v10026, 0
      %v10050 = vsel %vm1329, %v10027, 0
      %10052 = vmatprep.subr.mxu0 0.0
      %10053 = vmatpush1.msra.mxu0 %v9982
      %10054 = vmatprep.subr.mxu0 0.0
      %10055 = vmatpush1.msra.mxu0 %v9987
      %10056 = vmatprep.subr.mxu0 0.0
      %10057 = vmatpush1.msra.mxu0 %v9992
      %10058 = vmatprep.subr.mxu0 0.0
      %10059 = vmatpush1.msra.mxu0 %v9997
      %10060 = vmatprep.subr.mxu0 0.0
      %10061 = vmatpush1.msra.mxu0 %v10002
      %10062 = vmatprep.subr.mxu0 0.0
      %10063 = vmatpush1.msra.mxu0 %v10007
      %10064 = vmatprep.subr.mxu0 0.0
      %10065 = vmatpush1.msra.mxu0 %v10012
      %10066 = vmatprep.subr.mxu0 0.0
      %10067 = vmatpush1.msra.mxu0 %v10017
      %10068 = vmatprep.subr.mxu0 0.0
      %10069 = vmatpush1.msra.mxu0 0.0
      %10070 = vmatprep.subr.mxu0 0.0
      %10071 = vmatpush1.msra.mxu0 0.0
      %10072 = vmatprep.subr.mxu0 0.0
      %10073 = vmatpush1.msra.mxu0 0.0
      %10074 = vmatprep.subr.mxu0 0.0
      %10075 = vmatpush1.msra.mxu0 0.0
      %10076 = vmatprep.subr.mxu0 0.0
      %10077 = vmatpush1.msra.mxu0 0.0
      %10078 = vmatprep.subr.mxu0 0.0
      %10079 = vmatpush1.msra.mxu0 0.0
      %10080 = vmatprep.subr.mxu0 0.0
      %10081 = vmatpush1.msra.mxu0 0.0
      %10082 = vmatprep.subr.mxu0 0.0
      %10083 = vmatpush1.msra.mxu0 0.0
      %10084 = vmatprep.subr.mxu0 0.0
      %10085 = vmatpush1.msra.mxu0 0.0
      %10086 = vmatprep.subr.mxu0 0.0
      %10087 = vmatpush1.msra.mxu0 0.0
      %10088 = vmatprep.subr.mxu0 0.0
      %10089 = vmatpush1.msra.mxu0 0.0
      %10090 = vmatprep.subr.mxu0 0.0
      %10091 = vmatpush1.msra.mxu0 0.0
      %10092 = vmatprep.subr.mxu0 0.0
      %10093 = vmatpush1.msra.mxu0 0.0
      %10094 = vmatprep.subr.mxu0 0.0
      %10095 = vmatpush1.msra.mxu0 0.0
      %10096 = vmatprep.subr.mxu0 0.0
      %10097 = vmatpush1.msra.mxu0 0.0
      %10098 = vmatprep.subr.mxu0 0.0
      %10099 = vmatpush1.msra.mxu0 0.0
      %10100 = vmatprep.subr.mxu0 0.0
      %10101 = vmatpush1.msra.mxu0 0.0
      %10102 = vmatprep.subr.mxu0 0.0
      %10103 = vmatpush1.msra.mxu0 0.0
      %10104 = vmatprep.subr.mxu0 0.0
      %10105 = vmatpush1.msra.mxu0 0.0
      %10106 = vmatprep.subr.mxu0 0.0
      %10107 = vmatpush1.msra.mxu0 0.0
      %10108 = vmatprep.subr.mxu0 0.0
      %10109 = vmatpush1.msra.mxu0 0.0
      %10110 = vmatprep.subr.mxu0 0.0
      %10111 = vmatpush1.msra.mxu0 0.0
      %10112 = vmatprep.subr.mxu0 0.0
      %10113 = vmatpush1.msra.mxu0 0.0
      %10114 = vmatprep.subr.mxu0 0.0
      %10115 = vmatpush1.msra.mxu0 0.0
      %10116 = vmatprep.mubr.f32.mxu0 0.0
      %10117 = vmatmul.mubr.f32.gmra.mrb[0].mxu0 %v10029
      %v10118 = vpop.f32.mrb[0].mxu0
      %v10119 = vadd.f32 0.0, %v10118
      %v10120 = vpop.f32.mrb[0].mxu0
      %10121 = vmatprep.mubr.f32.mxu0 0.0
      %10122 = vmatmul.mubr.f32.gmra.mrb[0].mxu0 %v10032
      %v10123 = vpop.f32.mrb[0].mxu0
      %v10124 = vadd.f32 0.0, %v10123
      %v10125 = vpop.f32.mrb[0].mxu0
      %10126 = vmatprep.mubr.f32.mxu0 0.0
      %10127 = vmatmul.mubr.f32.gmra.mrb[0].mxu0 %v10035
      %v10128 = vpop.f32.mrb[0].mxu0
      %v10129 = vadd.f32 0.0, %v10128
      %v10130 = vpop.f32.mrb[0].mxu0
      %10131 = vmatprep.mubr.f32.mxu0 0.0
      %10132 = vmatmul.mubr.f32.gmra.mrb[0].mxu0 %v10038
      %v10133 = vpop.f32.mrb[0].mxu0
      %v10134 = vadd.f32 0.0, %v10133
      %v10135 = vpop.f32.mrb[0].mxu0
      %10136 = vmatprep.mubr.f32.mxu0 0.0
      %10137 = vmatmul.mubr.f32.gmra.mrb[0].mxu0 %v10041
      %v10138 = vpop.f32.mrb[0].mxu0
      %v10139 = vadd.f32 0.0, %v10138
      %v10140 = vpop.f32.mrb[0].mxu0
      %10141 = vmatprep.mubr.f32.mxu0 0.0
      %10142 = vmatmul.mubr.f32.gmra.mrb[0].mxu0 %v10044
      %v10143 = vpop.f32.mrb[0].mxu0
      %v10144 = vadd.f32 0.0, %v10143
      %v10145 = vpop.f32.mrb[0].mxu0
      %10146 = vmatprep.mubr.f32.mxu0 0.0
      %10147 = vmatmul.mubr.f32.gmra.mrb[0].mxu0 %v10047
      %v10148 = vpop.f32.mrb[0].mxu0
      %v10149 = vadd.f32 0.0, %v10148
      %v10150 = vpop.f32.mrb[0].mxu0
      %10151 = vmatprep.mubr.f32.mxu0 0.0
      %10152 = vmatmul.mubr.f32.gmra.mrb[0].mxu0 %v10050
      %v10153 = vpop.f32.mrb[0].mxu0
      %v10154 = vadd.f32 0.0, %v10153
      %v10155 = vpop.f32.mrb[0].mxu0
      %10156 = vdwg.mxu0
      %vm10157 = vcmask 7168
      %10158 = vst.msk [vmem:[%s550] sm:$0xff] %vm10157, %v10119
      %10159 = vst.msk [vmem:[%s550 + $0x8] sm:$0xff] %vm10157, %v10124
      %10160 = vst.msk [vmem:[%s550 + $0x10] sm:$0xff] %vm10157, %v10129
      %10161 = vst.msk [vmem:[%s550 + $0x18] sm:$0xff] %vm10157, %v10134
      %10162 = vst.msk [vmem:[%s550 + $0x20] sm:$0xff] %vm10157, %v10139
      %10163 = vst.msk [vmem:[%s550 + $0x28] sm:$0xff] %vm10157, %v10144
      %10164 = vst.msk [vmem:[%s550 + $0x30] sm:$0xff] %vm10157, %v10149
      %10165 = vst.msk [vmem:[%s550 + $0x38] sm:$0xff] %vm10157, %v10154
      %p10166 = scmp.lt.s32.totalorder %s30, 1
      %s10167 = scalar_select %p10166, %s30, 1
      %s10168 = smul.addr %s10167, 8
      %s10169 = smul.addr %s10168, 8
      %s10170 = scalar_lea.vmem %s17, %s10169
      // Predicated region
      $region89: #{simple_encoder_forward.1} parent=87 // pred_check
        %p10171 = pneg %p410
      $region90: #{simple_encoder_forward.1} parent=87 // pred_check_branch
        %10173 = sbr.rel (%p10171) target = $region92
      $region91: #{simple_encoder_forward.1} parent=87 // pred_region
        _
      $region92: #{simple_encoder_forward.1} parent=87 // pred_fallthru
        _
    $region88: #{simple_encoder_forward.1} parent=5 // pred_fallthru
      _
    %p10174 = scmp.le.s32.totalorder 2, %s25
    // Predicated region
    $region93: #{simple_encoder_forward.1} parent=5 // pred_check
      %p10175 = pneg %p10174
    $region94: #{simple_encoder_forward.1} parent=5 // pred_check_branch
      %10177 = sbr.rel (%p10175) target = $region96
    $region95: #{simple_encoder_forward.1} parent=5 // pred_region
      %s10178 = ssub.s32 %s25, 2
      // Predicated region
      $region97: #{simple_encoder_forward.1} parent=95 // pred_check
        %p10179 = pneg %p416
      $region98: #{simple_encoder_forward.1} parent=95 // pred_check_branch
        %10181 = sbr.rel (%p10179) target = $region100
      $region99: #{simple_encoder_forward.1} parent=95 // pred_region
        %p10182 = scmp.lt.s32.totalorder %s31, 1
        %s10183 = scalar_select %p10182, %s31, 1
        %s10184 = smul.addr %s10183, 8
        %s10185 = smul.addr %s10184, 8
        %s10186 = scalar_lea.vmem %s17, %s10185
      $region100: #{simple_encoder_forward.1} parent=95 // pred_fallthru
        _
    $region96: #{simple_encoder_forward.1} parent=5 // pred_fallthru
      _
  $region6: #{simple_encoder_forward.1} parent=0 // loop_footer
    %s29 = sadd.s32 1, %s25
  $region7: #{simple_encoder_forward.1} parent=0 // loop_footer_branch
    %24 = sbr.rel target = $region3
  $region8: #{simple_encoder_forward.1} parent=0 // loop_exit
    _

</llo_original>
